<compile_context>
chip_gen: v6e
topology: v6e:2x2x1
jax: 0.10.0
libtpu: 0.0.40
codegen_flags: <defaults>
</compile_context>

<pallas_src>
import functools
import math

import jax
import jax.numpy as jnp
from jax.experimental import pallas as pl
from jax.experimental.pallas import tpu as pltpu

_EPS = 1e-5


# ---------------------------------------------------------------------------
# In-kernel helpers (operate on register/VMEM values, no HBM traffic)
# ---------------------------------------------------------------------------
def _deinterleave_rows(xp):
    """Split (Lp, C) rows into even/odd phases via exact 0/1 selection matmuls."""
    lp, _ = xp.shape
    ne, no = (lp + 1) // 2, lp // 2
    re_ = jax.lax.broadcasted_iota(jnp.int32, (ne, lp), 0)
    ce_ = jax.lax.broadcasted_iota(jnp.int32, (ne, lp), 1)
    sel_e = (ce_ == 2 * re_).astype(xp.dtype)
    ro_ = jax.lax.broadcasted_iota(jnp.int32, (no, lp), 0)
    co_ = jax.lax.broadcasted_iota(jnp.int32, (no, lp), 1)
    sel_o = (co_ == 2 * ro_ + 1).astype(xp.dtype)
    even = jnp.dot(sel_e, xp, preferred_element_type=jnp.float32)
    odd = jnp.dot(sel_o, xp, preferred_element_type=jnp.float32)
    return even, odd


def _conv_k3_s1(h, l_per_sample, w_ref, b_ref):
    """k=3, stride 1, pad 1 conv (+folded BN) as ONE (B*L,3C)@(3C,Cout) dot."""
    bl, c = h.shape
    z = jnp.zeros((1, c), h.dtype)
    prev = jnp.concatenate([z, h[:-1, :]], axis=0)        # x[i-1]
    nxt = jnp.concatenate([h[1:, :], z], axis=0)          # x[i+1]
    if bl != l_per_sample:
        # Batch folded into M: zero the halo rows at per-sample boundaries.
        row = jax.lax.broadcasted_iota(jnp.int32, (bl, 1), 0)
        first = row == 0
        last = row == l_per_sample - 1
        for s in range(1, bl // l_per_sample):
            first = jnp.logical_or(first, row == s * l_per_sample)
            last = jnp.logical_or(last, row == (s + 1) * l_per_sample - 1)
        prev = jnp.where(first, 0.0, prev)
        nxt = jnp.where(last, 0.0, nxt)
    col = jnp.concatenate([prev, h, nxt], axis=-1).astype(jnp.bfloat16)
    out = jnp.dot(col, w_ref[...], preferred_element_type=jnp.float32)
    return out + b_ref[...]


def _conv_k3_s2_cols(x_s, l_out):
    """Per-sample im2col for k=3, stride 2, pad 1; also returns x[2i] rows."""
    _, c = x_s.shape
    z = jnp.zeros((1, c), x_s.dtype)
    xp = jnp.concatenate([z, x_s, z], axis=0)             # (Lin + 2, C)
    even, odd = _deinterleave_rows(xp)                    # xp[2i], xp[2i+1]
    tap0 = even[0:l_out, :]                               # x[2i-1]
    tap1 = odd[0:l_out, :]                                # x[2i]
    tap2 = even[1:1 + l_out, :]                           # x[2i+1]
    col = jnp.concatenate([tap0, tap1, tap2], axis=-1)    # (Lout, 3C)
    return col, tap1                                      # tap1 == downsample rows


def _stem_cols(x_s, l_out):
    """Per-sample im2col for the stem conv: k=15, stride 2, pad 3."""
    _, c = x_s.shape
    zp = jnp.zeros((3, c), x_s.dtype)
    xp = jnp.concatenate([zp, x_s, zp], axis=0)           # (Lin + 6, C)
    even, odd = _deinterleave_rows(xp)
    taps = []
    for k in range(15):
        src = even if k % 2 == 0 else odd
        off = k // 2
        taps.append(src[off:off + l_out, :])
    return jnp.concatenate(taps, axis=-1)                 # (Lout, 15*C)


# ---------------------------------------------------------------------------
# Fused whole-network kernel
# ---------------------------------------------------------------------------
def _resnet_kernel(*refs, b_tile, l_stem, blocks, vpu_fc):
    it = iter(refs)
    x_ref = next(it)
    stem_w, stem_b = next(it), next(it)
    blk_refs = []
    for (_cin, _planes, _stride, has_down, _lin, _lout) in blocks:
        n = 6 if has_down else 4
        blk_refs.append(tuple(next(it) for _ in range(n)))
    fc_w, fc_b = next(it), next(it)
    o_ref = next(it)

    # ---- stem: Conv1d(12, 32, k=15, s=2, p=3) + BN(folded) + ReLU ----------
    cols = [_stem_cols(x_ref[b].astype(jnp.float32), l_stem)
            for b in range(b_tile)]
    col = cols[0] if b_tile == 1 else jnp.concatenate(cols, axis=0)
    act = jnp.dot(col.astype(jnp.bfloat16), stem_w[...],
                  preferred_element_type=jnp.float32) + stem_b[...]
    act = jnp.maximum(act, 0.0)                            # (b_tile*l_stem, 32)

    # ---- residual stages (BasicBlocks) --------------------------------------
    for bi, (_cin, _planes, stride, has_down, lin, lout) in enumerate(blocks):
        wr = blk_refs[bi]
        w1, b1 = wr[0], wr[1]
        if has_down:
            wd, bd, w2, b2 = wr[2], wr[3], wr[4], wr[5]
        else:
            w2, b2 = wr[2], wr[3]

        if stride == 1:
            identity = act
            h = jnp.maximum(_conv_k3_s1(act, lin, w1, b1), 0.0)
            h = _conv_k3_s1(h, lin, w2, b2)
            act = jnp.maximum(h + identity, 0.0)
        else:
            ccols, dcols = [], []
            for b in range(b_tile):
                c_b, d_b = _conv_k3_s2_cols(act[b * lin:(b + 1) * lin, :], lout)
                ccols.append(c_b)
                dcols.append(d_b)
            col1 = ccols[0] if b_tile == 1 else jnp.concatenate(ccols, axis=0)
            down = dcols[0] if b_tile == 1 else jnp.concatenate(dcols, axis=0)
            h = jnp.dot(col1.astype(jnp.bfloat16), w1[...],
                        preferred_element_type=jnp.float32) + b1[...]
            h = jnp.maximum(h, 0.0)
            h = _conv_k3_s1(h, lout, w2, b2)
            identity = jnp.dot(down.astype(jnp.bfloat16), wd[...],
                               preferred_element_type=jnp.float32) + bd[...]
            act = jnp.maximum(h + identity, 0.0)

    # ---- AdaptiveAvgPool1d(1) + Linear fused epilogue ------------------------
    l_last = blocks[-1][5]
    feats = [jnp.mean(act[b * l_last:(b + 1) * l_last, :], axis=0, keepdims=True)
             for b in range(b_tile)]
    pooled = feats[0] if b_tile == 1 else jnp.concatenate(feats, axis=0)
    if vpu_fc:  # num_outputs == 1: VPU multiply + lane reduce, no MXU dot
        out = jnp.sum(pooled * fc_w[...], axis=-1, keepdims=True) + fc_b[...]
    else:
        out = jnp.dot(pooled.astype(jnp.bfloat16), fc_w[...],
                      preferred_element_type=jnp.float32) + fc_b[...]
    o_ref[0] = out.astype(o_ref.dtype)


# ---------------------------------------------------------------------------
# Wrapper: one pallas_call over batch tiles
# ---------------------------------------------------------------------------
def _pick_batch_tile(n):
    # Keep a >=2-way "parallel" grid axis (v7x megacore) while folding as much
    # batch as possible into the matmul M dim.
    cap = min(8, max(1, n // 2))
    for bt in range(cap, 0, -1):
        if n % bt == 0:
            return bt
    return 1


@jax.jit
def resnet_forward(params, x_ncl):
    """x_ncl: (N, 12, L) as in the PyTorch module -> (N, num_outputs)."""
    n, cin0, l_in = x_ncl.shape
    x = jnp.transpose(x_ncl, (0, 2, 1)).astype(jnp.float32)   # channels-last

    b_tile = _pick_batch_tile(n)
    grid_n = n // b_tile
    l_stem = (l_in + 2 * 3 - 15) // 2 + 1

    flat = [params["stem_w"], params["stem_b"]]
    blocks_meta = []
    cur_l = l_stem
    for blk in params["blocks"]:
        cin = blk["w1"].shape[0] // 3
        planes = blk["w1"].shape[1]
        has_down = "wd" in blk
        stride = 2 if has_down else 1        # true for this architecture
        lin = cur_l
        lout = (lin - 1) // 2 + 1 if stride == 2 else lin
        flat += [blk["w1"], blk["b1"]]
        if has_down:
            flat += [blk["wd"], blk["bd"]]
        flat += [blk["w2"], blk["b2"]]
        blocks_meta.append((cin, planes, stride, has_down, lin, lout))
        cur_l = lout
    flat += [params["fc_w"], params["fc_b"]]

    num_out = params["fc_b"].shape[-1]
    vpu_fc = num_out == 1

    in_specs = [pl.BlockSpec((b_tile, l_in, cin0), lambda i: (i, 0, 0))]
    in_specs += [pl.BlockSpec(w.shape, lambda i: (0, 0)) for w in flat]
    out_spec = pl.BlockSpec((1, b_tile, num_out), lambda i: (i, 0, 0))

    kernel = functools.partial(
        _resnet_kernel, b_tile=b_tile, l_stem=l_stem,
        blocks=tuple(blocks_meta), vpu_fc=vpu_fc)

    out = pl.pallas_call(
        kernel,
        out_shape=jax.ShapeDtypeStruct((grid_n, b_tile, num_out), jnp.float32),
        grid=(grid_n,),
        in_specs=in_specs,
        out_specs=out_spec,
        compiler_params=pltpu.CompilerParams(
            dimension_semantics=("parallel",),
            vmem_limit_bytes=64 * 1024 * 1024),
    )(x, *flat)
    return out.reshape(n, num_out)


# ---------------------------------------------------------------------------
# Parameters: PyTorch-style init, BN folded, conv weights packed (K*Cin, Cout)
# ---------------------------------------------------------------------------
def _bn_fold(c):
    gamma = jnp.ones((c,), jnp.float32)
    beta = jnp.zeros((c,), jnp.float32)
    rmean = jnp.zeros((c,), jnp.float32)
    rvar = jnp.ones((c,), jnp.float32)
    scale = gamma / jnp.sqrt(rvar + _EPS)
    shift = beta - rmean * scale
    return scale, shift


def _packed_conv(key, cout, cin, k):
    """kaiming_normal(fan_out) Conv1d weight, BN folded, packed (K*Cin, Cout)."""
    std = math.sqrt(2.0 / (cout * k))
    w = jax.random.normal(key, (cout, cin, k), jnp.float32) * std  # torch layout
    scale, shift = _bn_fold(cout)
    w = w * scale[:, None, None]
    w_packed = jnp.transpose(w, (2, 1, 0)).reshape(k * cin, cout)
    return w_packed.astype(jnp.bfloat16), shift.reshape(1, cout)


def init_params(key, layers=(2, 2, 2, 2), num_outputs=1):
    keys = iter(jax.random.split(key, 4 * sum(layers) + 8))
    params = {}
    params["stem_w"], params["stem_b"] = _packed_conv(next(keys), 32, 12, 15)

    inplanes = 32
    blocks = []
    for planes, nblocks, stride in ((32, layers[0], 1), (64, layers[1], 2),
                                    (128, layers[2], 2), (256, layers[3], 2)):
        for bidx in range(nblocks):
            s = stride if bidx == 0 else 1
            blk = {}
            blk["w1"], blk["b1"] = _packed_conv(next(keys), planes, inplanes, 3)
            blk["w2"], blk["b2"] = _packed_conv(next(keys), planes, planes, 3)
            if s != 1 or inplanes != planes:
                blk["wd"], blk["bd"] = _packed_conv(next(keys), planes, inplanes, 1)
            blocks.append(blk)
            inplanes = planes
    params["blocks"] = blocks

    bound = 1.0 / math.sqrt(256.0)
    wkey, bkey = jax.random.split(next(keys))
    fc_w = jax.random.uniform(wkey, (num_outputs, 256), jnp.float32, -bound, bound)
    fc_b = jax.random.uniform(bkey, (num_outputs,), jnp.float32, -bound, bound)
    # num_outputs == 1 -> store as (1, 256) for the VPU mul+reduce epilogue.
    params["fc_w"] = fc_w if num_outputs == 1 else jnp.transpose(fc_w)
    params["fc_b"] = fc_b.reshape(1, num_outputs)
    return params


# ---------------------------------------------------------------------------
if __name__ == "__main__":
    key = jax.random.PRNGKey(0)
    pkey, xkey = jax.random.split(key)
    params = init_params(pkey, layers=(2, 2, 2, 2), num_outputs=1)
    x = jax.random.normal(xkey, (2, 12, 64), jnp.float32)   # (N, C_in=12, L)
    out = resnet_forward(params, x)
    out = jax.block_until_ready(out)
    assert out.shape == (2, 1) and out.dtype == jnp.float32
    assert bool(jnp.all(jnp.isfinite(out)))
    print("KERNEL_OK")
</pallas_src>

<mosaic_0001>
module attributes {stable_mosaic.version = 11 : i64} {
  func.func @_resnet_kernel(%arg0: i32, %arg1: memref<1x64x12xf32, #tpu.memory_space<vmem>>, %arg2: memref<180x32xbf16, #tpu.memory_space<vmem>>, %arg3: memref<1x32xf32, #tpu.memory_space<vmem>>, %arg4: memref<96x32xbf16, #tpu.memory_space<vmem>>, %arg5: memref<1x32xf32, #tpu.memory_space<vmem>>, %arg6: memref<96x32xbf16, #tpu.memory_space<vmem>>, %arg7: memref<1x32xf32, #tpu.memory_space<vmem>>, %arg8: memref<96x32xbf16, #tpu.memory_space<vmem>>, %arg9: memref<1x32xf32, #tpu.memory_space<vmem>>, %arg10: memref<96x32xbf16, #tpu.memory_space<vmem>>, %arg11: memref<1x32xf32, #tpu.memory_space<vmem>>, %arg12: memref<96x64xbf16, #tpu.memory_space<vmem>>, %arg13: memref<1x64xf32, #tpu.memory_space<vmem>>, %arg14: memref<32x64xbf16, #tpu.memory_space<vmem>>, %arg15: memref<1x64xf32, #tpu.memory_space<vmem>>, %arg16: memref<192x64xbf16, #tpu.memory_space<vmem>>, %arg17: memref<1x64xf32, #tpu.memory_space<vmem>>, %arg18: memref<192x64xbf16, #tpu.memory_space<vmem>>, %arg19: memref<1x64xf32, #tpu.memory_space<vmem>>, %arg20: memref<192x64xbf16, #tpu.memory_space<vmem>>, %arg21: memref<1x64xf32, #tpu.memory_space<vmem>>, %arg22: memref<192x128xbf16, #tpu.memory_space<vmem>>, %arg23: memref<1x128xf32, #tpu.memory_space<vmem>>, %arg24: memref<64x128xbf16, #tpu.memory_space<vmem>>, %arg25: memref<1x128xf32, #tpu.memory_space<vmem>>, %arg26: memref<384x128xbf16, #tpu.memory_space<vmem>>, %arg27: memref<1x128xf32, #tpu.memory_space<vmem>>, %arg28: memref<384x128xbf16, #tpu.memory_space<vmem>>, %arg29: memref<1x128xf32, #tpu.memory_space<vmem>>, %arg30: memref<384x128xbf16, #tpu.memory_space<vmem>>, %arg31: memref<1x128xf32, #tpu.memory_space<vmem>>, %arg32: memref<384x256xbf16, #tpu.memory_space<vmem>>, %arg33: memref<1x256xf32, #tpu.memory_space<vmem>>, %arg34: memref<128x256xbf16, #tpu.memory_space<vmem>>, %arg35: memref<1x256xf32, #tpu.memory_space<vmem>>, %arg36: memref<768x256xbf16, #tpu.memory_space<vmem>>, %arg37: memref<1x256xf32, #tpu.memory_space<vmem>>, %arg38: memref<768x256xbf16, #tpu.memory_space<vmem>>, %arg39: memref<1x256xf32, #tpu.memory_space<vmem>>, %arg40: memref<768x256xbf16, #tpu.memory_space<vmem>>, %arg41: memref<1x256xf32, #tpu.memory_space<vmem>>, %arg42: memref<1x256xf32, #tpu.memory_space<vmem>>, %arg43: memref<1x1xf32, #tpu.memory_space<vmem>>, %arg44: memref<1x1x1xf32, #tpu.memory_space<vmem>>) attributes {dimension_semantics = [#tpu.dimension_semantics<parallel>], iteration_bounds = array<i64: 2>, scalar_prefetch = 0 : i64, scratch_operands = 0 : i64, tpu.core_type = #tpu.core_type<tc>, window_params = [{transform_indices = @transform_0, window_bounds = array<i64: 1, 64, 12>}, {pipeline_mode = #tpu.pipeline_mode<synchronous>, transform_indices = @transform_1, window_bounds = array<i64: 180, 32>}, {pipeline_mode = #tpu.pipeline_mode<synchronous>, transform_indices = @transform_2, window_bounds = array<i64: 1, 32>}, {pipeline_mode = #tpu.pipeline_mode<synchronous>, transform_indices = @transform_3, window_bounds = array<i64: 96, 32>}, {pipeline_mode = #tpu.pipeline_mode<synchronous>, transform_indices = @transform_4, window_bounds = array<i64: 1, 32>}, {pipeline_mode = #tpu.pipeline_mode<synchronous>, transform_indices = @transform_5, window_bounds = array<i64: 96, 32>}, {pipeline_mode = #tpu.pipeline_mode<synchronous>, transform_indices = @transform_6, window_bounds = array<i64: 1, 32>}, {pipeline_mode = #tpu.pipeline_mode<synchronous>, transform_indices = @transform_7, window_bounds = array<i64: 96, 32>}, {pipeline_mode = #tpu.pipeline_mode<synchronous>, transform_indices = @transform_8, window_bounds = array<i64: 1, 32>}, {pipeline_mode = #tpu.pipeline_mode<synchronous>, transform_indices = @transform_9, window_bounds = array<i64: 96, 32>}, {pipeline_mode = #tpu.pipeline_mode<synchronous>, transform_indices = @transform_10, window_bounds = array<i64: 1, 32>}, {pipeline_mode = #tpu.pipeline_mode<synchronous>, transform_indices = @transform_11, window_bounds = array<i64: 96, 64>}, {pipeline_mode = #tpu.pipeline_mode<synchronous>, transform_indices = @transform_12, window_bounds = array<i64: 1, 64>}, {pipeline_mode = #tpu.pipeline_mode<synchronous>, transform_indices = @transform_13, window_bounds = array<i64: 32, 64>}, {pipeline_mode = #tpu.pipeline_mode<synchronous>, transform_indices = @transform_14, window_bounds = array<i64: 1, 64>}, {pipeline_mode = #tpu.pipeline_mode<synchronous>, transform_indices = @transform_15, window_bounds = array<i64: 192, 64>}, {pipeline_mode = #tpu.pipeline_mode<synchronous>, transform_indices = @transform_16, window_bounds = array<i64: 1, 64>}, {pipeline_mode = #tpu.pipeline_mode<synchronous>, transform_indices = @transform_17, window_bounds = array<i64: 192, 64>}, {pipeline_mode = #tpu.pipeline_mode<synchronous>, transform_indices = @transform_18, window_bounds = array<i64: 1, 64>}, {pipeline_mode = #tpu.pipeline_mode<synchronous>, transform_indices = @transform_19, window_bounds = array<i64: 192, 64>}, {pipeline_mode = #tpu.pipeline_mode<synchronous>, transform_indices = @transform_20, window_bounds = array<i64: 1, 64>}, {pipeline_mode = #tpu.pipeline_mode<synchronous>, transform_indices = @transform_21, window_bounds = array<i64: 192, 128>}, {pipeline_mode = #tpu.pipeline_mode<synchronous>, transform_indices = @transform_22, window_bounds = array<i64: 1, 128>}, {pipeline_mode = #tpu.pipeline_mode<synchronous>, transform_indices = @transform_23, window_bounds = array<i64: 64, 128>}, {pipeline_mode = #tpu.pipeline_mode<synchronous>, transform_indices = @transform_24, window_bounds = array<i64: 1, 128>}, {pipeline_mode = #tpu.pipeline_mode<synchronous>, transform_indices = @transform_25, window_bounds = array<i64: 384, 128>}, {pipeline_mode = #tpu.pipeline_mode<synchronous>, transform_indices = @transform_26, window_bounds = array<i64: 1, 128>}, {pipeline_mode = #tpu.pipeline_mode<synchronous>, transform_indices = @transform_27, window_bounds = array<i64: 384, 128>}, {pipeline_mode = #tpu.pipeline_mode<synchronous>, transform_indices = @transform_28, window_bounds = array<i64: 1, 128>}, {pipeline_mode = #tpu.pipeline_mode<synchronous>, transform_indices = @transform_29, window_bounds = array<i64: 384, 128>}, {pipeline_mode = #tpu.pipeline_mode<synchronous>, transform_indices = @transform_30, window_bounds = array<i64: 1, 128>}, {pipeline_mode = #tpu.pipeline_mode<synchronous>, transform_indices = @transform_31, window_bounds = array<i64: 384, 256>}, {pipeline_mode = #tpu.pipeline_mode<synchronous>, transform_indices = @transform_32, window_bounds = array<i64: 1, 256>}, {pipeline_mode = #tpu.pipeline_mode<synchronous>, transform_indices = @transform_33, window_bounds = array<i64: 128, 256>}, {pipeline_mode = #tpu.pipeline_mode<synchronous>, transform_indices = @transform_34, window_bounds = array<i64: 1, 256>}, {pipeline_mode = #tpu.pipeline_mode<synchronous>, transform_indices = @transform_35, window_bounds = array<i64: 768, 256>}, {pipeline_mode = #tpu.pipeline_mode<synchronous>, transform_indices = @transform_36, window_bounds = array<i64: 1, 256>}, {pipeline_mode = #tpu.pipeline_mode<synchronous>, transform_indices = @transform_37, window_bounds = array<i64: 768, 256>}, {pipeline_mode = #tpu.pipeline_mode<synchronous>, transform_indices = @transform_38, window_bounds = array<i64: 1, 256>}, {pipeline_mode = #tpu.pipeline_mode<synchronous>, transform_indices = @transform_39, window_bounds = array<i64: 768, 256>}, {pipeline_mode = #tpu.pipeline_mode<synchronous>, transform_indices = @transform_40, window_bounds = array<i64: 1, 256>}, {pipeline_mode = #tpu.pipeline_mode<synchronous>, transform_indices = @transform_41, window_bounds = array<i64: 1, 256>}, {pipeline_mode = #tpu.pipeline_mode<synchronous>, transform_indices = @transform_42, window_bounds = array<i64: 1, 1>}, {transform_indices = @transform_43, window_bounds = array<i64: 1, 1, 1>}]} {
    %c0 = arith.constant 0 : index
    %c0_0 = arith.constant 0 : index
    %c0_1 = arith.constant 0 : index
    %0 = vector.load %arg1[%c0, %c0_0, %c0_1] : memref<1x64x12xf32, #tpu.memory_space<vmem>>, vector<1x64x12xf32>
    %1 = vector.shape_cast %0 : vector<1x64x12xf32> to vector<64x12xf32>
    %cst = arith.constant 0.000000e+00 : f32
    %2 = vector.broadcast %cst : f32 to vector<3x12xf32>
    %3 = tpu.concatenate %2, %1, %2 in 0 : vector<3x12xf32>, vector<64x12xf32>, vector<3x12xf32> -> vector<70x12xf32>
    %4 = tpu.iota {dimensions = array<i32: 0>} : vector<35x70xi32>
    %5 = tpu.iota {dimensions = array<i32: 1>} : vector<35x70xi32>
    %c2_i32 = arith.constant 2 : i32
    %6 = vector.broadcast %c2_i32 : i32 to vector<35x70xi32>
    %7 = arith.muli %6, %4 : vector<35x70xi32>
    %8 = arith.cmpi eq, %5, %7 : vector<35x70xi32>
    %9 = arith.extui %8 : vector<35x70xi1> to vector<35x70xi32>
    %10 = arith.sitofp %9 : vector<35x70xi32> to vector<35x70xf32>
    %11 = tpu.iota {dimensions = array<i32: 0>} : vector<35x70xi32>
    %12 = tpu.iota {dimensions = array<i32: 1>} : vector<35x70xi32>
    %c2_i32_2 = arith.constant 2 : i32
    %13 = vector.broadcast %c2_i32_2 : i32 to vector<35x70xi32>
    %14 = arith.muli %13, %11 : vector<35x70xi32>
    %c1_i32 = arith.constant 1 : i32
    %15 = vector.broadcast %c1_i32 : i32 to vector<35x70xi32>
    %16 = arith.addi %14, %15 : vector<35x70xi32>
    %17 = arith.cmpi eq, %12, %16 : vector<35x70xi32>
    %18 = arith.extui %17 : vector<35x70xi1> to vector<35x70xi32>
    %19 = arith.sitofp %18 : vector<35x70xi32> to vector<35x70xf32>
    %cst_3 = arith.constant dense<0.000000e+00> : vector<35x12xf32>
    %20 = tpu.matmul %10, %3, %cst_3 {dimension_numbers = #tpu.dot_dimension_numbers<[1], [0], [0], [1], [0, 0, 1, 1], [], []>} : vector<35x70xf32>, vector<70x12xf32>, vector<35x12xf32> -> vector<35x12xf32>
    %cst_4 = arith.constant dense<0.000000e+00> : vector<35x12xf32>
    %21 = tpu.matmul %19, %3, %cst_4 {dimension_numbers = #tpu.dot_dimension_numbers<[1], [0], [0], [1], [0, 0, 1, 1], [], []>} : vector<35x70xf32>, vector<70x12xf32>, vector<35x12xf32> -> vector<35x12xf32>
    %22 = vector.extract_strided_slice %20 {offsets = [0, 0], sizes = [28, 12], strides = [1, 1]} : vector<35x12xf32> to vector<28x12xf32>
    %23 = vector.extract_strided_slice %21 {offsets = [0, 0], sizes = [28, 12], strides = [1, 1]} : vector<35x12xf32> to vector<28x12xf32>
    %24 = vector.extract_strided_slice %20 {offsets = [1, 0], sizes = [28, 12], strides = [1, 1]} : vector<35x12xf32> to vector<28x12xf32>
    %25 = vector.extract_strided_slice %21 {offsets = [1, 0], sizes = [28, 12], strides = [1, 1]} : vector<35x12xf32> to vector<28x12xf32>
    %26 = vector.extract_strided_slice %20 {offsets = [2, 0], sizes = [28, 12], strides = [1, 1]} : vector<35x12xf32> to vector<28x12xf32>
    %27 = vector.extract_strided_slice %21 {offsets = [2, 0], sizes = [28, 12], strides = [1, 1]} : vector<35x12xf32> to vector<28x12xf32>
    %28 = vector.extract_strided_slice %20 {offsets = [3, 0], sizes = [28, 12], strides = [1, 1]} : vector<35x12xf32> to vector<28x12xf32>
    %29 = vector.extract_strided_slice %21 {offsets = [3, 0], sizes = [28, 12], strides = [1, 1]} : vector<35x12xf32> to vector<28x12xf32>
    %30 = vector.extract_strided_slice %20 {offsets = [4, 0], sizes = [28, 12], strides = [1, 1]} : vector<35x12xf32> to vector<28x12xf32>
    %31 = vector.extract_strided_slice %21 {offsets = [4, 0], sizes = [28, 12], strides = [1, 1]} : vector<35x12xf32> to vector<28x12xf32>
    %32 = vector.extract_strided_slice %20 {offsets = [5, 0], sizes = [28, 12], strides = [1, 1]} : vector<35x12xf32> to vector<28x12xf32>
    %33 = vector.extract_strided_slice %21 {offsets = [5, 0], sizes = [28, 12], strides = [1, 1]} : vector<35x12xf32> to vector<28x12xf32>
    %34 = vector.extract_strided_slice %20 {offsets = [6, 0], sizes = [28, 12], strides = [1, 1]} : vector<35x12xf32> to vector<28x12xf32>
    %35 = vector.extract_strided_slice %21 {offsets = [6, 0], sizes = [28, 12], strides = [1, 1]} : vector<35x12xf32> to vector<28x12xf32>
    %36 = vector.extract_strided_slice %20 {offsets = [7, 0], sizes = [28, 12], strides = [1, 1]} : vector<35x12xf32> to vector<28x12xf32>
    %37 = tpu.concatenate %22, %23, %24, %25, %26, %27, %28, %29, %30, %31, %32, %33, %34, %35, %36 in 1 : vector<28x12xf32>, vector<28x12xf32>, vector<28x12xf32>, vector<28x12xf32>, vector<28x12xf32>, vector<28x12xf32>, vector<28x12xf32>, vector<28x12xf32>, vector<28x12xf32>, vector<28x12xf32>, vector<28x12xf32>, vector<28x12xf32>, vector<28x12xf32>, vector<28x12xf32>, vector<28x12xf32> -> vector<28x180xf32>
    %38 = arith.truncf %37 : vector<28x180xf32> to vector<28x180xbf16>
    %c0_5 = arith.constant 0 : index
    %c0_6 = arith.constant 0 : index
    %39 = vector.load %arg2[%c0_5, %c0_6] : memref<180x32xbf16, #tpu.memory_space<vmem>>, vector<180x32xbf16>
    %cst_7 = arith.constant dense<0.000000e+00> : vector<28x32xf32>
    %40 = tpu.matmul %38, %39, %cst_7 {dimension_numbers = #tpu.dot_dimension_numbers<[1], [0], [0], [1], [0, 0, 1, 1], [], []>} : vector<28x180xbf16>, vector<180x32xbf16>, vector<28x32xf32> -> vector<28x32xf32>
    %c0_8 = arith.constant 0 : index
    %c0_9 = arith.constant 0 : index
    %41 = vector.load %arg3[%c0_8, %c0_9] : memref<1x32xf32, #tpu.memory_space<vmem>>, vector<1x32xf32>
    %42 = vector.broadcast %41 : vector<1x32xf32> to vector<28x32xf32>
    %43 = arith.addf %40, %42 : vector<28x32xf32>
    %cst_10 = arith.constant 0.000000e+00 : f32
    %44 = vector.broadcast %cst_10 : f32 to vector<28x32xf32>
    %45 = arith.maximumf %43, %44 : vector<28x32xf32>
    %cst_11 = arith.constant 0.000000e+00 : f32
    %46 = vector.broadcast %cst_11 : f32 to vector<1x32xf32>
    %47 = vector.extract_strided_slice %45 {offsets = [0, 0], sizes = [27, 32], strides = [1, 1]} : vector<28x32xf32> to vector<27x32xf32>
    %48 = tpu.concatenate %46, %47 in 0 : vector<1x32xf32>, vector<27x32xf32> -> vector<28x32xf32>
    %49 = vector.extract_strided_slice %45 {offsets = [1, 0], sizes = [27, 32], strides = [1, 1]} : vector<28x32xf32> to vector<27x32xf32>
    %50 = tpu.concatenate %49, %46 in 0 : vector<27x32xf32>, vector<1x32xf32> -> vector<28x32xf32>
    %51 = tpu.concatenate %48, %45, %50 in 1 : vector<28x32xf32>, vector<28x32xf32>, vector<28x32xf32> -> vector<28x96xf32>
    %52 = arith.truncf %51 : vector<28x96xf32> to vector<28x96xbf16>
    %c0_12 = arith.constant 0 : index
    %c0_13 = arith.constant 0 : index
    %53 = vector.load %arg4[%c0_12, %c0_13] : memref<96x32xbf16, #tpu.memory_space<vmem>>, vector<96x32xbf16>
    %cst_14 = arith.constant dense<0.000000e+00> : vector<28x32xf32>
    %54 = tpu.matmul %52, %53, %cst_14 {dimension_numbers = #tpu.dot_dimension_numbers<[1], [0], [0], [1], [0, 0, 1, 1], [], []>} : vector<28x96xbf16>, vector<96x32xbf16>, vector<28x32xf32> -> vector<28x32xf32>
    %c0_15 = arith.constant 0 : index
    %c0_16 = arith.constant 0 : index
    %55 = vector.load %arg5[%c0_15, %c0_16] : memref<1x32xf32, #tpu.memory_space<vmem>>, vector<1x32xf32>
    %56 = vector.broadcast %55 : vector<1x32xf32> to vector<28x32xf32>
    %57 = arith.addf %54, %56 : vector<28x32xf32>
    %cst_17 = arith.constant 0.000000e+00 : f32
    %58 = vector.broadcast %cst_17 : f32 to vector<28x32xf32>
    %59 = arith.maximumf %57, %58 : vector<28x32xf32>
    %cst_18 = arith.constant 0.000000e+00 : f32
    %60 = vector.broadcast %cst_18 : f32 to vector<1x32xf32>
    %61 = vector.extract_strided_slice %59 {offsets = [0, 0], sizes = [27, 32], strides = [1, 1]} : vector<28x32xf32> to vector<27x32xf32>
    %62 = tpu.concatenate %60, %61 in 0 : vector<1x32xf32>, vector<27x32xf32> -> vector<28x32xf32>
    %63 = vector.extract_strided_slice %59 {offsets = [1, 0], sizes = [27, 32], strides = [1, 1]} : vector<28x32xf32> to vector<27x32xf32>
    %64 = tpu.concatenate %63, %60 in 0 : vector<27x32xf32>, vector<1x32xf32> -> vector<28x32xf32>
    %65 = tpu.concatenate %62, %59, %64 in 1 : vector<28x32xf32>, vector<28x32xf32>, vector<28x32xf32> -> vector<28x96xf32>
    %66 = arith.truncf %65 : vector<28x96xf32> to vector<28x96xbf16>
    %c0_19 = arith.constant 0 : index
    %c0_20 = arith.constant 0 : index
    %67 = vector.load %arg6[%c0_19, %c0_20] : memref<96x32xbf16, #tpu.memory_space<vmem>>, vector<96x32xbf16>
    %cst_21 = arith.constant dense<0.000000e+00> : vector<28x32xf32>
    %68 = tpu.matmul %66, %67, %cst_21 {dimension_numbers = #tpu.dot_dimension_numbers<[1], [0], [0], [1], [0, 0, 1, 1], [], []>} : vector<28x96xbf16>, vector<96x32xbf16>, vector<28x32xf32> -> vector<28x32xf32>
    %c0_22 = arith.constant 0 : index
    %c0_23 = arith.constant 0 : index
    %69 = vector.load %arg7[%c0_22, %c0_23] : memref<1x32xf32, #tpu.memory_space<vmem>>, vector<1x32xf32>
    %70 = vector.broadcast %69 : vector<1x32xf32> to vector<28x32xf32>
    %71 = arith.addf %68, %70 : vector<28x32xf32>
    %72 = arith.addf %71, %45 : vector<28x32xf32>
    %cst_24 = arith.constant 0.000000e+00 : f32
    %73 = vector.broadcast %cst_24 : f32 to vector<28x32xf32>
    %74 = arith.maximumf %72, %73 : vector<28x32xf32>
    %cst_25 = arith.constant 0.000000e+00 : f32
    %75 = vector.broadcast %cst_25 : f32 to vector<1x32xf32>
    %76 = vector.extract_strided_slice %74 {offsets = [0, 0], sizes = [27, 32], strides = [1, 1]} : vector<28x32xf32> to vector<27x32xf32>
    %77 = tpu.concatenate %75, %76 in 0 : vector<1x32xf32>, vector<27x32xf32> -> vector<28x32xf32>
    %78 = vector.extract_strided_slice %74 {offsets = [1, 0], sizes = [27, 32], strides = [1, 1]} : vector<28x32xf32> to vector<27x32xf32>
    %79 = tpu.concatenate %78, %75 in 0 : vector<27x32xf32>, vector<1x32xf32> -> vector<28x32xf32>
    %80 = tpu.concatenate %77, %74, %79 in 1 : vector<28x32xf32>, vector<28x32xf32>, vector<28x32xf32> -> vector<28x96xf32>
    %81 = arith.truncf %80 : vector<28x96xf32> to vector<28x96xbf16>
    %c0_26 = arith.constant 0 : index
    %c0_27 = arith.constant 0 : index
    %82 = vector.load %arg8[%c0_26, %c0_27] : memref<96x32xbf16, #tpu.memory_space<vmem>>, vector<96x32xbf16>
    %cst_28 = arith.constant dense<0.000000e+00> : vector<28x32xf32>
    %83 = tpu.matmul %81, %82, %cst_28 {dimension_numbers = #tpu.dot_dimension_numbers<[1], [0], [0], [1], [0, 0, 1, 1], [], []>} : vector<28x96xbf16>, vector<96x32xbf16>, vector<28x32xf32> -> vector<28x32xf32>
    %c0_29 = arith.constant 0 : index
    %c0_30 = arith.constant 0 : index
    %84 = vector.load %arg9[%c0_29, %c0_30] : memref<1x32xf32, #tpu.memory_space<vmem>>, vector<1x32xf32>
    %85 = vector.broadcast %84 : vector<1x32xf32> to vector<28x32xf32>
    %86 = arith.addf %83, %85 : vector<28x32xf32>
    %cst_31 = arith.constant 0.000000e+00 : f32
    %87 = vector.broadcast %cst_31 : f32 to vector<28x32xf32>
    %88 = arith.maximumf %86, %87 : vector<28x32xf32>
    %cst_32 = arith.constant 0.000000e+00 : f32
    %89 = vector.broadcast %cst_32 : f32 to vector<1x32xf32>
    %90 = vector.extract_strided_slice %88 {offsets = [0, 0], sizes = [27, 32], strides = [1, 1]} : vector<28x32xf32> to vector<27x32xf32>
    %91 = tpu.concatenate %89, %90 in 0 : vector<1x32xf32>, vector<27x32xf32> -> vector<28x32xf32>
    %92 = vector.extract_strided_slice %88 {offsets = [1, 0], sizes = [27, 32], strides = [1, 1]} : vector<28x32xf32> to vector<27x32xf32>
    %93 = tpu.concatenate %92, %89 in 0 : vector<27x32xf32>, vector<1x32xf32> -> vector<28x32xf32>
    %94 = tpu.concatenate %91, %88, %93 in 1 : vector<28x32xf32>, vector<28x32xf32>, vector<28x32xf32> -> vector<28x96xf32>
    %95 = arith.truncf %94 : vector<28x96xf32> to vector<28x96xbf16>
    %c0_33 = arith.constant 0 : index
    %c0_34 = arith.constant 0 : index
    %96 = vector.load %arg10[%c0_33, %c0_34] : memref<96x32xbf16, #tpu.memory_space<vmem>>, vector<96x32xbf16>
    %cst_35 = arith.constant dense<0.000000e+00> : vector<28x32xf32>
    %97 = tpu.matmul %95, %96, %cst_35 {dimension_numbers = #tpu.dot_dimension_numbers<[1], [0], [0], [1], [0, 0, 1, 1], [], []>} : vector<28x96xbf16>, vector<96x32xbf16>, vector<28x32xf32> -> vector<28x32xf32>
    %c0_36 = arith.constant 0 : index
    %c0_37 = arith.constant 0 : index
    %98 = vector.load %arg11[%c0_36, %c0_37] : memref<1x32xf32, #tpu.memory_space<vmem>>, vector<1x32xf32>
    %99 = vector.broadcast %98 : vector<1x32xf32> to vector<28x32xf32>
    %100 = arith.addf %97, %99 : vector<28x32xf32>
    %101 = arith.addf %100, %74 : vector<28x32xf32>
    %cst_38 = arith.constant 0.000000e+00 : f32
    %102 = vector.broadcast %cst_38 : f32 to vector<28x32xf32>
    %103 = arith.maximumf %101, %102 : vector<28x32xf32>
    %cst_39 = arith.constant 0.000000e+00 : f32
    %104 = vector.broadcast %cst_39 : f32 to vector<1x32xf32>
    %105 = tpu.concatenate %104, %103, %104 in 0 : vector<1x32xf32>, vector<28x32xf32>, vector<1x32xf32> -> vector<30x32xf32>
    %106 = tpu.iota {dimensions = array<i32: 0>} : vector<15x30xi32>
    %107 = tpu.iota {dimensions = array<i32: 1>} : vector<15x30xi32>
    %c2_i32_40 = arith.constant 2 : i32
    %108 = vector.broadcast %c2_i32_40 : i32 to vector<15x30xi32>
    %109 = arith.muli %108, %106 : vector<15x30xi32>
    %110 = arith.cmpi eq, %107, %109 : vector<15x30xi32>
    %111 = arith.extui %110 : vector<15x30xi1> to vector<15x30xi32>
    %112 = arith.sitofp %111 : vector<15x30xi32> to vector<15x30xf32>
    %113 = tpu.iota {dimensions = array<i32: 0>} : vector<15x30xi32>
    %114 = tpu.iota {dimensions = array<i32: 1>} : vector<15x30xi32>
    %c2_i32_41 = arith.constant 2 : i32
    %115 = vector.broadcast %c2_i32_41 : i32 to vector<15x30xi32>
    %116 = arith.muli %115, %113 : vector<15x30xi32>
    %c1_i32_42 = arith.constant 1 : i32
    %117 = vector.broadcast %c1_i32_42 : i32 to vector<15x30xi32>
    %118 = arith.addi %116, %117 : vector<15x30xi32>
    %119 = arith.cmpi eq, %114, %118 : vector<15x30xi32>
    %120 = arith.extui %119 : vector<15x30xi1> to vector<15x30xi32>
    %121 = arith.sitofp %120 : vector<15x30xi32> to vector<15x30xf32>
    %cst_43 = arith.constant dense<0.000000e+00> : vector<15x32xf32>
    %122 = tpu.matmul %112, %105, %cst_43 {dimension_numbers = #tpu.dot_dimension_numbers<[1], [0], [0], [1], [0, 0, 1, 1], [], []>} : vector<15x30xf32>, vector<30x32xf32>, vector<15x32xf32> -> vector<15x32xf32>
    %cst_44 = arith.constant dense<0.000000e+00> : vector<15x32xf32>
    %123 = tpu.matmul %121, %105, %cst_44 {dimension_numbers = #tpu.dot_dimension_numbers<[1], [0], [0], [1], [0, 0, 1, 1], [], []>} : vector<15x30xf32>, vector<30x32xf32>, vector<15x32xf32> -> vector<15x32xf32>
    %124 = vector.extract_strided_slice %122 {offsets = [0, 0], sizes = [14, 32], strides = [1, 1]} : vector<15x32xf32> to vector<14x32xf32>
    %125 = vector.extract_strided_slice %123 {offsets = [0, 0], sizes = [14, 32], strides = [1, 1]} : vector<15x32xf32> to vector<14x32xf32>
    %126 = vector.extract_strided_slice %122 {offsets = [1, 0], sizes = [14, 32], strides = [1, 1]} : vector<15x32xf32> to vector<14x32xf32>
    %127 = tpu.concatenate %124, %125, %126 in 1 : vector<14x32xf32>, vector<14x32xf32>, vector<14x32xf32> -> vector<14x96xf32>
    %128 = arith.truncf %127 : vector<14x96xf32> to vector<14x96xbf16>
    %c0_45 = arith.constant 0 : index
    %c0_46 = arith.constant 0 : index
    %129 = vector.load %arg12[%c0_45, %c0_46] : memref<96x64xbf16, #tpu.memory_space<vmem>>, vector<96x64xbf16>
    %cst_47 = arith.constant dense<0.000000e+00> : vector<14x64xf32>
    %130 = tpu.matmul %128, %129, %cst_47 {dimension_numbers = #tpu.dot_dimension_numbers<[1], [0], [0], [1], [0, 0, 1, 1], [], []>} : vector<14x96xbf16>, vector<96x64xbf16>, vector<14x64xf32> -> vector<14x64xf32>
    %c0_48 = arith.constant 0 : index
    %c0_49 = arith.constant 0 : index
    %131 = vector.load %arg13[%c0_48, %c0_49] : memref<1x64xf32, #tpu.memory_space<vmem>>, vector<1x64xf32>
    %132 = vector.broadcast %131 : vector<1x64xf32> to vector<14x64xf32>
    %133 = arith.addf %130, %132 : vector<14x64xf32>
    %cst_50 = arith.constant 0.000000e+00 : f32
    %134 = vector.broadcast %cst_50 : f32 to vector<14x64xf32>
    %135 = arith.maximumf %133, %134 : vector<14x64xf32>
    %cst_51 = arith.constant 0.000000e+00 : f32
    %136 = vector.broadcast %cst_51 : f32 to vector<1x64xf32>
    %137 = vector.extract_strided_slice %135 {offsets = [0, 0], sizes = [13, 64], strides = [1, 1]} : vector<14x64xf32> to vector<13x64xf32>
    %138 = tpu.concatenate %136, %137 in 0 : vector<1x64xf32>, vector<13x64xf32> -> vector<14x64xf32>
    %139 = vector.extract_strided_slice %135 {offsets = [1, 0], sizes = [13, 64], strides = [1, 1]} : vector<14x64xf32> to vector<13x64xf32>
    %140 = tpu.concatenate %139, %136 in 0 : vector<13x64xf32>, vector<1x64xf32> -> vector<14x64xf32>
    %141 = tpu.concatenate %138, %135, %140 in 1 : vector<14x64xf32>, vector<14x64xf32>, vector<14x64xf32> -> vector<14x192xf32>
    %142 = arith.truncf %141 : vector<14x192xf32> to vector<14x192xbf16>
    %c0_52 = arith.constant 0 : index
    %c0_53 = arith.constant 0 : index
    %143 = vector.load %arg16[%c0_52, %c0_53] : memref<192x64xbf16, #tpu.memory_space<vmem>>, vector<192x64xbf16>
    %cst_54 = arith.constant dense<0.000000e+00> : vector<14x64xf32>
    %144 = tpu.matmul %142, %143, %cst_54 {dimension_numbers = #tpu.dot_dimension_numbers<[1], [0], [0], [1], [0, 0, 1, 1], [], []>} : vector<14x192xbf16>, vector<192x64xbf16>, vector<14x64xf32> -> vector<14x64xf32>
    %c0_55 = arith.constant 0 : index
    %c0_56 = arith.constant 0 : index
    %145 = vector.load %arg17[%c0_55, %c0_56] : memref<1x64xf32, #tpu.memory_space<vmem>>, vector<1x64xf32>
    %146 = vector.broadcast %145 : vector<1x64xf32> to vector<14x64xf32>
    %147 = arith.addf %144, %146 : vector<14x64xf32>
    %148 = arith.truncf %125 : vector<14x32xf32> to vector<14x32xbf16>
    %c0_57 = arith.constant 0 : index
    %c0_58 = arith.constant 0 : index
    %149 = vector.load %arg14[%c0_57, %c0_58] : memref<32x64xbf16, #tpu.memory_space<vmem>>, vector<32x64xbf16>
    %cst_59 = arith.constant dense<0.000000e+00> : vector<14x64xf32>
    %150 = tpu.matmul %148, %149, %cst_59 {dimension_numbers = #tpu.dot_dimension_numbers<[1], [0], [0], [1], [0, 0, 1, 1], [], []>} : vector<14x32xbf16>, vector<32x64xbf16>, vector<14x64xf32> -> vector<14x64xf32>
    %c0_60 = arith.constant 0 : index
    %c0_61 = arith.constant 0 : index
    %151 = vector.load %arg15[%c0_60, %c0_61] : memref<1x64xf32, #tpu.memory_space<vmem>>, vector<1x64xf32>
    %152 = vector.broadcast %151 : vector<1x64xf32> to vector<14x64xf32>
    %153 = arith.addf %150, %152 : vector<14x64xf32>
    %154 = arith.addf %147, %153 : vector<14x64xf32>
    %cst_62 = arith.constant 0.000000e+00 : f32
    %155 = vector.broadcast %cst_62 : f32 to vector<14x64xf32>
    %156 = arith.maximumf %154, %155 : vector<14x64xf32>
    %cst_63 = arith.constant 0.000000e+00 : f32
    %157 = vector.broadcast %cst_63 : f32 to vector<1x64xf32>
    %158 = vector.extract_strided_slice %156 {offsets = [0, 0], sizes = [13, 64], strides = [1, 1]} : vector<14x64xf32> to vector<13x64xf32>
    %159 = tpu.concatenate %157, %158 in 0 : vector<1x64xf32>, vector<13x64xf32> -> vector<14x64xf32>
    %160 = vector.extract_strided_slice %156 {offsets = [1, 0], sizes = [13, 64], strides = [1, 1]} : vector<14x64xf32> to vector<13x64xf32>
    %161 = tpu.concatenate %160, %157 in 0 : vector<13x64xf32>, vector<1x64xf32> -> vector<14x64xf32>
    %162 = tpu.concatenate %159, %156, %161 in 1 : vector<14x64xf32>, vector<14x64xf32>, vector<14x64xf32> -> vector<14x192xf32>
    %163 = arith.truncf %162 : vector<14x192xf32> to vector<14x192xbf16>
    %c0_64 = arith.constant 0 : index
    %c0_65 = arith.constant 0 : index
    %164 = vector.load %arg18[%c0_64, %c0_65] : memref<192x64xbf16, #tpu.memory_space<vmem>>, vector<192x64xbf16>
    %cst_66 = arith.constant dense<0.000000e+00> : vector<14x64xf32>
    %165 = tpu.matmul %163, %164, %cst_66 {dimension_numbers = #tpu.dot_dimension_numbers<[1], [0], [0], [1], [0, 0, 1, 1], [], []>} : vector<14x192xbf16>, vector<192x64xbf16>, vector<14x64xf32> -> vector<14x64xf32>
    %c0_67 = arith.constant 0 : index
    %c0_68 = arith.constant 0 : index
    %166 = vector.load %arg19[%c0_67, %c0_68] : memref<1x64xf32, #tpu.memory_space<vmem>>, vector<1x64xf32>
    %167 = vector.broadcast %166 : vector<1x64xf32> to vector<14x64xf32>
    %168 = arith.addf %165, %167 : vector<14x64xf32>
    %cst_69 = arith.constant 0.000000e+00 : f32
    %169 = vector.broadcast %cst_69 : f32 to vector<14x64xf32>
    %170 = arith.maximumf %168, %169 : vector<14x64xf32>
    %cst_70 = arith.constant 0.000000e+00 : f32
    %171 = vector.broadcast %cst_70 : f32 to vector<1x64xf32>
    %172 = vector.extract_strided_slice %170 {offsets = [0, 0], sizes = [13, 64], strides = [1, 1]} : vector<14x64xf32> to vector<13x64xf32>
    %173 = tpu.concatenate %171, %172 in 0 : vector<1x64xf32>, vector<13x64xf32> -> vector<14x64xf32>
    %174 = vector.extract_strided_slice %170 {offsets = [1, 0], sizes = [13, 64], strides = [1, 1]} : vector<14x64xf32> to vector<13x64xf32>
    %175 = tpu.concatenate %174, %171 in 0 : vector<13x64xf32>, vector<1x64xf32> -> vector<14x64xf32>
    %176 = tpu.concatenate %173, %170, %175 in 1 : vector<14x64xf32>, vector<14x64xf32>, vector<14x64xf32> -> vector<14x192xf32>
    %177 = arith.truncf %176 : vector<14x192xf32> to vector<14x192xbf16>
    %c0_71 = arith.constant 0 : index
    %c0_72 = arith.constant 0 : index
    %178 = vector.load %arg20[%c0_71, %c0_72] : memref<192x64xbf16, #tpu.memory_space<vmem>>, vector<192x64xbf16>
    %cst_73 = arith.constant dense<0.000000e+00> : vector<14x64xf32>
    %179 = tpu.matmul %177, %178, %cst_73 {dimension_numbers = #tpu.dot_dimension_numbers<[1], [0], [0], [1], [0, 0, 1, 1], [], []>} : vector<14x192xbf16>, vector<192x64xbf16>, vector<14x64xf32> -> vector<14x64xf32>
    %c0_74 = arith.constant 0 : index
    %c0_75 = arith.constant 0 : index
    %180 = vector.load %arg21[%c0_74, %c0_75] : memref<1x64xf32, #tpu.memory_space<vmem>>, vector<1x64xf32>
    %181 = vector.broadcast %180 : vector<1x64xf32> to vector<14x64xf32>
    %182 = arith.addf %179, %181 : vector<14x64xf32>
    %183 = arith.addf %182, %156 : vector<14x64xf32>
    %cst_76 = arith.constant 0.000000e+00 : f32
    %184 = vector.broadcast %cst_76 : f32 to vector<14x64xf32>
    %185 = arith.maximumf %183, %184 : vector<14x64xf32>
    %cst_77 = arith.constant 0.000000e+00 : f32
    %186 = vector.broadcast %cst_77 : f32 to vector<1x64xf32>
    %187 = tpu.concatenate %186, %185, %186 in 0 : vector<1x64xf32>, vector<14x64xf32>, vector<1x64xf32> -> vector<16x64xf32>
    %188 = tpu.iota {dimensions = array<i32: 0>} : vector<8x16xi32>
    %189 = tpu.iota {dimensions = array<i32: 1>} : vector<8x16xi32>
    %c2_i32_78 = arith.constant 2 : i32
    %190 = vector.broadcast %c2_i32_78 : i32 to vector<8x16xi32>
    %191 = arith.muli %190, %188 : vector<8x16xi32>
    %192 = arith.cmpi eq, %189, %191 : vector<8x16xi32>
    %193 = arith.extui %192 : vector<8x16xi1> to vector<8x16xi32>
    %194 = arith.sitofp %193 : vector<8x16xi32> to vector<8x16xf32>
    %195 = tpu.iota {dimensions = array<i32: 0>} : vector<8x16xi32>
    %196 = tpu.iota {dimensions = array<i32: 1>} : vector<8x16xi32>
    %c2_i32_79 = arith.constant 2 : i32
    %197 = vector.broadcast %c2_i32_79 : i32 to vector<8x16xi32>
    %198 = arith.muli %197, %195 : vector<8x16xi32>
    %c1_i32_80 = arith.constant 1 : i32
    %199 = vector.broadcast %c1_i32_80 : i32 to vector<8x16xi32>
    %200 = arith.addi %198, %199 : vector<8x16xi32>
    %201 = arith.cmpi eq, %196, %200 : vector<8x16xi32>
    %202 = arith.extui %201 : vector<8x16xi1> to vector<8x16xi32>
    %203 = arith.sitofp %202 : vector<8x16xi32> to vector<8x16xf32>
    %cst_81 = arith.constant dense<0.000000e+00> : vector<8x64xf32>
    %204 = tpu.matmul %194, %187, %cst_81 {dimension_numbers = #tpu.dot_dimension_numbers<[1], [0], [0], [1], [0, 0, 1, 1], [], []>} : vector<8x16xf32>, vector<16x64xf32>, vector<8x64xf32> -> vector<8x64xf32>
    %cst_82 = arith.constant dense<0.000000e+00> : vector<8x64xf32>
    %205 = tpu.matmul %203, %187, %cst_82 {dimension_numbers = #tpu.dot_dimension_numbers<[1], [0], [0], [1], [0, 0, 1, 1], [], []>} : vector<8x16xf32>, vector<16x64xf32>, vector<8x64xf32> -> vector<8x64xf32>
    %206 = vector.extract_strided_slice %204 {offsets = [0, 0], sizes = [7, 64], strides = [1, 1]} : vector<8x64xf32> to vector<7x64xf32>
    %207 = vector.extract_strided_slice %205 {offsets = [0, 0], sizes = [7, 64], strides = [1, 1]} : vector<8x64xf32> to vector<7x64xf32>
    %208 = vector.extract_strided_slice %204 {offsets = [1, 0], sizes = [7, 64], strides = [1, 1]} : vector<8x64xf32> to vector<7x64xf32>
    %209 = tpu.concatenate %206, %207, %208 in 1 : vector<7x64xf32>, vector<7x64xf32>, vector<7x64xf32> -> vector<7x192xf32>
    %210 = arith.truncf %209 : vector<7x192xf32> to vector<7x192xbf16>
    %c0_83 = arith.constant 0 : index
    %c0_84 = arith.constant 0 : index
    %211 = vector.load %arg22[%c0_83, %c0_84] : memref<192x128xbf16, #tpu.memory_space<vmem>>, vector<192x128xbf16>
    %cst_85 = arith.constant dense<0.000000e+00> : vector<7x128xf32>
    %212 = tpu.matmul %210, %211, %cst_85 {dimension_numbers = #tpu.dot_dimension_numbers<[1], [0], [0], [1], [0, 0, 1, 1], [], []>} : vector<7x192xbf16>, vector<192x128xbf16>, vector<7x128xf32> -> vector<7x128xf32>
    %c0_86 = arith.constant 0 : index
    %c0_87 = arith.constant 0 : index
    %213 = vector.load %arg23[%c0_86, %c0_87] : memref<1x128xf32, #tpu.memory_space<vmem>>, vector<1x128xf32>
    %214 = vector.broadcast %213 : vector<1x128xf32> to vector<7x128xf32>
    %215 = arith.addf %212, %214 : vector<7x128xf32>
    %cst_88 = arith.constant 0.000000e+00 : f32
    %216 = vector.broadcast %cst_88 : f32 to vector<7x128xf32>
    %217 = arith.maximumf %215, %216 : vector<7x128xf32>
    %cst_89 = arith.constant 0.000000e+00 : f32
    %218 = vector.broadcast %cst_89 : f32 to vector<1x128xf32>
    %219 = vector.extract_strided_slice %217 {offsets = [0, 0], sizes = [6, 128], strides = [1, 1]} : vector<7x128xf32> to vector<6x128xf32>
    %220 = tpu.concatenate %218, %219 in 0 : vector<1x128xf32>, vector<6x128xf32> -> vector<7x128xf32>
    %221 = vector.extract_strided_slice %217 {offsets = [1, 0], sizes = [6, 128], strides = [1, 1]} : vector<7x128xf32> to vector<6x128xf32>
    %222 = tpu.concatenate %221, %218 in 0 : vector<6x128xf32>, vector<1x128xf32> -> vector<7x128xf32>
    %223 = tpu.concatenate %220, %217, %222 in 1 : vector<7x128xf32>, vector<7x128xf32>, vector<7x128xf32> -> vector<7x384xf32>
    %224 = arith.truncf %223 : vector<7x384xf32> to vector<7x384xbf16>
    %c0_90 = arith.constant 0 : index
    %c0_91 = arith.constant 0 : index
    %225 = vector.load %arg26[%c0_90, %c0_91] : memref<384x128xbf16, #tpu.memory_space<vmem>>, vector<384x128xbf16>
    %cst_92 = arith.constant dense<0.000000e+00> : vector<7x128xf32>
    %226 = tpu.matmul %224, %225, %cst_92 {dimension_numbers = #tpu.dot_dimension_numbers<[1], [0], [0], [1], [0, 0, 1, 1], [], []>} : vector<7x384xbf16>, vector<384x128xbf16>, vector<7x128xf32> -> vector<7x128xf32>
    %c0_93 = arith.constant 0 : index
    %c0_94 = arith.constant 0 : index
    %227 = vector.load %arg27[%c0_93, %c0_94] : memref<1x128xf32, #tpu.memory_space<vmem>>, vector<1x128xf32>
    %228 = vector.broadcast %227 : vector<1x128xf32> to vector<7x128xf32>
    %229 = arith.addf %226, %228 : vector<7x128xf32>
    %230 = arith.truncf %207 : vector<7x64xf32> to vector<7x64xbf16>
    %c0_95 = arith.constant 0 : index
    %c0_96 = arith.constant 0 : index
    %231 = vector.load %arg24[%c0_95, %c0_96] : memref<64x128xbf16, #tpu.memory_space<vmem>>, vector<64x128xbf16>
    %cst_97 = arith.constant dense<0.000000e+00> : vector<7x128xf32>
    %232 = tpu.matmul %230, %231, %cst_97 {dimension_numbers = #tpu.dot_dimension_numbers<[1], [0], [0], [1], [0, 0, 1, 1], [], []>} : vector<7x64xbf16>, vector<64x128xbf16>, vector<7x128xf32> -> vector<7x128xf32>
    %c0_98 = arith.constant 0 : index
    %c0_99 = arith.constant 0 : index
    %233 = vector.load %arg25[%c0_98, %c0_99] : memref<1x128xf32, #tpu.memory_space<vmem>>, vector<1x128xf32>
    %234 = vector.broadcast %233 : vector<1x128xf32> to vector<7x128xf32>
    %235 = arith.addf %232, %234 : vector<7x128xf32>
    %236 = arith.addf %229, %235 : vector<7x128xf32>
    %cst_100 = arith.constant 0.000000e+00 : f32
    %237 = vector.broadcast %cst_100 : f32 to vector<7x128xf32>
    %238 = arith.maximumf %236, %237 : vector<7x128xf32>
    %cst_101 = arith.constant 0.000000e+00 : f32
    %239 = vector.broadcast %cst_101 : f32 to vector<1x128xf32>
    %240 = vector.extract_strided_slice %238 {offsets = [0, 0], sizes = [6, 128], strides = [1, 1]} : vector<7x128xf32> to vector<6x128xf32>
    %241 = tpu.concatenate %239, %240 in 0 : vector<1x128xf32>, vector<6x128xf32> -> vector<7x128xf32>
    %242 = vector.extract_strided_slice %238 {offsets = [1, 0], sizes = [6, 128], strides = [1, 1]} : vector<7x128xf32> to vector<6x128xf32>
    %243 = tpu.concatenate %242, %239 in 0 : vector<6x128xf32>, vector<1x128xf32> -> vector<7x128xf32>
    %244 = tpu.concatenate %241, %238, %243 in 1 : vector<7x128xf32>, vector<7x128xf32>, vector<7x128xf32> -> vector<7x384xf32>
    %245 = arith.truncf %244 : vector<7x384xf32> to vector<7x384xbf16>
    %c0_102 = arith.constant 0 : index
    %c0_103 = arith.constant 0 : index
    %246 = vector.load %arg28[%c0_102, %c0_103] : memref<384x128xbf16, #tpu.memory_space<vmem>>, vector<384x128xbf16>
    %cst_104 = arith.constant dense<0.000000e+00> : vector<7x128xf32>
    %247 = tpu.matmul %245, %246, %cst_104 {dimension_numbers = #tpu.dot_dimension_numbers<[1], [0], [0], [1], [0, 0, 1, 1], [], []>} : vector<7x384xbf16>, vector<384x128xbf16>, vector<7x128xf32> -> vector<7x128xf32>
    %c0_105 = arith.constant 0 : index
    %c0_106 = arith.constant 0 : index
    %248 = vector.load %arg29[%c0_105, %c0_106] : memref<1x128xf32, #tpu.memory_space<vmem>>, vector<1x128xf32>
    %249 = vector.broadcast %248 : vector<1x128xf32> to vector<7x128xf32>
    %250 = arith.addf %247, %249 : vector<7x128xf32>
    %cst_107 = arith.constant 0.000000e+00 : f32
    %251 = vector.broadcast %cst_107 : f32 to vector<7x128xf32>
    %252 = arith.maximumf %250, %251 : vector<7x128xf32>
    %cst_108 = arith.constant 0.000000e+00 : f32
    %253 = vector.broadcast %cst_108 : f32 to vector<1x128xf32>
    %254 = vector.extract_strided_slice %252 {offsets = [0, 0], sizes = [6, 128], strides = [1, 1]} : vector<7x128xf32> to vector<6x128xf32>
    %255 = tpu.concatenate %253, %254 in 0 : vector<1x128xf32>, vector<6x128xf32> -> vector<7x128xf32>
    %256 = vector.extract_strided_slice %252 {offsets = [1, 0], sizes = [6, 128], strides = [1, 1]} : vector<7x128xf32> to vector<6x128xf32>
    %257 = tpu.concatenate %256, %253 in 0 : vector<6x128xf32>, vector<1x128xf32> -> vector<7x128xf32>
    %258 = tpu.concatenate %255, %252, %257 in 1 : vector<7x128xf32>, vector<7x128xf32>, vector<7x128xf32> -> vector<7x384xf32>
    %259 = arith.truncf %258 : vector<7x384xf32> to vector<7x384xbf16>
    %c0_109 = arith.constant 0 : index
    %c0_110 = arith.constant 0 : index
    %260 = vector.load %arg30[%c0_109, %c0_110] : memref<384x128xbf16, #tpu.memory_space<vmem>>, vector<384x128xbf16>
    %cst_111 = arith.constant dense<0.000000e+00> : vector<7x128xf32>
    %261 = tpu.matmul %259, %260, %cst_111 {dimension_numbers = #tpu.dot_dimension_numbers<[1], [0], [0], [1], [0, 0, 1, 1], [], []>} : vector<7x384xbf16>, vector<384x128xbf16>, vector<7x128xf32> -> vector<7x128xf32>
    %c0_112 = arith.constant 0 : index
    %c0_113 = arith.constant 0 : index
    %262 = vector.load %arg31[%c0_112, %c0_113] : memref<1x128xf32, #tpu.memory_space<vmem>>, vector<1x128xf32>
    %263 = vector.broadcast %262 : vector<1x128xf32> to vector<7x128xf32>
    %264 = arith.addf %261, %263 : vector<7x128xf32>
    %265 = arith.addf %264, %238 : vector<7x128xf32>
    %cst_114 = arith.constant 0.000000e+00 : f32
    %266 = vector.broadcast %cst_114 : f32 to vector<7x128xf32>
    %267 = arith.maximumf %265, %266 : vector<7x128xf32>
    %cst_115 = arith.constant 0.000000e+00 : f32
    %268 = vector.broadcast %cst_115 : f32 to vector<1x128xf32>
    %269 = tpu.concatenate %268, %267, %268 in 0 : vector<1x128xf32>, vector<7x128xf32>, vector<1x128xf32> -> vector<9x128xf32>
    %270 = tpu.iota {dimensions = array<i32: 0>} : vector<5x9xi32>
    %271 = tpu.iota {dimensions = array<i32: 1>} : vector<5x9xi32>
    %c2_i32_116 = arith.constant 2 : i32
    %272 = vector.broadcast %c2_i32_116 : i32 to vector<5x9xi32>
    %273 = arith.muli %272, %270 : vector<5x9xi32>
    %274 = arith.cmpi eq, %271, %273 : vector<5x9xi32>
    %275 = arith.extui %274 : vector<5x9xi1> to vector<5x9xi32>
    %276 = arith.sitofp %275 : vector<5x9xi32> to vector<5x9xf32>
    %277 = tpu.iota {dimensions = array<i32: 0>} : vector<4x9xi32>
    %278 = tpu.iota {dimensions = array<i32: 1>} : vector<4x9xi32>
    %c2_i32_117 = arith.constant 2 : i32
    %279 = vector.broadcast %c2_i32_117 : i32 to vector<4x9xi32>
    %280 = arith.muli %279, %277 : vector<4x9xi32>
    %c1_i32_118 = arith.constant 1 : i32
    %281 = vector.broadcast %c1_i32_118 : i32 to vector<4x9xi32>
    %282 = arith.addi %280, %281 : vector<4x9xi32>
    %283 = arith.cmpi eq, %278, %282 : vector<4x9xi32>
    %284 = arith.extui %283 : vector<4x9xi1> to vector<4x9xi32>
    %285 = arith.sitofp %284 : vector<4x9xi32> to vector<4x9xf32>
    %cst_119 = arith.constant dense<0.000000e+00> : vector<5x128xf32>
    %286 = tpu.matmul %276, %269, %cst_119 {dimension_numbers = #tpu.dot_dimension_numbers<[1], [0], [0], [1], [0, 0, 1, 1], [], []>} : vector<5x9xf32>, vector<9x128xf32>, vector<5x128xf32> -> vector<5x128xf32>
    %cst_120 = arith.constant dense<0.000000e+00> : vector<4x128xf32>
    %287 = tpu.matmul %285, %269, %cst_120 {dimension_numbers = #tpu.dot_dimension_numbers<[1], [0], [0], [1], [0, 0, 1, 1], [], []>} : vector<4x9xf32>, vector<9x128xf32>, vector<4x128xf32> -> vector<4x128xf32>
    %288 = vector.extract_strided_slice %286 {offsets = [0, 0], sizes = [4, 128], strides = [1, 1]} : vector<5x128xf32> to vector<4x128xf32>
    %289 = vector.extract_strided_slice %286 {offsets = [1, 0], sizes = [4, 128], strides = [1, 1]} : vector<5x128xf32> to vector<4x128xf32>
    %290 = tpu.concatenate %288, %287, %289 in 1 : vector<4x128xf32>, vector<4x128xf32>, vector<4x128xf32> -> vector<4x384xf32>
    %291 = arith.truncf %290 : vector<4x384xf32> to vector<4x384xbf16>
    %c0_121 = arith.constant 0 : index
    %c0_122 = arith.constant 0 : index
    %292 = vector.load %arg32[%c0_121, %c0_122] : memref<384x256xbf16, #tpu.memory_space<vmem>>, vector<384x256xbf16>
    %cst_123 = arith.constant dense<0.000000e+00> : vector<4x256xf32>
    %293 = tpu.matmul %291, %292, %cst_123 {dimension_numbers = #tpu.dot_dimension_numbers<[1], [0], [0], [1], [0, 0, 1, 1], [], []>} : vector<4x384xbf16>, vector<384x256xbf16>, vector<4x256xf32> -> vector<4x256xf32>
    %c0_124 = arith.constant 0 : index
    %c0_125 = arith.constant 0 : index
    %294 = vector.load %arg33[%c0_124, %c0_125] : memref<1x256xf32, #tpu.memory_space<vmem>>, vector<1x256xf32>
    %295 = vector.broadcast %294 : vector<1x256xf32> to vector<4x256xf32>
    %296 = arith.addf %293, %295 : vector<4x256xf32>
    %cst_126 = arith.constant 0.000000e+00 : f32
    %297 = vector.broadcast %cst_126 : f32 to vector<4x256xf32>
    %298 = arith.maximumf %296, %297 : vector<4x256xf32>
    %cst_127 = arith.constant 0.000000e+00 : f32
    %299 = vector.broadcast %cst_127 : f32 to vector<1x256xf32>
    %300 = vector.extract_strided_slice %298 {offsets = [0, 0], sizes = [3, 256], strides = [1, 1]} : vector<4x256xf32> to vector<3x256xf32>
    %301 = tpu.concatenate %299, %300 in 0 : vector<1x256xf32>, vector<3x256xf32> -> vector<4x256xf32>
    %302 = vector.extract_strided_slice %298 {offsets = [1, 0], sizes = [3, 256], strides = [1, 1]} : vector<4x256xf32> to vector<3x256xf32>
    %303 = tpu.concatenate %302, %299 in 0 : vector<3x256xf32>, vector<1x256xf32> -> vector<4x256xf32>
    %304 = tpu.concatenate %301, %298, %303 in 1 : vector<4x256xf32>, vector<4x256xf32>, vector<4x256xf32> -> vector<4x768xf32>
    %305 = arith.truncf %304 : vector<4x768xf32> to vector<4x768xbf16>
    %c0_128 = arith.constant 0 : index
    %c0_129 = arith.constant 0 : index
    %306 = vector.load %arg36[%c0_128, %c0_129] : memref<768x256xbf16, #tpu.memory_space<vmem>>, vector<768x256xbf16>
    %cst_130 = arith.constant dense<0.000000e+00> : vector<4x256xf32>
    %307 = tpu.matmul %305, %306, %cst_130 {dimension_numbers = #tpu.dot_dimension_numbers<[1], [0], [0], [1], [0, 0, 1, 1], [], []>} : vector<4x768xbf16>, vector<768x256xbf16>, vector<4x256xf32> -> vector<4x256xf32>
    %c0_131 = arith.constant 0 : index
    %c0_132 = arith.constant 0 : index
    %308 = vector.load %arg37[%c0_131, %c0_132] : memref<1x256xf32, #tpu.memory_space<vmem>>, vector<1x256xf32>
    %309 = vector.broadcast %308 : vector<1x256xf32> to vector<4x256xf32>
    %310 = arith.addf %307, %309 : vector<4x256xf32>
    %311 = arith.truncf %287 : vector<4x128xf32> to vector<4x128xbf16>
    %c0_133 = arith.constant 0 : index
    %c0_134 = arith.constant 0 : index
    %312 = vector.load %arg34[%c0_133, %c0_134] : memref<128x256xbf16, #tpu.memory_space<vmem>>, vector<128x256xbf16>
    %cst_135 = arith.constant dense<0.000000e+00> : vector<4x256xf32>
    %313 = tpu.matmul %311, %312, %cst_135 {dimension_numbers = #tpu.dot_dimension_numbers<[1], [0], [0], [1], [0, 0, 1, 1], [], []>} : vector<4x128xbf16>, vector<128x256xbf16>, vector<4x256xf32> -> vector<4x256xf32>
    %c0_136 = arith.constant 0 : index
    %c0_137 = arith.constant 0 : index
    %314 = vector.load %arg35[%c0_136, %c0_137] : memref<1x256xf32, #tpu.memory_space<vmem>>, vector<1x256xf32>
    %315 = vector.broadcast %314 : vector<1x256xf32> to vector<4x256xf32>
    %316 = arith.addf %313, %315 : vector<4x256xf32>
    %317 = arith.addf %310, %316 : vector<4x256xf32>
    %cst_138 = arith.constant 0.000000e+00 : f32
    %318 = vector.broadcast %cst_138 : f32 to vector<4x256xf32>
    %319 = arith.maximumf %317, %318 : vector<4x256xf32>
    %cst_139 = arith.constant 0.000000e+00 : f32
    %320 = vector.broadcast %cst_139 : f32 to vector<1x256xf32>
    %321 = vector.extract_strided_slice %319 {offsets = [0, 0], sizes = [3, 256], strides = [1, 1]} : vector<4x256xf32> to vector<3x256xf32>
    %322 = tpu.concatenate %320, %321 in 0 : vector<1x256xf32>, vector<3x256xf32> -> vector<4x256xf32>
    %323 = vector.extract_strided_slice %319 {offsets = [1, 0], sizes = [3, 256], strides = [1, 1]} : vector<4x256xf32> to vector<3x256xf32>
    %324 = tpu.concatenate %323, %320 in 0 : vector<3x256xf32>, vector<1x256xf32> -> vector<4x256xf32>
    %325 = tpu.concatenate %322, %319, %324 in 1 : vector<4x256xf32>, vector<4x256xf32>, vector<4x256xf32> -> vector<4x768xf32>
    %326 = arith.truncf %325 : vector<4x768xf32> to vector<4x768xbf16>
    %c0_140 = arith.constant 0 : index
    %c0_141 = arith.constant 0 : index
    %327 = vector.load %arg38[%c0_140, %c0_141] : memref<768x256xbf16, #tpu.memory_space<vmem>>, vector<768x256xbf16>
    %cst_142 = arith.constant dense<0.000000e+00> : vector<4x256xf32>
    %328 = tpu.matmul %326, %327, %cst_142 {dimension_numbers = #tpu.dot_dimension_numbers<[1], [0], [0], [1], [0, 0, 1, 1], [], []>} : vector<4x768xbf16>, vector<768x256xbf16>, vector<4x256xf32> -> vector<4x256xf32>
    %c0_143 = arith.constant 0 : index
    %c0_144 = arith.constant 0 : index
    %329 = vector.load %arg39[%c0_143, %c0_144] : memref<1x256xf32, #tpu.memory_space<vmem>>, vector<1x256xf32>
    %330 = vector.broadcast %329 : vector<1x256xf32> to vector<4x256xf32>
    %331 = arith.addf %328, %330 : vector<4x256xf32>
    %cst_145 = arith.constant 0.000000e+00 : f32
    %332 = vector.broadcast %cst_145 : f32 to vector<4x256xf32>
    %333 = arith.maximumf %331, %332 : vector<4x256xf32>
    %cst_146 = arith.constant 0.000000e+00 : f32
    %334 = vector.broadcast %cst_146 : f32 to vector<1x256xf32>
    %335 = vector.extract_strided_slice %333 {offsets = [0, 0], sizes = [3, 256], strides = [1, 1]} : vector<4x256xf32> to vector<3x256xf32>
    %336 = tpu.concatenate %334, %335 in 0 : vector<1x256xf32>, vector<3x256xf32> -> vector<4x256xf32>
    %337 = vector.extract_strided_slice %333 {offsets = [1, 0], sizes = [3, 256], strides = [1, 1]} : vector<4x256xf32> to vector<3x256xf32>
    %338 = tpu.concatenate %337, %334 in 0 : vector<3x256xf32>, vector<1x256xf32> -> vector<4x256xf32>
    %339 = tpu.concatenate %336, %333, %338 in 1 : vector<4x256xf32>, vector<4x256xf32>, vector<4x256xf32> -> vector<4x768xf32>
    %340 = arith.truncf %339 : vector<4x768xf32> to vector<4x768xbf16>
    %c0_147 = arith.constant 0 : index
    %c0_148 = arith.constant 0 : index
    %341 = vector.load %arg40[%c0_147, %c0_148] : memref<768x256xbf16, #tpu.memory_space<vmem>>, vector<768x256xbf16>
    %cst_149 = arith.constant dense<0.000000e+00> : vector<4x256xf32>
    %342 = tpu.matmul %340, %341, %cst_149 {dimension_numbers = #tpu.dot_dimension_numbers<[1], [0], [0], [1], [0, 0, 1, 1], [], []>} : vector<4x768xbf16>, vector<768x256xbf16>, vector<4x256xf32> -> vector<4x256xf32>
    %c0_150 = arith.constant 0 : index
    %c0_151 = arith.constant 0 : index
    %343 = vector.load %arg41[%c0_150, %c0_151] : memref<1x256xf32, #tpu.memory_space<vmem>>, vector<1x256xf32>
    %344 = vector.broadcast %343 : vector<1x256xf32> to vector<4x256xf32>
    %345 = arith.addf %342, %344 : vector<4x256xf32>
    %346 = arith.addf %345, %319 : vector<4x256xf32>
    %cst_152 = arith.constant 0.000000e+00 : f32
    %347 = vector.broadcast %cst_152 : f32 to vector<4x256xf32>
    %348 = arith.maximumf %346, %347 : vector<4x256xf32>
    %cst_153 = arith.constant dense<0.000000e+00> : vector<256xf32>
    %349 = vector.multi_reduction <add>, %348, %cst_153 [0] : vector<4x256xf32> to vector<256xf32>
    %350 = vector.shape_cast %349 : vector<256xf32> to vector<1x256xf32>
    %cst_154 = arith.constant 4.000000e+00 : f32
    %351 = vector.broadcast %cst_154 : f32 to vector<1x256xf32>
    %352 = arith.divf %350, %351 : vector<1x256xf32>
    %c0_155 = arith.constant 0 : index
    %c0_156 = arith.constant 0 : index
    %353 = vector.load %arg42[%c0_155, %c0_156] : memref<1x256xf32, #tpu.memory_space<vmem>>, vector<1x256xf32>
    %354 = arith.mulf %352, %353 : vector<1x256xf32>
    %cst_157 = arith.constant dense<0.000000e+00> : vector<1xf32>
    %355 = vector.multi_reduction <add>, %354, %cst_157 [1] : vector<1x256xf32> to vector<1xf32>
    %356 = vector.shape_cast %355 : vector<1xf32> to vector<1x1xf32>
    %c0_158 = arith.constant 0 : index
    %c0_159 = arith.constant 0 : index
    %357 = vector.load %arg43[%c0_158, %c0_159] : memref<1x1xf32, #tpu.memory_space<vmem>>, vector<1x1xf32>
    %358 = arith.addf %356, %357 : vector<1x1xf32>
    %c0_160 = arith.constant 0 : index
    %c0_161 = arith.constant 0 : index
    %c0_162 = arith.constant 0 : index
    %359 = vector.load %arg44[%c0_160, %c0_161, %c0_162] : memref<1x1x1xf32, #tpu.memory_space<vmem>>, vector<1x1x1xf32>
    %360 = vector.shape_cast %359 : vector<1x1x1xf32> to vector<1x1xf32>
    %361 = vector.shape_cast %358 : vector<1x1xf32> to vector<1x1x1xf32>
    tpu.vector_store %arg44[%c0_160, %c0_161, %c0_162], %361 {strides = array<i32>} : memref<1x1x1xf32, #tpu.memory_space<vmem>>, vector<1x1x1xf32>,
    return
  }
  func.func @transform_0(%arg0: i32) -> (i32, i32, i32) {
    %c0_i32 = arith.constant 0 : i32
    %c0_i32_0 = arith.constant 0 : i32
    %c0_i32_1 = arith.constant 0 : i32
    return %arg0, %c0_i32, %c0_i32_0 : i32, i32, i32
  }
  func.func @transform_1(%arg0: i32) -> (i32, i32) {
    %c0_i32 = arith.constant 0 : i32
    %c0_i32_0 = arith.constant 0 : i32
    %c0_i32_1 = arith.constant 0 : i32
    return %c0_i32, %c0_i32_0 : i32, i32
  }
  func.func @transform_2(%arg0: i32) -> (i32, i32) {
    %c0_i32 = arith.constant 0 : i32
    %c0_i32_0 = arith.constant 0 : i32
    %c0_i32_1 = arith.constant 0 : i32
    return %c0_i32, %c0_i32_0 : i32, i32
  }
  func.func @transform_3(%arg0: i32) -> (i32, i32) {
    %c0_i32 = arith.constant 0 : i32
    %c0_i32_0 = arith.constant 0 : i32
    %c0_i32_1 = arith.constant 0 : i32
    return %c0_i32, %c0_i32_0 : i32, i32
  }
  func.func @transform_4(%arg0: i32) -> (i32, i32) {
    %c0_i32 = arith.constant 0 : i32
    %c0_i32_0 = arith.constant 0 : i32
    %c0_i32_1 = arith.constant 0 : i32
    return %c0_i32, %c0_i32_0 : i32, i32
  }
  func.func @transform_5(%arg0: i32) -> (i32, i32) {
    %c0_i32 = arith.constant 0 : i32
    %c0_i32_0 = arith.constant 0 : i32
    %c0_i32_1 = arith.constant 0 : i32
    return %c0_i32, %c0_i32_0 : i32, i32
  }
  func.func @transform_6(%arg0: i32) -> (i32, i32) {
    %c0_i32 = arith.constant 0 : i32
    %c0_i32_0 = arith.constant 0 : i32
    %c0_i32_1 = arith.constant 0 : i32
    return %c0_i32, %c0_i32_0 : i32, i32
  }
  func.func @transform_7(%arg0: i32) -> (i32, i32) {
    %c0_i32 = arith.constant 0 : i32
    %c0_i32_0 = arith.constant 0 : i32
    %c0_i32_1 = arith.constant 0 : i32
    return %c0_i32, %c0_i32_0 : i32, i32
  }
  func.func @transform_8(%arg0: i32) -> (i32, i32) {
    %c0_i32 = arith.constant 0 : i32
    %c0_i32_0 = arith.constant 0 : i32
    %c0_i32_1 = arith.constant 0 : i32
    return %c0_i32, %c0_i32_0 : i32, i32
  }
  func.func @transform_9(%arg0: i32) -> (i32, i32) {
    %c0_i32 = arith.constant 0 : i32
    %c0_i32_0 = arith.constant 0 : i32
    %c0_i32_1 = arith.constant 0 : i32
    return %c0_i32, %c0_i32_0 : i32, i32
  }
  func.func @transform_10(%arg0: i32) -> (i32, i32) {
    %c0_i32 = arith.constant 0 : i32
    %c0_i32_0 = arith.constant 0 : i32
    %c0_i32_1 = arith.constant 0 : i32
    return %c0_i32, %c0_i32_0 : i32, i32
  }
  func.func @transform_11(%arg0: i32) -> (i32, i32) {
    %c0_i32 = arith.constant 0 : i32
    %c0_i32_0 = arith.constant 0 : i32
    %c0_i32_1 = arith.constant 0 : i32
    return %c0_i32, %c0_i32_0 : i32, i32
  }
  func.func @transform_12(%arg0: i32) -> (i32, i32) {
    %c0_i32 = arith.constant 0 : i32
    %c0_i32_0 = arith.constant 0 : i32
    %c0_i32_1 = arith.constant 0 : i32
    return %c0_i32, %c0_i32_0 : i32, i32
  }
  func.func @transform_13(%arg0: i32) -> (i32, i32) {
    %c0_i32 = arith.constant 0 : i32
    %c0_i32_0 = arith.constant 0 : i32
    %c0_i32_1 = arith.constant 0 : i32
    return %c0_i32, %c0_i32_0 : i32, i32
  }
  func.func @transform_14(%arg0: i32) -> (i32, i32) {
    %c0_i32 = arith.constant 0 : i32
    %c0_i32_0 = arith.constant 0 : i32
    %c0_i32_1 = arith.constant 0 : i32
    return %c0_i32, %c0_i32_0 : i32, i32
  }
  func.func @transform_15(%arg0: i32) -> (i32, i32) {
    %c0_i32 = arith.constant 0 : i32
    %c0_i32_0 = arith.constant 0 : i32
    %c0_i32_1 = arith.constant 0 : i32
    return %c0_i32, %c0_i32_0 : i32, i32
  }
  func.func @transform_16(%arg0: i32) -> (i32, i32) {
    %c0_i32 = arith.constant 0 : i32
    %c0_i32_0 = arith.constant 0 : i32
    %c0_i32_1 = arith.constant 0 : i32
    return %c0_i32, %c0_i32_0 : i32, i32
  }
  func.func @transform_17(%arg0: i32) -> (i32, i32) {
    %c0_i32 = arith.constant 0 : i32
    %c0_i32_0 = arith.constant 0 : i32
    %c0_i32_1 = arith.constant 0 : i32
    return %c0_i32, %c0_i32_0 : i32, i32
  }
  func.func @transform_18(%arg0: i32) -> (i32, i32) {
    %c0_i32 = arith.constant 0 : i32
    %c0_i32_0 = arith.constant 0 : i32
    %c0_i32_1 = arith.constant 0 : i32
    return %c0_i32, %c0_i32_0 : i32, i32
  }
  func.func @transform_19(%arg0: i32) -> (i32, i32) {
    %c0_i32 = arith.constant 0 : i32
    %c0_i32_0 = arith.constant 0 : i32
    %c0_i32_1 = arith.constant 0 : i32
    return %c0_i32, %c0_i32_0 : i32, i32
  }
  func.func @transform_20(%arg0: i32) -> (i32, i32) {
    %c0_i32 = arith.constant 0 : i32
    %c0_i32_0 = arith.constant 0 : i32
    %c0_i32_1 = arith.constant 0 : i32
    return %c0_i32, %c0_i32_0 : i32, i32
  }
  func.func @transform_21(%arg0: i32) -> (i32, i32) {
    %c0_i32 = arith.constant 0 : i32
    %c0_i32_0 = arith.constant 0 : i32
    %c0_i32_1 = arith.constant 0 : i32
    return %c0_i32, %c0_i32_0 : i32, i32
  }
  func.func @transform_22(%arg0: i32) -> (i32, i32) {
    %c0_i32 = arith.constant 0 : i32
    %c0_i32_0 = arith.constant 0 : i32
    %c0_i32_1 = arith.constant 0 : i32
    return %c0_i32, %c0_i32_0 : i32, i32
  }
  func.func @transform_23(%arg0: i32) -> (i32, i32) {
    %c0_i32 = arith.constant 0 : i32
    %c0_i32_0 = arith.constant 0 : i32
    %c0_i32_1 = arith.constant 0 : i32
    return %c0_i32, %c0_i32_0 : i32, i32
  }
  func.func @transform_24(%arg0: i32) -> (i32, i32) {
    %c0_i32 = arith.constant 0 : i32
    %c0_i32_0 = arith.constant 0 : i32
    %c0_i32_1 = arith.constant 0 : i32
    return %c0_i32, %c0_i32_0 : i32, i32
  }
  func.func @transform_25(%arg0: i32) -> (i32, i32) {
    %c0_i32 = arith.constant 0 : i32
    %c0_i32_0 = arith.constant 0 : i32
    %c0_i32_1 = arith.constant 0 : i32
    return %c0_i32, %c0_i32_0 : i32, i32
  }
  func.func @transform_26(%arg0: i32) -> (i32, i32) {
    %c0_i32 = arith.constant 0 : i32
    %c0_i32_0 = arith.constant 0 : i32
    %c0_i32_1 = arith.constant 0 : i32
    return %c0_i32, %c0_i32_0 : i32, i32
  }
  func.func @transform_27(%arg0: i32) -> (i32, i32) {
    %c0_i32 = arith.constant 0 : i32
    %c0_i32_0 = arith.constant 0 : i32
    %c0_i32_1 = arith.constant 0 : i32
    return %c0_i32, %c0_i32_0 : i32, i32
  }
  func.func @transform_28(%arg0: i32) -> (i32, i32) {
    %c0_i32 = arith.constant 0 : i32
    %c0_i32_0 = arith.constant 0 : i32
    %c0_i32_1 = arith.constant 0 : i32
    return %c0_i32, %c0_i32_0 : i32, i32
  }
  func.func @transform_29(%arg0: i32) -> (i32, i32) {
    %c0_i32 = arith.constant 0 : i32
    %c0_i32_0 = arith.constant 0 : i32
    %c0_i32_1 = arith.constant 0 : i32
    return %c0_i32, %c0_i32_0 : i32, i32
  }
  func.func @transform_30(%arg0: i32) -> (i32, i32) {
    %c0_i32 = arith.constant 0 : i32
    %c0_i32_0 = arith.constant 0 : i32
    %c0_i32_1 = arith.constant 0 : i32
    return %c0_i32, %c0_i32_0 : i32, i32
  }
  func.func @transform_31(%arg0: i32) -> (i32, i32) {
    %c0_i32 = arith.constant 0 : i32
    %c0_i32_0 = arith.constant 0 : i32
    %c0_i32_1 = arith.constant 0 : i32
    return %c0_i32, %c0_i32_0 : i32, i32
  }
  func.func @transform_32(%arg0: i32) -> (i32, i32) {
    %c0_i32 = arith.constant 0 : i32
    %c0_i32_0 = arith.constant 0 : i32
    %c0_i32_1 = arith.constant 0 : i32
    return %c0_i32, %c0_i32_0 : i32, i32
  }
  func.func @transform_33(%arg0: i32) -> (i32, i32) {
    %c0_i32 = arith.constant 0 : i32
    %c0_i32_0 = arith.constant 0 : i32
    %c0_i32_1 = arith.constant 0 : i32
    return %c0_i32, %c0_i32_0 : i32, i32
  }
  func.func @transform_34(%arg0: i32) -> (i32, i32) {
    %c0_i32 = arith.constant 0 : i32
    %c0_i32_0 = arith.constant 0 : i32
    %c0_i32_1 = arith.constant 0 : i32
    return %c0_i32, %c0_i32_0 : i32, i32
  }
  func.func @transform_35(%arg0: i32) -> (i32, i32) {
    %c0_i32 = arith.constant 0 : i32
    %c0_i32_0 = arith.constant 0 : i32
    %c0_i32_1 = arith.constant 0 : i32
    return %c0_i32, %c0_i32_0 : i32, i32
  }
  func.func @transform_36(%arg0: i32) -> (i32, i32) {
    %c0_i32 = arith.constant 0 : i32
    %c0_i32_0 = arith.constant 0 : i32
    %c0_i32_1 = arith.constant 0 : i32
    return %c0_i32, %c0_i32_0 : i32, i32
  }
  func.func @transform_37(%arg0: i32) -> (i32, i32) {
    %c0_i32 = arith.constant 0 : i32
    %c0_i32_0 = arith.constant 0 : i32
    %c0_i32_1 = arith.constant 0 : i32
    return %c0_i32, %c0_i32_0 : i32, i32
  }
  func.func @transform_38(%arg0: i32) -> (i32, i32) {
    %c0_i32 = arith.constant 0 : i32
    %c0_i32_0 = arith.constant 0 : i32
    %c0_i32_1 = arith.constant 0 : i32
    return %c0_i32, %c0_i32_0 : i32, i32
  }
  func.func @transform_39(%arg0: i32) -> (i32, i32) {
    %c0_i32 = arith.constant 0 : i32
    %c0_i32_0 = arith.constant 0 : i32
    %c0_i32_1 = arith.constant 0 : i32
    return %c0_i32, %c0_i32_0 : i32, i32
  }
  func.func @transform_40(%arg0: i32) -> (i32, i32) {
    %c0_i32 = arith.constant 0 : i32
    %c0_i32_0 = arith.constant 0 : i32
    %c0_i32_1 = arith.constant 0 : i32
    return %c0_i32, %c0_i32_0 : i32, i32
  }
  func.func @transform_41(%arg0: i32) -> (i32, i32) {
    %c0_i32 = arith.constant 0 : i32
    %c0_i32_0 = arith.constant 0 : i32
    %c0_i32_1 = arith.constant 0 : i32
    return %c0_i32, %c0_i32_0 : i32, i32
  }
  func.func @transform_42(%arg0: i32) -> (i32, i32) {
    %c0_i32 = arith.constant 0 : i32
    %c0_i32_0 = arith.constant 0 : i32
    %c0_i32_1 = arith.constant 0 : i32
    return %c0_i32, %c0_i32_0 : i32, i32
  }
  func.func @transform_43(%arg0: i32) -> (i32, i32, i32) {
    %c0_i32 = arith.constant 0 : i32
    %c0_i32_0 = arith.constant 0 : i32
    %c0_i32_1 = arith.constant 0 : i32
    return %arg0, %c0_i32, %c0_i32_0 : i32, i32, i32
  }
}

</mosaic_0001>

<llo_original>
// kernel: resnet_forward.1
$region0: #{resnet_forward.1}
  #allocation0 [shape = 'u32[]', space=smem, size = 0x4, offset = 0x4, fixed_abs, tag = 'smem constant byte address 0x4 - core index']
  #allocation1 [shape = 'u32[144,128]{1,0:T(1,128)}', space=vmem, size = 0x12000, scoped, tag = 'internal scratch']
  #allocation2 [shape = 'f32[1,1]{1,0:T(1,128)S(1)}', space=vmem, size = 0x200, scoped, tag = 'scoped memory for resnet_forward.1']
  %s0 = inlined_call_operand.smem [shape: u32[44], index: -1, kind: input, shape index: {}]
  %s1 = sld [smem:[%s0]]
  %s2 = scalar_lea.smem %s0, 1
  %s3 = sld [smem:[%s2]]
  %s4 = scalar_lea.smem %s0, 2
  %s5 = sld [smem:[%s4]]
  %s6 = scalar_lea.smem %s0, 3
  %s7 = sld [smem:[%s6]]
  %s8 = scalar_lea.smem %s0, 4
  %s9 = sld [smem:[%s8]]
  %s10 = scalar_lea.smem %s0, 5
  %s11 = sld [smem:[%s10]]
  %s12 = scalar_lea.smem %s0, 6
  %s13 = sld [smem:[%s12]]
  %s14 = scalar_lea.smem %s0, 7
  %s15 = sld [smem:[%s14]]
  %s16 = scalar_lea.smem %s0, 8
  %s17 = sld [smem:[%s16]]
  %s18 = scalar_lea.smem %s0, 9
  %s19 = sld [smem:[%s18]]
  %s20 = scalar_lea.smem %s0, 10
  %s21 = sld [smem:[%s20]]
  %s22 = scalar_lea.smem %s0, 11
  %s23 = sld [smem:[%s22]]
  %s24 = scalar_lea.smem %s0, 12
  %s25 = sld [smem:[%s24]]
  %s26 = scalar_lea.smem %s0, 13
  %s27 = sld [smem:[%s26]]
  %s28 = scalar_lea.smem %s0, 14
  %s29 = sld [smem:[%s28]]
  %s30 = scalar_lea.smem %s0, 15
  %s31 = sld [smem:[%s30]]
  %s32 = scalar_lea.smem %s0, 16
  %s33 = sld [smem:[%s32]]
  %s34 = scalar_lea.smem %s0, 17
  %s35 = sld [smem:[%s34]]
  %s36 = scalar_lea.smem %s0, 18
  %s37 = sld [smem:[%s36]]
  %s38 = scalar_lea.smem %s0, 19
  %s39 = sld [smem:[%s38]]
  %s40 = scalar_lea.smem %s0, 20
  %s41 = sld [smem:[%s40]]
  %s42 = scalar_lea.smem %s0, 21
  %s43 = sld [smem:[%s42]]
  %s44 = scalar_lea.smem %s0, 22
  %s45 = sld [smem:[%s44]]
  %s46 = scalar_lea.smem %s0, 23
  %s47 = sld [smem:[%s46]]
  %s48 = scalar_lea.smem %s0, 24
  %s49 = sld [smem:[%s48]]
  %s50 = scalar_lea.smem %s0, 25
  %s51 = sld [smem:[%s50]]
  %s52 = scalar_lea.smem %s0, 26
  %s53 = sld [smem:[%s52]]
  %s54 = scalar_lea.smem %s0, 27
  %s55 = sld [smem:[%s54]]
  %s56 = scalar_lea.smem %s0, 28
  %s57 = sld [smem:[%s56]]
  %s58 = scalar_lea.smem %s0, 29
  %s59 = sld [smem:[%s58]]
  %s60 = scalar_lea.smem %s0, 30
  %s61 = sld [smem:[%s60]]
  %s62 = scalar_lea.smem %s0, 31
  %s63 = sld [smem:[%s62]]
  %s64 = scalar_lea.smem %s0, 32
  %s65 = sld [smem:[%s64]]
  %s66 = scalar_lea.smem %s0, 33
  %s67 = sld [smem:[%s66]]
  %s68 = scalar_lea.smem %s0, 34
  %s69 = sld [smem:[%s68]]
  %s70 = scalar_lea.smem %s0, 35
  %s71 = sld [smem:[%s70]]
  %s72 = scalar_lea.smem %s0, 36
  %s73 = sld [smem:[%s72]]
  %s74 = scalar_lea.smem %s0, 37
  %s75 = sld [smem:[%s74]]
  %s76 = scalar_lea.smem %s0, 38
  %s77 = sld [smem:[%s76]]
  %s78 = scalar_lea.smem %s0, 39
  %s79 = sld [smem:[%s78]]
  %s80 = scalar_lea.smem %s0, 40
  %s81 = sld [smem:[%s80]]
  %s82 = scalar_lea.smem %s0, 41
  %s83 = sld [smem:[%s82]]
  %s84 = scalar_lea.smem %s0, 42
  %s85 = sld [smem:[%s84]]
  %s86 = scalar_lea.smem %s0, 43
  %s87 = sld [smem:[%s86]]
  %s88 = sld [smem:[#allocation0]]
  $region313: #{resnet_forward.1} parent=0
    _
  %s90 = ssub.s32 1, %s88
  %s91 = scalar_select 0, %s90, %s88
  %v92 = vstv %s85
  %93 = vst [vmem:[#allocation2] sm:$0x1] %v92
  $region1: #{resnet_forward.1} parent=0
    #allocation3 [shape = 'u8[512]{0}', space=vmem, size = 0x400, scoped, tag = 'input window, operand 4, single buffered']
    #allocation4 [shape = 's32[2]{0}', space=sflag, size = 0x8, scoped, tag = 'scoped memory for resnet_forward.1']
    #allocation5 [shape = 'u8[512]{0}', space=vmem, size = 0x400, scoped, tag = 'input window, operand 6, single buffered']
    #allocation6 [shape = 's32[1]{0}', space=sflag, size = 0x4, scoped, tag = 'scoped memory for resnet_forward.1']
    #allocation7 [shape = 'u8[512]{0}', space=vmem, size = 0x400, scoped, tag = 'input window, operand 8, single buffered']
    #allocation8 [shape = 'u8[512]{0}', space=vmem, size = 0x400, scoped, tag = 'input window, operand 10, single buffered']
    #allocation9 [shape = 's32[1]{0}', space=sflag, size = 0x4, scoped, tag = 'scoped memory for resnet_forward.1']
    #allocation10 [shape = 'u8[512]{0}', space=vmem, size = 0x400, scoped, tag = 'input window, operand 12, single buffered']
    #allocation11 [shape = 'u8[8192]{0}', space=vmem, size = 0x2000, scoped, tag = 'input window, operand 13, single buffered']
    #allocation12 [shape = 's32[1]{0}', space=sflag, size = 0x4, scoped, tag = 'scoped memory for resnet_forward.1']
    #allocation13 [shape = 'u8[512]{0}', space=vmem, size = 0x400, scoped, tag = 'input window, operand 14, single buffered']
    #allocation14 [shape = 'u8[512]{0}', space=vmem, size = 0x400, scoped, tag = 'input window, operand 16, single buffered']
    #allocation15 [shape = 's32[1]{0}', space=sflag, size = 0x4, scoped, tag = 'scoped memory for resnet_forward.1']
    #allocation16 [shape = 'u8[512]{0}', space=vmem, size = 0x400, scoped, tag = 'input window, operand 18, single buffered']
    #allocation17 [shape = 'u8[512]{0}', space=vmem, size = 0x400, scoped, tag = 'input window, operand 20, single buffered']
    #allocation18 [shape = 's32[1]{0}', space=sflag, size = 0x4, scoped, tag = 'scoped memory for resnet_forward.1']
    #allocation19 [shape = 'u8[49152]{0}', space=vmem, size = 0xc000, scoped, tag = 'input window, operand 21, single buffered']
    #allocation20 [shape = 'u8[512]{0}', space=vmem, size = 0x400, scoped, tag = 'input window, operand 22, single buffered']
    #allocation21 [shape = 's32[1]{0}', space=sflag, size = 0x4, scoped, tag = 'scoped memory for resnet_forward.1']
    #allocation22 [shape = 'u8[16384]{0}', space=vmem, size = 0x4000, scoped, tag = 'input window, operand 23, single buffered']
    #allocation23 [shape = 'u8[512]{0}', space=vmem, size = 0x400, scoped, tag = 'input window, operand 24, single buffered']
    #allocation24 [shape = 's32[1]{0}', space=sflag, size = 0x4, scoped, tag = 'scoped memory for resnet_forward.1']
    #allocation25 [shape = 'u8[98304]{0}', space=vmem, size = 0x18000, scoped, tag = 'input window, operand 25, single buffered']
    #allocation26 [shape = 'u8[512]{0}', space=vmem, size = 0x400, scoped, tag = 'input window, operand 26, single buffered']
    #allocation27 [shape = 's32[1]{0}', space=sflag, size = 0x4, scoped, tag = 'scoped memory for resnet_forward.1']
    #allocation28 [shape = 'u8[98304]{0}', space=vmem, size = 0x18000, scoped, tag = 'input window, operand 27, single buffered']
    #allocation29 [shape = 'u8[512]{0}', space=vmem, size = 0x400, scoped, tag = 'input window, operand 28, single buffered']
    #allocation30 [shape = 's32[1]{0}', space=sflag, size = 0x4, scoped, tag = 'scoped memory for resnet_forward.1']
    #allocation31 [shape = 'u8[98304]{0}', space=vmem, size = 0x18000, scoped, tag = 'input window, operand 29, single buffered']
    #allocation32 [shape = 'u8[512]{0}', space=vmem, size = 0x400, scoped, tag = 'input window, operand 30, single buffered']
    #allocation33 [shape = 's32[1]{0}', space=sflag, size = 0x4, scoped, tag = 'scoped memory for resnet_forward.1']
    #allocation34 [shape = 'u8[65536]{0}', space=vmem, size = 0x10000, scoped, tag = 'input window, operand 33, single buffered']
    #allocation35 [shape = 'u8[1024]{0}', space=vmem, size = 0x400, scoped, tag = 'input window, operand 34, single buffered']
    #allocation36 [shape = 's32[1]{0}', space=sflag, size = 0x4, scoped, tag = 'scoped memory for resnet_forward.1']
    #allocation37 [shape = 'u8[1024]{0}', space=vmem, size = 0x400, scoped, tag = 'input window, operand 36, single buffered']
    #allocation38 [shape = 'u8[393216]{0}', space=vmem, size = 0x60000, scoped, tag = 'input window, operand 37, single buffered']
    #allocation39 [shape = 's32[1]{0}', space=sflag, size = 0x4, scoped, tag = 'scoped memory for resnet_forward.1']
    #allocation40 [shape = 'u8[393216]{0}', space=vmem, size = 0x60000, scoped, tag = 'input window, operand 39, single buffered']
    #allocation41 [shape = 'u8[1024]{0}', space=vmem, size = 0x400, scoped, tag = 'input window, operand 40, single buffered']
    #allocation42 [shape = 's32[1]{0}', space=sflag, size = 0x4, scoped, tag = 'scoped memory for resnet_forward.1']
    #allocation43 [shape = 'u8[1024]{0}', space=vmem, size = 0x400, scoped, tag = 'input window, operand 41, single buffered']
    %94 = vsyncpa [#allocation4], 0
    %95 = vsyncpa [#allocation6], 0
    %96 = vsyncpa [#allocation9], 0
    %97 = vsyncpa [#allocation12], 0
    %98 = vsyncpa [#allocation15], 0
    %99 = vsyncpa [#allocation18], 0
    %100 = vsyncpa [#allocation21], 0
    %101 = vsyncpa [#allocation24], 0
    %102 = vsyncpa [#allocation27], 0
    %103 = vsyncpa [#allocation30], 0
    %104 = vsyncpa [#allocation33], 0
    %105 = vsyncpa [#allocation36], 0
    %106 = vsyncpa [#allocation39], 0
    %107 = vsyncpa [#allocation42], 0
    loop: start=0, step=1, limit=4
    $region2: #{resnet_forward.1} parent=1 // loop_pre_header
      _
    $region3: #{resnet_forward.1} parent=1 // loop_header
      %s109 = sphi 0, %s113
      %p110 = scmp.ge.s32.totalorder %s109, 4
      %s119 = sphi 0, %s121
      %s122 = sphi 0, %s119
      %s123 = sphi 0, %s122
      %s139 = sphi 0, %s123
      %s143 = sphi 0, %s143
      %s145 = sphi 0, %s143
      %s146 = sphi 0, %s145
      %s160 = sphi 0, %s146
      %s164 = sphi 0, %s164
      %s166 = sphi 0, %s164
      %s167 = sphi 0, %s166
      %s181 = sphi 0, %s167
      %s185 = sphi 0, %s185
      %s187 = sphi 0, %s185
      %s188 = sphi 0, %s187
      %s202 = sphi 0, %s188
      %s206 = sphi 0, %s206
      %s208 = sphi 0, %s206
      %s209 = sphi 0, %s208
      %s223 = sphi 0, %s209
      %s227 = sphi 0, %s227
      %s229 = sphi 0, %s227
      %s230 = sphi 0, %s229
      %s244 = sphi 0, %s230
      %s248 = sphi 0, %s248
      %s250 = sphi 0, %s248
      %s251 = sphi 0, %s250
      %s265 = sphi 0, %s251
      %s269 = sphi 0, %s269
      %s271 = sphi 0, %s269
      %s272 = sphi 0, %s271
      %s286 = sphi 0, %s272
      %s290 = sphi 0, %s290
      %s292 = sphi 0, %s290
      %s293 = sphi 0, %s292
      %s307 = sphi 0, %s293
      %s311 = sphi 0, %s311
      %s313 = sphi 0, %s311
      %s314 = sphi 0, %s313
      %s328 = sphi 0, %s314
      %s332 = sphi 0, %s332
      %s334 = sphi 0, %s332
      %s335 = sphi 0, %s334
      %s349 = sphi 0, %s335
      %s353 = sphi 0, %s353
      %s355 = sphi 0, %s353
      %s356 = sphi 0, %s355
      %s370 = sphi 0, %s356
      %s374 = sphi 0, %s374
      %s376 = sphi 0, %s374
      %s377 = sphi 0, %s376
      %s391 = sphi 0, %s377
      %s395 = sphi 0, %s395
      %s397 = sphi 0, %s395
      %s398 = sphi 0, %s397
      %s412 = sphi 0, %s398
      %s416 = sphi 0, %s416
      %s418 = sphi 0, %s416
      %s419 = sphi 0, %s418
      %s433 = sphi 0, %s419
      %s437 = sphi 0, %s437
      %s439 = sphi 0, %s437
      %s440 = sphi 0, %s439
      %s454 = sphi 0, %s440
      %s458 = sphi 0, %s458
      %s460 = sphi 0, %s458
      %s461 = sphi 0, %s460
      %s475 = sphi 0, %s461
      %s479 = sphi 0, %s479
      %s481 = sphi 0, %s479
      %s482 = sphi 0, %s481
      %s496 = sphi 0, %s482
      %s500 = sphi 0, %s500
      %s502 = sphi 0, %s500
      %s503 = sphi 0, %s502
      %s517 = sphi 0, %s503
      %s521 = sphi 0, %s521
      %s523 = sphi 0, %s521
      %s524 = sphi 0, %s523
      %s538 = sphi 0, %s524
      %s542 = sphi 0, %s542
      %s544 = sphi 0, %s542
      %s545 = sphi 0, %s544
      %s559 = sphi 0, %s545
      %s563 = sphi 0, %s563
      %s565 = sphi 0, %s563
      %s566 = sphi 0, %s565
      %s580 = sphi 0, %s566
      %s584 = sphi 0, %s584
      %s586 = sphi 0, %s584
      %s587 = sphi 0, %s586
      %s601 = sphi 0, %s587
      %s605 = sphi 0, %s605
      %s607 = sphi 0, %s605
      %s608 = sphi 0, %s607
      %s622 = sphi 0, %s608
      %s626 = sphi 0, %s626
      %s628 = sphi 0, %s626
      %s629 = sphi 0, %s628
      %s643 = sphi 0, %s629
      %s647 = sphi 0, %s647
      %s649 = sphi 0, %s647
      %s650 = sphi 0, %s649
      %s664 = sphi 0, %s650
      %s668 = sphi 0, %s668
      %s670 = sphi 0, %s668
      %s671 = sphi 0, %s670
      %s685 = sphi 0, %s671
      %s689 = sphi 0, %s689
      %s691 = sphi 0, %s689
      %s692 = sphi 0, %s691
      %s706 = sphi 0, %s692
      %s710 = sphi 0, %s710
      %s712 = sphi 0, %s710
      %s713 = sphi 0, %s712
      %s727 = sphi 0, %s713
      %s731 = sphi 0, %s731
      %s733 = sphi 0, %s731
      %s734 = sphi 0, %s733
      %s748 = sphi 0, %s734
      %s752 = sphi 0, %s752
      %s754 = sphi 0, %s752
      %s755 = sphi 0, %s754
      %s769 = sphi 0, %s755
      %s773 = sphi 0, %s773
      %s775 = sphi 0, %s773
      %s776 = sphi 0, %s775
      %s790 = sphi 0, %s776
      %s794 = sphi 0, %s794
      %s796 = sphi 0, %s794
      %s797 = sphi 0, %s796
      %s811 = sphi 0, %s797
      %s815 = sphi 0, %s815
      %s817 = sphi 0, %s815
      %s818 = sphi 0, %s817
      %s832 = sphi 0, %s818
      %s836 = sphi 0, %s836
      %s838 = sphi 0, %s836
      %s839 = sphi 0, %s838
      %s853 = sphi 0, %s839
      %s857 = sphi 0, %s857
      %s859 = sphi 0, %s857
      %s860 = sphi 0, %s859
      %s874 = sphi 0, %s860
      %s878 = sphi 0, %s878
      %s880 = sphi 0, %s878
      %s881 = sphi 0, %s880
      %s895 = sphi 0, %s881
      %s899 = sphi 0, %s899
      %s901 = sphi 0, %s899
      %s902 = sphi 0, %s901
      %s916 = sphi 0, %s902
      %s920 = sphi 0, %s920
      %s922 = sphi 0, %s920
      %s923 = sphi 0, %s922
      %s937 = sphi 0, %s923
      %s941 = sphi 0, %s941
      %s943 = sphi 0, %s941
      %s944 = sphi 0, %s943
      %s958 = sphi 0, %s944
      %s962 = sphi 0, %s962
      %s964 = sphi 0, %s962
      %s965 = sphi 0, %s964
      %s979 = sphi 0, %s965
      %s983 = sphi 0, %s983
      %s985 = sphi 0, %s983
      %s986 = sphi 0, %s985
      %s1000 = sphi 0, %s986
      %s1004 = sphi 0, %s1004
      %s1006 = sphi 0, %s1004
      %s1007 = sphi 0, %s1006
      %s1021 = sphi 0, %s1007
      %s1027 = sphi 0, %s1029
      %s1030 = sphi 0, %s1027
      %s1031 = sphi 0, %s1030
      %s1047 = sphi 0, %s1031
    $region4: #{resnet_forward.1} parent=1 // loop_header_branch
      %112 = sbr.rel (%p110) target = $region8
    $region5: #{resnet_forward.1} parent=1 // loop_body
      %s114 = ssub.s32 %s109, 1
      %s115 = ssub.s32 %s109, 2
      %s116 = sadd.s32 %s109, 1
      %s117 = ssub.s32 %s109, %s116
      %p118 = scmp.eq.s32.totalorder %s117, 0
      %s120 = sadd.s32 %s119, 1
      %s121 = scalar_select %p118, %s119, %s120
      %p124 = pneg %p118
      %p125 = scmp.eq.s32.totalorder %s109, 1
      %p126 = por %p124, %p125
      %p127 = scmp.ne.s32.totalorder %s119, %s122
      %p128 = scmp.eq.s32.totalorder %s109, 0
      %p129 = por %p127, %p128
      %p130 = scmp.ne.s32.totalorder %s119, %s122
      %p131 = scmp.eq.s32.totalorder %s114, 1
      %p132 = por %p130, %p131
      %p133 = scmp.ne.s32.totalorder %s122, %s123
      %p134 = scmp.eq.s32.totalorder %s114, 0
      %p135 = por %p133, %p134
      %p136 = scmp.ne.s32.totalorder %s122, %s123
      %p137 = scmp.eq.s32.totalorder %s115, 1
      %p138 = por %p136, %p137
      %p140 = scmp.ne.s32.totalorder %s123, %s139
      %p141 = scmp.eq.s32.totalorder %s115, 0
      %p142 = por %p140, %p141
      %s144 = sadd.s32 %s143, 1
      %p147 = scmp.eq.s32.totalorder %s109, 1
      %p148 = scmp.ne.s32.totalorder %s143, %s145
      %p149 = scmp.eq.s32.totalorder %s109, 0
      %p150 = por %p148, %p149
      %p151 = scmp.ne.s32.totalorder %s143, %s145
      %p152 = scmp.eq.s32.totalorder %s114, 1
      %p153 = por %p151, %p152
      %p154 = scmp.ne.s32.totalorder %s145, %s146
      %p155 = scmp.eq.s32.totalorder %s114, 0
      %p156 = por %p154, %p155
      %p157 = scmp.ne.s32.totalorder %s145, %s146
      %p158 = scmp.eq.s32.totalorder %s115, 1
      %p159 = por %p157, %p158
      %p161 = scmp.ne.s32.totalorder %s146, %s160
      %p162 = scmp.eq.s32.totalorder %s115, 0
      %p163 = por %p161, %p162
      %s165 = sadd.s32 %s164, 1
      %p168 = scmp.eq.s32.totalorder %s109, 1
      %p169 = scmp.ne.s32.totalorder %s164, %s166
      %p170 = scmp.eq.s32.totalorder %s109, 0
      %p171 = por %p169, %p170
      %p172 = scmp.ne.s32.totalorder %s164, %s166
      %p173 = scmp.eq.s32.totalorder %s114, 1
      %p174 = por %p172, %p173
      %p175 = scmp.ne.s32.totalorder %s166, %s167
      %p176 = scmp.eq.s32.totalorder %s114, 0
      %p177 = por %p175, %p176
      %p178 = scmp.ne.s32.totalorder %s166, %s167
      %p179 = scmp.eq.s32.totalorder %s115, 1
      %p180 = por %p178, %p179
      %p182 = scmp.ne.s32.totalorder %s167, %s181
      %p183 = scmp.eq.s32.totalorder %s115, 0
      %p184 = por %p182, %p183
      %s186 = sadd.s32 %s185, 1
      %p189 = scmp.eq.s32.totalorder %s109, 1
      %p190 = scmp.ne.s32.totalorder %s185, %s187
      %p191 = scmp.eq.s32.totalorder %s109, 0
      %p192 = por %p190, %p191
      %p193 = scmp.ne.s32.totalorder %s185, %s187
      %p194 = scmp.eq.s32.totalorder %s114, 1
      %p195 = por %p193, %p194
      %p196 = scmp.ne.s32.totalorder %s187, %s188
      %p197 = scmp.eq.s32.totalorder %s114, 0
      %p198 = por %p196, %p197
      %p199 = scmp.ne.s32.totalorder %s187, %s188
      %p200 = scmp.eq.s32.totalorder %s115, 1
      %p201 = por %p199, %p200
      %p203 = scmp.ne.s32.totalorder %s188, %s202
      %p204 = scmp.eq.s32.totalorder %s115, 0
      %p205 = por %p203, %p204
      %s207 = sadd.s32 %s206, 1
      %p210 = scmp.eq.s32.totalorder %s109, 1
      %p211 = scmp.ne.s32.totalorder %s206, %s208
      %p212 = scmp.eq.s32.totalorder %s109, 0
      %p213 = por %p211, %p212
      %p214 = scmp.ne.s32.totalorder %s206, %s208
      %p215 = scmp.eq.s32.totalorder %s114, 1
      %p216 = por %p214, %p215
      %p217 = scmp.ne.s32.totalorder %s208, %s209
      %p218 = scmp.eq.s32.totalorder %s114, 0
      %p219 = por %p217, %p218
      %p220 = scmp.ne.s32.totalorder %s208, %s209
      %p221 = scmp.eq.s32.totalorder %s115, 1
      %p222 = por %p220, %p221
      %p224 = scmp.ne.s32.totalorder %s209, %s223
      %p225 = scmp.eq.s32.totalorder %s115, 0
      %p226 = por %p224, %p225
      %s228 = sadd.s32 %s227, 1
      %p231 = scmp.eq.s32.totalorder %s109, 1
      %p232 = scmp.ne.s32.totalorder %s227, %s229
      %p233 = scmp.eq.s32.totalorder %s109, 0
      %p234 = por %p232, %p233
      %p235 = scmp.ne.s32.totalorder %s227, %s229
      %p236 = scmp.eq.s32.totalorder %s114, 1
      %p237 = por %p235, %p236
      %p238 = scmp.ne.s32.totalorder %s229, %s230
      %p239 = scmp.eq.s32.totalorder %s114, 0
      %p240 = por %p238, %p239
      %p241 = scmp.ne.s32.totalorder %s229, %s230
      %p242 = scmp.eq.s32.totalorder %s115, 1
      %p243 = por %p241, %p242
      %p245 = scmp.ne.s32.totalorder %s230, %s244
      %p246 = scmp.eq.s32.totalorder %s115, 0
      %p247 = por %p245, %p246
      %s249 = sadd.s32 %s248, 1
      %p252 = scmp.eq.s32.totalorder %s109, 1
      %p253 = scmp.ne.s32.totalorder %s248, %s250
      %p254 = scmp.eq.s32.totalorder %s109, 0
      %p255 = por %p253, %p254
      %p256 = scmp.ne.s32.totalorder %s248, %s250
      %p257 = scmp.eq.s32.totalorder %s114, 1
      %p258 = por %p256, %p257
      %p259 = scmp.ne.s32.totalorder %s250, %s251
      %p260 = scmp.eq.s32.totalorder %s114, 0
      %p261 = por %p259, %p260
      %p262 = scmp.ne.s32.totalorder %s250, %s251
      %p263 = scmp.eq.s32.totalorder %s115, 1
      %p264 = por %p262, %p263
      %p266 = scmp.ne.s32.totalorder %s251, %s265
      %p267 = scmp.eq.s32.totalorder %s115, 0
      %p268 = por %p266, %p267
      %s270 = sadd.s32 %s269, 1
      %p273 = scmp.eq.s32.totalorder %s109, 1
      %p274 = scmp.ne.s32.totalorder %s269, %s271
      %p275 = scmp.eq.s32.totalorder %s109, 0
      %p276 = por %p274, %p275
      %p277 = scmp.ne.s32.totalorder %s269, %s271
      %p278 = scmp.eq.s32.totalorder %s114, 1
      %p279 = por %p277, %p278
      %p280 = scmp.ne.s32.totalorder %s271, %s272
      %p281 = scmp.eq.s32.totalorder %s114, 0
      %p282 = por %p280, %p281
      %p283 = scmp.ne.s32.totalorder %s271, %s272
      %p284 = scmp.eq.s32.totalorder %s115, 1
      %p285 = por %p283, %p284
      %p287 = scmp.ne.s32.totalorder %s272, %s286
      %p288 = scmp.eq.s32.totalorder %s115, 0
      %p289 = por %p287, %p288
      %s291 = sadd.s32 %s290, 1
      %p294 = scmp.eq.s32.totalorder %s109, 1
      %p295 = scmp.ne.s32.totalorder %s290, %s292
      %p296 = scmp.eq.s32.totalorder %s109, 0
      %p297 = por %p295, %p296
      %p298 = scmp.ne.s32.totalorder %s290, %s292
      %p299 = scmp.eq.s32.totalorder %s114, 1
      %p300 = por %p298, %p299
      %p301 = scmp.ne.s32.totalorder %s292, %s293
      %p302 = scmp.eq.s32.totalorder %s114, 0
      %p303 = por %p301, %p302
      %p304 = scmp.ne.s32.totalorder %s292, %s293
      %p305 = scmp.eq.s32.totalorder %s115, 1
      %p306 = por %p304, %p305
      %p308 = scmp.ne.s32.totalorder %s293, %s307
      %p309 = scmp.eq.s32.totalorder %s115, 0
      %p310 = por %p308, %p309
      %s312 = sadd.s32 %s311, 1
      %p315 = scmp.eq.s32.totalorder %s109, 1
      %p316 = scmp.ne.s32.totalorder %s311, %s313
      %p317 = scmp.eq.s32.totalorder %s109, 0
      %p318 = por %p316, %p317
      %p319 = scmp.ne.s32.totalorder %s311, %s313
      %p320 = scmp.eq.s32.totalorder %s114, 1
      %p321 = por %p319, %p320
      %p322 = scmp.ne.s32.totalorder %s313, %s314
      %p323 = scmp.eq.s32.totalorder %s114, 0
      %p324 = por %p322, %p323
      %p325 = scmp.ne.s32.totalorder %s313, %s314
      %p326 = scmp.eq.s32.totalorder %s115, 1
      %p327 = por %p325, %p326
      %p329 = scmp.ne.s32.totalorder %s314, %s328
      %p330 = scmp.eq.s32.totalorder %s115, 0
      %p331 = por %p329, %p330
      %s333 = sadd.s32 %s332, 1
      %p336 = scmp.eq.s32.totalorder %s109, 1
      %p337 = scmp.ne.s32.totalorder %s332, %s334
      %p338 = scmp.eq.s32.totalorder %s109, 0
      %p339 = por %p337, %p338
      %p340 = scmp.ne.s32.totalorder %s332, %s334
      %p341 = scmp.eq.s32.totalorder %s114, 1
      %p342 = por %p340, %p341
      %p343 = scmp.ne.s32.totalorder %s334, %s335
      %p344 = scmp.eq.s32.totalorder %s114, 0
      %p345 = por %p343, %p344
      %p346 = scmp.ne.s32.totalorder %s334, %s335
      %p347 = scmp.eq.s32.totalorder %s115, 1
      %p348 = por %p346, %p347
      %p350 = scmp.ne.s32.totalorder %s335, %s349
      %p351 = scmp.eq.s32.totalorder %s115, 0
      %p352 = por %p350, %p351
      %s354 = sadd.s32 %s353, 1
      %p357 = scmp.eq.s32.totalorder %s109, 1
      %p358 = scmp.ne.s32.totalorder %s353, %s355
      %p359 = scmp.eq.s32.totalorder %s109, 0
      %p360 = por %p358, %p359
      %p361 = scmp.ne.s32.totalorder %s353, %s355
      %p362 = scmp.eq.s32.totalorder %s114, 1
      %p363 = por %p361, %p362
      %p364 = scmp.ne.s32.totalorder %s355, %s356
      %p365 = scmp.eq.s32.totalorder %s114, 0
      %p366 = por %p364, %p365
      %p367 = scmp.ne.s32.totalorder %s355, %s356
      %p368 = scmp.eq.s32.totalorder %s115, 1
      %p369 = por %p367, %p368
      %p371 = scmp.ne.s32.totalorder %s356, %s370
      %p372 = scmp.eq.s32.totalorder %s115, 0
      %p373 = por %p371, %p372
      %s375 = sadd.s32 %s374, 1
      %p378 = scmp.eq.s32.totalorder %s109, 1
      %p379 = scmp.ne.s32.totalorder %s374, %s376
      %p380 = scmp.eq.s32.totalorder %s109, 0
      %p381 = por %p379, %p380
      %p382 = scmp.ne.s32.totalorder %s374, %s376
      %p383 = scmp.eq.s32.totalorder %s114, 1
      %p384 = por %p382, %p383
      %p385 = scmp.ne.s32.totalorder %s376, %s377
      %p386 = scmp.eq.s32.totalorder %s114, 0
      %p387 = por %p385, %p386
      %p388 = scmp.ne.s32.totalorder %s376, %s377
      %p389 = scmp.eq.s32.totalorder %s115, 1
      %p390 = por %p388, %p389
      %p392 = scmp.ne.s32.totalorder %s377, %s391
      %p393 = scmp.eq.s32.totalorder %s115, 0
      %p394 = por %p392, %p393
      %s396 = sadd.s32 %s395, 1
      %p399 = scmp.eq.s32.totalorder %s109, 1
      %p400 = scmp.ne.s32.totalorder %s395, %s397
      %p401 = scmp.eq.s32.totalorder %s109, 0
      %p402 = por %p400, %p401
      %p403 = scmp.ne.s32.totalorder %s395, %s397
      %p404 = scmp.eq.s32.totalorder %s114, 1
      %p405 = por %p403, %p404
      %p406 = scmp.ne.s32.totalorder %s397, %s398
      %p407 = scmp.eq.s32.totalorder %s114, 0
      %p408 = por %p406, %p407
      %p409 = scmp.ne.s32.totalorder %s397, %s398
      %p410 = scmp.eq.s32.totalorder %s115, 1
      %p411 = por %p409, %p410
      %p413 = scmp.ne.s32.totalorder %s398, %s412
      %p414 = scmp.eq.s32.totalorder %s115, 0
      %p415 = por %p413, %p414
      %s417 = sadd.s32 %s416, 1
      %p420 = scmp.eq.s32.totalorder %s109, 1
      %p421 = scmp.ne.s32.totalorder %s416, %s418
      %p422 = scmp.eq.s32.totalorder %s109, 0
      %p423 = por %p421, %p422
      %p424 = scmp.ne.s32.totalorder %s416, %s418
      %p425 = scmp.eq.s32.totalorder %s114, 1
      %p426 = por %p424, %p425
      %p427 = scmp.ne.s32.totalorder %s418, %s419
      %p428 = scmp.eq.s32.totalorder %s114, 0
      %p429 = por %p427, %p428
      %p430 = scmp.ne.s32.totalorder %s418, %s419
      %p431 = scmp.eq.s32.totalorder %s115, 1
      %p432 = por %p430, %p431
      %p434 = scmp.ne.s32.totalorder %s419, %s433
      %p435 = scmp.eq.s32.totalorder %s115, 0
      %p436 = por %p434, %p435
      %s438 = sadd.s32 %s437, 1
      %p441 = scmp.eq.s32.totalorder %s109, 1
      %p442 = scmp.ne.s32.totalorder %s437, %s439
      %p443 = scmp.eq.s32.totalorder %s109, 0
      %p444 = por %p442, %p443
      %p445 = scmp.ne.s32.totalorder %s437, %s439
      %p446 = scmp.eq.s32.totalorder %s114, 1
      %p447 = por %p445, %p446
      %p448 = scmp.ne.s32.totalorder %s439, %s440
      %p449 = scmp.eq.s32.totalorder %s114, 0
      %p450 = por %p448, %p449
      %p451 = scmp.ne.s32.totalorder %s439, %s440
      %p452 = scmp.eq.s32.totalorder %s115, 1
      %p453 = por %p451, %p452
      %p455 = scmp.ne.s32.totalorder %s440, %s454
      %p456 = scmp.eq.s32.totalorder %s115, 0
      %p457 = por %p455, %p456
      %s459 = sadd.s32 %s458, 1
      %p462 = scmp.eq.s32.totalorder %s109, 1
      %p463 = scmp.ne.s32.totalorder %s458, %s460
      %p464 = scmp.eq.s32.totalorder %s109, 0
      %p465 = por %p463, %p464
      %p466 = scmp.ne.s32.totalorder %s458, %s460
      %p467 = scmp.eq.s32.totalorder %s114, 1
      %p468 = por %p466, %p467
      %p469 = scmp.ne.s32.totalorder %s460, %s461
      %p470 = scmp.eq.s32.totalorder %s114, 0
      %p471 = por %p469, %p470
      %p472 = scmp.ne.s32.totalorder %s460, %s461
      %p473 = scmp.eq.s32.totalorder %s115, 1
      %p474 = por %p472, %p473
      %p476 = scmp.ne.s32.totalorder %s461, %s475
      %p477 = scmp.eq.s32.totalorder %s115, 0
      %p478 = por %p476, %p477
      %s480 = sadd.s32 %s479, 1
      %p483 = scmp.eq.s32.totalorder %s109, 1
      %p484 = scmp.ne.s32.totalorder %s479, %s481
      %p485 = scmp.eq.s32.totalorder %s109, 0
      %p486 = por %p484, %p485
      %p487 = scmp.ne.s32.totalorder %s479, %s481
      %p488 = scmp.eq.s32.totalorder %s114, 1
      %p489 = por %p487, %p488
      %p490 = scmp.ne.s32.totalorder %s481, %s482
      %p491 = scmp.eq.s32.totalorder %s114, 0
      %p492 = por %p490, %p491
      %p493 = scmp.ne.s32.totalorder %s481, %s482
      %p494 = scmp.eq.s32.totalorder %s115, 1
      %p495 = por %p493, %p494
      %p497 = scmp.ne.s32.totalorder %s482, %s496
      %p498 = scmp.eq.s32.totalorder %s115, 0
      %p499 = por %p497, %p498
      %s501 = sadd.s32 %s500, 1
      %p504 = scmp.eq.s32.totalorder %s109, 1
      %p505 = scmp.ne.s32.totalorder %s500, %s502
      %p506 = scmp.eq.s32.totalorder %s109, 0
      %p507 = por %p505, %p506
      %p508 = scmp.ne.s32.totalorder %s500, %s502
      %p509 = scmp.eq.s32.totalorder %s114, 1
      %p510 = por %p508, %p509
      %p511 = scmp.ne.s32.totalorder %s502, %s503
      %p512 = scmp.eq.s32.totalorder %s114, 0
      %p513 = por %p511, %p512
      %p514 = scmp.ne.s32.totalorder %s502, %s503
      %p515 = scmp.eq.s32.totalorder %s115, 1
      %p516 = por %p514, %p515
      %p518 = scmp.ne.s32.totalorder %s503, %s517
      %p519 = scmp.eq.s32.totalorder %s115, 0
      %p520 = por %p518, %p519
      %s522 = sadd.s32 %s521, 1
      %p525 = scmp.eq.s32.totalorder %s109, 1
      %p526 = scmp.ne.s32.totalorder %s521, %s523
      %p527 = scmp.eq.s32.totalorder %s109, 0
      %p528 = por %p526, %p527
      %p529 = scmp.ne.s32.totalorder %s521, %s523
      %p530 = scmp.eq.s32.totalorder %s114, 1
      %p531 = por %p529, %p530
      %p532 = scmp.ne.s32.totalorder %s523, %s524
      %p533 = scmp.eq.s32.totalorder %s114, 0
      %p534 = por %p532, %p533
      %p535 = scmp.ne.s32.totalorder %s523, %s524
      %p536 = scmp.eq.s32.totalorder %s115, 1
      %p537 = por %p535, %p536
      %p539 = scmp.ne.s32.totalorder %s524, %s538
      %p540 = scmp.eq.s32.totalorder %s115, 0
      %p541 = por %p539, %p540
      %s543 = sadd.s32 %s542, 1
      %p546 = scmp.eq.s32.totalorder %s109, 1
      %p547 = scmp.ne.s32.totalorder %s542, %s544
      %p548 = scmp.eq.s32.totalorder %s109, 0
      %p549 = por %p547, %p548
      %p550 = scmp.ne.s32.totalorder %s542, %s544
      %p551 = scmp.eq.s32.totalorder %s114, 1
      %p552 = por %p550, %p551
      %p553 = scmp.ne.s32.totalorder %s544, %s545
      %p554 = scmp.eq.s32.totalorder %s114, 0
      %p555 = por %p553, %p554
      %p556 = scmp.ne.s32.totalorder %s544, %s545
      %p557 = scmp.eq.s32.totalorder %s115, 1
      %p558 = por %p556, %p557
      %p560 = scmp.ne.s32.totalorder %s545, %s559
      %p561 = scmp.eq.s32.totalorder %s115, 0
      %p562 = por %p560, %p561
      %s564 = sadd.s32 %s563, 1
      %p567 = scmp.eq.s32.totalorder %s109, 1
      %p568 = scmp.ne.s32.totalorder %s563, %s565
      %p569 = scmp.eq.s32.totalorder %s109, 0
      %p570 = por %p568, %p569
      %p571 = scmp.ne.s32.totalorder %s563, %s565
      %p572 = scmp.eq.s32.totalorder %s114, 1
      %p573 = por %p571, %p572
      %p574 = scmp.ne.s32.totalorder %s565, %s566
      %p575 = scmp.eq.s32.totalorder %s114, 0
      %p576 = por %p574, %p575
      %p577 = scmp.ne.s32.totalorder %s565, %s566
      %p578 = scmp.eq.s32.totalorder %s115, 1
      %p579 = por %p577, %p578
      %p581 = scmp.ne.s32.totalorder %s566, %s580
      %p582 = scmp.eq.s32.totalorder %s115, 0
      %p583 = por %p581, %p582
      %s585 = sadd.s32 %s584, 1
      %p588 = scmp.eq.s32.totalorder %s109, 1
      %p589 = scmp.ne.s32.totalorder %s584, %s586
      %p590 = scmp.eq.s32.totalorder %s109, 0
      %p591 = por %p589, %p590
      %p592 = scmp.ne.s32.totalorder %s584, %s586
      %p593 = scmp.eq.s32.totalorder %s114, 1
      %p594 = por %p592, %p593
      %p595 = scmp.ne.s32.totalorder %s586, %s587
      %p596 = scmp.eq.s32.totalorder %s114, 0
      %p597 = por %p595, %p596
      %p598 = scmp.ne.s32.totalorder %s586, %s587
      %p599 = scmp.eq.s32.totalorder %s115, 1
      %p600 = por %p598, %p599
      %p602 = scmp.ne.s32.totalorder %s587, %s601
      %p603 = scmp.eq.s32.totalorder %s115, 0
      %p604 = por %p602, %p603
      %s606 = sadd.s32 %s605, 1
      %p609 = scmp.eq.s32.totalorder %s109, 1
      %p610 = scmp.ne.s32.totalorder %s605, %s607
      %p611 = scmp.eq.s32.totalorder %s109, 0
      %p612 = por %p610, %p611
      %p613 = scmp.ne.s32.totalorder %s605, %s607
      %p614 = scmp.eq.s32.totalorder %s114, 1
      %p615 = por %p613, %p614
      %p616 = scmp.ne.s32.totalorder %s607, %s608
      %p617 = scmp.eq.s32.totalorder %s114, 0
      %p618 = por %p616, %p617
      %p619 = scmp.ne.s32.totalorder %s607, %s608
      %p620 = scmp.eq.s32.totalorder %s115, 1
      %p621 = por %p619, %p620
      %p623 = scmp.ne.s32.totalorder %s608, %s622
      %p624 = scmp.eq.s32.totalorder %s115, 0
      %p625 = por %p623, %p624
      %s627 = sadd.s32 %s626, 1
      %p630 = scmp.eq.s32.totalorder %s109, 1
      %p631 = scmp.ne.s32.totalorder %s626, %s628
      %p632 = scmp.eq.s32.totalorder %s109, 0
      %p633 = por %p631, %p632
      %p634 = scmp.ne.s32.totalorder %s626, %s628
      %p635 = scmp.eq.s32.totalorder %s114, 1
      %p636 = por %p634, %p635
      %p637 = scmp.ne.s32.totalorder %s628, %s629
      %p638 = scmp.eq.s32.totalorder %s114, 0
      %p639 = por %p637, %p638
      %p640 = scmp.ne.s32.totalorder %s628, %s629
      %p641 = scmp.eq.s32.totalorder %s115, 1
      %p642 = por %p640, %p641
      %p644 = scmp.ne.s32.totalorder %s629, %s643
      %p645 = scmp.eq.s32.totalorder %s115, 0
      %p646 = por %p644, %p645
      %s648 = sadd.s32 %s647, 1
      %p651 = scmp.eq.s32.totalorder %s109, 1
      %p652 = scmp.ne.s32.totalorder %s647, %s649
      %p653 = scmp.eq.s32.totalorder %s109, 0
      %p654 = por %p652, %p653
      %p655 = scmp.ne.s32.totalorder %s647, %s649
      %p656 = scmp.eq.s32.totalorder %s114, 1
      %p657 = por %p655, %p656
      %p658 = scmp.ne.s32.totalorder %s649, %s650
      %p659 = scmp.eq.s32.totalorder %s114, 0
      %p660 = por %p658, %p659
      %p661 = scmp.ne.s32.totalorder %s649, %s650
      %p662 = scmp.eq.s32.totalorder %s115, 1
      %p663 = por %p661, %p662
      %p665 = scmp.ne.s32.totalorder %s650, %s664
      %p666 = scmp.eq.s32.totalorder %s115, 0
      %p667 = por %p665, %p666
      %s669 = sadd.s32 %s668, 1
      %p672 = scmp.eq.s32.totalorder %s109, 1
      %p673 = scmp.ne.s32.totalorder %s668, %s670
      %p674 = scmp.eq.s32.totalorder %s109, 0
      %p675 = por %p673, %p674
      %p676 = scmp.ne.s32.totalorder %s668, %s670
      %p677 = scmp.eq.s32.totalorder %s114, 1
      %p678 = por %p676, %p677
      %p679 = scmp.ne.s32.totalorder %s670, %s671
      %p680 = scmp.eq.s32.totalorder %s114, 0
      %p681 = por %p679, %p680
      %p682 = scmp.ne.s32.totalorder %s670, %s671
      %p683 = scmp.eq.s32.totalorder %s115, 1
      %p684 = por %p682, %p683
      %p686 = scmp.ne.s32.totalorder %s671, %s685
      %p687 = scmp.eq.s32.totalorder %s115, 0
      %p688 = por %p686, %p687
      %s690 = sadd.s32 %s689, 1
      %p693 = scmp.eq.s32.totalorder %s109, 1
      %p694 = scmp.ne.s32.totalorder %s689, %s691
      %p695 = scmp.eq.s32.totalorder %s109, 0
      %p696 = por %p694, %p695
      %p697 = scmp.ne.s32.totalorder %s689, %s691
      %p698 = scmp.eq.s32.totalorder %s114, 1
      %p699 = por %p697, %p698
      %p700 = scmp.ne.s32.totalorder %s691, %s692
      %p701 = scmp.eq.s32.totalorder %s114, 0
      %p702 = por %p700, %p701
      %p703 = scmp.ne.s32.totalorder %s691, %s692
      %p704 = scmp.eq.s32.totalorder %s115, 1
      %p705 = por %p703, %p704
      %p707 = scmp.ne.s32.totalorder %s692, %s706
      %p708 = scmp.eq.s32.totalorder %s115, 0
      %p709 = por %p707, %p708
      %s711 = sadd.s32 %s710, 1
      %p714 = scmp.eq.s32.totalorder %s109, 1
      %p715 = scmp.ne.s32.totalorder %s710, %s712
      %p716 = scmp.eq.s32.totalorder %s109, 0
      %p717 = por %p715, %p716
      %p718 = scmp.ne.s32.totalorder %s710, %s712
      %p719 = scmp.eq.s32.totalorder %s114, 1
      %p720 = por %p718, %p719
      %p721 = scmp.ne.s32.totalorder %s712, %s713
      %p722 = scmp.eq.s32.totalorder %s114, 0
      %p723 = por %p721, %p722
      %p724 = scmp.ne.s32.totalorder %s712, %s713
      %p725 = scmp.eq.s32.totalorder %s115, 1
      %p726 = por %p724, %p725
      %p728 = scmp.ne.s32.totalorder %s713, %s727
      %p729 = scmp.eq.s32.totalorder %s115, 0
      %p730 = por %p728, %p729
      %s732 = sadd.s32 %s731, 1
      %p735 = scmp.eq.s32.totalorder %s109, 1
      %p736 = scmp.ne.s32.totalorder %s731, %s733
      %p737 = scmp.eq.s32.totalorder %s109, 0
      %p738 = por %p736, %p737
      %p739 = scmp.ne.s32.totalorder %s731, %s733
      %p740 = scmp.eq.s32.totalorder %s114, 1
      %p741 = por %p739, %p740
      %p742 = scmp.ne.s32.totalorder %s733, %s734
      %p743 = scmp.eq.s32.totalorder %s114, 0
      %p744 = por %p742, %p743
      %p745 = scmp.ne.s32.totalorder %s733, %s734
      %p746 = scmp.eq.s32.totalorder %s115, 1
      %p747 = por %p745, %p746
      %p749 = scmp.ne.s32.totalorder %s734, %s748
      %p750 = scmp.eq.s32.totalorder %s115, 0
      %p751 = por %p749, %p750
      %s753 = sadd.s32 %s752, 1
      %p756 = scmp.eq.s32.totalorder %s109, 1
      %p757 = scmp.ne.s32.totalorder %s752, %s754
      %p758 = scmp.eq.s32.totalorder %s109, 0
      %p759 = por %p757, %p758
      %p760 = scmp.ne.s32.totalorder %s752, %s754
      %p761 = scmp.eq.s32.totalorder %s114, 1
      %p762 = por %p760, %p761
      %p763 = scmp.ne.s32.totalorder %s754, %s755
      %p764 = scmp.eq.s32.totalorder %s114, 0
      %p765 = por %p763, %p764
      %p766 = scmp.ne.s32.totalorder %s754, %s755
      %p767 = scmp.eq.s32.totalorder %s115, 1
      %p768 = por %p766, %p767
      %p770 = scmp.ne.s32.totalorder %s755, %s769
      %p771 = scmp.eq.s32.totalorder %s115, 0
      %p772 = por %p770, %p771
      %s774 = sadd.s32 %s773, 1
      %p777 = scmp.eq.s32.totalorder %s109, 1
      %p778 = scmp.ne.s32.totalorder %s773, %s775
      %p779 = scmp.eq.s32.totalorder %s109, 0
      %p780 = por %p778, %p779
      %p781 = scmp.ne.s32.totalorder %s773, %s775
      %p782 = scmp.eq.s32.totalorder %s114, 1
      %p783 = por %p781, %p782
      %p784 = scmp.ne.s32.totalorder %s775, %s776
      %p785 = scmp.eq.s32.totalorder %s114, 0
      %p786 = por %p784, %p785
      %p787 = scmp.ne.s32.totalorder %s775, %s776
      %p788 = scmp.eq.s32.totalorder %s115, 1
      %p789 = por %p787, %p788
      %p791 = scmp.ne.s32.totalorder %s776, %s790
      %p792 = scmp.eq.s32.totalorder %s115, 0
      %p793 = por %p791, %p792
      %s795 = sadd.s32 %s794, 1
      %p798 = scmp.eq.s32.totalorder %s109, 1
      %p799 = scmp.ne.s32.totalorder %s794, %s796
      %p800 = scmp.eq.s32.totalorder %s109, 0
      %p801 = por %p799, %p800
      %p802 = scmp.ne.s32.totalorder %s794, %s796
      %p803 = scmp.eq.s32.totalorder %s114, 1
      %p804 = por %p802, %p803
      %p805 = scmp.ne.s32.totalorder %s796, %s797
      %p806 = scmp.eq.s32.totalorder %s114, 0
      %p807 = por %p805, %p806
      %p808 = scmp.ne.s32.totalorder %s796, %s797
      %p809 = scmp.eq.s32.totalorder %s115, 1
      %p810 = por %p808, %p809
      %p812 = scmp.ne.s32.totalorder %s797, %s811
      %p813 = scmp.eq.s32.totalorder %s115, 0
      %p814 = por %p812, %p813
      %s816 = sadd.s32 %s815, 1
      %p819 = scmp.eq.s32.totalorder %s109, 1
      %p820 = scmp.ne.s32.totalorder %s815, %s817
      %p821 = scmp.eq.s32.totalorder %s109, 0
      %p822 = por %p820, %p821
      %p823 = scmp.ne.s32.totalorder %s815, %s817
      %p824 = scmp.eq.s32.totalorder %s114, 1
      %p825 = por %p823, %p824
      %p826 = scmp.ne.s32.totalorder %s817, %s818
      %p827 = scmp.eq.s32.totalorder %s114, 0
      %p828 = por %p826, %p827
      %p829 = scmp.ne.s32.totalorder %s817, %s818
      %p830 = scmp.eq.s32.totalorder %s115, 1
      %p831 = por %p829, %p830
      %p833 = scmp.ne.s32.totalorder %s818, %s832
      %p834 = scmp.eq.s32.totalorder %s115, 0
      %p835 = por %p833, %p834
      %s837 = sadd.s32 %s836, 1
      %p840 = scmp.eq.s32.totalorder %s109, 1
      %p841 = scmp.ne.s32.totalorder %s836, %s838
      %p842 = scmp.eq.s32.totalorder %s109, 0
      %p843 = por %p841, %p842
      %p844 = scmp.ne.s32.totalorder %s836, %s838
      %p845 = scmp.eq.s32.totalorder %s114, 1
      %p846 = por %p844, %p845
      %p847 = scmp.ne.s32.totalorder %s838, %s839
      %p848 = scmp.eq.s32.totalorder %s114, 0
      %p849 = por %p847, %p848
      %p850 = scmp.ne.s32.totalorder %s838, %s839
      %p851 = scmp.eq.s32.totalorder %s115, 1
      %p852 = por %p850, %p851
      %p854 = scmp.ne.s32.totalorder %s839, %s853
      %p855 = scmp.eq.s32.totalorder %s115, 0
      %p856 = por %p854, %p855
      %s858 = sadd.s32 %s857, 1
      %p861 = scmp.eq.s32.totalorder %s109, 1
      %p862 = scmp.ne.s32.totalorder %s857, %s859
      %p863 = scmp.eq.s32.totalorder %s109, 0
      %p864 = por %p862, %p863
      %p865 = scmp.ne.s32.totalorder %s857, %s859
      %p866 = scmp.eq.s32.totalorder %s114, 1
      %p867 = por %p865, %p866
      %p868 = scmp.ne.s32.totalorder %s859, %s860
      %p869 = scmp.eq.s32.totalorder %s114, 0
      %p870 = por %p868, %p869
      %p871 = scmp.ne.s32.totalorder %s859, %s860
      %p872 = scmp.eq.s32.totalorder %s115, 1
      %p873 = por %p871, %p872
      %p875 = scmp.ne.s32.totalorder %s860, %s874
      %p876 = scmp.eq.s32.totalorder %s115, 0
      %p877 = por %p875, %p876
      %s879 = sadd.s32 %s878, 1
      %p882 = scmp.eq.s32.totalorder %s109, 1
      %p883 = scmp.ne.s32.totalorder %s878, %s880
      %p884 = scmp.eq.s32.totalorder %s109, 0
      %p885 = por %p883, %p884
      %p886 = scmp.ne.s32.totalorder %s878, %s880
      %p887 = scmp.eq.s32.totalorder %s114, 1
      %p888 = por %p886, %p887
      %p889 = scmp.ne.s32.totalorder %s880, %s881
      %p890 = scmp.eq.s32.totalorder %s114, 0
      %p891 = por %p889, %p890
      %p892 = scmp.ne.s32.totalorder %s880, %s881
      %p893 = scmp.eq.s32.totalorder %s115, 1
      %p894 = por %p892, %p893
      %p896 = scmp.ne.s32.totalorder %s881, %s895
      %p897 = scmp.eq.s32.totalorder %s115, 0
      %p898 = por %p896, %p897
      %s900 = sadd.s32 %s899, 1
      %p903 = scmp.eq.s32.totalorder %s109, 1
      %p904 = scmp.ne.s32.totalorder %s899, %s901
      %p905 = scmp.eq.s32.totalorder %s109, 0
      %p906 = por %p904, %p905
      %p907 = scmp.ne.s32.totalorder %s899, %s901
      %p908 = scmp.eq.s32.totalorder %s114, 1
      %p909 = por %p907, %p908
      %p910 = scmp.ne.s32.totalorder %s901, %s902
      %p911 = scmp.eq.s32.totalorder %s114, 0
      %p912 = por %p910, %p911
      %p913 = scmp.ne.s32.totalorder %s901, %s902
      %p914 = scmp.eq.s32.totalorder %s115, 1
      %p915 = por %p913, %p914
      %p917 = scmp.ne.s32.totalorder %s902, %s916
      %p918 = scmp.eq.s32.totalorder %s115, 0
      %p919 = por %p917, %p918
      %s921 = sadd.s32 %s920, 1
      %p924 = scmp.eq.s32.totalorder %s109, 1
      %p925 = scmp.ne.s32.totalorder %s920, %s922
      %p926 = scmp.eq.s32.totalorder %s109, 0
      %p927 = por %p925, %p926
      %p928 = scmp.ne.s32.totalorder %s920, %s922
      %p929 = scmp.eq.s32.totalorder %s114, 1
      %p930 = por %p928, %p929
      %p931 = scmp.ne.s32.totalorder %s922, %s923
      %p932 = scmp.eq.s32.totalorder %s114, 0
      %p933 = por %p931, %p932
      %p934 = scmp.ne.s32.totalorder %s922, %s923
      %p935 = scmp.eq.s32.totalorder %s115, 1
      %p936 = por %p934, %p935
      %p938 = scmp.ne.s32.totalorder %s923, %s937
      %p939 = scmp.eq.s32.totalorder %s115, 0
      %p940 = por %p938, %p939
      %s942 = sadd.s32 %s941, 1
      %p945 = scmp.eq.s32.totalorder %s109, 1
      %p946 = scmp.ne.s32.totalorder %s941, %s943
      %p947 = scmp.eq.s32.totalorder %s109, 0
      %p948 = por %p946, %p947
      %p949 = scmp.ne.s32.totalorder %s941, %s943
      %p950 = scmp.eq.s32.totalorder %s114, 1
      %p951 = por %p949, %p950
      %p952 = scmp.ne.s32.totalorder %s943, %s944
      %p953 = scmp.eq.s32.totalorder %s114, 0
      %p954 = por %p952, %p953
      %p955 = scmp.ne.s32.totalorder %s943, %s944
      %p956 = scmp.eq.s32.totalorder %s115, 1
      %p957 = por %p955, %p956
      %p959 = scmp.ne.s32.totalorder %s944, %s958
      %p960 = scmp.eq.s32.totalorder %s115, 0
      %p961 = por %p959, %p960
      %s963 = sadd.s32 %s962, 1
      %p966 = scmp.eq.s32.totalorder %s109, 1
      %p967 = scmp.ne.s32.totalorder %s962, %s964
      %p968 = scmp.eq.s32.totalorder %s109, 0
      %p969 = por %p967, %p968
      %p970 = scmp.ne.s32.totalorder %s962, %s964
      %p971 = scmp.eq.s32.totalorder %s114, 1
      %p972 = por %p970, %p971
      %p973 = scmp.ne.s32.totalorder %s964, %s965
      %p974 = scmp.eq.s32.totalorder %s114, 0
      %p975 = por %p973, %p974
      %p976 = scmp.ne.s32.totalorder %s964, %s965
      %p977 = scmp.eq.s32.totalorder %s115, 1
      %p978 = por %p976, %p977
      %p980 = scmp.ne.s32.totalorder %s965, %s979
      %p981 = scmp.eq.s32.totalorder %s115, 0
      %p982 = por %p980, %p981
      %s984 = sadd.s32 %s983, 1
      %p987 = scmp.eq.s32.totalorder %s109, 1
      %p988 = scmp.ne.s32.totalorder %s983, %s985
      %p989 = scmp.eq.s32.totalorder %s109, 0
      %p990 = por %p988, %p989
      %p991 = scmp.ne.s32.totalorder %s983, %s985
      %p992 = scmp.eq.s32.totalorder %s114, 1
      %p993 = por %p991, %p992
      %p994 = scmp.ne.s32.totalorder %s985, %s986
      %p995 = scmp.eq.s32.totalorder %s114, 0
      %p996 = por %p994, %p995
      %p997 = scmp.ne.s32.totalorder %s985, %s986
      %p998 = scmp.eq.s32.totalorder %s115, 1
      %p999 = por %p997, %p998
      %p1001 = scmp.ne.s32.totalorder %s986, %s1000
      %p1002 = scmp.eq.s32.totalorder %s115, 0
      %p1003 = por %p1001, %p1002
      %s1005 = sadd.s32 %s1004, 1
      %p1008 = scmp.eq.s32.totalorder %s109, 1
      %p1009 = scmp.ne.s32.totalorder %s1004, %s1006
      %p1010 = scmp.eq.s32.totalorder %s109, 0
      %p1011 = por %p1009, %p1010
      %p1012 = scmp.ne.s32.totalorder %s1004, %s1006
      %p1013 = scmp.eq.s32.totalorder %s114, 1
      %p1014 = por %p1012, %p1013
      %p1015 = scmp.ne.s32.totalorder %s1006, %s1007
      %p1016 = scmp.eq.s32.totalorder %s114, 0
      %p1017 = por %p1015, %p1016
      %p1018 = scmp.ne.s32.totalorder %s1006, %s1007
      %p1019 = scmp.eq.s32.totalorder %s115, 1
      %p1020 = por %p1018, %p1019
      %p1022 = scmp.ne.s32.totalorder %s1007, %s1021
      %p1023 = scmp.eq.s32.totalorder %s115, 0
      %p1024 = por %p1022, %p1023
      %s1025 = ssub.s32 %s109, %s116
      %p1026 = scmp.eq.s32.totalorder %s1025, 0
      %s1028 = sadd.s32 %s1027, 1
      %s1029 = scalar_select %p1026, %s1027, %s1028
      %p1032 = pneg %p1026
      %p1033 = scmp.eq.s32.totalorder %s109, 1
      %p1034 = por %p1032, %p1033
      %p1035 = scmp.ne.s32.totalorder %s1027, %s1030
      %p1036 = scmp.eq.s32.totalorder %s109, 0
      %p1037 = por %p1035, %p1036
      %p1038 = scmp.ne.s32.totalorder %s1027, %s1030
      %p1039 = scmp.eq.s32.totalorder %s114, 1
      %p1040 = por %p1038, %p1039
      %p1041 = scmp.ne.s32.totalorder %s1030, %s1031
      %p1042 = scmp.eq.s32.totalorder %s114, 0
      %p1043 = por %p1041, %p1042
      %p1044 = scmp.ne.s32.totalorder %s1030, %s1031
      %p1045 = scmp.eq.s32.totalorder %s115, 1
      %p1046 = por %p1044, %p1045
      %p1048 = scmp.ne.s32.totalorder %s1031, %s1047
      %p1049 = scmp.eq.s32.totalorder %s115, 0
      %p1050 = por %p1048, %p1049
      %p1051 = scmp.le.s32.totalorder 1, %s109
      %p1052 = scmp.lt.s32.totalorder %s109, 3
      %p1053 = pnand %p1051, %p1052
      %p1054 = pneg %p1053
      // Predicated region
      $region9: #{resnet_forward.1} parent=5 // pred_check
        _
      $region10: #{resnet_forward.1} parent=5 // pred_check_branch
        %1056 = sbr.rel (%p1053) target = $region12
      $region11: #{resnet_forward.1} parent=5 // pred_region
        %s1057 = ssub.s32 %s109, 1
        // Predicated region
        $region13: #{resnet_forward.1} parent=11 // pred_check
          %p1058 = pneg %p156
        $region14: #{resnet_forward.1} parent=11 // pred_check_branch
          %1060 = sbr.rel (%p1058) target = $region16
        $region15: #{resnet_forward.1} parent=11 // pred_region
          _
        $region16: #{resnet_forward.1} parent=11 // pred_fallthru
          _
        // Predicated region
        $region17: #{resnet_forward.1} parent=11 // pred_check
          %p1061 = pneg %p177
        $region18: #{resnet_forward.1} parent=11 // pred_check_branch
          %1063 = sbr.rel (%p1061) target = $region20
        $region19: #{resnet_forward.1} parent=11 // pred_region
          _
        $region20: #{resnet_forward.1} parent=11 // pred_fallthru
          _
        // Predicated region
        $region21: #{resnet_forward.1} parent=11 // pred_check
          %p1064 = pneg %p198
        $region22: #{resnet_forward.1} parent=11 // pred_check_branch
          %1066 = sbr.rel (%p1064) target = $region24
        $region23: #{resnet_forward.1} parent=11 // pred_region
          _
        $region24: #{resnet_forward.1} parent=11 // pred_fallthru
          _
        // Predicated region
        $region25: #{resnet_forward.1} parent=11 // pred_check
          %p1067 = pneg %p219
        $region26: #{resnet_forward.1} parent=11 // pred_check_branch
          %1069 = sbr.rel (%p1067) target = $region28
        $region27: #{resnet_forward.1} parent=11 // pred_region
          %s1071 = ssub.s32 16, 16
          %1072 = vsyncadd [#allocation4], %s1071
          %s1074 = sshll.u32 [#allocation3], 4
          %s1075 = int_to_ptr.vmem [resolvable:$true] %s1074
          %1077 = dma.hbm_to_vmem [thread:$0]  %s9, 16, %s1075, [#allocation4]
        $region28: #{resnet_forward.1} parent=11 // pred_fallthru
          _
        // Predicated region
        $region29: #{resnet_forward.1} parent=11 // pred_check
          %p1078 = pneg %p240
        $region30: #{resnet_forward.1} parent=11 // pred_check_branch
          %1080 = sbr.rel (%p1078) target = $region32
        $region31: #{resnet_forward.1} parent=11 // pred_region
          _
        $region32: #{resnet_forward.1} parent=11 // pred_fallthru
          _
        // Predicated region
        $region33: #{resnet_forward.1} parent=11 // pred_check
          %p1081 = pneg %p261
        $region34: #{resnet_forward.1} parent=11 // pred_check_branch
          %1083 = sbr.rel (%p1081) target = $region36
        $region35: #{resnet_forward.1} parent=11 // pred_region
          %s1085 = ssub.s32 16, 16
          %1086 = vsyncadd [#allocation6], %s1085
          %s1088 = sshll.u32 [#allocation5], 4
          %s1089 = int_to_ptr.vmem [resolvable:$true] %s1088
          %1091 = dma.hbm_to_vmem [thread:$0]  %s13, 16, %s1089, [#allocation6]
        $region36: #{resnet_forward.1} parent=11 // pred_fallthru
          _
        // Predicated region
        $region37: #{resnet_forward.1} parent=11 // pred_check
          %p1092 = pneg %p282
        $region38: #{resnet_forward.1} parent=11 // pred_check_branch
          %1094 = sbr.rel (%p1092) target = $region40
        $region39: #{resnet_forward.1} parent=11 // pred_region
          _
        $region40: #{resnet_forward.1} parent=11 // pred_fallthru
          _
        // Predicated region
        $region41: #{resnet_forward.1} parent=11 // pred_check
          %p1095 = pneg %p303
        $region42: #{resnet_forward.1} parent=11 // pred_check_branch
          %1097 = sbr.rel (%p1095) target = $region44
        $region43: #{resnet_forward.1} parent=11 // pred_region
          %s1099 = ssub.s32 16, 16
          %1100 = vsyncadd [#allocation6], %s1099
          %s1102 = sshll.u32 [#allocation7], 4
          %s1103 = int_to_ptr.vmem [resolvable:$true] %s1102
          %1105 = dma.hbm_to_vmem [thread:$0]  %s17, 16, %s1103, [#allocation6]
        $region44: #{resnet_forward.1} parent=11 // pred_fallthru
          _
        // Predicated region
        $region45: #{resnet_forward.1} parent=11 // pred_check
          %p1106 = pneg %p324
        $region46: #{resnet_forward.1} parent=11 // pred_check_branch
          %1108 = sbr.rel (%p1106) target = $region48
        $region47: #{resnet_forward.1} parent=11 // pred_region
          _
        $region48: #{resnet_forward.1} parent=11 // pred_fallthru
          _
        // Predicated region
        $region49: #{resnet_forward.1} parent=11 // pred_check
          %p1109 = pneg %p345
        $region50: #{resnet_forward.1} parent=11 // pred_check_branch
          %1111 = sbr.rel (%p1109) target = $region52
        $region51: #{resnet_forward.1} parent=11 // pred_region
          %s1113 = ssub.s32 16, 16
          %1114 = vsyncadd [#allocation9], %s1113
          %s1116 = sshll.u32 [#allocation8], 4
          %s1117 = int_to_ptr.vmem [resolvable:$true] %s1116
          %1119 = dma.hbm_to_vmem [thread:$0]  %s21, 16, %s1117, [#allocation9]
        $region52: #{resnet_forward.1} parent=11 // pred_fallthru
          _
        // Predicated region
        $region53: #{resnet_forward.1} parent=11 // pred_check
          %p1120 = pneg %p366
        $region54: #{resnet_forward.1} parent=11 // pred_check_branch
          %1122 = sbr.rel (%p1120) target = $region56
        $region55: #{resnet_forward.1} parent=11 // pred_region
          _
        $region56: #{resnet_forward.1} parent=11 // pred_fallthru
          _
        // Predicated region
        $region57: #{resnet_forward.1} parent=11 // pred_check
          %p1123 = pneg %p387
        $region58: #{resnet_forward.1} parent=11 // pred_check_branch
          %1125 = sbr.rel (%p1123) target = $region60
        $region59: #{resnet_forward.1} parent=11 // pred_region
          %s1127 = ssub.s32 16, 16
          %1128 = vsyncadd [#allocation9], %s1127
          %s1130 = sshll.u32 [#allocation10], 4
          %s1131 = int_to_ptr.vmem [resolvable:$true] %s1130
          %1133 = dma.hbm_to_vmem [thread:$0]  %s25, 16, %s1131, [#allocation9]
        $region60: #{resnet_forward.1} parent=11 // pred_fallthru
          _
        // Predicated region
        $region61: #{resnet_forward.1} parent=11 // pred_check
          %p1134 = pneg %p408
        $region62: #{resnet_forward.1} parent=11 // pred_check_branch
          %1136 = sbr.rel (%p1134) target = $region64
        $region63: #{resnet_forward.1} parent=11 // pred_region
          %s1138 = ssub.s32 256, 256
          %1139 = vsyncadd [#allocation12], %s1138
          %s1140 = sshll.u32 [#allocation11], 4
          %s1141 = int_to_ptr.vmem [resolvable:$true] %s1140
          %1146 = dma.hbm_to_vmem [thread:$0]  %s27, 256, %s1141, [#allocation12], 64, 64, 4
        $region64: #{resnet_forward.1} parent=11 // pred_fallthru
          _
        // Predicated region
        $region65: #{resnet_forward.1} parent=11 // pred_check
          %p1147 = pneg %p429
        $region66: #{resnet_forward.1} parent=11 // pred_check_branch
          %1149 = sbr.rel (%p1147) target = $region68
        $region67: #{resnet_forward.1} parent=11 // pred_region
          %s1151 = ssub.s32 16, 16
          %1152 = vsyncadd [#allocation12], %s1151
          %s1154 = sshll.u32 [#allocation13], 4
          %s1155 = int_to_ptr.vmem [resolvable:$true] %s1154
          %1157 = dma.hbm_to_vmem [thread:$0]  %s29, 16, %s1155, [#allocation12]
        $region68: #{resnet_forward.1} parent=11 // pred_fallthru
          _
        // Predicated region
        $region69: #{resnet_forward.1} parent=11 // pred_check
          %p1158 = pneg %p450
        $region70: #{resnet_forward.1} parent=11 // pred_check_branch
          %1160 = sbr.rel (%p1158) target = $region72
        $region71: #{resnet_forward.1} parent=11 // pred_region
          _
        $region72: #{resnet_forward.1} parent=11 // pred_fallthru
          _
        // Predicated region
        $region73: #{resnet_forward.1} parent=11 // pred_check
          %p1161 = pneg %p471
        $region74: #{resnet_forward.1} parent=11 // pred_check_branch
          %1163 = sbr.rel (%p1161) target = $region76
        $region75: #{resnet_forward.1} parent=11 // pred_region
          %s1165 = ssub.s32 16, 16
          %1166 = vsyncadd [#allocation15], %s1165
          %s1168 = sshll.u32 [#allocation14], 4
          %s1169 = int_to_ptr.vmem [resolvable:$true] %s1168
          %1171 = dma.hbm_to_vmem [thread:$0]  %s33, 16, %s1169, [#allocation15]
        $region76: #{resnet_forward.1} parent=11 // pred_fallthru
          _
        // Predicated region
        $region77: #{resnet_forward.1} parent=11 // pred_check
          %p1172 = pneg %p492
        $region78: #{resnet_forward.1} parent=11 // pred_check_branch
          %1174 = sbr.rel (%p1172) target = $region80
        $region79: #{resnet_forward.1} parent=11 // pred_region
          _
        $region80: #{resnet_forward.1} parent=11 // pred_fallthru
          _
        // Predicated region
        $region81: #{resnet_forward.1} parent=11 // pred_check
          %p1175 = pneg %p513
        $region82: #{resnet_forward.1} parent=11 // pred_check_branch
          %1177 = sbr.rel (%p1175) target = $region84
        $region83: #{resnet_forward.1} parent=11 // pred_region
          %s1179 = ssub.s32 16, 16
          %1180 = vsyncadd [#allocation15], %s1179
          %s1182 = sshll.u32 [#allocation16], 4
          %s1183 = int_to_ptr.vmem [resolvable:$true] %s1182
          %1185 = dma.hbm_to_vmem [thread:$0]  %s37, 16, %s1183, [#allocation15]
        $region84: #{resnet_forward.1} parent=11 // pred_fallthru
          _
        // Predicated region
        $region85: #{resnet_forward.1} parent=11 // pred_check
          %p1186 = pneg %p534
        $region86: #{resnet_forward.1} parent=11 // pred_check_branch
          %1188 = sbr.rel (%p1186) target = $region88
        $region87: #{resnet_forward.1} parent=11 // pred_region
          _
        $region88: #{resnet_forward.1} parent=11 // pred_fallthru
          _
        // Predicated region
        $region89: #{resnet_forward.1} parent=11 // pred_check
          %p1189 = pneg %p555
        $region90: #{resnet_forward.1} parent=11 // pred_check_branch
          %1191 = sbr.rel (%p1189) target = $region92
        $region91: #{resnet_forward.1} parent=11 // pred_region
          %s1193 = ssub.s32 16, 16
          %1194 = vsyncadd [#allocation18], %s1193
          %s1196 = sshll.u32 [#allocation17], 4
          %s1197 = int_to_ptr.vmem [resolvable:$true] %s1196
          %1199 = dma.hbm_to_vmem [thread:$0]  %s41, 16, %s1197, [#allocation18]
        $region92: #{resnet_forward.1} parent=11 // pred_fallthru
          _
        // Predicated region
        $region93: #{resnet_forward.1} parent=11 // pred_check
          %p1200 = pneg %p576
        $region94: #{resnet_forward.1} parent=11 // pred_check_branch
          %1202 = sbr.rel (%p1200) target = $region96
        $region95: #{resnet_forward.1} parent=11 // pred_region
          %s1204 = ssub.s32 1536, 1536
          %1205 = vsyncadd [#allocation18], %s1204
          %s1206 = sshll.u32 [#allocation19], 4
          %s1207 = int_to_ptr.vmem [resolvable:$true] %s1206
          %1212 = dma.hbm_to_vmem [thread:$0]  %s43, 1536, %s1207, [#allocation18], 64, 64, 4
        $region96: #{resnet_forward.1} parent=11 // pred_fallthru
          _
        // Predicated region
        $region97: #{resnet_forward.1} parent=11 // pred_check
          %p1213 = pneg %p597
        $region98: #{resnet_forward.1} parent=11 // pred_check_branch
          %1215 = sbr.rel (%p1213) target = $region100
        $region99: #{resnet_forward.1} parent=11 // pred_region
          %s1217 = ssub.s32 16, 16
          %1218 = vsyncadd [#allocation21], %s1217
          %s1220 = sshll.u32 [#allocation20], 4
          %s1221 = int_to_ptr.vmem [resolvable:$true] %s1220
          %1223 = dma.hbm_to_vmem [thread:$0]  %s45, 16, %s1221, [#allocation21]
        $region100: #{resnet_forward.1} parent=11 // pred_fallthru
          _
        // Predicated region
        $region101: #{resnet_forward.1} parent=11 // pred_check
          %p1224 = pneg %p618
        $region102: #{resnet_forward.1} parent=11 // pred_check_branch
          %1226 = sbr.rel (%p1224) target = $region104
        $region103: #{resnet_forward.1} parent=11 // pred_region
          %s1228 = ssub.s32 512, 512
          %1229 = vsyncadd [#allocation21], %s1228
          %s1230 = sshll.u32 [#allocation22], 4
          %s1231 = int_to_ptr.vmem [resolvable:$true] %s1230
          %1236 = dma.hbm_to_vmem [thread:$0]  %s47, 512, %s1231, [#allocation21], 64, 64, 4
        $region104: #{resnet_forward.1} parent=11 // pred_fallthru
          _
        // Predicated region
        $region105: #{resnet_forward.1} parent=11 // pred_check
          %p1237 = pneg %p639
        $region106: #{resnet_forward.1} parent=11 // pred_check_branch
          %1239 = sbr.rel (%p1237) target = $region108
        $region107: #{resnet_forward.1} parent=11 // pred_region
          %s1241 = ssub.s32 16, 16
          %1242 = vsyncadd [#allocation24], %s1241
          %s1244 = sshll.u32 [#allocation23], 4
          %s1245 = int_to_ptr.vmem [resolvable:$true] %s1244
          %1247 = dma.hbm_to_vmem [thread:$0]  %s49, 16, %s1245, [#allocation24]
        $region108: #{resnet_forward.1} parent=11 // pred_fallthru
          _
        // Predicated region
        $region109: #{resnet_forward.1} parent=11 // pred_check
          %p1248 = pneg %p660
        $region110: #{resnet_forward.1} parent=11 // pred_check_branch
          %1250 = sbr.rel (%p1248) target = $region112
        $region111: #{resnet_forward.1} parent=11 // pred_region
          %s1252 = ssub.s32 3072, 3072
          %1253 = vsyncadd [#allocation24], %s1252
          %s1254 = sshll.u32 [#allocation25], 4
          %s1255 = int_to_ptr.vmem [resolvable:$true] %s1254
          %1260 = dma.hbm_to_vmem [thread:$0]  %s51, 3072, %s1255, [#allocation24], 64, 64, 4
        $region112: #{resnet_forward.1} parent=11 // pred_fallthru
          _
        // Predicated region
        $region113: #{resnet_forward.1} parent=11 // pred_check
          %p1261 = pneg %p681
        $region114: #{resnet_forward.1} parent=11 // pred_check_branch
          %1263 = sbr.rel (%p1261) target = $region116
        $region115: #{resnet_forward.1} parent=11 // pred_region
          %s1265 = ssub.s32 16, 16
          %1266 = vsyncadd [#allocation27], %s1265
          %s1268 = sshll.u32 [#allocation26], 4
          %s1269 = int_to_ptr.vmem [resolvable:$true] %s1268
          %1271 = dma.hbm_to_vmem [thread:$0]  %s53, 16, %s1269, [#allocation27]
        $region116: #{resnet_forward.1} parent=11 // pred_fallthru
          _
        // Predicated region
        $region117: #{resnet_forward.1} parent=11 // pred_check
          %p1272 = pneg %p702
        $region118: #{resnet_forward.1} parent=11 // pred_check_branch
          %1274 = sbr.rel (%p1272) target = $region120
        $region119: #{resnet_forward.1} parent=11 // pred_region
          %s1276 = ssub.s32 3072, 3072
          %1277 = vsyncadd [#allocation27], %s1276
          %s1278 = sshll.u32 [#allocation28], 4
          %s1279 = int_to_ptr.vmem [resolvable:$true] %s1278
          %1284 = dma.hbm_to_vmem [thread:$0]  %s55, 3072, %s1279, [#allocation27], 64, 64, 4
        $region120: #{resnet_forward.1} parent=11 // pred_fallthru
          _
        // Predicated region
        $region121: #{resnet_forward.1} parent=11 // pred_check
          %p1285 = pneg %p723
        $region122: #{resnet_forward.1} parent=11 // pred_check_branch
          %1287 = sbr.rel (%p1285) target = $region124
        $region123: #{resnet_forward.1} parent=11 // pred_region
          %s1289 = ssub.s32 16, 16
          %1290 = vsyncadd [#allocation30], %s1289
          %s1292 = sshll.u32 [#allocation29], 4
          %s1293 = int_to_ptr.vmem [resolvable:$true] %s1292
          %1295 = dma.hbm_to_vmem [thread:$0]  %s57, 16, %s1293, [#allocation30]
        $region124: #{resnet_forward.1} parent=11 // pred_fallthru
          _
        // Predicated region
        $region125: #{resnet_forward.1} parent=11 // pred_check
          %p1296 = pneg %p744
        $region126: #{resnet_forward.1} parent=11 // pred_check_branch
          %1298 = sbr.rel (%p1296) target = $region128
        $region127: #{resnet_forward.1} parent=11 // pred_region
          %s1300 = ssub.s32 3072, 3072
          %1301 = vsyncadd [#allocation30], %s1300
          %s1302 = sshll.u32 [#allocation31], 4
          %s1303 = int_to_ptr.vmem [resolvable:$true] %s1302
          %1308 = dma.hbm_to_vmem [thread:$0]  %s59, 3072, %s1303, [#allocation30], 64, 64, 4
        $region128: #{resnet_forward.1} parent=11 // pred_fallthru
          _
        // Predicated region
        $region129: #{resnet_forward.1} parent=11 // pred_check
          %p1309 = pneg %p765
        $region130: #{resnet_forward.1} parent=11 // pred_check_branch
          %1311 = sbr.rel (%p1309) target = $region132
        $region131: #{resnet_forward.1} parent=11 // pred_region
          %s1313 = ssub.s32 16, 16
          %1314 = vsyncadd [#allocation33], %s1313
          %s1316 = sshll.u32 [#allocation32], 4
          %s1317 = int_to_ptr.vmem [resolvable:$true] %s1316
          %1319 = dma.hbm_to_vmem [thread:$0]  %s61, 16, %s1317, [#allocation33]
        $region132: #{resnet_forward.1} parent=11 // pred_fallthru
          _
        // Predicated region
        $region133: #{resnet_forward.1} parent=11 // pred_check
          %p1320 = pneg %p786
        $region134: #{resnet_forward.1} parent=11 // pred_check_branch
          %1322 = sbr.rel (%p1320) target = $region136
        $region135: #{resnet_forward.1} parent=11 // pred_region
          _
        $region136: #{resnet_forward.1} parent=11 // pred_fallthru
          _
        // Predicated region
        $region137: #{resnet_forward.1} parent=11 // pred_check
          %p1323 = pneg %p807
        $region138: #{resnet_forward.1} parent=11 // pred_check_branch
          %1325 = sbr.rel (%p1323) target = $region140
        $region139: #{resnet_forward.1} parent=11 // pred_region
          _
        $region140: #{resnet_forward.1} parent=11 // pred_fallthru
          _
        // Predicated region
        $region141: #{resnet_forward.1} parent=11 // pred_check
          %p1326 = pneg %p828
        $region142: #{resnet_forward.1} parent=11 // pred_check_branch
          %1328 = sbr.rel (%p1326) target = $region144
        $region143: #{resnet_forward.1} parent=11 // pred_region
          %s1330 = ssub.s32 2048, 2048
          %1331 = vsyncadd [#allocation33], %s1330
          %s1332 = sshll.u32 [#allocation34], 4
          %s1333 = int_to_ptr.vmem [resolvable:$true] %s1332
          %1338 = dma.hbm_to_vmem [thread:$0]  %s67, 2048, %s1333, [#allocation33], 128, 128, 8
        $region144: #{resnet_forward.1} parent=11 // pred_fallthru
          _
        // Predicated region
        $region145: #{resnet_forward.1} parent=11 // pred_check
          %p1339 = pneg %p849
        $region146: #{resnet_forward.1} parent=11 // pred_check_branch
          %1341 = sbr.rel (%p1339) target = $region148
        $region147: #{resnet_forward.1} parent=11 // pred_region
          %s1343 = ssub.s32 32, 32
          %1344 = vsyncadd [#allocation36], %s1343
          %s1346 = sshll.u32 [#allocation35], 4
          %s1347 = int_to_ptr.vmem [resolvable:$true] %s1346
          %1349 = dma.hbm_to_vmem [thread:$0]  %s69, 32, %s1347, [#allocation36]
        $region148: #{resnet_forward.1} parent=11 // pred_fallthru
          _
        // Predicated region
        $region149: #{resnet_forward.1} parent=11 // pred_check
          %p1350 = pneg %p870
        $region150: #{resnet_forward.1} parent=11 // pred_check_branch
          %1352 = sbr.rel (%p1350) target = $region152
        $region151: #{resnet_forward.1} parent=11 // pred_region
          _
        $region152: #{resnet_forward.1} parent=11 // pred_fallthru
          _
        // Predicated region
        $region153: #{resnet_forward.1} parent=11 // pred_check
          %p1353 = pneg %p891
        $region154: #{resnet_forward.1} parent=11 // pred_check_branch
          %1355 = sbr.rel (%p1353) target = $region156
        $region155: #{resnet_forward.1} parent=11 // pred_region
          %s1357 = ssub.s32 32, 32
          %1358 = vsyncadd [#allocation36], %s1357
          %s1360 = sshll.u32 [#allocation37], 4
          %s1361 = int_to_ptr.vmem [resolvable:$true] %s1360
          %1363 = dma.hbm_to_vmem [thread:$0]  %s73, 32, %s1361, [#allocation36]
        $region156: #{resnet_forward.1} parent=11 // pred_fallthru
          _
        // Predicated region
        $region157: #{resnet_forward.1} parent=11 // pred_check
          %p1364 = pneg %p912
        $region158: #{resnet_forward.1} parent=11 // pred_check_branch
          %1366 = sbr.rel (%p1364) target = $region160
        $region159: #{resnet_forward.1} parent=11 // pred_region
          %s1368 = ssub.s32 12288, 12288
          %1369 = vsyncadd [#allocation39], %s1368
          %s1370 = sshll.u32 [#allocation38], 4
          %s1371 = int_to_ptr.vmem [resolvable:$true] %s1370
          %1376 = dma.hbm_to_vmem [thread:$0]  %s75, 12288, %s1371, [#allocation39], 128, 128, 8
        $region160: #{resnet_forward.1} parent=11 // pred_fallthru
          _
        // Predicated region
        $region161: #{resnet_forward.1} parent=11 // pred_check
          %p1377 = pneg %p933
        $region162: #{resnet_forward.1} parent=11 // pred_check_branch
          %1379 = sbr.rel (%p1377) target = $region164
        $region163: #{resnet_forward.1} parent=11 // pred_region
          _
        $region164: #{resnet_forward.1} parent=11 // pred_fallthru
          _
        // Predicated region
        $region165: #{resnet_forward.1} parent=11 // pred_check
          %p1380 = pneg %p954
        $region166: #{resnet_forward.1} parent=11 // pred_check_branch
          %1382 = sbr.rel (%p1380) target = $region168
        $region167: #{resnet_forward.1} parent=11 // pred_region
          %s1384 = ssub.s32 12288, 12288
          %1385 = vsyncadd [#allocation39], %s1384
          %s1386 = sshll.u32 [#allocation40], 4
          %s1387 = int_to_ptr.vmem [resolvable:$true] %s1386
          %1392 = dma.hbm_to_vmem [thread:$0]  %s79, 12288, %s1387, [#allocation39], 128, 128, 8
        $region168: #{resnet_forward.1} parent=11 // pred_fallthru
          _
        // Predicated region
        $region169: #{resnet_forward.1} parent=11 // pred_check
          %p1393 = pneg %p975
        $region170: #{resnet_forward.1} parent=11 // pred_check_branch
          %1395 = sbr.rel (%p1393) target = $region172
        $region171: #{resnet_forward.1} parent=11 // pred_region
          %s1397 = ssub.s32 32, 32
          %1398 = vsyncadd [#allocation42], %s1397
          %s1400 = sshll.u32 [#allocation41], 4
          %s1401 = int_to_ptr.vmem [resolvable:$true] %s1400
          %1403 = dma.hbm_to_vmem [thread:$0]  %s81, 32, %s1401, [#allocation42]
        $region172: #{resnet_forward.1} parent=11 // pred_fallthru
          _
        // Predicated region
        $region173: #{resnet_forward.1} parent=11 // pred_check
          %p1404 = pneg %p996
        $region174: #{resnet_forward.1} parent=11 // pred_check_branch
          %1406 = sbr.rel (%p1404) target = $region176
        $region175: #{resnet_forward.1} parent=11 // pred_region
          %s1408 = ssub.s32 32, 32
          %1409 = vsyncadd [#allocation42], %s1408
          %s1411 = sshll.u32 [#allocation43], 4
          %s1412 = int_to_ptr.vmem [resolvable:$true] %s1411
          %1414 = dma.hbm_to_vmem [thread:$0]  %s83, 32, %s1412, [#allocation42]
        $region176: #{resnet_forward.1} parent=11 // pred_fallthru
          _
        // Predicated region
        $region177: #{resnet_forward.1} parent=11 // pred_check
          %p1415 = pneg %p1017
        $region178: #{resnet_forward.1} parent=11 // pred_check_branch
          %1417 = sbr.rel (%p1415) target = $region180
        $region179: #{resnet_forward.1} parent=11 // pred_region
          _
        $region180: #{resnet_forward.1} parent=11 // pred_fallthru
          _
      $region12: #{resnet_forward.1} parent=5 // pred_fallthru
        _
      %p1418 = scmp.lt.s32.totalorder %s109, 2
      // Predicated region
      $region181: #{resnet_forward.1} parent=5 // pred_check
        %p1419 = pneg %p1418
      $region182: #{resnet_forward.1} parent=5 // pred_check_branch
        %1421 = sbr.rel (%p1419) target = $region184
      $region183: #{resnet_forward.1} parent=5 // pred_region
        // Predicated region
        $region185: #{resnet_forward.1} parent=183 // pred_check
          %p1422 = pneg %p129
        $region186: #{resnet_forward.1} parent=183 // pred_check_branch
          %1424 = sbr.rel (%p1422) target = $region188
        $region187: #{resnet_forward.1} parent=183 // pred_region
          %p1425 = scmp.lt.s32.totalorder %s109, 1
          %s1426 = scalar_select %p1425, %s109, 1
          %s1427 = smul.addr %s1426, 8
          %s1428 = smul.addr %s1427, 8
          %s1429 = scalar_lea.vmem %s1, %s1428
        $region188: #{resnet_forward.1} parent=183 // pred_fallthru
          _
      $region184: #{resnet_forward.1} parent=5 // pred_fallthru
        _
      %p1430 = scmp.le.s32.totalorder 1, %s109
      %p1431 = scmp.lt.s32.totalorder %s109, 3
      %p1432 = pnand %p1430, %p1431
      %p1433 = pneg %p1432
      // Predicated region
      $region189: #{resnet_forward.1} parent=5 // pred_check
        _
      $region190: #{resnet_forward.1} parent=5 // pred_check_branch
        %1435 = sbr.rel (%p1432) target = $region192
      $region191: #{resnet_forward.1} parent=5 // pred_region
        %s1436 = ssub.s32 %s109, 1
        // Predicated region
        $region193: #{resnet_forward.1} parent=191 // pred_check
          %p1437 = pneg %p219
        $region194: #{resnet_forward.1} parent=191 // pred_check_branch
          %1439 = sbr.rel (%p1437) target = $region196
        $region195: #{resnet_forward.1} parent=191 // pred_region
          %1440 = dma.done [#allocation4], 16
        $region196: #{resnet_forward.1} parent=191 // pred_fallthru
          _
        // Predicated region
        $region197: #{resnet_forward.1} parent=191 // pred_check
          %p1441 = pneg %p261
        $region198: #{resnet_forward.1} parent=191 // pred_check_branch
          %1443 = sbr.rel (%p1441) target = $region200
        $region199: #{resnet_forward.1} parent=191 // pred_region
          %1444 = dma.done [#allocation6], 16
        $region200: #{resnet_forward.1} parent=191 // pred_fallthru
          _
        // Predicated region
        $region201: #{resnet_forward.1} parent=191 // pred_check
          %p1445 = pneg %p303
        $region202: #{resnet_forward.1} parent=191 // pred_check_branch
          %1447 = sbr.rel (%p1445) target = $region204
        $region203: #{resnet_forward.1} parent=191 // pred_region
          %1448 = dma.done [#allocation6], 16
        $region204: #{resnet_forward.1} parent=191 // pred_fallthru
          _
        // Predicated region
        $region205: #{resnet_forward.1} parent=191 // pred_check
          %p1449 = pneg %p345
        $region206: #{resnet_forward.1} parent=191 // pred_check_branch
          %1451 = sbr.rel (%p1449) target = $region208
        $region207: #{resnet_forward.1} parent=191 // pred_region
          %1452 = dma.done [#allocation9], 16
        $region208: #{resnet_forward.1} parent=191 // pred_fallthru
          _
        // Predicated region
        $region209: #{resnet_forward.1} parent=191 // pred_check
          %p1453 = pneg %p387
        $region210: #{resnet_forward.1} parent=191 // pred_check_branch
          %1455 = sbr.rel (%p1453) target = $region212
        $region211: #{resnet_forward.1} parent=191 // pred_region
          %1456 = dma.done [#allocation9], 16
        $region212: #{resnet_forward.1} parent=191 // pred_fallthru
          _
        // Predicated region
        $region213: #{resnet_forward.1} parent=191 // pred_check
          %p1457 = pneg %p408
        $region214: #{resnet_forward.1} parent=191 // pred_check_branch
          %1459 = sbr.rel (%p1457) target = $region216
        $region215: #{resnet_forward.1} parent=191 // pred_region
          %1460 = dma.done [#allocation12], 256
        $region216: #{resnet_forward.1} parent=191 // pred_fallthru
          _
        // Predicated region
        $region217: #{resnet_forward.1} parent=191 // pred_check
          %p1461 = pneg %p429
        $region218: #{resnet_forward.1} parent=191 // pred_check_branch
          %1463 = sbr.rel (%p1461) target = $region220
        $region219: #{resnet_forward.1} parent=191 // pred_region
          %1464 = dma.done [#allocation12], 16
        $region220: #{resnet_forward.1} parent=191 // pred_fallthru
          _
        // Predicated region
        $region221: #{resnet_forward.1} parent=191 // pred_check
          %p1465 = pneg %p471
        $region222: #{resnet_forward.1} parent=191 // pred_check_branch
          %1467 = sbr.rel (%p1465) target = $region224
        $region223: #{resnet_forward.1} parent=191 // pred_region
          %1468 = dma.done [#allocation15], 16
        $region224: #{resnet_forward.1} parent=191 // pred_fallthru
          _
        // Predicated region
        $region225: #{resnet_forward.1} parent=191 // pred_check
          %p1469 = pneg %p513
        $region226: #{resnet_forward.1} parent=191 // pred_check_branch
          %1471 = sbr.rel (%p1469) target = $region228
        $region227: #{resnet_forward.1} parent=191 // pred_region
          %1472 = dma.done [#allocation15], 16
        $region228: #{resnet_forward.1} parent=191 // pred_fallthru
          _
        // Predicated region
        $region229: #{resnet_forward.1} parent=191 // pred_check
          %p1473 = pneg %p555
        $region230: #{resnet_forward.1} parent=191 // pred_check_branch
          %1475 = sbr.rel (%p1473) target = $region232
        $region231: #{resnet_forward.1} parent=191 // pred_region
          %1476 = dma.done [#allocation18], 16
        $region232: #{resnet_forward.1} parent=191 // pred_fallthru
          _
        // Predicated region
        $region233: #{resnet_forward.1} parent=191 // pred_check
          %p1477 = pneg %p576
        $region234: #{resnet_forward.1} parent=191 // pred_check_branch
          %1479 = sbr.rel (%p1477) target = $region236
        $region235: #{resnet_forward.1} parent=191 // pred_region
          %1480 = dma.done [#allocation18], 1536
        $region236: #{resnet_forward.1} parent=191 // pred_fallthru
          _
        // Predicated region
        $region237: #{resnet_forward.1} parent=191 // pred_check
          %p1481 = pneg %p597
        $region238: #{resnet_forward.1} parent=191 // pred_check_branch
          %1483 = sbr.rel (%p1481) target = $region240
        $region239: #{resnet_forward.1} parent=191 // pred_region
          %1484 = dma.done [#allocation21], 16
        $region240: #{resnet_forward.1} parent=191 // pred_fallthru
          _
        // Predicated region
        $region241: #{resnet_forward.1} parent=191 // pred_check
          %p1485 = pneg %p618
        $region242: #{resnet_forward.1} parent=191 // pred_check_branch
          %1487 = sbr.rel (%p1485) target = $region244
        $region243: #{resnet_forward.1} parent=191 // pred_region
          %1488 = dma.done [#allocation21], 512
        $region244: #{resnet_forward.1} parent=191 // pred_fallthru
          _
        // Predicated region
        $region245: #{resnet_forward.1} parent=191 // pred_check
          %p1489 = pneg %p639
        $region246: #{resnet_forward.1} parent=191 // pred_check_branch
          %1491 = sbr.rel (%p1489) target = $region248
        $region247: #{resnet_forward.1} parent=191 // pred_region
          %1492 = dma.done [#allocation24], 16
        $region248: #{resnet_forward.1} parent=191 // pred_fallthru
          _
        // Predicated region
        $region249: #{resnet_forward.1} parent=191 // pred_check
          %p1493 = pneg %p660
        $region250: #{resnet_forward.1} parent=191 // pred_check_branch
          %1495 = sbr.rel (%p1493) target = $region252
        $region251: #{resnet_forward.1} parent=191 // pred_region
          %1496 = dma.done [#allocation24], 3072
        $region252: #{resnet_forward.1} parent=191 // pred_fallthru
          _
        // Predicated region
        $region253: #{resnet_forward.1} parent=191 // pred_check
          %p1497 = pneg %p681
        $region254: #{resnet_forward.1} parent=191 // pred_check_branch
          %1499 = sbr.rel (%p1497) target = $region256
        $region255: #{resnet_forward.1} parent=191 // pred_region
          %1500 = dma.done [#allocation27], 16
        $region256: #{resnet_forward.1} parent=191 // pred_fallthru
          _
        // Predicated region
        $region257: #{resnet_forward.1} parent=191 // pred_check
          %p1501 = pneg %p702
        $region258: #{resnet_forward.1} parent=191 // pred_check_branch
          %1503 = sbr.rel (%p1501) target = $region260
        $region259: #{resnet_forward.1} parent=191 // pred_region
          %1504 = dma.done [#allocation27], 3072
        $region260: #{resnet_forward.1} parent=191 // pred_fallthru
          _
        // Predicated region
        $region261: #{resnet_forward.1} parent=191 // pred_check
          %p1505 = pneg %p723
        $region262: #{resnet_forward.1} parent=191 // pred_check_branch
          %1507 = sbr.rel (%p1505) target = $region264
        $region263: #{resnet_forward.1} parent=191 // pred_region
          %1508 = dma.done [#allocation30], 16
        $region264: #{resnet_forward.1} parent=191 // pred_fallthru
          _
        // Predicated region
        $region265: #{resnet_forward.1} parent=191 // pred_check
          %p1509 = pneg %p744
        $region266: #{resnet_forward.1} parent=191 // pred_check_branch
          %1511 = sbr.rel (%p1509) target = $region268
        $region267: #{resnet_forward.1} parent=191 // pred_region
          %1512 = dma.done [#allocation30], 3072
        $region268: #{resnet_forward.1} parent=191 // pred_fallthru
          _
        // Predicated region
        $region269: #{resnet_forward.1} parent=191 // pred_check
          %p1513 = pneg %p765
        $region270: #{resnet_forward.1} parent=191 // pred_check_branch
          %1515 = sbr.rel (%p1513) target = $region272
        $region271: #{resnet_forward.1} parent=191 // pred_region
          %1516 = dma.done [#allocation33], 16
        $region272: #{resnet_forward.1} parent=191 // pred_fallthru
          _
        // Predicated region
        $region273: #{resnet_forward.1} parent=191 // pred_check
          %p1517 = pneg %p828
        $region274: #{resnet_forward.1} parent=191 // pred_check_branch
          %1519 = sbr.rel (%p1517) target = $region276
        $region275: #{resnet_forward.1} parent=191 // pred_region
          %1520 = dma.done [#allocation33], 2048
        $region276: #{resnet_forward.1} parent=191 // pred_fallthru
          _
        // Predicated region
        $region277: #{resnet_forward.1} parent=191 // pred_check
          %p1521 = pneg %p849
        $region278: #{resnet_forward.1} parent=191 // pred_check_branch
          %1523 = sbr.rel (%p1521) target = $region280
        $region279: #{resnet_forward.1} parent=191 // pred_region
          %1524 = dma.done [#allocation36], 32
        $region280: #{resnet_forward.1} parent=191 // pred_fallthru
          _
        // Predicated region
        $region281: #{resnet_forward.1} parent=191 // pred_check
          %p1525 = pneg %p891
        $region282: #{resnet_forward.1} parent=191 // pred_check_branch
          %1527 = sbr.rel (%p1525) target = $region284
        $region283: #{resnet_forward.1} parent=191 // pred_region
          %1528 = dma.done [#allocation36], 32
        $region284: #{resnet_forward.1} parent=191 // pred_fallthru
          _
        // Predicated region
        $region285: #{resnet_forward.1} parent=191 // pred_check
          %p1529 = pneg %p912
        $region286: #{resnet_forward.1} parent=191 // pred_check_branch
          %1531 = sbr.rel (%p1529) target = $region288
        $region287: #{resnet_forward.1} parent=191 // pred_region
          %1532 = dma.done [#allocation39], 12288
        $region288: #{resnet_forward.1} parent=191 // pred_fallthru
          _
        // Predicated region
        $region289: #{resnet_forward.1} parent=191 // pred_check
          %p1533 = pneg %p954
        $region290: #{resnet_forward.1} parent=191 // pred_check_branch
          %1535 = sbr.rel (%p1533) target = $region292
        $region291: #{resnet_forward.1} parent=191 // pred_region
          %1536 = dma.done [#allocation39], 12288
        $region292: #{resnet_forward.1} parent=191 // pred_fallthru
          _
        // Predicated region
        $region293: #{resnet_forward.1} parent=191 // pred_check
          %p1537 = pneg %p975
        $region294: #{resnet_forward.1} parent=191 // pred_check_branch
          %1539 = sbr.rel (%p1537) target = $region296
        $region295: #{resnet_forward.1} parent=191 // pred_region
          %1540 = dma.done [#allocation42], 32
        $region296: #{resnet_forward.1} parent=191 // pred_fallthru
          _
        // Predicated region
        $region297: #{resnet_forward.1} parent=191 // pred_check
          %p1541 = pneg %p996
        $region298: #{resnet_forward.1} parent=191 // pred_check_branch
          %1543 = sbr.rel (%p1541) target = $region300
        $region299: #{resnet_forward.1} parent=191 // pred_region
          %1544 = dma.done [#allocation42], 32
        $region300: #{resnet_forward.1} parent=191 // pred_fallthru
          _
        %p1545 = scmp.lt.s32.totalorder %s114, 1
        %s1546 = scalar_select %p1545, %s114, 1
        %s1547 = smul.addr %s1546, 8
        %s1548 = smul.addr %s1547, 8
        %s1549 = scalar_lea.vmem %s1, %s1548
        %p1550 = pneg %p135
        %p1551 = pneg %p132
        %p1552 = pneg %p156
        %p1553 = pneg %p153
        %p1554 = pneg %p177
        %p1555 = pneg %p174
        %p1556 = pneg %p198
        %p1557 = pneg %p195
        %p1558 = pneg %p219
        %p1559 = pneg %p216
        %p1560 = pneg %p240
        %p1561 = pneg %p237
        %p1562 = pneg %p261
        %p1563 = pneg %p258
        %p1564 = pneg %p282
        %p1565 = pneg %p279
        %p1566 = pneg %p303
        %p1567 = pneg %p300
        %p1568 = pneg %p324
        %p1569 = pneg %p321
        %p1570 = pneg %p345
        %p1571 = pneg %p342
        %p1572 = pneg %p366
        %p1573 = pneg %p363
        %p1574 = pneg %p387
        %p1575 = pneg %p384
        %p1576 = pneg %p408
        %p1577 = pneg %p405
        %p1578 = pneg %p429
        %p1579 = pneg %p426
        %p1580 = pneg %p450
        %p1581 = pneg %p447
        %p1582 = pneg %p471
        %p1583 = pneg %p468
        %p1584 = pneg %p492
        %p1585 = pneg %p489
        %p1586 = pneg %p513
        %p1587 = pneg %p510
        %p1588 = pneg %p534
        %p1589 = pneg %p531
        %p1590 = pneg %p555
        %p1591 = pneg %p552
        %p1592 = pneg %p576
        %p1593 = pneg %p573
        %p1594 = pneg %p597
        %p1595 = pneg %p594
        %p1596 = pneg %p618
        %p1597 = pneg %p615
        %p1598 = pneg %p639
        %p1599 = pneg %p636
        %p1600 = pneg %p660
        %p1601 = pneg %p657
        %p1602 = pneg %p681
        %p1603 = pneg %p678
        %p1604 = pneg %p702
        %p1605 = pneg %p699
        %p1606 = pneg %p723
        %p1607 = pneg %p720
        %p1608 = pneg %p744
        %p1609 = pneg %p741
        %p1610 = pneg %p765
        %p1611 = pneg %p762
        %p1612 = pneg %p786
        %p1613 = pneg %p783
        %p1614 = pneg %p807
        %p1615 = pneg %p804
        %p1616 = pneg %p828
        %p1617 = pneg %p825
        %p1618 = pneg %p849
        %p1619 = pneg %p846
        %p1620 = pneg %p870
        %p1621 = pneg %p867
        %p1622 = pneg %p891
        %p1623 = pneg %p888
        %p1624 = pneg %p912
        %p1625 = pneg %p909
        %p1626 = pneg %p933
        %p1627 = pneg %p930
        %p1628 = pneg %p954
        %p1629 = pneg %p951
        %p1630 = pneg %p975
        %p1631 = pneg %p972
        %p1632 = pneg %p996
        %p1633 = pneg %p993
        %p1634 = pneg %p1017
        %p1635 = pneg %p1014
        %p1636 = pneg %p1043
        %p1637 = pneg %p1040
        %p1638 = scmp.lt.s32.totalorder %s114, 1
        %s1639 = scalar_select %p1638, %s114, 1
        %s1640 = scalar_lea.vmem %s87, %s1639
        %p1641 = scmp.lt.s32.totalorder %s114, 1
        %s1642 = scalar_select %p1641, %s114, 1
        %s1643 = smul.addr %s1642, 8
        %s1644 = smul.addr %s1643, 8
        %s1645 = scalar_lea.vmem %s1, %s1644
        %p1646 = scmp.lt.s32.totalorder %s114, 1
        %s1647 = scalar_select %p1646, %s114, 1
        %s1648 = scalar_lea.vmem %s87, %s1647
        %v1650 = vld [vmem:[%s1645] sm:$0xff]
        %v1651 = vld [vmem:[%s1645 + $0x8] sm:$0xff]
        %v1652 = vld [vmem:[%s1645 + $0x10] sm:$0xff]
        %v1653 = vld [vmem:[%s1645 + $0x18] sm:$0xff]
        %v1654 = vld [vmem:[%s1645 + $0x20] sm:$0xff]
        %v1655 = vld [vmem:[%s1645 + $0x28] sm:$0xff]
        %v1656 = vld [vmem:[%s1645 + $0x30] sm:$0xff]
        %v1657 = vld [vmem:[%s1645 + $0x38] sm:$0xff]
        %vm1666 = vcmask 1042432
        %v1667 = vrot.slane %v1650, 5
        %v1668 = vrot.slane %v1651, 5
        %v1669 = vsel %vm1666, %v1667, %v1668
        %v1670 = vrot.slane %v1652, 5
        %v1671 = vsel %vm1666, %v1668, %v1670
        %v1672 = vrot.slane %v1653, 5
        %v1673 = vsel %vm1666, %v1670, %v1672
        %v1674 = vrot.slane %v1654, 5
        %v1675 = vsel %vm1666, %v1672, %v1674
        %v1676 = vrot.slane %v1655, 5
        %v1677 = vsel %vm1666, %v1674, %v1676
        %v1678 = vrot.slane %v1656, 5
        %v1679 = vsel %vm1666, %v1676, %v1678
        %v1680 = vrot.slane %v1657, 5
        %v1681 = vsel %vm1666, %v1678, %v1680
        %v1691 = vsel %vm1666, 0.0, %v1667
        %v1692 = vsel %vm1666, %v1680, 0.0
        %v1693 = vlaneseq
        %v1694 = vshrl.u32 %v1693, 7
        %v1695 = vadd.s32 %v1694, 8
        %v1696 = vadd.s32 %v1694, 16
        %v1697 = vadd.s32 %v1694, 24
        %v1698 = vadd.s32 %v1694, 32
        %v1699 = vlaneseq
        %v1700 = vand.u32 %v1699, 127
        %v1701 = vmul.u32 %v1694, 2
        %v1702 = vmul.u32 %v1695, 2
        %v1703 = vmul.u32 %v1696, 2
        %v1704 = vmul.u32 %v1697, 2
        %v1705 = vmul.u32 %v1698, 2
        %vm1706 = vcmp.eq.s32.totalorder %v1700, %v1701
        %vm1707 = vcmp.eq.s32.totalorder %v1700, %v1702
        %vm1708 = vcmp.eq.s32.totalorder %v1700, %v1703
        %vm1709 = vcmp.eq.s32.totalorder %v1700, %v1704
        %vm1710 = vcmp.eq.s32.totalorder %v1700, %v1705
        %v1711 = vsel %vm1706, 1, 0
        %v1712 = vsel %vm1707, 1, 0
        %v1713 = vsel %vm1708, 1, 0
        %v1714 = vsel %vm1709, 1, 0
        %v1715 = vsel %vm1710, 1, 0
        %v1716 = vcvt.s32.f32 %v1711
        %v1717 = vcvt.s32.f32 %v1712
        %v1718 = vcvt.s32.f32 %v1713
        %v1719 = vcvt.s32.f32 %v1714
        %v1720 = vcvt.s32.f32 %v1715
        %v1721 = vadd.s32 %v1701, 1
        %v1722 = vadd.s32 %v1702, 1
        %v1723 = vadd.s32 %v1703, 1
        %v1724 = vadd.s32 %v1704, 1
        %v1725 = vadd.s32 %v1705, 1
        %vm1726 = vcmp.eq.s32.totalorder %v1700, %v1721
        %vm1727 = vcmp.eq.s32.totalorder %v1700, %v1722
        %vm1728 = vcmp.eq.s32.totalorder %v1700, %v1723
        %vm1729 = vcmp.eq.s32.totalorder %v1700, %v1724
        %vm1730 = vcmp.eq.s32.totalorder %v1700, %v1725
        %v1731 = vsel %vm1726, 1, 0
        %v1732 = vsel %vm1727, 1, 0
        %v1733 = vsel %vm1728, 1, 0
        %v1734 = vsel %vm1729, 1, 0
        %v1735 = vsel %vm1730, 1, 0
        %v1736 = vcvt.s32.f32 %v1731
        %v1737 = vcvt.s32.f32 %v1732
        %v1738 = vcvt.s32.f32 %v1733
        %v1739 = vcvt.s32.f32 %v1734
        %v1740 = vcvt.s32.f32 %v1735
        %vm1741 = vcmask 572416
        %v1743 = vsel %vm1741, %v1716, 0
        %v1746 = vsel %vm1741, %v1717, 0
        %v1749 = vsel %vm1741, %v1718, 0
        %v1752 = vsel %vm1741, %v1719, 0
        %v1755 = vsel %vm1741, %v1720, 0
        %vm1757 = vcmask 1045504
        %v1759 = vsel %vm1757, %v1692, 0
        %1761 = vmatprep.subr.mxu0 0.0
        %1762 = vmatpush1.msra.mxu0 0.0
        %1763 = vmatprep.subr.mxu0 0.0
        %1764 = vmatpush1.msra.mxu0 0.0
        %1765 = vmatprep.subr.mxu0 0.0
        %1766 = vmatpush1.msra.mxu0 0.0
        %1767 = vmatprep.subr.mxu0 0.0
        %1768 = vmatpush1.msra.mxu0 0.0
        %1769 = vmatprep.subr.mxu0 0.0
        %1770 = vmatpush1.msra.mxu0 0.0
        %1771 = vmatprep.subr.mxu0 0.0
        %1772 = vmatpush1.msra.mxu0 0.0
        %1773 = vmatprep.subr.mxu0 0.0
        %1774 = vmatpush1.msra.mxu0 0.0
        %1775 = vmatprep.subr.mxu0 0.0
        %1776 = vmatpush1.msra.mxu0 %v1759
        %1777 = vmatprep.subr.mxu0 0.0
        %1778 = vmatpush1.msra.mxu0 %v1681
        %1779 = vmatprep.subr.mxu0 0.0
        %1780 = vmatpush1.msra.mxu0 %v1679
        %1781 = vmatprep.subr.mxu0 0.0
        %1782 = vmatpush1.msra.mxu0 %v1677
        %1783 = vmatprep.subr.mxu0 0.0
        %1784 = vmatpush1.msra.mxu0 %v1675
        %1785 = vmatprep.subr.mxu0 0.0
        %1786 = vmatpush1.msra.mxu0 %v1673
        %1787 = vmatprep.subr.mxu0 0.0
        %1788 = vmatpush1.msra.mxu0 %v1671
        %1789 = vmatprep.subr.mxu0 0.0
        %1790 = vmatpush1.msra.mxu0 %v1669
        %1791 = vmatprep.subr.mxu0 0.0
        %1792 = vmatpush1.msra.mxu0 %v1691
        %1793 = vmatprep.subr.mxu0 0.0
        %1794 = vmatpush2.msra.mxu0 0.0
        %1795 = vmatprep.subr.mxu0 0.0
        %1796 = vmatpush2.msra.mxu0 0.0
        %1797 = vmatprep.subr.mxu0 0.0
        %1798 = vmatpush2.msra.mxu0 0.0
        %1799 = vmatprep.subr.mxu0 0.0
        %1800 = vmatpush2.msra.mxu0 0.0
        %1801 = vmatprep.subr.mxu0 0.0
        %1802 = vmatpush2.msra.mxu0 0.0
        %1803 = vmatprep.subr.mxu0 0.0
        %1804 = vmatpush2.msra.mxu0 0.0
        %1805 = vmatprep.subr.mxu0 0.0
        %1806 = vmatpush2.msra.mxu0 0.0
        %1807 = vmatprep.subr.mxu0 0.0
        %1808 = vmatpush2.msra.mxu0 0.0
        %1809 = vmatprep.subr.mxu0 0.0
        %1810 = vmatpush2.msra.mxu0 0.0
        %1811 = vmatprep.subr.mxu0 0.0
        %1812 = vmatpush2.msra.mxu0 0.0
        %1813 = vmatprep.subr.mxu0 0.0
        %1814 = vmatpush2.msra.mxu0 0.0
        %1815 = vmatprep.subr.mxu0 0.0
        %1816 = vmatpush2.msra.mxu0 0.0
        %1817 = vmatprep.subr.mxu0 0.0
        %1818 = vmatpush2.msra.mxu0 0.0
        %1819 = vmatprep.subr.mxu0 0.0
        %1820 = vmatpush2.msra.mxu0 0.0
        %1821 = vmatprep.subr.mxu0 0.0
        %1822 = vmatpush2.msra.mxu0 0.0
        %1823 = vmatprep.subr.mxu0 0.0
        %1824 = vmatpush2.msra.mxu0 0.0
        %1825 = vmatprep.mubr.f32.mxu0 0.0
        %1826 = vmatmul.mubr.f32.gmra.mxu0 %v1743
        %v1827 = vpop.f32.mrf.mxu0
        %v1828 = vadd.f32 0.0, %v1827
        %v1829 = vpop.f32.mrf.mxu0
        %1830 = vmatprep.mubr.f32.mxu0 0.0
        %1831 = vmatmul.mubr.f32.gmra.mxu0 %v1746
        %v1832 = vpop.f32.mrf.mxu0
        %v1833 = vadd.f32 0.0, %v1832
        %v1834 = vpop.f32.mrf.mxu0
        %1835 = vmatprep.mubr.f32.mxu0 0.0
        %1836 = vmatmul.mubr.f32.gmra.mxu0 %v1749
        %v1837 = vpop.f32.mrf.mxu0
        %v1838 = vadd.f32 0.0, %v1837
        %v1839 = vpop.f32.mrf.mxu0
        %1840 = vmatprep.mubr.f32.mxu0 0.0
        %1841 = vmatmul.mubr.f32.gmra.mxu0 %v1752
        %v1842 = vpop.f32.mrf.mxu0
        %v1843 = vadd.f32 0.0, %v1842
        %v1844 = vpop.f32.mrf.mxu0
        %1845 = vmatprep.mubr.f32.mxu0 0.0
        %1846 = vmatmul.mubr.f32.gmra.mxu0 %v1755
        %v1847 = vpop.f32.mrf.mxu0
        %v1848 = vadd.f32 0.0, %v1847
        %v1849 = vpop.f32.mrf.mxu0
        %1850 = vdwg.mxu0
        %v1852 = vsel %vm1741, %v1736, 0
        %v1855 = vsel %vm1741, %v1737, 0
        %v1858 = vsel %vm1741, %v1738, 0
        %v1861 = vsel %vm1741, %v1739, 0
        %v1864 = vsel %vm1741, %v1740, 0
        %1866 = vmatprep.subr.mxu0 0.0
        %1867 = vmatpush1.msra.mxu0 0.0
        %1868 = vmatprep.subr.mxu0 0.0
        %1869 = vmatpush1.msra.mxu0 0.0
        %1870 = vmatprep.subr.mxu0 0.0
        %1871 = vmatpush1.msra.mxu0 0.0
        %1872 = vmatprep.subr.mxu0 0.0
        %1873 = vmatpush1.msra.mxu0 0.0
        %1874 = vmatprep.subr.mxu0 0.0
        %1875 = vmatpush1.msra.mxu0 0.0
        %1876 = vmatprep.subr.mxu0 0.0
        %1877 = vmatpush1.msra.mxu0 0.0
        %1878 = vmatprep.subr.mxu0 0.0
        %1879 = vmatpush1.msra.mxu0 0.0
        %1880 = vmatprep.subr.mxu0 0.0
        %1881 = vmatpush1.msra.mxu0 %v1759
        %1882 = vmatprep.subr.mxu0 0.0
        %1883 = vmatpush1.msra.mxu0 %v1681
        %1884 = vmatprep.subr.mxu0 0.0
        %1885 = vmatpush1.msra.mxu0 %v1679
        %1886 = vmatprep.subr.mxu0 0.0
        %1887 = vmatpush1.msra.mxu0 %v1677
        %1888 = vmatprep.subr.mxu0 0.0
        %1889 = vmatpush1.msra.mxu0 %v1675
        %1890 = vmatprep.subr.mxu0 0.0
        %1891 = vmatpush1.msra.mxu0 %v1673
        %1892 = vmatprep.subr.mxu0 0.0
        %1893 = vmatpush1.msra.mxu0 %v1671
        %1894 = vmatprep.subr.mxu0 0.0
        %1895 = vmatpush1.msra.mxu0 %v1669
        %1896 = vmatprep.subr.mxu0 0.0
        %1897 = vmatpush1.msra.mxu0 %v1691
        %1898 = vmatprep.subr.mxu0 0.0
        %1899 = vmatpush2.msra.mxu0 0.0
        %1900 = vmatprep.subr.mxu0 0.0
        %1901 = vmatpush2.msra.mxu0 0.0
        %1902 = vmatprep.subr.mxu0 0.0
        %1903 = vmatpush2.msra.mxu0 0.0
        %1904 = vmatprep.subr.mxu0 0.0
        %1905 = vmatpush2.msra.mxu0 0.0
        %1906 = vmatprep.subr.mxu0 0.0
        %1907 = vmatpush2.msra.mxu0 0.0
        %1908 = vmatprep.subr.mxu0 0.0
        %1909 = vmatpush2.msra.mxu0 0.0
        %1910 = vmatprep.subr.mxu0 0.0
        %1911 = vmatpush2.msra.mxu0 0.0
        %1912 = vmatprep.subr.mxu0 0.0
        %1913 = vmatpush2.msra.mxu0 0.0
        %1914 = vmatprep.subr.mxu0 0.0
        %1915 = vmatpush2.msra.mxu0 0.0
        %1916 = vmatprep.subr.mxu0 0.0
        %1917 = vmatpush2.msra.mxu0 0.0
        %1918 = vmatprep.subr.mxu0 0.0
        %1919 = vmatpush2.msra.mxu0 0.0
        %1920 = vmatprep.subr.mxu0 0.0
        %1921 = vmatpush2.msra.mxu0 0.0
        %1922 = vmatprep.subr.mxu0 0.0
        %1923 = vmatpush2.msra.mxu0 0.0
        %1924 = vmatprep.subr.mxu0 0.0
        %1925 = vmatpush2.msra.mxu0 0.0
        %1926 = vmatprep.subr.mxu0 0.0
        %1927 = vmatpush2.msra.mxu0 0.0
        %1928 = vmatprep.subr.mxu0 0.0
        %1929 = vmatpush2.msra.mxu0 0.0
        %1930 = vmatprep.mubr.f32.mxu0 0.0
        %1931 = vmatmul.mubr.f32.gmra.mxu0 %v1852
        %v1932 = vpop.f32.mrf.mxu0
        %v1933 = vadd.f32 0.0, %v1932
        %v1934 = vpop.f32.mrf.mxu0
        %1935 = vmatprep.mubr.f32.mxu0 0.0
        %1936 = vmatmul.mubr.f32.gmra.mxu0 %v1855
        %v1937 = vpop.f32.mrf.mxu0
        %v1938 = vadd.f32 0.0, %v1937
        %v1939 = vpop.f32.mrf.mxu0
        %1940 = vmatprep.mubr.f32.mxu0 0.0
        %1941 = vmatmul.mubr.f32.gmra.mxu0 %v1858
        %v1942 = vpop.f32.mrf.mxu0
        %v1943 = vadd.f32 0.0, %v1942
        %v1944 = vpop.f32.mrf.mxu0
        %1945 = vmatprep.mubr.f32.mxu0 0.0
        %1946 = vmatmul.mubr.f32.gmra.mxu0 %v1861
        %v1947 = vpop.f32.mrf.mxu0
        %v1948 = vadd.f32 0.0, %v1947
        %v1949 = vpop.f32.mrf.mxu0
        %1950 = vmatprep.mubr.f32.mxu0 0.0
        %1951 = vmatmul.mubr.f32.gmra.mxu0 %v1864
        %v1952 = vpop.f32.mrf.mxu0
        %v1953 = vadd.f32 0.0, %v1952
        %v1954 = vpop.f32.mrf.mxu0
        %1955 = vdwg.mxu0
        %1960 = vrot.lane.b32.xlu0 %v1933, 12
        %v1961 = vpop.permute.xlu0 %1960
        %1962 = vrot.lane.b32.xlu0 %v1938, 12
        %v1963 = vpop.permute.xlu0 %1962
        %1964 = vrot.lane.b32.xlu0 %v1943, 12
        %v1965 = vpop.permute.xlu0 %1964
        %1966 = vrot.lane.b32.xlu0 %v1948, 12
        %v1967 = vpop.permute.xlu0 %1966
        %vm1976 = vcmask 1046528
        %v1977 = vrot.slane %v1828, 1
        %v1978 = vrot.slane %v1833, 1
        %v1979 = vsel %vm1976, %v1977, %v1978
        %v1980 = vrot.slane %v1838, 1
        %v1981 = vsel %vm1976, %v1978, %v1980
        %v1982 = vrot.slane %v1843, 1
        %v1983 = vsel %vm1976, %v1980, %v1982
        %1984 = vrot.lane.b32.xlu0 %v1979, 24
        %v1985 = vpop.permute.xlu0 %1984
        %1986 = vrot.lane.b32.xlu0 %v1981, 24
        %v1987 = vpop.permute.xlu0 %1986
        %1988 = vrot.lane.b32.xlu0 %v1983, 24
        %v1989 = vpop.permute.xlu0 %1988
        %1990 = vrot.lane.b32.xlu0 %v1982, 24
        %v1991 = vpop.permute.xlu0 %1990
        %v1996 = vrot.slane %v1933, 1
        %v1997 = vrot.slane %v1938, 1
        %v1998 = vsel %vm1976, %v1996, %v1997
        %v1999 = vrot.slane %v1943, 1
        %v2000 = vsel %vm1976, %v1997, %v1999
        %v2001 = vrot.slane %v1948, 1
        %v2002 = vsel %vm1976, %v1999, %v2001
        %2003 = vrot.lane.b32.xlu0 %v1998, 36
        %v2004 = vpop.permute.xlu0 %2003
        %2005 = vrot.lane.b32.xlu0 %v2000, 36
        %v2006 = vpop.permute.xlu0 %2005
        %2007 = vrot.lane.b32.xlu0 %v2002, 36
        %v2008 = vpop.permute.xlu0 %2007
        %2009 = vrot.lane.b32.xlu0 %v2001, 36
        %v2010 = vpop.permute.xlu0 %2009
        %v2015 = vrot.slane %v1828, 2
        %v2016 = vrot.slane %v1833, 2
        %v2017 = vsel %vm1757, %v2015, %v2016
        %v2018 = vrot.slane %v1838, 2
        %v2019 = vsel %vm1757, %v2016, %v2018
        %v2020 = vrot.slane %v1843, 2
        %v2021 = vsel %vm1757, %v2018, %v2020
        %2022 = vrot.lane.b32.xlu0 %v2017, 48
        %v2023 = vpop.permute.xlu0 %2022
        %2024 = vrot.lane.b32.xlu0 %v2019, 48
        %v2025 = vpop.permute.xlu0 %2024
        %2026 = vrot.lane.b32.xlu0 %v2021, 48
        %v2027 = vpop.permute.xlu0 %2026
        %2028 = vrot.lane.b32.xlu0 %v2020, 48
        %v2029 = vpop.permute.xlu0 %2028
        %v2034 = vrot.slane %v1933, 2
        %v2035 = vrot.slane %v1938, 2
        %v2036 = vsel %vm1757, %v2034, %v2035
        %v2037 = vrot.slane %v1943, 2
        %v2038 = vsel %vm1757, %v2035, %v2037
        %v2039 = vrot.slane %v1948, 2
        %v2040 = vsel %vm1757, %v2037, %v2039
        %2041 = vrot.lane.b32.xlu0 %v2036, 60
        %v2042 = vpop.permute.xlu0 %2041
        %2043 = vrot.lane.b32.xlu0 %v2038, 60
        %v2044 = vpop.permute.xlu0 %2043
        %2045 = vrot.lane.b32.xlu0 %v2040, 60
        %v2046 = vpop.permute.xlu0 %2045
        %2047 = vrot.lane.b32.xlu0 %v2039, 60
        %v2048 = vpop.permute.xlu0 %2047
        %vm2053 = vcmask 1044480
        %v2054 = vrot.slane %v1828, 3
        %v2055 = vrot.slane %v1833, 3
        %v2056 = vsel %vm2053, %v2054, %v2055
        %v2057 = vrot.slane %v1838, 3
        %v2058 = vsel %vm2053, %v2055, %v2057
        %v2059 = vrot.slane %v1843, 3
        %v2060 = vsel %vm2053, %v2057, %v2059
        %2061 = vrot.lane.b32.xlu0 %v2056, 72
        %v2062 = vpop.permute.xlu0 %2061
        %2063 = vrot.lane.b32.xlu0 %v2058, 72
        %v2064 = vpop.permute.xlu0 %2063
        %2065 = vrot.lane.b32.xlu0 %v2060, 72
        %v2066 = vpop.permute.xlu0 %2065
        %2067 = vrot.lane.b32.xlu0 %v2059, 72
        %v2068 = vpop.permute.xlu0 %2067
        %v2073 = vrot.slane %v1933, 3
        %v2074 = vrot.slane %v1938, 3
        %v2075 = vsel %vm2053, %v2073, %v2074
        %v2076 = vrot.slane %v1943, 3
        %v2077 = vsel %vm2053, %v2074, %v2076
        %v2078 = vrot.slane %v1948, 3
        %v2079 = vsel %vm2053, %v2076, %v2078
        %2080 = vrot.lane.b32.xlu0 %v2075, 84
        %v2081 = vpop.permute.xlu0 %2080
        %2082 = vrot.lane.b32.xlu0 %v2077, 84
        %v2083 = vpop.permute.xlu0 %2082
        %2084 = vrot.lane.b32.xlu0 %v2079, 84
        %v2085 = vpop.permute.xlu0 %2084
        %2086 = vrot.lane.b32.xlu0 %v2078, 84
        %v2087 = vpop.permute.xlu0 %2086
        %vm2092 = vcmask 1043456
        %v2093 = vrot.slane %v1828, 4
        %v2094 = vrot.slane %v1833, 4
        %v2095 = vsel %vm2092, %v2093, %v2094
        %v2096 = vrot.slane %v1838, 4
        %v2097 = vsel %vm2092, %v2094, %v2096
        %v2098 = vrot.slane %v1843, 4
        %v2099 = vsel %vm2092, %v2096, %v2098
        %2100 = vrot.lane.b32.xlu0 %v2095, 96
        %v2101 = vpop.permute.xlu0 %2100
        %2102 = vrot.lane.b32.xlu0 %v2097, 96
        %v2103 = vpop.permute.xlu0 %2102
        %2104 = vrot.lane.b32.xlu0 %v2099, 96
        %v2105 = vpop.permute.xlu0 %2104
        %2106 = vrot.lane.b32.xlu0 %v2098, 96
        %v2107 = vpop.permute.xlu0 %2106
        %v2112 = vrot.slane %v1933, 4
        %v2113 = vrot.slane %v1938, 4
        %v2114 = vsel %vm2092, %v2112, %v2113
        %v2115 = vrot.slane %v1943, 4
        %v2116 = vsel %vm2092, %v2113, %v2115
        %v2117 = vrot.slane %v1948, 4
        %v2118 = vsel %vm2092, %v2115, %v2117
        %2119 = vrot.lane.b32.xlu0 %v2114, 108
        %v2120 = vpop.permute.xlu0 %2119
        %2121 = vrot.lane.b32.xlu0 %v2116, 108
        %v2122 = vpop.permute.xlu0 %2121
        %2123 = vrot.lane.b32.xlu0 %v2118, 108
        %v2124 = vpop.permute.xlu0 %2123
        %2125 = vrot.lane.b32.xlu0 %v2117, 108
        %v2126 = vpop.permute.xlu0 %2125
        %v2132 = vrot.slane %v1828, 5
        %v2133 = vrot.slane %v1833, 5
        %v2134 = vsel %vm1666, %v2132, %v2133
        %v2135 = vrot.slane %v1838, 5
        %v2136 = vsel %vm1666, %v2133, %v2135
        %v2137 = vrot.slane %v1843, 5
        %v2138 = vsel %vm1666, %v2135, %v2137
        %v2139 = vrot.slane %v1848, 5
        %v2140 = vsel %vm1666, %v2137, %v2139
        %2141 = vrot.lane.b32.xlu0 %v2134, 120
        %v2142 = vpop.permute.xlu0 %2141
        %2143 = vrot.lane.b32.xlu0 %v2136, 120
        %v2144 = vpop.permute.xlu0 %2143
        %2145 = vrot.lane.b32.xlu0 %v2138, 120
        %v2146 = vpop.permute.xlu0 %2145
        %2147 = vrot.lane.b32.xlu0 %v2140, 120
        %v2148 = vpop.permute.xlu0 %2147
        %v2154 = vrot.slane %v1933, 5
        %v2155 = vrot.slane %v1938, 5
        %v2156 = vsel %vm1666, %v2154, %v2155
        %v2157 = vrot.slane %v1943, 5
        %v2158 = vsel %vm1666, %v2155, %v2157
        %v2159 = vrot.slane %v1948, 5
        %v2160 = vsel %vm1666, %v2157, %v2159
        %v2161 = vrot.slane %v1953, 5
        %v2162 = vsel %vm1666, %v2159, %v2161
        %2163 = vrot.lane.b32.xlu0 %v2156, 4
        %v2164 = vpop.permute.xlu0 %2163
        %2165 = vrot.lane.b32.xlu0 %v2158, 4
        %v2166 = vpop.permute.xlu0 %2165
        %2167 = vrot.lane.b32.xlu0 %v2160, 4
        %v2168 = vpop.permute.xlu0 %2167
        %2169 = vrot.lane.b32.xlu0 %v2162, 4
        %v2170 = vpop.permute.xlu0 %2169
        %vm2175 = vcmask 1041408
        %v2176 = vrot.slane %v1828, 6
        %v2177 = vrot.slane %v1833, 6
        %v2178 = vsel %vm2175, %v2176, %v2177
        %v2179 = vrot.slane %v1838, 6
        %v2180 = vsel %vm2175, %v2177, %v2179
        %v2181 = vrot.slane %v1843, 6
        %v2182 = vsel %vm2175, %v2179, %v2181
        %v2183 = vrot.slane %v1848, 6
        %v2184 = vsel %vm2175, %v2181, %v2183
        %2185 = vrot.lane.b32.xlu0 %v2178, 16
        %v2186 = vpop.permute.xlu0 %2185
        %2187 = vrot.lane.b32.xlu0 %v2180, 16
        %v2188 = vpop.permute.xlu0 %2187
        %2189 = vrot.lane.b32.xlu0 %v2182, 16
        %v2190 = vpop.permute.xlu0 %2189
        %2191 = vrot.lane.b32.xlu0 %v2184, 16
        %v2192 = vpop.permute.xlu0 %2191
        %v2197 = vrot.slane %v1933, 6
        %v2198 = vrot.slane %v1938, 6
        %v2199 = vsel %vm2175, %v2197, %v2198
        %v2200 = vrot.slane %v1943, 6
        %v2201 = vsel %vm2175, %v2198, %v2200
        %v2202 = vrot.slane %v1948, 6
        %v2203 = vsel %vm2175, %v2200, %v2202
        %v2204 = vrot.slane %v1953, 6
        %v2205 = vsel %vm2175, %v2202, %v2204
        %2206 = vrot.lane.b32.xlu0 %v2199, 28
        %v2207 = vpop.permute.xlu0 %2206
        %2208 = vrot.lane.b32.xlu0 %v2201, 28
        %v2209 = vpop.permute.xlu0 %2208
        %2210 = vrot.lane.b32.xlu0 %v2203, 28
        %v2211 = vpop.permute.xlu0 %2210
        %2212 = vrot.lane.b32.xlu0 %v2205, 28
        %v2213 = vpop.permute.xlu0 %2212
        %vm2218 = vcmask 1040384
        %v2219 = vrot.slane %v1828, 7
        %v2220 = vrot.slane %v1833, 7
        %v2221 = vsel %vm2218, %v2219, %v2220
        %v2222 = vrot.slane %v1838, 7
        %v2223 = vsel %vm2218, %v2220, %v2222
        %v2224 = vrot.slane %v1843, 7
        %v2225 = vsel %vm2218, %v2222, %v2224
        %v2226 = vrot.slane %v1848, 7
        %v2227 = vsel %vm2218, %v2224, %v2226
        %2228 = vrot.lane.b32.xlu0 %v2221, 40
        %v2229 = vpop.permute.xlu0 %2228
        %2230 = vrot.lane.b32.xlu0 %v2223, 40
        %v2231 = vpop.permute.xlu0 %2230
        %2232 = vrot.lane.b32.xlu0 %v2225, 40
        %v2233 = vpop.permute.xlu0 %2232
        %2234 = vrot.lane.b32.xlu0 %v2227, 40
        %v2235 = vpop.permute.xlu0 %2234
        %vm2240 = vcmask 97280
        %v2241 = vsel %vm2240, %v1828, %v1961
        %v2242 = vsel %vm2240, %v1833, %v1963
        %v2243 = vsel %vm2240, %v1838, %v1965
        %v2244 = vsel %vm2240, %v1843, %v1967
        %vm2245 = vcmask 195584
        %v2246 = vsel %vm2245, %v2241, %v1985
        %v2247 = vsel %vm2245, %v2242, %v1987
        %v2248 = vsel %vm2245, %v2243, %v1989
        %v2249 = vsel %vm2245, %v2244, %v1991
        %vm2250 = vcmask 293888
        %v2251 = vsel %vm2250, %v2246, %v2004
        %v2252 = vsel %vm2250, %v2247, %v2006
        %v2253 = vsel %vm2250, %v2248, %v2008
        %v2254 = vsel %vm2250, %v2249, %v2010
        %vm2255 = vcmask 392192
        %v2256 = vsel %vm2255, %v2251, %v2023
        %v2257 = vsel %vm2255, %v2252, %v2025
        %v2258 = vsel %vm2255, %v2253, %v2027
        %v2259 = vsel %vm2255, %v2254, %v2029
        %vm2260 = vcmask 490496
        %v2261 = vsel %vm2260, %v2256, %v2042
        %v2262 = vsel %vm2260, %v2257, %v2044
        %v2263 = vsel %vm2260, %v2258, %v2046
        %v2264 = vsel %vm2260, %v2259, %v2048
        %vm2265 = vcmask 588800
        %v2266 = vsel %vm2265, %v2261, %v2062
        %v2267 = vsel %vm2265, %v2262, %v2064
        %v2268 = vsel %vm2265, %v2263, %v2066
        %v2269 = vsel %vm2265, %v2264, %v2068
        %vm2270 = vcmask 687104
        %v2271 = vsel %vm2270, %v2266, %v2081
        %v2272 = vsel %vm2270, %v2267, %v2083
        %v2273 = vsel %vm2270, %v2268, %v2085
        %v2274 = vsel %vm2270, %v2269, %v2087
        %vm2275 = vcmask 785408
        %v2276 = vsel %vm2275, %v2271, %v2101
        %v2277 = vsel %vm2275, %v2272, %v2103
        %v2278 = vsel %vm2275, %v2273, %v2105
        %v2279 = vsel %vm2275, %v2274, %v2107
        %vm2280 = vcmask 883712
        %v2281 = vsel %vm2280, %v2276, %v2120
        %v2282 = vsel %vm2280, %v2277, %v2122
        %v2283 = vsel %vm2280, %v2278, %v2124
        %v2284 = vsel %vm2280, %v2279, %v2126
        %vm2285 = vcmask 982016
        %v2286 = vsel %vm2285, %v2281, %v2142
        %v2287 = vsel %vm2285, %v2282, %v2144
        %v2288 = vsel %vm2285, %v2283, %v2146
        %v2289 = vsel %vm2285, %v2284, %v2148
        %vm2290 = vcmask 31744
        %v2291 = vsel %vm2290, %v2142, %v2164
        %v2292 = vsel %vm2290, %v2144, %v2166
        %v2293 = vsel %vm2290, %v2146, %v2168
        %v2294 = vsel %vm2290, %v2148, %v2170
        %vm2295 = vcmask 130048
        %v2296 = vsel %vm2295, %v2291, %v2186
        %v2297 = vsel %vm2295, %v2292, %v2188
        %v2298 = vsel %vm2295, %v2293, %v2190
        %v2299 = vsel %vm2295, %v2294, %v2192
        %vm2300 = vcmask 228352
        %v2301 = vsel %vm2300, %v2296, %v2207
        %v2302 = vsel %vm2300, %v2297, %v2209
        %v2303 = vsel %vm2300, %v2298, %v2211
        %v2304 = vsel %vm2300, %v2299, %v2213
        %vm2305 = vcmask 326656
        %v2306 = vsel %vm2305, %v2301, %v2229
        %v2307 = vsel %vm2305, %v2302, %v2231
        %v2308 = vsel %vm2305, %v2303, %v2233
        %v2309 = vsel %vm2305, %v2304, %v2235
        %v2310 = vpack.c.bf16 %v2287, %v2286
        %v2311 = vpack.c.bf16 %v2307, %v2306
        %v2312 = vpack.c.bf16 %v2289, %v2288
        %v2313 = vpack.c.bf16 %v2309, %v2308
        %v2314 = vld [vmem:[%s3] sm:$0xf]
        %v2315 = vld [vmem:[%s3 + $0x4] sm:$0xf]
        %v2316 = vld [vmem:[%s3 + $0x8] sm:$0xf]
        %v2317 = vld [vmem:[%s3 + $0xc] sm:$0xf]
        %v2318 = vld [vmem:[%s3 + $0x10] sm:$0xf]
        %v2319 = vld [vmem:[%s3 + $0x14] sm:$0xf]
        %v2320 = vld [vmem:[%s3 + $0x18] sm:$0xf]
        %v2321 = vld [vmem:[%s3 + $0x1c] sm:$0xf]
        %v2322 = vld [vmem:[%s3 + $0x20] sm:$0xf]
        %v2323 = vld [vmem:[%s3 + $0x24] sm:$0xf]
        %v2324 = vld [vmem:[%s3 + $0x28] sm:$0xf]
        %v2325 = vld [vmem:[%s3 + $0x2c] sm:$0xf]
        %v2326 = vld [vmem:[%s3 + $0x30] sm:$0xf]
        %v2327 = vld [vmem:[%s3 + $0x34] sm:$0xf]
        %v2328 = vld [vmem:[%s3 + $0x38] sm:$0xf]
        %v2329 = vld [vmem:[%s3 + $0x3c] sm:$0xf]
        %v2330 = vld [vmem:[%s3 + $0x40] sm:$0xf]
        %v2331 = vld [vmem:[%s3 + $0x44] sm:$0xf]
        %v2332 = vld [vmem:[%s3 + $0x48] sm:$0xf]
        %v2333 = vld [vmem:[%s3 + $0x4c] sm:$0xf]
        %v2334 = vld [vmem:[%s3 + $0x50] sm:$0xf]
        %v2335 = vld [vmem:[%s3 + $0x54] sm:$0xf]
        %v2336 = vld [vmem:[%s3 + $0x58] sm:$0x3]
        %v2337 = vld [vmem:[%s5] sm:$0x1]
        %v2339 = vlaneseq
        %v2340 = vshrl.u32 %v2339, 7
        %v2341 = vsub.s32 0, %v2340
        %v2342 = vrot.slane %v2337, %v2341
        %v2367 = vunpack.c.l.b16 %v2314
        %v2368 = vunpack.c.l.b16 %v2315
        %v2369 = vunpack.c.l.b16 %v2316
        %v2370 = vunpack.c.l.b16 %v2317
        %v2371 = vunpack.c.l.b16 %v2318
        %v2372 = vunpack.c.l.b16 %v2319
        %v2373 = vunpack.c.l.b16 %v2320
        %v2374 = vunpack.c.l.b16 %v2321
        %v2375 = vunpack.c.l.b16 %v2322
        %v2376 = vunpack.c.l.b16 %v2323
        %v2377 = vunpack.c.l.b16 %v2324
        %v2378 = vunpack.c.l.b16 %v2325
        %v2379 = vunpack.c.l.b16 %v2326
        %v2380 = vunpack.c.l.b16 %v2327
        %v2381 = vunpack.c.l.b16 %v2328
        %v2382 = vunpack.c.l.b16 %v2329
        %v2383 = vunpack.c.l.b16 %v2330
        %v2384 = vunpack.c.l.b16 %v2331
        %v2385 = vunpack.c.l.b16 %v2332
        %v2386 = vunpack.c.l.b16 %v2333
        %v2387 = vunpack.c.l.b16 %v2334
        %v2388 = vunpack.c.l.b16 %v2335
        %v2389 = vunpack.c.l.b16 %v2336
        %v2390 = vpack.c.b16 %v2368, %v2367
        %v2391 = vpack.c.b16 %v2370, %v2369
        %v2392 = vpack.c.b16 %v2372, %v2371
        %v2393 = vpack.c.b16 %v2374, %v2373
        %v2394 = vpack.c.b16 %v2376, %v2375
        %v2395 = vpack.c.b16 %v2378, %v2377
        %v2396 = vpack.c.b16 %v2380, %v2379
        %v2397 = vpack.c.b16 %v2382, %v2381
        %v2398 = vpack.c.b16 %v2384, %v2383
        %v2399 = vpack.c.b16 %v2386, %v2385
        %v2400 = vpack.c.b16 %v2388, %v2387
        %v2401 = vpack.c.b16 %v2389, %v2389
        %vm2413 = vcmask 424960
        %v2415 = vsel %vm2413, %v2311, 0
        %v2418 = vsel %vm2413, %v2313, 0
        %v2421 = vsel %vm2175, %v2401, 0
        %2423 = vmatprep.subr.bf16.mxu0 0
        %2424 = vmatpush1.bf16.msra.mxu0 %v2397
        %2425 = vmatprep.subr.bf16.mxu0 0
        %2426 = vmatpush1.bf16.msra.mxu0 %v2396
        %2427 = vmatprep.subr.bf16.mxu0 0
        %2428 = vmatpush1.bf16.msra.mxu0 %v2395
        %2429 = vmatprep.subr.bf16.mxu0 0
        %2430 = vmatpush1.bf16.msra.mxu0 %v2394
        %2431 = vmatprep.subr.bf16.mxu0 0
        %2432 = vmatpush1.bf16.msra.mxu0 %v2393
        %2433 = vmatprep.subr.bf16.mxu0 0
        %2434 = vmatpush1.bf16.msra.mxu0 %v2392
        %2435 = vmatprep.subr.bf16.mxu0 0
        %2436 = vmatpush1.bf16.msra.mxu0 %v2391
        %2437 = vmatprep.subr.bf16.mxu0 0
        %2438 = vmatpush1.bf16.msra.mxu0 %v2390
        %2439 = vmatprep.subr.bf16.mxu0 0
        %2440 = vmatpush2.bf16.msra.mxu0 0
        %2441 = vmatprep.subr.bf16.mxu0 0
        %2442 = vmatpush2.bf16.msra.mxu0 0
        %2443 = vmatprep.subr.bf16.mxu0 0
        %2444 = vmatpush2.bf16.msra.mxu0 0
        %2445 = vmatprep.subr.bf16.mxu0 0
        %2446 = vmatpush2.bf16.msra.mxu0 0
        %2447 = vmatprep.subr.bf16.mxu0 0
        %2448 = vmatpush2.bf16.msra.mxu0 %v2421
        %2449 = vmatprep.subr.bf16.mxu0 0
        %2450 = vmatpush2.bf16.msra.mxu0 %v2400
        %2451 = vmatprep.subr.bf16.mxu0 0
        %2452 = vmatpush2.bf16.msra.mxu0 %v2399
        %2453 = vmatprep.subr.bf16.mxu0 0
        %2454 = vmatpush2.bf16.msra.mxu0 %v2398
        %2455 = vmatprep.mubr.bf16.mxu0 %v2415
        %2456 = vmatmul.mubr.bf16.gmra.mxu0 %v2310
        %v2457 = vpop.f32.mrf.mxu0
        %v2458 = vadd.f32 %v2342, %v2457
        %v2459 = vpop.f32.mrf.mxu0
        %v2460 = vpop.f32.mrf.mxu0
        %v2461 = vadd.f32 %v2342, %v2460
        %v2462 = vpop.f32.mrf.mxu0
        %2463 = vmatprep.mubr.bf16.mxu0 %v2418
        %2464 = vmatmul.mubr.bf16.gmra.mxu0 %v2312
        %v2465 = vpop.f32.mrf.mxu0
        %v2466 = vadd.f32 %v2342, %v2465
        %v2467 = vpop.f32.mrf.mxu0
        %v2468 = vpop.f32.mrf.mxu0
        %v2469 = vadd.f32 %v2342, %v2468
        %v2470 = vpop.f32.mrf.mxu0
        %2471 = vdwg.mxu0
        %v2472 = vmax.f32 %v2458, 0.0
        %v2473 = vmax.f32 %v2461, 0.0
        %v2474 = vmax.f32 %v2466, 0.0
        %v2475 = vmax.f32 %v2469, 0.0
        %v2480 = vrot.slane %v2472, 7
        %v2481 = vrot.slane %v2473, 7
        %v2482 = vsel %vm2218, %v2480, %v2481
        %v2483 = vrot.slane %v2474, 7
        %v2484 = vsel %vm2218, %v2481, %v2483
        %v2485 = vrot.slane %v2475, 7
        %v2486 = vsel %vm2218, %v2483, %v2485
        %v2491 = vsel %vm2218, 0.0, %v2480
        %v2492 = vrot.slane %v2472, 1
        %v2493 = vrot.slane %v2473, 1
        %v2494 = vsel %vm1976, %v2492, %v2493
        %v2495 = vrot.slane %v2474, 1
        %v2496 = vsel %vm1976, %v2493, %v2495
        %v2497 = vrot.slane %v2475, 1
        %v2498 = vsel %vm1976, %v2495, %v2497
        %v2500 = vsel %vm1666, %v2497, 0.0
        %2501 = vrot.lane.b32.xlu0 %v2472, 32
        %v2502 = vpop.permute.xlu0 %2501
        %2503 = vrot.lane.b32.xlu0 %v2473, 32
        %v2504 = vpop.permute.xlu0 %2503
        %2505 = vrot.lane.b32.xlu0 %v2474, 32
        %v2506 = vpop.permute.xlu0 %2505
        %2507 = vrot.lane.b32.xlu0 %v2475, 32
        %v2508 = vpop.permute.xlu0 %2507
        %2514 = vrot.lane.b32.xlu0 %v2494, 64
        %v2515 = vpop.permute.xlu0 %2514
        %2516 = vrot.lane.b32.xlu0 %v2496, 64
        %v2517 = vpop.permute.xlu0 %2516
        %2518 = vrot.lane.b32.xlu0 %v2498, 64
        %v2519 = vpop.permute.xlu0 %2518
        %2520 = vrot.lane.b32.xlu0 %v2500, 64
        %v2521 = vpop.permute.xlu0 %2520
        %vm2526 = vcmask 261120
        %v2527 = vsel %vm2526, %v2491, %v2502
        %v2528 = vsel %vm2526, %v2482, %v2504
        %v2529 = vsel %vm2526, %v2484, %v2506
        %v2530 = vsel %vm2526, %v2486, %v2508
        %vm2531 = vcmask 523264
        %v2532 = vsel %vm2531, %v2527, %v2515
        %v2533 = vsel %vm2531, %v2528, %v2517
        %v2534 = vsel %vm2531, %v2529, %v2519
        %v2535 = vsel %vm2531, %v2530, %v2521
        %v2536 = vpack.c.bf16 %v2533, %v2532
        %v2537 = vpack.c.bf16 %v2535, %v2534
        %v2538 = vld [vmem:[%s7] sm:$0xf]
        %v2539 = vld [vmem:[%s7 + $0x4] sm:$0xf]
        %v2540 = vld [vmem:[%s7 + $0x8] sm:$0xf]
        %v2541 = vld [vmem:[%s7 + $0xc] sm:$0xf]
        %v2542 = vld [vmem:[%s7 + $0x10] sm:$0xf]
        %v2543 = vld [vmem:[%s7 + $0x14] sm:$0xf]
        %v2544 = vld [vmem:[%s7 + $0x18] sm:$0xf]
        %v2545 = vld [vmem:[%s7 + $0x1c] sm:$0xf]
        %v2546 = vld [vmem:[%s7 + $0x20] sm:$0xf]
        %v2547 = vld [vmem:[%s7 + $0x24] sm:$0xf]
        %v2548 = vld [vmem:[%s7 + $0x28] sm:$0xf]
        %v2549 = vld [vmem:[%s7 + $0x2c] sm:$0xf]
        %v2550 = vld [vmem:[#allocation3] sm:$0x1]
        %v2552 = vlaneseq
        %v2553 = vshrl.u32 %v2552, 7
        %v2554 = vsub.s32 0, %v2553
        %v2555 = vrot.slane %v2550, %v2554
        %v2569 = vunpack.c.l.b16 %v2538
        %v2570 = vunpack.c.l.b16 %v2539
        %v2571 = vunpack.c.l.b16 %v2540
        %v2572 = vunpack.c.l.b16 %v2541
        %v2573 = vunpack.c.l.b16 %v2542
        %v2574 = vunpack.c.l.b16 %v2543
        %v2575 = vunpack.c.l.b16 %v2544
        %v2576 = vunpack.c.l.b16 %v2545
        %v2577 = vunpack.c.l.b16 %v2546
        %v2578 = vunpack.c.l.b16 %v2547
        %v2579 = vunpack.c.l.b16 %v2548
        %v2580 = vunpack.c.l.b16 %v2549
        %v2581 = vpack.c.b16 %v2570, %v2569
        %v2582 = vpack.c.b16 %v2572, %v2571
        %v2583 = vpack.c.b16 %v2574, %v2573
        %v2584 = vpack.c.b16 %v2576, %v2575
        %v2585 = vpack.c.b16 %v2578, %v2577
        %v2586 = vpack.c.b16 %v2580, %v2579
        %v2594 = vsel %vm2275, %v2536, 0
        %v2597 = vsel %vm2275, %v2537, 0
        %2599 = vmatprep.subr.bf16.mxu0 0
        %2600 = vmatpush1.bf16.msra.mxu0 0
        %2601 = vmatprep.subr.bf16.mxu0 0
        %2602 = vmatpush1.bf16.msra.mxu0 0
        %2603 = vmatprep.subr.bf16.mxu0 0
        %2604 = vmatpush1.bf16.msra.mxu0 %v2586
        %2605 = vmatprep.subr.bf16.mxu0 0
        %2606 = vmatpush1.bf16.msra.mxu0 %v2585
        %2607 = vmatprep.subr.bf16.mxu0 0
        %2608 = vmatpush1.bf16.msra.mxu0 %v2584
        %2609 = vmatprep.subr.bf16.mxu0 0
        %2610 = vmatpush1.bf16.msra.mxu0 %v2583
        %2611 = vmatprep.subr.bf16.mxu0 0
        %2612 = vmatpush1.bf16.msra.mxu0 %v2582
        %2613 = vmatprep.subr.bf16.mxu0 0
        %2614 = vmatpush1.bf16.msra.mxu0 %v2581
        %2615 = vmatprep.subr.bf16.mxu0 0
        %2616 = vmatpush2.bf16.msra.mxu0 0
        %2617 = vmatprep.subr.bf16.mxu0 0
        %2618 = vmatpush2.bf16.msra.mxu0 0
        %2619 = vmatprep.subr.bf16.mxu0 0
        %2620 = vmatpush2.bf16.msra.mxu0 0
        %2621 = vmatprep.subr.bf16.mxu0 0
        %2622 = vmatpush2.bf16.msra.mxu0 0
        %2623 = vmatprep.subr.bf16.mxu0 0
        %2624 = vmatpush2.bf16.msra.mxu0 0
        %2625 = vmatprep.subr.bf16.mxu0 0
        %2626 = vmatpush2.bf16.msra.mxu0 0
        %2627 = vmatprep.subr.bf16.mxu0 0
        %2628 = vmatpush2.bf16.msra.mxu0 0
        %2629 = vmatprep.subr.bf16.mxu0 0
        %2630 = vmatpush2.bf16.msra.mxu0 0
        %2631 = vmatprep.mubr.bf16.mxu0 0
        %2632 = vmatmul.mubr.bf16.gmra.mxu0 %v2594
        %v2633 = vpop.f32.mrf.mxu0
        %v2634 = vadd.f32 %v2555, %v2633
        %v2635 = vpop.f32.mrf.mxu0
        %v2636 = vpop.f32.mrf.mxu0
        %v2637 = vadd.f32 %v2555, %v2636
        %v2638 = vpop.f32.mrf.mxu0
        %2639 = vmatprep.mubr.bf16.mxu0 0
        %2640 = vmatmul.mubr.bf16.gmra.mxu0 %v2597
        %v2641 = vpop.f32.mrf.mxu0
        %v2642 = vadd.f32 %v2555, %v2641
        %v2643 = vpop.f32.mrf.mxu0
        %v2644 = vpop.f32.mrf.mxu0
        %v2645 = vadd.f32 %v2555, %v2644
        %v2646 = vpop.f32.mrf.mxu0
        %2647 = vdwg.mxu0
        %v2648 = vmax.f32 %v2634, 0.0
        %v2649 = vmax.f32 %v2637, 0.0
        %v2650 = vmax.f32 %v2642, 0.0
        %v2651 = vmax.f32 %v2645, 0.0
        %v2656 = vrot.slane %v2648, 7
        %v2657 = vrot.slane %v2649, 7
        %v2658 = vsel %vm2218, %v2656, %v2657
        %v2659 = vrot.slane %v2650, 7
        %v2660 = vsel %vm2218, %v2657, %v2659
        %v2661 = vrot.slane %v2651, 7
        %v2662 = vsel %vm2218, %v2659, %v2661
        %v2667 = vsel %vm2218, 0.0, %v2656
        %v2668 = vrot.slane %v2648, 1
        %v2669 = vrot.slane %v2649, 1
        %v2670 = vsel %vm1976, %v2668, %v2669
        %v2671 = vrot.slane %v2650, 1
        %v2672 = vsel %vm1976, %v2669, %v2671
        %v2673 = vrot.slane %v2651, 1
        %v2674 = vsel %vm1976, %v2671, %v2673
        %v2676 = vsel %vm1666, %v2673, 0.0
        %2677 = vrot.lane.b32.xlu0 %v2648, 32
        %v2678 = vpop.permute.xlu0 %2677
        %2679 = vrot.lane.b32.xlu0 %v2649, 32
        %v2680 = vpop.permute.xlu0 %2679
        %2681 = vrot.lane.b32.xlu0 %v2650, 32
        %v2682 = vpop.permute.xlu0 %2681
        %2683 = vrot.lane.b32.xlu0 %v2651, 32
        %v2684 = vpop.permute.xlu0 %2683
        %2690 = vrot.lane.b32.xlu0 %v2670, 64
        %v2691 = vpop.permute.xlu0 %2690
        %2692 = vrot.lane.b32.xlu0 %v2672, 64
        %v2693 = vpop.permute.xlu0 %2692
        %2694 = vrot.lane.b32.xlu0 %v2674, 64
        %v2695 = vpop.permute.xlu0 %2694
        %2696 = vrot.lane.b32.xlu0 %v2676, 64
        %v2697 = vpop.permute.xlu0 %2696
        %v2702 = vsel %vm2526, %v2667, %v2678
        %v2703 = vsel %vm2526, %v2658, %v2680
        %v2704 = vsel %vm2526, %v2660, %v2682
        %v2705 = vsel %vm2526, %v2662, %v2684
        %v2706 = vsel %vm2531, %v2702, %v2691
        %v2707 = vsel %vm2531, %v2703, %v2693
        %v2708 = vsel %vm2531, %v2704, %v2695
        %v2709 = vsel %vm2531, %v2705, %v2697
        %v2710 = vpack.c.bf16 %v2707, %v2706
        %v2711 = vpack.c.bf16 %v2709, %v2708
        %v2712 = vld [vmem:[%s11] sm:$0xf]
        %v2713 = vld [vmem:[%s11 + $0x4] sm:$0xf]
        %v2714 = vld [vmem:[%s11 + $0x8] sm:$0xf]
        %v2715 = vld [vmem:[%s11 + $0xc] sm:$0xf]
        %v2716 = vld [vmem:[%s11 + $0x10] sm:$0xf]
        %v2717 = vld [vmem:[%s11 + $0x14] sm:$0xf]
        %v2718 = vld [vmem:[%s11 + $0x18] sm:$0xf]
        %v2719 = vld [vmem:[%s11 + $0x1c] sm:$0xf]
        %v2720 = vld [vmem:[%s11 + $0x20] sm:$0xf]
        %v2721 = vld [vmem:[%s11 + $0x24] sm:$0xf]
        %v2722 = vld [vmem:[%s11 + $0x28] sm:$0xf]
        %v2723 = vld [vmem:[%s11 + $0x2c] sm:$0xf]
        %v2724 = vld [vmem:[#allocation5] sm:$0x1]
        %v2726 = vlaneseq
        %v2727 = vshrl.u32 %v2726, 7
        %v2728 = vsub.s32 0, %v2727
        %v2729 = vrot.slane %v2724, %v2728
        %v2743 = vunpack.c.l.b16 %v2712
        %v2744 = vunpack.c.l.b16 %v2713
        %v2745 = vunpack.c.l.b16 %v2714
        %v2746 = vunpack.c.l.b16 %v2715
        %v2747 = vunpack.c.l.b16 %v2716
        %v2748 = vunpack.c.l.b16 %v2717
        %v2749 = vunpack.c.l.b16 %v2718
        %v2750 = vunpack.c.l.b16 %v2719
        %v2751 = vunpack.c.l.b16 %v2720
        %v2752 = vunpack.c.l.b16 %v2721
        %v2753 = vunpack.c.l.b16 %v2722
        %v2754 = vunpack.c.l.b16 %v2723
        %v2755 = vpack.c.b16 %v2744, %v2743
        %v2756 = vpack.c.b16 %v2746, %v2745
        %v2757 = vpack.c.b16 %v2748, %v2747
        %v2758 = vpack.c.b16 %v2750, %v2749
        %v2759 = vpack.c.b16 %v2752, %v2751
        %v2760 = vpack.c.b16 %v2754, %v2753
        %v2768 = vsel %vm2275, %v2710, 0
        %v2771 = vsel %vm2275, %v2711, 0
        %2773 = vmatprep.subr.bf16.mxu0 0
        %2774 = vmatpush1.bf16.msra.mxu0 0
        %2775 = vmatprep.subr.bf16.mxu0 0
        %2776 = vmatpush1.bf16.msra.mxu0 0
        %2777 = vmatprep.subr.bf16.mxu0 0
        %2778 = vmatpush1.bf16.msra.mxu0 %v2760
        %2779 = vmatprep.subr.bf16.mxu0 0
        %2780 = vmatpush1.bf16.msra.mxu0 %v2759
        %2781 = vmatprep.subr.bf16.mxu0 0
        %2782 = vmatpush1.bf16.msra.mxu0 %v2758
        %2783 = vmatprep.subr.bf16.mxu0 0
        %2784 = vmatpush1.bf16.msra.mxu0 %v2757
        %2785 = vmatprep.subr.bf16.mxu0 0
        %2786 = vmatpush1.bf16.msra.mxu0 %v2756
        %2787 = vmatprep.subr.bf16.mxu0 0
        %2788 = vmatpush1.bf16.msra.mxu0 %v2755
        %2789 = vmatprep.subr.bf16.mxu0 0
        %2790 = vmatpush2.bf16.msra.mxu0 0
        %2791 = vmatprep.subr.bf16.mxu0 0
        %2792 = vmatpush2.bf16.msra.mxu0 0
        %2793 = vmatprep.subr.bf16.mxu0 0
        %2794 = vmatpush2.bf16.msra.mxu0 0
        %2795 = vmatprep.subr.bf16.mxu0 0
        %2796 = vmatpush2.bf16.msra.mxu0 0
        %2797 = vmatprep.subr.bf16.mxu0 0
        %2798 = vmatpush2.bf16.msra.mxu0 0
        %2799 = vmatprep.subr.bf16.mxu0 0
        %2800 = vmatpush2.bf16.msra.mxu0 0
        %2801 = vmatprep.subr.bf16.mxu0 0
        %2802 = vmatpush2.bf16.msra.mxu0 0
        %2803 = vmatprep.subr.bf16.mxu0 0
        %2804 = vmatpush2.bf16.msra.mxu0 0
        %2805 = vmatprep.mubr.bf16.mxu0 0
        %2806 = vmatmul.mubr.bf16.gmra.mxu0 %v2768
        %v2807 = vpop.f32.mrf.mxu0
        %v2808 = vadd.f32 %v2729, %v2807
        %v2809 = vpop.f32.mrf.mxu0
        %v2810 = vpop.f32.mrf.mxu0
        %v2811 = vadd.f32 %v2729, %v2810
        %v2812 = vpop.f32.mrf.mxu0
        %2813 = vmatprep.mubr.bf16.mxu0 0
        %2814 = vmatmul.mubr.bf16.gmra.mxu0 %v2771
        %v2815 = vpop.f32.mrf.mxu0
        %v2816 = vadd.f32 %v2729, %v2815
        %v2817 = vpop.f32.mrf.mxu0
        %v2818 = vpop.f32.mrf.mxu0
        %v2819 = vadd.f32 %v2729, %v2818
        %v2820 = vpop.f32.mrf.mxu0
        %2821 = vdwg.mxu0
        %v2822 = vadd.f32 %v2808, %v2472
        %v2823 = vadd.f32 %v2811, %v2473
        %v2824 = vadd.f32 %v2816, %v2474
        %v2825 = vadd.f32 %v2819, %v2475
        %v2826 = vmax.f32 %v2822, 0.0
        %v2827 = vmax.f32 %v2823, 0.0
        %v2828 = vmax.f32 %v2824, 0.0
        %v2829 = vmax.f32 %v2825, 0.0
        %v2834 = vrot.slane %v2826, 7
        %v2835 = vrot.slane %v2827, 7
        %v2836 = vsel %vm2218, %v2834, %v2835
        %v2837 = vrot.slane %v2828, 7
        %v2838 = vsel %vm2218, %v2835, %v2837
        %v2839 = vrot.slane %v2829, 7
        %v2840 = vsel %vm2218, %v2837, %v2839
        %v2845 = vsel %vm2218, 0.0, %v2834
        %v2846 = vrot.slane %v2826, 1
        %v2847 = vrot.slane %v2827, 1
        %v2848 = vsel %vm1976, %v2846, %v2847
        %v2849 = vrot.slane %v2828, 1
        %v2850 = vsel %vm1976, %v2847, %v2849
        %v2851 = vrot.slane %v2829, 1
        %v2852 = vsel %vm1976, %v2849, %v2851
        %v2854 = vsel %vm1666, %v2851, 0.0
        %2855 = vrot.lane.b32.xlu0 %v2826, 32
        %v2856 = vpop.permute.xlu0 %2855
        %2857 = vrot.lane.b32.xlu0 %v2827, 32
        %v2858 = vpop.permute.xlu0 %2857
        %2859 = vrot.lane.b32.xlu0 %v2828, 32
        %v2860 = vpop.permute.xlu0 %2859
        %2861 = vrot.lane.b32.xlu0 %v2829, 32
        %v2862 = vpop.permute.xlu0 %2861
        %2868 = vrot.lane.b32.xlu0 %v2848, 64
        %v2869 = vpop.permute.xlu0 %2868
        %2870 = vrot.lane.b32.xlu0 %v2850, 64
        %v2871 = vpop.permute.xlu0 %2870
        %2872 = vrot.lane.b32.xlu0 %v2852, 64
        %v2873 = vpop.permute.xlu0 %2872
        %2874 = vrot.lane.b32.xlu0 %v2854, 64
        %v2875 = vpop.permute.xlu0 %2874
        %v2880 = vsel %vm2526, %v2845, %v2856
        %v2881 = vsel %vm2526, %v2836, %v2858
        %v2882 = vsel %vm2526, %v2838, %v2860
        %v2883 = vsel %vm2526, %v2840, %v2862
        %v2884 = vsel %vm2531, %v2880, %v2869
        %v2885 = vsel %vm2531, %v2881, %v2871
        %v2886 = vsel %vm2531, %v2882, %v2873
        %v2887 = vsel %vm2531, %v2883, %v2875
        %v2888 = vpack.c.bf16 %v2885, %v2884
        %v2889 = vpack.c.bf16 %v2887, %v2886
        %v2890 = vld [vmem:[%s15] sm:$0xf]
        %v2891 = vld [vmem:[%s15 + $0x4] sm:$0xf]
        %v2892 = vld [vmem:[%s15 + $0x8] sm:$0xf]
        %v2893 = vld [vmem:[%s15 + $0xc] sm:$0xf]
        %v2894 = vld [vmem:[%s15 + $0x10] sm:$0xf]
        %v2895 = vld [vmem:[%s15 + $0x14] sm:$0xf]
        %v2896 = vld [vmem:[%s15 + $0x18] sm:$0xf]
        %v2897 = vld [vmem:[%s15 + $0x1c] sm:$0xf]
        %v2898 = vld [vmem:[%s15 + $0x20] sm:$0xf]
        %v2899 = vld [vmem:[%s15 + $0x24] sm:$0xf]
        %v2900 = vld [vmem:[%s15 + $0x28] sm:$0xf]
        %v2901 = vld [vmem:[%s15 + $0x2c] sm:$0xf]
        %v2902 = vld [vmem:[#allocation7] sm:$0x1]
        %v2904 = vlaneseq
        %v2905 = vshrl.u32 %v2904, 7
        %v2906 = vsub.s32 0, %v2905
        %v2907 = vrot.slane %v2902, %v2906
        %v2921 = vunpack.c.l.b16 %v2890
        %v2922 = vunpack.c.l.b16 %v2891
        %v2923 = vunpack.c.l.b16 %v2892
        %v2924 = vunpack.c.l.b16 %v2893
        %v2925 = vunpack.c.l.b16 %v2894
        %v2926 = vunpack.c.l.b16 %v2895
        %v2927 = vunpack.c.l.b16 %v2896
        %v2928 = vunpack.c.l.b16 %v2897
        %v2929 = vunpack.c.l.b16 %v2898
        %v2930 = vunpack.c.l.b16 %v2899
        %v2931 = vunpack.c.l.b16 %v2900
        %v2932 = vunpack.c.l.b16 %v2901
        %v2933 = vpack.c.b16 %v2922, %v2921
        %v2934 = vpack.c.b16 %v2924, %v2923
        %v2935 = vpack.c.b16 %v2926, %v2925
        %v2936 = vpack.c.b16 %v2928, %v2927
        %v2937 = vpack.c.b16 %v2930, %v2929
        %v2938 = vpack.c.b16 %v2932, %v2931
        %v2946 = vsel %vm2275, %v2888, 0
        %v2949 = vsel %vm2275, %v2889, 0
        %2951 = vmatprep.subr.bf16.mxu0 0
        %2952 = vmatpush1.bf16.msra.mxu0 0
        %2953 = vmatprep.subr.bf16.mxu0 0
        %2954 = vmatpush1.bf16.msra.mxu0 0
        %2955 = vmatprep.subr.bf16.mxu0 0
        %2956 = vmatpush1.bf16.msra.mxu0 %v2938
        %2957 = vmatprep.subr.bf16.mxu0 0
        %2958 = vmatpush1.bf16.msra.mxu0 %v2937
        %2959 = vmatprep.subr.bf16.mxu0 0
        %2960 = vmatpush1.bf16.msra.mxu0 %v2936
        %2961 = vmatprep.subr.bf16.mxu0 0
        %2962 = vmatpush1.bf16.msra.mxu0 %v2935
        %2963 = vmatprep.subr.bf16.mxu0 0
        %2964 = vmatpush1.bf16.msra.mxu0 %v2934
        %2965 = vmatprep.subr.bf16.mxu0 0
        %2966 = vmatpush1.bf16.msra.mxu0 %v2933
        %2967 = vmatprep.subr.bf16.mxu0 0
        %2968 = vmatpush2.bf16.msra.mxu0 0
        %2969 = vmatprep.subr.bf16.mxu0 0
        %2970 = vmatpush2.bf16.msra.mxu0 0
        %2971 = vmatprep.subr.bf16.mxu0 0
        %2972 = vmatpush2.bf16.msra.mxu0 0
        %2973 = vmatprep.subr.bf16.mxu0 0
        %2974 = vmatpush2.bf16.msra.mxu0 0
        %2975 = vmatprep.subr.bf16.mxu0 0
        %2976 = vmatpush2.bf16.msra.mxu0 0
        %2977 = vmatprep.subr.bf16.mxu0 0
        %2978 = vmatpush2.bf16.msra.mxu0 0
        %2979 = vmatprep.subr.bf16.mxu0 0
        %2980 = vmatpush2.bf16.msra.mxu0 0
        %2981 = vmatprep.subr.bf16.mxu0 0
        %2982 = vmatpush2.bf16.msra.mxu0 0
        %2983 = vmatprep.mubr.bf16.mxu0 0
        %2984 = vmatmul.mubr.bf16.gmra.mxu0 %v2946
        %v2985 = vpop.f32.mrf.mxu0
        %v2986 = vadd.f32 %v2907, %v2985
        %v2987 = vpop.f32.mrf.mxu0
        %v2988 = vpop.f32.mrf.mxu0
        %v2989 = vadd.f32 %v2907, %v2988
        %v2990 = vpop.f32.mrf.mxu0
        %2991 = vmatprep.mubr.bf16.mxu0 0
        %2992 = vmatmul.mubr.bf16.gmra.mxu0 %v2949
        %v2993 = vpop.f32.mrf.mxu0
        %v2994 = vadd.f32 %v2907, %v2993
        %v2995 = vpop.f32.mrf.mxu0
        %v2996 = vpop.f32.mrf.mxu0
        %v2997 = vadd.f32 %v2907, %v2996
        %v2998 = vpop.f32.mrf.mxu0
        %2999 = vdwg.mxu0
        %v3000 = vmax.f32 %v2986, 0.0
        %v3001 = vmax.f32 %v2989, 0.0
        %v3002 = vmax.f32 %v2994, 0.0
        %v3003 = vmax.f32 %v2997, 0.0
        %v3008 = vrot.slane %v3000, 7
        %v3009 = vrot.slane %v3001, 7
        %v3010 = vsel %vm2218, %v3008, %v3009
        %v3011 = vrot.slane %v3002, 7
        %v3012 = vsel %vm2218, %v3009, %v3011
        %v3013 = vrot.slane %v3003, 7
        %v3014 = vsel %vm2218, %v3011, %v3013
        %v3019 = vsel %vm2218, 0.0, %v3008
        %v3020 = vrot.slane %v3000, 1
        %v3021 = vrot.slane %v3001, 1
        %v3022 = vsel %vm1976, %v3020, %v3021
        %v3023 = vrot.slane %v3002, 1
        %v3024 = vsel %vm1976, %v3021, %v3023
        %v3025 = vrot.slane %v3003, 1
        %v3026 = vsel %vm1976, %v3023, %v3025
        %v3028 = vsel %vm1666, %v3025, 0.0
        %3029 = vrot.lane.b32.xlu0 %v3000, 32
        %v3030 = vpop.permute.xlu0 %3029
        %3031 = vrot.lane.b32.xlu0 %v3001, 32
        %v3032 = vpop.permute.xlu0 %3031
        %3033 = vrot.lane.b32.xlu0 %v3002, 32
        %v3034 = vpop.permute.xlu0 %3033
        %3035 = vrot.lane.b32.xlu0 %v3003, 32
        %v3036 = vpop.permute.xlu0 %3035
        %3042 = vrot.lane.b32.xlu0 %v3022, 64
        %v3043 = vpop.permute.xlu0 %3042
        %3044 = vrot.lane.b32.xlu0 %v3024, 64
        %v3045 = vpop.permute.xlu0 %3044
        %3046 = vrot.lane.b32.xlu0 %v3026, 64
        %v3047 = vpop.permute.xlu0 %3046
        %3048 = vrot.lane.b32.xlu0 %v3028, 64
        %v3049 = vpop.permute.xlu0 %3048
        %v3054 = vsel %vm2526, %v3019, %v3030
        %v3055 = vsel %vm2526, %v3010, %v3032
        %v3056 = vsel %vm2526, %v3012, %v3034
        %v3057 = vsel %vm2526, %v3014, %v3036
        %v3058 = vsel %vm2531, %v3054, %v3043
        %v3059 = vsel %vm2531, %v3055, %v3045
        %v3060 = vsel %vm2531, %v3056, %v3047
        %v3061 = vsel %vm2531, %v3057, %v3049
        %v3062 = vpack.c.bf16 %v3059, %v3058
        %v3063 = vpack.c.bf16 %v3061, %v3060
        %v3064 = vld [vmem:[%s19] sm:$0xf]
        %v3065 = vld [vmem:[%s19 + $0x4] sm:$0xf]
        %v3066 = vld [vmem:[%s19 + $0x8] sm:$0xf]
        %v3067 = vld [vmem:[%s19 + $0xc] sm:$0xf]
        %v3068 = vld [vmem:[%s19 + $0x10] sm:$0xf]
        %v3069 = vld [vmem:[%s19 + $0x14] sm:$0xf]
        %v3070 = vld [vmem:[%s19 + $0x18] sm:$0xf]
        %v3071 = vld [vmem:[%s19 + $0x1c] sm:$0xf]
        %v3072 = vld [vmem:[%s19 + $0x20] sm:$0xf]
        %v3073 = vld [vmem:[%s19 + $0x24] sm:$0xf]
        %v3074 = vld [vmem:[%s19 + $0x28] sm:$0xf]
        %v3075 = vld [vmem:[%s19 + $0x2c] sm:$0xf]
        %v3076 = vld [vmem:[#allocation8] sm:$0x1]
        %v3078 = vlaneseq
        %v3079 = vshrl.u32 %v3078, 7
        %v3080 = vsub.s32 0, %v3079
        %v3081 = vrot.slane %v3076, %v3080
        %v3095 = vunpack.c.l.b16 %v3064
        %v3096 = vunpack.c.l.b16 %v3065
        %v3097 = vunpack.c.l.b16 %v3066
        %v3098 = vunpack.c.l.b16 %v3067
        %v3099 = vunpack.c.l.b16 %v3068
        %v3100 = vunpack.c.l.b16 %v3069
        %v3101 = vunpack.c.l.b16 %v3070
        %v3102 = vunpack.c.l.b16 %v3071
        %v3103 = vunpack.c.l.b16 %v3072
        %v3104 = vunpack.c.l.b16 %v3073
        %v3105 = vunpack.c.l.b16 %v3074
        %v3106 = vunpack.c.l.b16 %v3075
        %v3107 = vpack.c.b16 %v3096, %v3095
        %v3108 = vpack.c.b16 %v3098, %v3097
        %v3109 = vpack.c.b16 %v3100, %v3099
        %v3110 = vpack.c.b16 %v3102, %v3101
        %v3111 = vpack.c.b16 %v3104, %v3103
        %v3112 = vpack.c.b16 %v3106, %v3105
        %v3120 = vsel %vm2275, %v3062, 0
        %v3123 = vsel %vm2275, %v3063, 0
        %3125 = vmatprep.subr.bf16.mxu0 0
        %3126 = vmatpush1.bf16.msra.mxu0 0
        %3127 = vmatprep.subr.bf16.mxu0 0
        %3128 = vmatpush1.bf16.msra.mxu0 0
        %3129 = vmatprep.subr.bf16.mxu0 0
        %3130 = vmatpush1.bf16.msra.mxu0 %v3112
        %3131 = vmatprep.subr.bf16.mxu0 0
        %3132 = vmatpush1.bf16.msra.mxu0 %v3111
        %3133 = vmatprep.subr.bf16.mxu0 0
        %3134 = vmatpush1.bf16.msra.mxu0 %v3110
        %3135 = vmatprep.subr.bf16.mxu0 0
        %3136 = vmatpush1.bf16.msra.mxu0 %v3109
        %3137 = vmatprep.subr.bf16.mxu0 0
        %3138 = vmatpush1.bf16.msra.mxu0 %v3108
        %3139 = vmatprep.subr.bf16.mxu0 0
        %3140 = vmatpush1.bf16.msra.mxu0 %v3107
        %3141 = vmatprep.subr.bf16.mxu0 0
        %3142 = vmatpush2.bf16.msra.mxu0 0
        %3143 = vmatprep.subr.bf16.mxu0 0
        %3144 = vmatpush2.bf16.msra.mxu0 0
        %3145 = vmatprep.subr.bf16.mxu0 0
        %3146 = vmatpush2.bf16.msra.mxu0 0
        %3147 = vmatprep.subr.bf16.mxu0 0
        %3148 = vmatpush2.bf16.msra.mxu0 0
        %3149 = vmatprep.subr.bf16.mxu0 0
        %3150 = vmatpush2.bf16.msra.mxu0 0
        %3151 = vmatprep.subr.bf16.mxu0 0
        %3152 = vmatpush2.bf16.msra.mxu0 0
        %3153 = vmatprep.subr.bf16.mxu0 0
        %3154 = vmatpush2.bf16.msra.mxu0 0
        %3155 = vmatprep.subr.bf16.mxu0 0
        %3156 = vmatpush2.bf16.msra.mxu0 0
        %3157 = vmatprep.mubr.bf16.mxu0 0
        %3158 = vmatmul.mubr.bf16.gmra.mxu0 %v3120
        %v3159 = vpop.f32.mrf.mxu0
        %v3160 = vadd.f32 %v3081, %v3159
        %v3161 = vpop.f32.mrf.mxu0
        %v3162 = vpop.f32.mrf.mxu0
        %v3163 = vadd.f32 %v3081, %v3162
        %v3164 = vpop.f32.mrf.mxu0
        %3165 = vmatprep.mubr.bf16.mxu0 0
        %3166 = vmatmul.mubr.bf16.gmra.mxu0 %v3123
        %v3167 = vpop.f32.mrf.mxu0
        %v3168 = vadd.f32 %v3081, %v3167
        %v3169 = vpop.f32.mrf.mxu0
        %v3170 = vpop.f32.mrf.mxu0
        %v3171 = vadd.f32 %v3081, %v3170
        %v3172 = vpop.f32.mrf.mxu0
        %3173 = vdwg.mxu0
        %v3174 = vadd.f32 %v3160, %v2826
        %v3175 = vadd.f32 %v3163, %v2827
        %v3176 = vadd.f32 %v3168, %v2828
        %v3177 = vadd.f32 %v3171, %v2829
        %v3178 = vmax.f32 %v3174, 0.0
        %v3179 = vmax.f32 %v3175, 0.0
        %v3180 = vmax.f32 %v3176, 0.0
        %v3181 = vmax.f32 %v3177, 0.0
        %v3186 = vrot.slane %v3178, 7
        %v3187 = vrot.slane %v3179, 7
        %v3188 = vsel %vm2218, %v3186, %v3187
        %v3189 = vrot.slane %v3180, 7
        %v3190 = vsel %vm2218, %v3187, %v3189
        %v3191 = vrot.slane %v3181, 7
        %v3192 = vsel %vm2218, %v3189, %v3191
        %v3197 = vsel %vm2218, 0.0, %v3186
        %v3198 = vsel %vm2053, %v3192, 0.0
        %vm3199 = vcmask 244736
        %v3200 = vsel %vm3199, %v1716, 0
        %v3202 = vsel %vm3199, %v1717, 0
        %v3205 = vsel %vm1757, %v3198, 0
        %3207 = vmatprep.subr.mxu0 0.0
        %3208 = vmatpush1.msra.mxu0 0.0
        %3209 = vmatprep.subr.mxu0 0.0
        %3210 = vmatpush1.msra.mxu0 0.0
        %3211 = vmatprep.subr.mxu0 0.0
        %3212 = vmatpush1.msra.mxu0 0.0
        %3213 = vmatprep.subr.mxu0 0.0
        %3214 = vmatpush1.msra.mxu0 0.0
        %3215 = vmatprep.subr.mxu0 0.0
        %3216 = vmatpush1.msra.mxu0 0.0
        %3217 = vmatprep.subr.mxu0 0.0
        %3218 = vmatpush1.msra.mxu0 0.0
        %3219 = vmatprep.subr.mxu0 0.0
        %3220 = vmatpush1.msra.mxu0 0.0
        %3221 = vmatprep.subr.mxu0 0.0
        %3222 = vmatpush1.msra.mxu0 0.0
        %3223 = vmatprep.subr.mxu0 0.0
        %3224 = vmatpush1.msra.mxu0 0.0
        %3225 = vmatprep.subr.mxu0 0.0
        %3226 = vmatpush1.msra.mxu0 0.0
        %3227 = vmatprep.subr.mxu0 0.0
        %3228 = vmatpush1.msra.mxu0 0.0
        %3229 = vmatprep.subr.mxu0 0.0
        %3230 = vmatpush1.msra.mxu0 0.0
        %3231 = vmatprep.subr.mxu0 0.0
        %3232 = vmatpush1.msra.mxu0 %v3205
        %3233 = vmatprep.subr.mxu0 0.0
        %3234 = vmatpush1.msra.mxu0 %v3190
        %3235 = vmatprep.subr.mxu0 0.0
        %3236 = vmatpush1.msra.mxu0 %v3188
        %3237 = vmatprep.subr.mxu0 0.0
        %3238 = vmatpush1.msra.mxu0 %v3197
        %3239 = vmatprep.subr.mxu0 0.0
        %3240 = vmatpush2.msra.mxu0 0.0
        %3241 = vmatprep.subr.mxu0 0.0
        %3242 = vmatpush2.msra.mxu0 0.0
        %3243 = vmatprep.subr.mxu0 0.0
        %3244 = vmatpush2.msra.mxu0 0.0
        %3245 = vmatprep.subr.mxu0 0.0
        %3246 = vmatpush2.msra.mxu0 0.0
        %3247 = vmatprep.subr.mxu0 0.0
        %3248 = vmatpush2.msra.mxu0 0.0
        %3249 = vmatprep.subr.mxu0 0.0
        %3250 = vmatpush2.msra.mxu0 0.0
        %3251 = vmatprep.subr.mxu0 0.0
        %3252 = vmatpush2.msra.mxu0 0.0
        %3253 = vmatprep.subr.mxu0 0.0
        %3254 = vmatpush2.msra.mxu0 0.0
        %3255 = vmatprep.subr.mxu0 0.0
        %3256 = vmatpush2.msra.mxu0 0.0
        %3257 = vmatprep.subr.mxu0 0.0
        %3258 = vmatpush2.msra.mxu0 0.0
        %3259 = vmatprep.subr.mxu0 0.0
        %3260 = vmatpush2.msra.mxu0 0.0
        %3261 = vmatprep.subr.mxu0 0.0
        %3262 = vmatpush2.msra.mxu0 0.0
        %3263 = vmatprep.subr.mxu0 0.0
        %3264 = vmatpush2.msra.mxu0 0.0
        %3265 = vmatprep.subr.mxu0 0.0
        %3266 = vmatpush2.msra.mxu0 0.0
        %3267 = vmatprep.subr.mxu0 0.0
        %3268 = vmatpush2.msra.mxu0 0.0
        %3269 = vmatprep.subr.mxu0 0.0
        %3270 = vmatpush2.msra.mxu0 0.0
        %3271 = vmatprep.mubr.f32.mxu0 0.0
        %3272 = vmatmul.mubr.f32.gmra.mxu0 %v3200
        %v3273 = vpop.f32.mrf.mxu0
        %v3274 = vadd.f32 0.0, %v3273
        %v3275 = vpop.f32.mrf.mxu0
        %3276 = vmatprep.mubr.f32.mxu0 0.0
        %3277 = vmatmul.mubr.f32.gmra.mxu0 %v3202
        %v3278 = vpop.f32.mrf.mxu0
        %v3279 = vadd.f32 0.0, %v3278
        %v3280 = vpop.f32.mrf.mxu0
        %3281 = vdwg.mxu0
        %v3282 = vsel %vm3199, %v1736, 0
        %v3284 = vsel %vm3199, %v1737, 0
        %3286 = vmatprep.subr.mxu0 0.0
        %3287 = vmatpush1.msra.mxu0 0.0
        %3288 = vmatprep.subr.mxu0 0.0
        %3289 = vmatpush1.msra.mxu0 0.0
        %3290 = vmatprep.subr.mxu0 0.0
        %3291 = vmatpush1.msra.mxu0 0.0
        %3292 = vmatprep.subr.mxu0 0.0
        %3293 = vmatpush1.msra.mxu0 0.0
        %3294 = vmatprep.subr.mxu0 0.0
        %3295 = vmatpush1.msra.mxu0 0.0
        %3296 = vmatprep.subr.mxu0 0.0
        %3297 = vmatpush1.msra.mxu0 0.0
        %3298 = vmatprep.subr.mxu0 0.0
        %3299 = vmatpush1.msra.mxu0 0.0
        %3300 = vmatprep.subr.mxu0 0.0
        %3301 = vmatpush1.msra.mxu0 0.0
        %3302 = vmatprep.subr.mxu0 0.0
        %3303 = vmatpush1.msra.mxu0 0.0
        %3304 = vmatprep.subr.mxu0 0.0
        %3305 = vmatpush1.msra.mxu0 0.0
        %3306 = vmatprep.subr.mxu0 0.0
        %3307 = vmatpush1.msra.mxu0 0.0
        %3308 = vmatprep.subr.mxu0 0.0
        %3309 = vmatpush1.msra.mxu0 0.0
        %3310 = vmatprep.subr.mxu0 0.0
        %3311 = vmatpush1.msra.mxu0 %v3205
        %3312 = vmatprep.subr.mxu0 0.0
        %3313 = vmatpush1.msra.mxu0 %v3190
        %3314 = vmatprep.subr.mxu0 0.0
        %3315 = vmatpush1.msra.mxu0 %v3188
        %3316 = vmatprep.subr.mxu0 0.0
        %3317 = vmatpush1.msra.mxu0 %v3197
        %3318 = vmatprep.subr.mxu0 0.0
        %3319 = vmatpush2.msra.mxu0 0.0
        %3320 = vmatprep.subr.mxu0 0.0
        %3321 = vmatpush2.msra.mxu0 0.0
        %3322 = vmatprep.subr.mxu0 0.0
        %3323 = vmatpush2.msra.mxu0 0.0
        %3324 = vmatprep.subr.mxu0 0.0
        %3325 = vmatpush2.msra.mxu0 0.0
        %3326 = vmatprep.subr.mxu0 0.0
        %3327 = vmatpush2.msra.mxu0 0.0
        %3328 = vmatprep.subr.mxu0 0.0
        %3329 = vmatpush2.msra.mxu0 0.0
        %3330 = vmatprep.subr.mxu0 0.0
        %3331 = vmatpush2.msra.mxu0 0.0
        %3332 = vmatprep.subr.mxu0 0.0
        %3333 = vmatpush2.msra.mxu0 0.0
        %3334 = vmatprep.subr.mxu0 0.0
        %3335 = vmatpush2.msra.mxu0 0.0
        %3336 = vmatprep.subr.mxu0 0.0
        %3337 = vmatpush2.msra.mxu0 0.0
        %3338 = vmatprep.subr.mxu0 0.0
        %3339 = vmatpush2.msra.mxu0 0.0
        %3340 = vmatprep.subr.mxu0 0.0
        %3341 = vmatpush2.msra.mxu0 0.0
        %3342 = vmatprep.subr.mxu0 0.0
        %3343 = vmatpush2.msra.mxu0 0.0
        %3344 = vmatprep.subr.mxu0 0.0
        %3345 = vmatpush2.msra.mxu0 0.0
        %3346 = vmatprep.subr.mxu0 0.0
        %3347 = vmatpush2.msra.mxu0 0.0
        %3348 = vmatprep.subr.mxu0 0.0
        %3349 = vmatpush2.msra.mxu0 0.0
        %3350 = vmatprep.mubr.f32.mxu0 0.0
        %3351 = vmatmul.mubr.f32.gmra.mxu0 %v3282
        %v3352 = vpop.f32.mrf.mxu0
        %v3353 = vadd.f32 0.0, %v3352
        %v3354 = vpop.f32.mrf.mxu0
        %3355 = vmatprep.mubr.f32.mxu0 0.0
        %3356 = vmatmul.mubr.f32.gmra.mxu0 %v3284
        %v3357 = vpop.f32.mrf.mxu0
        %v3358 = vadd.f32 0.0, %v3357
        %v3359 = vpop.f32.mrf.mxu0
        %3360 = vdwg.mxu0
        %3363 = vrot.lane.b32.xlu0 %v3353, 32
        %v3364 = vpop.permute.xlu0 %3363
        %3365 = vrot.lane.b32.xlu0 %v3358, 32
        %v3366 = vpop.permute.xlu0 %3365
        %v3371 = vrot.slane %v3274, 1
        %v3372 = vrot.slane %v3279, 1
        %v3373 = vsel %vm1976, %v3371, %v3372
        %3374 = vrot.lane.b32.xlu0 %v3373, 64
        %v3375 = vpop.permute.xlu0 %3374
        %3376 = vrot.lane.b32.xlu0 %v3372, 64
        %v3377 = vpop.permute.xlu0 %3376
        %v3380 = vsel %vm2526, %v3274, %v3364
        %v3381 = vsel %vm2526, %v3279, %v3366
        %v3382 = vsel %vm2531, %v3380, %v3375
        %v3383 = vsel %vm2531, %v3381, %v3377
        %v3384 = vpack.c.bf16 %v3383, %v3382
        %v3385 = vld [vmem:[%s23] sm:$0xf]
        %v3386 = vld [vmem:[%s23 + $0x4] sm:$0xf]
        %v3387 = vld [vmem:[%s23 + $0x8] sm:$0xf]
        %v3388 = vld [vmem:[%s23 + $0xc] sm:$0xf]
        %v3389 = vld [vmem:[%s23 + $0x10] sm:$0xf]
        %v3390 = vld [vmem:[%s23 + $0x14] sm:$0xf]
        %v3391 = vld [vmem:[%s23 + $0x18] sm:$0xf]
        %v3392 = vld [vmem:[%s23 + $0x1c] sm:$0xf]
        %v3393 = vld [vmem:[%s23 + $0x20] sm:$0xf]
        %v3394 = vld [vmem:[%s23 + $0x24] sm:$0xf]
        %v3395 = vld [vmem:[%s23 + $0x28] sm:$0xf]
        %v3396 = vld [vmem:[%s23 + $0x2c] sm:$0xf]
        %v3397 = vld [vmem:[#allocation10] sm:$0x1]
        %v3399 = vlaneseq
        %v3400 = vshrl.u32 %v3399, 7
        %v3401 = vsub.s32 0, %v3400
        %v3402 = vrot.slane %v3397, %v3401
        %v3416 = vunpack.c.l.b16 %v3385
        %v3417 = vunpack.c.l.b16 %v3386
        %v3418 = vunpack.c.l.b16 %v3387
        %v3419 = vunpack.c.l.b16 %v3388
        %v3420 = vunpack.c.l.b16 %v3389
        %v3421 = vunpack.c.l.b16 %v3390
        %v3422 = vunpack.c.l.b16 %v3391
        %v3423 = vunpack.c.l.b16 %v3392
        %v3424 = vunpack.c.l.b16 %v3393
        %v3425 = vunpack.c.l.b16 %v3394
        %v3426 = vunpack.c.l.b16 %v3395
        %v3427 = vunpack.c.l.b16 %v3396
        %v3428 = vpack.c.b16 %v3417, %v3416
        %v3429 = vpack.c.b16 %v3419, %v3418
        %v3430 = vpack.c.b16 %v3421, %v3420
        %v3431 = vpack.c.b16 %v3423, %v3422
        %v3432 = vpack.c.b16 %v3425, %v3424
        %v3433 = vpack.c.b16 %v3427, %v3426
        %v3441 = vsel %vm2275, %v3384, 0
        %3443 = vmatprep.subr.bf16.mxu0 0
        %3444 = vmatpush1.bf16.msra.mxu0 0
        %3445 = vmatprep.subr.bf16.mxu0 0
        %3446 = vmatpush1.bf16.msra.mxu0 0
        %3447 = vmatprep.subr.bf16.mxu0 0
        %3448 = vmatpush1.bf16.msra.mxu0 %v3433
        %3449 = vmatprep.subr.bf16.mxu0 0
        %3450 = vmatpush1.bf16.msra.mxu0 %v3432
        %3451 = vmatprep.subr.bf16.mxu0 0
        %3452 = vmatpush1.bf16.msra.mxu0 %v3431
        %3453 = vmatprep.subr.bf16.mxu0 0
        %3454 = vmatpush1.bf16.msra.mxu0 %v3430
        %3455 = vmatprep.subr.bf16.mxu0 0
        %3456 = vmatpush1.bf16.msra.mxu0 %v3429
        %3457 = vmatprep.subr.bf16.mxu0 0
        %3458 = vmatpush1.bf16.msra.mxu0 %v3428
        %3459 = vmatprep.subr.bf16.mxu0 0
        %3460 = vmatpush2.bf16.msra.mxu0 0
        %3461 = vmatprep.subr.bf16.mxu0 0
        %3462 = vmatpush2.bf16.msra.mxu0 0
        %3463 = vmatprep.subr.bf16.mxu0 0
        %3464 = vmatpush2.bf16.msra.mxu0 0
        %3465 = vmatprep.subr.bf16.mxu0 0
        %3466 = vmatpush2.bf16.msra.mxu0 0
        %3467 = vmatprep.subr.bf16.mxu0 0
        %3468 = vmatpush2.bf16.msra.mxu0 0
        %3469 = vmatprep.subr.bf16.mxu0 0
        %3470 = vmatpush2.bf16.msra.mxu0 0
        %3471 = vmatprep.subr.bf16.mxu0 0
        %3472 = vmatpush2.bf16.msra.mxu0 0
        %3473 = vmatprep.subr.bf16.mxu0 0
        %3474 = vmatpush2.bf16.msra.mxu0 0
        %3475 = vmatprep.mubr.bf16.mxu0 0
        %3476 = vmatmul.mubr.bf16.gmra.mxu0 %v3441
        %v3477 = vpop.f32.mrf.mxu0
        %v3478 = vadd.f32 %v3402, %v3477
        %v3479 = vpop.f32.mrf.mxu0
        %v3480 = vpop.f32.mrf.mxu0
        %v3481 = vadd.f32 %v3402, %v3480
        %v3482 = vpop.f32.mrf.mxu0
        %3483 = vdwg.mxu0
        %v3484 = vmax.f32 %v3478, 0.0
        %v3485 = vmax.f32 %v3481, 0.0
        %v3488 = vrot.slane %v3484, 7
        %v3489 = vrot.slane %v3485, 7
        %v3490 = vsel %vm2218, %v3488, %v3489
        %v3493 = vsel %vm2218, 0.0, %v3488
        %v3494 = vrot.slane %v3484, 1
        %v3495 = vrot.slane %v3485, 1
        %v3496 = vsel %vm1976, %v3494, %v3495
        %v3499 = vsel %vm2053, %v3495, 0.0
        %3500 = vrot.lane.b32.xlu0 %v3484, 64
        %v3501 = vpop.permute.xlu0 %3500
        %3502 = vrot.lane.b32.xlu0 %v3485, 64
        %v3503 = vpop.permute.xlu0 %3502
        %v3506 = vsel %vm2531, %v3493, %v3501
        %v3507 = vsel %vm2531, %v3490, %v3503
        %v3508 = vpack.c.bf16 %v3507, %v3506
        %v3509 = vpack.c.bf16 %v3499, %v3496
        %v3510 = vld [vmem:[%s31] sm:$0xf]
        %v3511 = vld [vmem:[%s31 + $0x4] sm:$0xf]
        %v3512 = vld [vmem:[%s31 + $0x8] sm:$0xf]
        %v3513 = vld [vmem:[%s31 + $0xc] sm:$0xf]
        %v3514 = vld [vmem:[%s31 + $0x10] sm:$0xf]
        %v3515 = vld [vmem:[%s31 + $0x14] sm:$0xf]
        %v3516 = vld [vmem:[%s31 + $0x18] sm:$0xf]
        %v3517 = vld [vmem:[%s31 + $0x1c] sm:$0xf]
        %v3518 = vld [vmem:[%s31 + $0x20] sm:$0xf]
        %v3519 = vld [vmem:[%s31 + $0x24] sm:$0xf]
        %v3520 = vld [vmem:[%s31 + $0x28] sm:$0xf]
        %v3521 = vld [vmem:[%s31 + $0x2c] sm:$0xf]
        %v3522 = vld [vmem:[%s31 + $0x30] sm:$0xf]
        %v3523 = vld [vmem:[%s31 + $0x34] sm:$0xf]
        %v3524 = vld [vmem:[%s31 + $0x38] sm:$0xf]
        %v3525 = vld [vmem:[%s31 + $0x3c] sm:$0xf]
        %v3526 = vld [vmem:[%s31 + $0x40] sm:$0xf]
        %v3527 = vld [vmem:[%s31 + $0x44] sm:$0xf]
        %v3528 = vld [vmem:[%s31 + $0x48] sm:$0xf]
        %v3529 = vld [vmem:[%s31 + $0x4c] sm:$0xf]
        %v3530 = vld [vmem:[%s31 + $0x50] sm:$0xf]
        %v3531 = vld [vmem:[%s31 + $0x54] sm:$0xf]
        %v3532 = vld [vmem:[%s31 + $0x58] sm:$0xf]
        %v3533 = vld [vmem:[%s31 + $0x5c] sm:$0xf]
        %v3534 = vld [vmem:[#allocation14] sm:$0x1]
        %v3536 = vlaneseq
        %v3537 = vshrl.u32 %v3536, 7
        %v3538 = vsub.s32 0, %v3537
        %v3539 = vrot.slane %v3534, %v3538
        %v3565 = vunpack.c.l.b16 %v3510
        %v3566 = vunpack.c.l.b16 %v3511
        %v3567 = vunpack.c.l.b16 %v3512
        %v3568 = vunpack.c.l.b16 %v3513
        %v3569 = vunpack.c.l.b16 %v3514
        %v3570 = vunpack.c.l.b16 %v3515
        %v3571 = vunpack.c.l.b16 %v3516
        %v3572 = vunpack.c.l.b16 %v3517
        %v3573 = vunpack.c.l.b16 %v3518
        %v3574 = vunpack.c.l.b16 %v3519
        %v3575 = vunpack.c.l.b16 %v3520
        %v3576 = vunpack.c.l.b16 %v3521
        %v3577 = vunpack.c.l.b16 %v3522
        %v3578 = vunpack.c.l.b16 %v3523
        %v3579 = vunpack.c.l.b16 %v3524
        %v3580 = vunpack.c.l.b16 %v3525
        %v3581 = vunpack.c.l.b16 %v3526
        %v3582 = vunpack.c.l.b16 %v3527
        %v3583 = vunpack.c.l.b16 %v3528
        %v3584 = vunpack.c.l.b16 %v3529
        %v3585 = vunpack.c.l.b16 %v3530
        %v3586 = vunpack.c.l.b16 %v3531
        %v3587 = vunpack.c.l.b16 %v3532
        %v3588 = vunpack.c.l.b16 %v3533
        %v3589 = vpack.c.b16 %v3566, %v3565
        %v3590 = vpack.c.b16 %v3568, %v3567
        %v3591 = vpack.c.b16 %v3570, %v3569
        %v3592 = vpack.c.b16 %v3572, %v3571
        %v3593 = vpack.c.b16 %v3574, %v3573
        %v3594 = vpack.c.b16 %v3576, %v3575
        %v3595 = vpack.c.b16 %v3578, %v3577
        %v3596 = vpack.c.b16 %v3580, %v3579
        %v3597 = vpack.c.b16 %v3582, %v3581
        %v3598 = vpack.c.b16 %v3584, %v3583
        %v3599 = vpack.c.b16 %v3586, %v3585
        %v3600 = vpack.c.b16 %v3588, %v3587
        %v3614 = vsel %vm2531, %v3509, 0
        %3616 = vmatprep.subr.bf16.mxu0 0
        %3617 = vmatpush1.bf16.msra.mxu0 %v3596
        %3618 = vmatprep.subr.bf16.mxu0 0
        %3619 = vmatpush1.bf16.msra.mxu0 %v3595
        %3620 = vmatprep.subr.bf16.mxu0 0
        %3621 = vmatpush1.bf16.msra.mxu0 %v3594
        %3622 = vmatprep.subr.bf16.mxu0 0
        %3623 = vmatpush1.bf16.msra.mxu0 %v3593
        %3624 = vmatprep.subr.bf16.mxu0 0
        %3625 = vmatpush1.bf16.msra.mxu0 %v3592
        %3626 = vmatprep.subr.bf16.mxu0 0
        %3627 = vmatpush1.bf16.msra.mxu0 %v3591
        %3628 = vmatprep.subr.bf16.mxu0 0
        %3629 = vmatpush1.bf16.msra.mxu0 %v3590
        %3630 = vmatprep.subr.bf16.mxu0 0
        %3631 = vmatpush1.bf16.msra.mxu0 %v3589
        %3632 = vmatprep.subr.bf16.mxu0 0
        %3633 = vmatpush2.bf16.msra.mxu0 0
        %3634 = vmatprep.subr.bf16.mxu0 0
        %3635 = vmatpush2.bf16.msra.mxu0 0
        %3636 = vmatprep.subr.bf16.mxu0 0
        %3637 = vmatpush2.bf16.msra.mxu0 0
        %3638 = vmatprep.subr.bf16.mxu0 0
        %3639 = vmatpush2.bf16.msra.mxu0 0
        %3640 = vmatprep.subr.bf16.mxu0 0
        %3641 = vmatpush2.bf16.msra.mxu0 %v3600
        %3642 = vmatprep.subr.bf16.mxu0 0
        %3643 = vmatpush2.bf16.msra.mxu0 %v3599
        %3644 = vmatprep.subr.bf16.mxu0 0
        %3645 = vmatpush2.bf16.msra.mxu0 %v3598
        %3646 = vmatprep.subr.bf16.mxu0 0
        %3647 = vmatpush2.bf16.msra.mxu0 %v3597
        %3648 = vmatprep.mubr.bf16.mxu0 %v3614
        %3649 = vmatmul.mubr.bf16.gmra.mxu0 %v3508
        %v3650 = vpop.f32.mrf.mxu0
        %v3651 = vadd.f32 %v3539, %v3650
        %v3652 = vpop.f32.mrf.mxu0
        %v3653 = vpop.f32.mrf.mxu0
        %v3654 = vadd.f32 %v3539, %v3653
        %v3655 = vpop.f32.mrf.mxu0
        %3656 = vdwg.mxu0
        %v3657 = vpack.c.bf16 %v3358, %v3353
        %v3658 = vld [vmem:[#allocation11] sm:$0xf]
        %v3659 = vld [vmem:[#allocation11 + $0x4] sm:$0xf]
        %v3660 = vld [vmem:[#allocation11 + $0x8] sm:$0xf]
        %v3661 = vld [vmem:[#allocation11 + $0xc] sm:$0xf]
        %v3662 = vld [vmem:[#allocation13] sm:$0x1]
        %v3664 = vlaneseq
        %v3665 = vshrl.u32 %v3664, 7
        %v3666 = vsub.s32 0, %v3665
        %v3667 = vrot.slane %v3662, %v3666
        %v3673 = vunpack.c.l.b16 %v3658
        %v3674 = vunpack.c.l.b16 %v3659
        %v3675 = vunpack.c.l.b16 %v3660
        %v3676 = vunpack.c.l.b16 %v3661
        %v3677 = vpack.c.b16 %v3674, %v3673
        %v3678 = vpack.c.b16 %v3676, %v3675
        %v3682 = vsel %vm2526, %v3657, 0
        %3684 = vmatprep.subr.bf16.mxu0 0
        %3685 = vmatpush1.bf16.msra.mxu0 0
        %3686 = vmatprep.subr.bf16.mxu0 0
        %3687 = vmatpush1.bf16.msra.mxu0 0
        %3688 = vmatprep.subr.bf16.mxu0 0
        %3689 = vmatpush1.bf16.msra.mxu0 0
        %3690 = vmatprep.subr.bf16.mxu0 0
        %3691 = vmatpush1.bf16.msra.mxu0 0
        %3692 = vmatprep.subr.bf16.mxu0 0
        %3693 = vmatpush1.bf16.msra.mxu0 0
        %3694 = vmatprep.subr.bf16.mxu0 0
        %3695 = vmatpush1.bf16.msra.mxu0 0
        %3696 = vmatprep.subr.bf16.mxu0 0
        %3697 = vmatpush1.bf16.msra.mxu0 %v3678
        %3698 = vmatprep.subr.bf16.mxu0 0
        %3699 = vmatpush1.bf16.msra.mxu0 %v3677
        %3700 = vmatprep.subr.bf16.mxu0 0
        %3701 = vmatpush2.bf16.msra.mxu0 0
        %3702 = vmatprep.subr.bf16.mxu0 0
        %3703 = vmatpush2.bf16.msra.mxu0 0
        %3704 = vmatprep.subr.bf16.mxu0 0
        %3705 = vmatpush2.bf16.msra.mxu0 0
        %3706 = vmatprep.subr.bf16.mxu0 0
        %3707 = vmatpush2.bf16.msra.mxu0 0
        %3708 = vmatprep.subr.bf16.mxu0 0
        %3709 = vmatpush2.bf16.msra.mxu0 0
        %3710 = vmatprep.subr.bf16.mxu0 0
        %3711 = vmatpush2.bf16.msra.mxu0 0
        %3712 = vmatprep.subr.bf16.mxu0 0
        %3713 = vmatpush2.bf16.msra.mxu0 0
        %3714 = vmatprep.subr.bf16.mxu0 0
        %3715 = vmatpush2.bf16.msra.mxu0 0
        %3716 = vmatprep.mubr.bf16.mxu0 0
        %3717 = vmatmul.mubr.bf16.gmra.mxu0 %v3682
        %v3718 = vpop.f32.mrf.mxu0
        %v3719 = vadd.f32 %v3667, %v3718
        %v3720 = vpop.f32.mrf.mxu0
        %v3721 = vpop.f32.mrf.mxu0
        %v3722 = vadd.f32 %v3667, %v3721
        %v3723 = vpop.f32.mrf.mxu0
        %3724 = vdwg.mxu0
        %v3725 = vadd.f32 %v3651, %v3719
        %v3726 = vadd.f32 %v3654, %v3722
        %v3727 = vmax.f32 %v3725, 0.0
        %v3728 = vmax.f32 %v3726, 0.0
        %v3731 = vrot.slane %v3727, 7
        %v3732 = vrot.slane %v3728, 7
        %v3733 = vsel %vm2218, %v3731, %v3732
        %v3736 = vsel %vm2218, 0.0, %v3731
        %v3737 = vrot.slane %v3727, 1
        %v3738 = vrot.slane %v3728, 1
        %v3739 = vsel %vm1976, %v3737, %v3738
        %v3742 = vsel %vm2053, %v3738, 0.0
        %3743 = vrot.lane.b32.xlu0 %v3727, 64
        %v3744 = vpop.permute.xlu0 %3743
        %3745 = vrot.lane.b32.xlu0 %v3728, 64
        %v3746 = vpop.permute.xlu0 %3745
        %v3749 = vsel %vm2531, %v3736, %v3744
        %v3750 = vsel %vm2531, %v3733, %v3746
        %v3751 = vpack.c.bf16 %v3750, %v3749
        %v3752 = vpack.c.bf16 %v3742, %v3739
        %v3753 = vld [vmem:[%s35] sm:$0xf]
        %v3754 = vld [vmem:[%s35 + $0x4] sm:$0xf]
        %v3755 = vld [vmem:[%s35 + $0x8] sm:$0xf]
        %v3756 = vld [vmem:[%s35 + $0xc] sm:$0xf]
        %v3757 = vld [vmem:[%s35 + $0x10] sm:$0xf]
        %v3758 = vld [vmem:[%s35 + $0x14] sm:$0xf]
        %v3759 = vld [vmem:[%s35 + $0x18] sm:$0xf]
        %v3760 = vld [vmem:[%s35 + $0x1c] sm:$0xf]
        %v3761 = vld [vmem:[%s35 + $0x20] sm:$0xf]
        %v3762 = vld [vmem:[%s35 + $0x24] sm:$0xf]
        %v3763 = vld [vmem:[%s35 + $0x28] sm:$0xf]
        %v3764 = vld [vmem:[%s35 + $0x2c] sm:$0xf]
        %v3765 = vld [vmem:[%s35 + $0x30] sm:$0xf]
        %v3766 = vld [vmem:[%s35 + $0x34] sm:$0xf]
        %v3767 = vld [vmem:[%s35 + $0x38] sm:$0xf]
        %v3768 = vld [vmem:[%s35 + $0x3c] sm:$0xf]
        %v3769 = vld [vmem:[%s35 + $0x40] sm:$0xf]
        %v3770 = vld [vmem:[%s35 + $0x44] sm:$0xf]
        %v3771 = vld [vmem:[%s35 + $0x48] sm:$0xf]
        %v3772 = vld [vmem:[%s35 + $0x4c] sm:$0xf]
        %v3773 = vld [vmem:[%s35 + $0x50] sm:$0xf]
        %v3774 = vld [vmem:[%s35 + $0x54] sm:$0xf]
        %v3775 = vld [vmem:[%s35 + $0x58] sm:$0xf]
        %v3776 = vld [vmem:[%s35 + $0x5c] sm:$0xf]
        %v3777 = vld [vmem:[#allocation16] sm:$0x1]
        %v3779 = vlaneseq
        %v3780 = vshrl.u32 %v3779, 7
        %v3781 = vsub.s32 0, %v3780
        %v3782 = vrot.slane %v3777, %v3781
        %v3808 = vunpack.c.l.b16 %v3753
        %v3809 = vunpack.c.l.b16 %v3754
        %v3810 = vunpack.c.l.b16 %v3755
        %v3811 = vunpack.c.l.b16 %v3756
        %v3812 = vunpack.c.l.b16 %v3757
        %v3813 = vunpack.c.l.b16 %v3758
        %v3814 = vunpack.c.l.b16 %v3759
        %v3815 = vunpack.c.l.b16 %v3760
        %v3816 = vunpack.c.l.b16 %v3761
        %v3817 = vunpack.c.l.b16 %v3762
        %v3818 = vunpack.c.l.b16 %v3763
        %v3819 = vunpack.c.l.b16 %v3764
        %v3820 = vunpack.c.l.b16 %v3765
        %v3821 = vunpack.c.l.b16 %v3766
        %v3822 = vunpack.c.l.b16 %v3767
        %v3823 = vunpack.c.l.b16 %v3768
        %v3824 = vunpack.c.l.b16 %v3769
        %v3825 = vunpack.c.l.b16 %v3770
        %v3826 = vunpack.c.l.b16 %v3771
        %v3827 = vunpack.c.l.b16 %v3772
        %v3828 = vunpack.c.l.b16 %v3773
        %v3829 = vunpack.c.l.b16 %v3774
        %v3830 = vunpack.c.l.b16 %v3775
        %v3831 = vunpack.c.l.b16 %v3776
        %v3832 = vpack.c.b16 %v3809, %v3808
        %v3833 = vpack.c.b16 %v3811, %v3810
        %v3834 = vpack.c.b16 %v3813, %v3812
        %v3835 = vpack.c.b16 %v3815, %v3814
        %v3836 = vpack.c.b16 %v3817, %v3816
        %v3837 = vpack.c.b16 %v3819, %v3818
        %v3838 = vpack.c.b16 %v3821, %v3820
        %v3839 = vpack.c.b16 %v3823, %v3822
        %v3840 = vpack.c.b16 %v3825, %v3824
        %v3841 = vpack.c.b16 %v3827, %v3826
        %v3842 = vpack.c.b16 %v3829, %v3828
        %v3843 = vpack.c.b16 %v3831, %v3830
        %v3857 = vsel %vm2531, %v3752, 0
        %3859 = vmatprep.subr.bf16.mxu0 0
        %3860 = vmatpush1.bf16.msra.mxu0 %v3839
        %3861 = vmatprep.subr.bf16.mxu0 0
        %3862 = vmatpush1.bf16.msra.mxu0 %v3838
        %3863 = vmatprep.subr.bf16.mxu0 0
        %3864 = vmatpush1.bf16.msra.mxu0 %v3837
        %3865 = vmatprep.subr.bf16.mxu0 0
        %3866 = vmatpush1.bf16.msra.mxu0 %v3836
        %3867 = vmatprep.subr.bf16.mxu0 0
        %3868 = vmatpush1.bf16.msra.mxu0 %v3835
        %3869 = vmatprep.subr.bf16.mxu0 0
        %3870 = vmatpush1.bf16.msra.mxu0 %v3834
        %3871 = vmatprep.subr.bf16.mxu0 0
        %3872 = vmatpush1.bf16.msra.mxu0 %v3833
        %3873 = vmatprep.subr.bf16.mxu0 0
        %3874 = vmatpush1.bf16.msra.mxu0 %v3832
        %3875 = vmatprep.subr.bf16.mxu0 0
        %3876 = vmatpush2.bf16.msra.mxu0 0
        %3877 = vmatprep.subr.bf16.mxu0 0
        %3878 = vmatpush2.bf16.msra.mxu0 0
        %3879 = vmatprep.subr.bf16.mxu0 0
        %3880 = vmatpush2.bf16.msra.mxu0 0
        %3881 = vmatprep.subr.bf16.mxu0 0
        %3882 = vmatpush2.bf16.msra.mxu0 0
        %3883 = vmatprep.subr.bf16.mxu0 0
        %3884 = vmatpush2.bf16.msra.mxu0 %v3843
        %3885 = vmatprep.subr.bf16.mxu0 0
        %3886 = vmatpush2.bf16.msra.mxu0 %v3842
        %3887 = vmatprep.subr.bf16.mxu0 0
        %3888 = vmatpush2.bf16.msra.mxu0 %v3841
        %3889 = vmatprep.subr.bf16.mxu0 0
        %3890 = vmatpush2.bf16.msra.mxu0 %v3840
        %3891 = vmatprep.mubr.bf16.mxu0 %v3857
        %3892 = vmatmul.mubr.bf16.gmra.mxu0 %v3751
        %v3893 = vpop.f32.mrf.mxu0
        %v3894 = vadd.f32 %v3782, %v3893
        %v3895 = vpop.f32.mrf.mxu0
        %v3896 = vpop.f32.mrf.mxu0
        %v3897 = vadd.f32 %v3782, %v3896
        %v3898 = vpop.f32.mrf.mxu0
        %3899 = vdwg.mxu0
        %v3900 = vmax.f32 %v3894, 0.0
        %v3901 = vmax.f32 %v3897, 0.0
        %v3904 = vrot.slane %v3900, 7
        %v3905 = vrot.slane %v3901, 7
        %v3906 = vsel %vm2218, %v3904, %v3905
        %v3909 = vsel %vm2218, 0.0, %v3904
        %v3910 = vrot.slane %v3900, 1
        %v3911 = vrot.slane %v3901, 1
        %v3912 = vsel %vm1976, %v3910, %v3911
        %v3915 = vsel %vm2053, %v3911, 0.0
        %3916 = vrot.lane.b32.xlu0 %v3900, 64
        %v3917 = vpop.permute.xlu0 %3916
        %3918 = vrot.lane.b32.xlu0 %v3901, 64
        %v3919 = vpop.permute.xlu0 %3918
        %v3922 = vsel %vm2531, %v3909, %v3917
        %v3923 = vsel %vm2531, %v3906, %v3919
        %v3924 = vpack.c.bf16 %v3923, %v3922
        %v3925 = vpack.c.bf16 %v3915, %v3912
        %v3926 = vld [vmem:[%s39] sm:$0xf]
        %v3927 = vld [vmem:[%s39 + $0x4] sm:$0xf]
        %v3928 = vld [vmem:[%s39 + $0x8] sm:$0xf]
        %v3929 = vld [vmem:[%s39 + $0xc] sm:$0xf]
        %v3930 = vld [vmem:[%s39 + $0x10] sm:$0xf]
        %v3931 = vld [vmem:[%s39 + $0x14] sm:$0xf]
        %v3932 = vld [vmem:[%s39 + $0x18] sm:$0xf]
        %v3933 = vld [vmem:[%s39 + $0x1c] sm:$0xf]
        %v3934 = vld [vmem:[%s39 + $0x20] sm:$0xf]
        %v3935 = vld [vmem:[%s39 + $0x24] sm:$0xf]
        %v3936 = vld [vmem:[%s39 + $0x28] sm:$0xf]
        %v3937 = vld [vmem:[%s39 + $0x2c] sm:$0xf]
        %v3938 = vld [vmem:[%s39 + $0x30] sm:$0xf]
        %v3939 = vld [vmem:[%s39 + $0x34] sm:$0xf]
        %v3940 = vld [vmem:[%s39 + $0x38] sm:$0xf]
        %v3941 = vld [vmem:[%s39 + $0x3c] sm:$0xf]
        %v3942 = vld [vmem:[%s39 + $0x40] sm:$0xf]
        %v3943 = vld [vmem:[%s39 + $0x44] sm:$0xf]
        %v3944 = vld [vmem:[%s39 + $0x48] sm:$0xf]
        %v3945 = vld [vmem:[%s39 + $0x4c] sm:$0xf]
        %v3946 = vld [vmem:[%s39 + $0x50] sm:$0xf]
        %v3947 = vld [vmem:[%s39 + $0x54] sm:$0xf]
        %v3948 = vld [vmem:[%s39 + $0x58] sm:$0xf]
        %v3949 = vld [vmem:[%s39 + $0x5c] sm:$0xf]
        %v3950 = vld [vmem:[#allocation17] sm:$0x1]
        %v3952 = vlaneseq
        %v3953 = vshrl.u32 %v3952, 7
        %v3954 = vsub.s32 0, %v3953
        %v3955 = vrot.slane %v3950, %v3954
        %v3981 = vunpack.c.l.b16 %v3926
        %v3982 = vunpack.c.l.b16 %v3927
        %v3983 = vunpack.c.l.b16 %v3928
        %v3984 = vunpack.c.l.b16 %v3929
        %v3985 = vunpack.c.l.b16 %v3930
        %v3986 = vunpack.c.l.b16 %v3931
        %v3987 = vunpack.c.l.b16 %v3932
        %v3988 = vunpack.c.l.b16 %v3933
        %v3989 = vunpack.c.l.b16 %v3934
        %v3990 = vunpack.c.l.b16 %v3935
        %v3991 = vunpack.c.l.b16 %v3936
        %v3992 = vunpack.c.l.b16 %v3937
        %v3993 = vunpack.c.l.b16 %v3938
        %v3994 = vunpack.c.l.b16 %v3939
        %v3995 = vunpack.c.l.b16 %v3940
        %v3996 = vunpack.c.l.b16 %v3941
        %v3997 = vunpack.c.l.b16 %v3942
        %v3998 = vunpack.c.l.b16 %v3943
        %v3999 = vunpack.c.l.b16 %v3944
        %v4000 = vunpack.c.l.b16 %v3945
        %v4001 = vunpack.c.l.b16 %v3946
        %v4002 = vunpack.c.l.b16 %v3947
        %v4003 = vunpack.c.l.b16 %v3948
        %v4004 = vunpack.c.l.b16 %v3949
        %v4005 = vpack.c.b16 %v3982, %v3981
        %v4006 = vpack.c.b16 %v3984, %v3983
        %v4007 = vpack.c.b16 %v3986, %v3985
        %v4008 = vpack.c.b16 %v3988, %v3987
        %v4009 = vpack.c.b16 %v3990, %v3989
        %v4010 = vpack.c.b16 %v3992, %v3991
        %v4011 = vpack.c.b16 %v3994, %v3993
        %v4012 = vpack.c.b16 %v3996, %v3995
        %v4013 = vpack.c.b16 %v3998, %v3997
        %v4014 = vpack.c.b16 %v4000, %v3999
        %v4015 = vpack.c.b16 %v4002, %v4001
        %v4016 = vpack.c.b16 %v4004, %v4003
        %v4030 = vsel %vm2531, %v3925, 0
        %4032 = vmatprep.subr.bf16.mxu0 0
        %4033 = vmatpush1.bf16.msra.mxu0 %v4012
        %4034 = vmatprep.subr.bf16.mxu0 0
        %4035 = vmatpush1.bf16.msra.mxu0 %v4011
        %4036 = vmatprep.subr.bf16.mxu0 0
        %4037 = vmatpush1.bf16.msra.mxu0 %v4010
        %4038 = vmatprep.subr.bf16.mxu0 0
        %4039 = vmatpush1.bf16.msra.mxu0 %v4009
        %4040 = vmatprep.subr.bf16.mxu0 0
        %4041 = vmatpush1.bf16.msra.mxu0 %v4008
        %4042 = vmatprep.subr.bf16.mxu0 0
        %4043 = vmatpush1.bf16.msra.mxu0 %v4007
        %4044 = vmatprep.subr.bf16.mxu0 0
        %4045 = vmatpush1.bf16.msra.mxu0 %v4006
        %4046 = vmatprep.subr.bf16.mxu0 0
        %4047 = vmatpush1.bf16.msra.mxu0 %v4005
        %4048 = vmatprep.subr.bf16.mxu0 0
        %4049 = vmatpush2.bf16.msra.mxu0 0
        %4050 = vmatprep.subr.bf16.mxu0 0
        %4051 = vmatpush2.bf16.msra.mxu0 0
        %4052 = vmatprep.subr.bf16.mxu0 0
        %4053 = vmatpush2.bf16.msra.mxu0 0
        %4054 = vmatprep.subr.bf16.mxu0 0
        %4055 = vmatpush2.bf16.msra.mxu0 0
        %4056 = vmatprep.subr.bf16.mxu0 0
        %4057 = vmatpush2.bf16.msra.mxu0 %v4016
        %4058 = vmatprep.subr.bf16.mxu0 0
        %4059 = vmatpush2.bf16.msra.mxu0 %v4015
        %4060 = vmatprep.subr.bf16.mxu0 0
        %4061 = vmatpush2.bf16.msra.mxu0 %v4014
        %4062 = vmatprep.subr.bf16.mxu0 0
        %4063 = vmatpush2.bf16.msra.mxu0 %v4013
        %4064 = vmatprep.mubr.bf16.mxu0 %v4030
        %4065 = vmatmul.mubr.bf16.gmra.mxu0 %v3924
        %v4066 = vpop.f32.mrf.mxu0
        %v4067 = vadd.f32 %v3955, %v4066
        %v4068 = vpop.f32.mrf.mxu0
        %v4069 = vpop.f32.mrf.mxu0
        %v4070 = vadd.f32 %v3955, %v4069
        %v4071 = vpop.f32.mrf.mxu0
        %4072 = vdwg.mxu0
        %v4073 = vadd.f32 %v4067, %v3727
        %v4074 = vadd.f32 %v4070, %v3728
        %v4075 = vmax.f32 %v4073, 0.0
        %v4076 = vmax.f32 %v4074, 0.0
        %v4079 = vrot.slane %v4075, 7
        %v4080 = vrot.slane %v4076, 7
        %v4081 = vsel %vm2218, %v4079, %v4080
        %v4084 = vsel %vm2218, 0.0, %v4079
        %v4085 = vsel %vm1976, %v4081, 0.0
        %v4086 = vsel %vm2295, %v1716, 0
        %4088 = vmatprep.subr.mxu0 0.0
        %4089 = vmatpush1.msra.mxu0 0.0
        %4090 = vmatprep.subr.mxu0 0.0
        %4091 = vmatpush1.msra.mxu0 0.0
        %4092 = vmatprep.subr.mxu0 0.0
        %4093 = vmatpush1.msra.mxu0 0.0
        %4094 = vmatprep.subr.mxu0 0.0
        %4095 = vmatpush1.msra.mxu0 0.0
        %4096 = vmatprep.subr.mxu0 0.0
        %4097 = vmatpush1.msra.mxu0 0.0
        %4098 = vmatprep.subr.mxu0 0.0
        %4099 = vmatpush1.msra.mxu0 0.0
        %4100 = vmatprep.subr.mxu0 0.0
        %4101 = vmatpush1.msra.mxu0 0.0
        %4102 = vmatprep.subr.mxu0 0.0
        %4103 = vmatpush1.msra.mxu0 0.0
        %4104 = vmatprep.subr.mxu0 0.0
        %4105 = vmatpush1.msra.mxu0 0.0
        %4106 = vmatprep.subr.mxu0 0.0
        %4107 = vmatpush1.msra.mxu0 0.0
        %4108 = vmatprep.subr.mxu0 0.0
        %4109 = vmatpush1.msra.mxu0 0.0
        %4110 = vmatprep.subr.mxu0 0.0
        %4111 = vmatpush1.msra.mxu0 0.0
        %4112 = vmatprep.subr.mxu0 0.0
        %4113 = vmatpush1.msra.mxu0 0.0
        %4114 = vmatprep.subr.mxu0 0.0
        %4115 = vmatpush1.msra.mxu0 0.0
        %4116 = vmatprep.subr.mxu0 0.0
        %4117 = vmatpush1.msra.mxu0 %v4085
        %4118 = vmatprep.subr.mxu0 0.0
        %4119 = vmatpush1.msra.mxu0 %v4084
        %4120 = vmatprep.subr.mxu0 0.0
        %4121 = vmatpush2.msra.mxu0 0.0
        %4122 = vmatprep.subr.mxu0 0.0
        %4123 = vmatpush2.msra.mxu0 0.0
        %4124 = vmatprep.subr.mxu0 0.0
        %4125 = vmatpush2.msra.mxu0 0.0
        %4126 = vmatprep.subr.mxu0 0.0
        %4127 = vmatpush2.msra.mxu0 0.0
        %4128 = vmatprep.subr.mxu0 0.0
        %4129 = vmatpush2.msra.mxu0 0.0
        %4130 = vmatprep.subr.mxu0 0.0
        %4131 = vmatpush2.msra.mxu0 0.0
        %4132 = vmatprep.subr.mxu0 0.0
        %4133 = vmatpush2.msra.mxu0 0.0
        %4134 = vmatprep.subr.mxu0 0.0
        %4135 = vmatpush2.msra.mxu0 0.0
        %4136 = vmatprep.subr.mxu0 0.0
        %4137 = vmatpush2.msra.mxu0 0.0
        %4138 = vmatprep.subr.mxu0 0.0
        %4139 = vmatpush2.msra.mxu0 0.0
        %4140 = vmatprep.subr.mxu0 0.0
        %4141 = vmatpush2.msra.mxu0 0.0
        %4142 = vmatprep.subr.mxu0 0.0
        %4143 = vmatpush2.msra.mxu0 0.0
        %4144 = vmatprep.subr.mxu0 0.0
        %4145 = vmatpush2.msra.mxu0 0.0
        %4146 = vmatprep.subr.mxu0 0.0
        %4147 = vmatpush2.msra.mxu0 0.0
        %4148 = vmatprep.subr.mxu0 0.0
        %4149 = vmatpush2.msra.mxu0 0.0
        %4150 = vmatprep.subr.mxu0 0.0
        %4151 = vmatpush2.msra.mxu0 0.0
        %4152 = vmatprep.mubr.f32.mxu0 0.0
        %4153 = vmatmul.mubr.f32.gmra.mxu0 %v4086
        %v4154 = vpop.f32.mrf.mxu0
        %v4155 = vadd.f32 0.0, %v4154
        %v4156 = vpop.f32.mrf.mxu0
        %4157 = vdwg.mxu0
        %v4158 = vsel %vm2295, %v1736, 0
        %4160 = vmatprep.subr.mxu0 0.0
        %4161 = vmatpush1.msra.mxu0 0.0
        %4162 = vmatprep.subr.mxu0 0.0
        %4163 = vmatpush1.msra.mxu0 0.0
        %4164 = vmatprep.subr.mxu0 0.0
        %4165 = vmatpush1.msra.mxu0 0.0
        %4166 = vmatprep.subr.mxu0 0.0
        %4167 = vmatpush1.msra.mxu0 0.0
        %4168 = vmatprep.subr.mxu0 0.0
        %4169 = vmatpush1.msra.mxu0 0.0
        %4170 = vmatprep.subr.mxu0 0.0
        %4171 = vmatpush1.msra.mxu0 0.0
        %4172 = vmatprep.subr.mxu0 0.0
        %4173 = vmatpush1.msra.mxu0 0.0
        %4174 = vmatprep.subr.mxu0 0.0
        %4175 = vmatpush1.msra.mxu0 0.0
        %4176 = vmatprep.subr.mxu0 0.0
        %4177 = vmatpush1.msra.mxu0 0.0
        %4178 = vmatprep.subr.mxu0 0.0
        %4179 = vmatpush1.msra.mxu0 0.0
        %4180 = vmatprep.subr.mxu0 0.0
        %4181 = vmatpush1.msra.mxu0 0.0
        %4182 = vmatprep.subr.mxu0 0.0
        %4183 = vmatpush1.msra.mxu0 0.0
        %4184 = vmatprep.subr.mxu0 0.0
        %4185 = vmatpush1.msra.mxu0 0.0
        %4186 = vmatprep.subr.mxu0 0.0
        %4187 = vmatpush1.msra.mxu0 0.0
        %4188 = vmatprep.subr.mxu0 0.0
        %4189 = vmatpush1.msra.mxu0 %v4085
        %4190 = vmatprep.subr.mxu0 0.0
        %4191 = vmatpush1.msra.mxu0 %v4084
        %4192 = vmatprep.subr.mxu0 0.0
        %4193 = vmatpush2.msra.mxu0 0.0
        %4194 = vmatprep.subr.mxu0 0.0
        %4195 = vmatpush2.msra.mxu0 0.0
        %4196 = vmatprep.subr.mxu0 0.0
        %4197 = vmatpush2.msra.mxu0 0.0
        %4198 = vmatprep.subr.mxu0 0.0
        %4199 = vmatpush2.msra.mxu0 0.0
        %4200 = vmatprep.subr.mxu0 0.0
        %4201 = vmatpush2.msra.mxu0 0.0
        %4202 = vmatprep.subr.mxu0 0.0
        %4203 = vmatpush2.msra.mxu0 0.0
        %4204 = vmatprep.subr.mxu0 0.0
        %4205 = vmatpush2.msra.mxu0 0.0
        %4206 = vmatprep.subr.mxu0 0.0
        %4207 = vmatpush2.msra.mxu0 0.0
        %4208 = vmatprep.subr.mxu0 0.0
        %4209 = vmatpush2.msra.mxu0 0.0
        %4210 = vmatprep.subr.mxu0 0.0
        %4211 = vmatpush2.msra.mxu0 0.0
        %4212 = vmatprep.subr.mxu0 0.0
        %4213 = vmatpush2.msra.mxu0 0.0
        %4214 = vmatprep.subr.mxu0 0.0
        %4215 = vmatpush2.msra.mxu0 0.0
        %4216 = vmatprep.subr.mxu0 0.0
        %4217 = vmatpush2.msra.mxu0 0.0
        %4218 = vmatprep.subr.mxu0 0.0
        %4219 = vmatpush2.msra.mxu0 0.0
        %4220 = vmatprep.subr.mxu0 0.0
        %4221 = vmatpush2.msra.mxu0 0.0
        %4222 = vmatprep.subr.mxu0 0.0
        %4223 = vmatpush2.msra.mxu0 0.0
        %4224 = vmatprep.mubr.f32.mxu0 0.0
        %4225 = vmatmul.mubr.f32.gmra.mxu0 %v4158
        %v4226 = vpop.f32.mrf.mxu0
        %v4227 = vadd.f32 0.0, %v4226
        %v4228 = vpop.f32.mrf.mxu0
        %4229 = vdwg.mxu0
        %4231 = vrot.lane.b32.xlu0 %v4227, 64
        %v4232 = vpop.permute.xlu0 %4231
        %v4235 = vrot.slane %v4155, 1
        %v4237 = vsel %vm2531, %v4155, %v4232
        %v4238 = vpack.c.bf16 %v4237, %v4237
        %v4239 = vpack.c.bf16 %v4235, %v4235
        %v4240 = vld [vmem:[#allocation19] sm:$0xf]
        %v4241 = vld [vmem:[#allocation19 + $0x4] sm:$0xf]
        %v4242 = vld [vmem:[#allocation19 + $0x8] sm:$0xf]
        %v4243 = vld [vmem:[#allocation19 + $0xc] sm:$0xf]
        %v4244 = vld [vmem:[#allocation19 + $0x10] sm:$0xf]
        %v4245 = vld [vmem:[#allocation19 + $0x14] sm:$0xf]
        %v4246 = vld [vmem:[#allocation19 + $0x18] sm:$0xf]
        %v4247 = vld [vmem:[#allocation19 + $0x1c] sm:$0xf]
        %v4248 = vld [vmem:[#allocation19 + $0x20] sm:$0xf]
        %v4249 = vld [vmem:[#allocation19 + $0x24] sm:$0xf]
        %v4250 = vld [vmem:[#allocation19 + $0x28] sm:$0xf]
        %v4251 = vld [vmem:[#allocation19 + $0x2c] sm:$0xf]
        %v4252 = vld [vmem:[#allocation19 + $0x30] sm:$0xf]
        %v4253 = vld [vmem:[#allocation19 + $0x34] sm:$0xf]
        %v4254 = vld [vmem:[#allocation19 + $0x38] sm:$0xf]
        %v4255 = vld [vmem:[#allocation19 + $0x3c] sm:$0xf]
        %v4256 = vld [vmem:[#allocation19 + $0x40] sm:$0xf]
        %v4257 = vld [vmem:[#allocation19 + $0x44] sm:$0xf]
        %v4258 = vld [vmem:[#allocation19 + $0x48] sm:$0xf]
        %v4259 = vld [vmem:[#allocation19 + $0x4c] sm:$0xf]
        %v4260 = vld [vmem:[#allocation19 + $0x50] sm:$0xf]
        %v4261 = vld [vmem:[#allocation19 + $0x54] sm:$0xf]
        %v4262 = vld [vmem:[#allocation19 + $0x58] sm:$0xf]
        %v4263 = vld [vmem:[#allocation19 + $0x5c] sm:$0xf]
        %v4264 = vld [vmem:[#allocation20] sm:$0x1]
        %v4266 = vlaneseq
        %v4267 = vshrl.u32 %v4266, 7
        %v4268 = vsub.s32 0, %v4267
        %v4269 = vrot.slane %v4264, %v4268
        %v4295 = vunpack.c.l.b16 %v4240
        %v4296 = vunpack.c.l.b16 %v4241
        %v4297 = vunpack.c.l.b16 %v4242
        %v4298 = vunpack.c.l.b16 %v4243
        %v4299 = vunpack.c.l.b16 %v4244
        %v4300 = vunpack.c.l.b16 %v4245
        %v4301 = vunpack.c.l.b16 %v4246
        %v4302 = vunpack.c.l.b16 %v4247
        %v4303 = vunpack.c.l.b16 %v4248
        %v4304 = vunpack.c.l.b16 %v4249
        %v4305 = vunpack.c.l.b16 %v4250
        %v4306 = vunpack.c.l.b16 %v4251
        %v4307 = vunpack.c.l.b16 %v4252
        %v4308 = vunpack.c.l.b16 %v4253
        %v4309 = vunpack.c.l.b16 %v4254
        %v4310 = vunpack.c.l.b16 %v4255
        %v4311 = vunpack.c.l.b16 %v4256
        %v4312 = vunpack.c.l.b16 %v4257
        %v4313 = vunpack.c.l.b16 %v4258
        %v4314 = vunpack.c.l.b16 %v4259
        %v4315 = vunpack.c.l.b16 %v4260
        %v4316 = vunpack.c.l.b16 %v4261
        %v4317 = vunpack.c.l.b16 %v4262
        %v4318 = vunpack.c.l.b16 %v4263
        %v4319 = vpack.c.b16 %v4296, %v4295
        %v4320 = vpack.c.b16 %v4298, %v4297
        %v4321 = vpack.c.b16 %v4300, %v4299
        %v4322 = vpack.c.b16 %v4302, %v4301
        %v4323 = vpack.c.b16 %v4304, %v4303
        %v4324 = vpack.c.b16 %v4306, %v4305
        %v4325 = vpack.c.b16 %v4308, %v4307
        %v4326 = vpack.c.b16 %v4310, %v4309
        %v4327 = vpack.c.b16 %v4312, %v4311
        %v4328 = vpack.c.b16 %v4314, %v4313
        %v4329 = vpack.c.b16 %v4316, %v4315
        %v4330 = vpack.c.b16 %v4318, %v4317
        %v4344 = vsel %vm2531, %v4239, 0
        %4346 = vmatprep.subr.bf16.mxu0 0
        %4347 = vmatpush1.bf16.msra.mxu0 %v4326
        %4348 = vmatprep.subr.bf16.mxu0 0
        %4349 = vmatpush1.bf16.msra.mxu0 %v4325
        %4350 = vmatprep.subr.bf16.mxu0 0
        %4351 = vmatpush1.bf16.msra.mxu0 %v4324
        %4352 = vmatprep.subr.bf16.mxu0 0
        %4353 = vmatpush1.bf16.msra.mxu0 %v4323
        %4354 = vmatprep.subr.bf16.mxu0 0
        %4355 = vmatpush1.bf16.msra.mxu0 %v4322
        %4356 = vmatprep.subr.bf16.mxu0 0
        %4357 = vmatpush1.bf16.msra.mxu0 %v4321
        %4358 = vmatprep.subr.bf16.mxu0 0
        %4359 = vmatpush1.bf16.msra.mxu0 %v4320
        %4360 = vmatprep.subr.bf16.mxu0 0
        %4361 = vmatpush1.bf16.msra.mxu0 %v4319
        %4362 = vmatprep.subr.bf16.mxu0 0
        %4363 = vmatpush2.bf16.msra.mxu0 0
        %4364 = vmatprep.subr.bf16.mxu0 0
        %4365 = vmatpush2.bf16.msra.mxu0 0
        %4366 = vmatprep.subr.bf16.mxu0 0
        %4367 = vmatpush2.bf16.msra.mxu0 0
        %4368 = vmatprep.subr.bf16.mxu0 0
        %4369 = vmatpush2.bf16.msra.mxu0 0
        %4370 = vmatprep.subr.bf16.mxu0 0
        %4371 = vmatpush2.bf16.msra.mxu0 %v4330
        %4372 = vmatprep.subr.bf16.mxu0 0
        %4373 = vmatpush2.bf16.msra.mxu0 %v4329
        %4374 = vmatprep.subr.bf16.mxu0 0
        %4375 = vmatpush2.bf16.msra.mxu0 %v4328
        %4376 = vmatprep.subr.bf16.mxu0 0
        %4377 = vmatpush2.bf16.msra.mxu0 %v4327
        %4378 = vmatprep.mubr.bf16.mxu0 %v4344
        %4379 = vmatmul.mubr.bf16.gmra.mxu0 %v4238
        %v4380 = vpop.f32.mrf.mxu0
        %v4381 = vadd.f32 %v4269, %v4380
        %v4382 = vpop.f32.mrf.mxu0
        %v4383 = vpop.f32.mrf.mxu0
        %v4384 = vpop.f32.mrf.mxu0
        %4385 = vdwg.mxu0
        %v4386 = vmax.f32 %v4381, 0.0
        %v4388 = vrot.slane %v4386, 7
        %v4390 = vsel %vm2218, 0.0, %v4388
        %v4391 = vrot.slane %v4386, 1
        %v4393 = vsel %vm1757, %v4391, 0.0
        %v4394 = vpack.c.bf16 %v4390, %v4390
        %v4395 = vpack.c.bf16 %v4386, %v4386
        %v4396 = vpack.c.bf16 %v4393, %v4393
        %v4397 = vld [vmem:[#allocation25] sm:$0xf]
        %v4398 = vld [vmem:[#allocation25 + $0x4] sm:$0xf]
        %v4399 = vld [vmem:[#allocation25 + $0x8] sm:$0xf]
        %v4400 = vld [vmem:[#allocation25 + $0xc] sm:$0xf]
        %v4401 = vld [vmem:[#allocation25 + $0x10] sm:$0xf]
        %v4402 = vld [vmem:[#allocation25 + $0x14] sm:$0xf]
        %v4403 = vld [vmem:[#allocation25 + $0x18] sm:$0xf]
        %v4404 = vld [vmem:[#allocation25 + $0x1c] sm:$0xf]
        %v4405 = vld [vmem:[#allocation25 + $0x20] sm:$0xf]
        %v4406 = vld [vmem:[#allocation25 + $0x24] sm:$0xf]
        %v4407 = vld [vmem:[#allocation25 + $0x28] sm:$0xf]
        %v4408 = vld [vmem:[#allocation25 + $0x2c] sm:$0xf]
        %v4409 = vld [vmem:[#allocation25 + $0x30] sm:$0xf]
        %v4410 = vld [vmem:[#allocation25 + $0x34] sm:$0xf]
        %v4411 = vld [vmem:[#allocation25 + $0x38] sm:$0xf]
        %v4412 = vld [vmem:[#allocation25 + $0x3c] sm:$0xf]
        %v4413 = vld [vmem:[#allocation25 + $0x40] sm:$0xf]
        %v4414 = vld [vmem:[#allocation25 + $0x44] sm:$0xf]
        %v4415 = vld [vmem:[#allocation25 + $0x48] sm:$0xf]
        %v4416 = vld [vmem:[#allocation25 + $0x4c] sm:$0xf]
        %v4417 = vld [vmem:[#allocation25 + $0x50] sm:$0xf]
        %v4418 = vld [vmem:[#allocation25 + $0x54] sm:$0xf]
        %v4419 = vld [vmem:[#allocation25 + $0x58] sm:$0xf]
        %v4420 = vld [vmem:[#allocation25 + $0x5c] sm:$0xf]
        %v4421 = vld [vmem:[#allocation25 + $0x60] sm:$0xf]
        %v4422 = vld [vmem:[#allocation25 + $0x64] sm:$0xf]
        %v4423 = vld [vmem:[#allocation25 + $0x68] sm:$0xf]
        %v4424 = vld [vmem:[#allocation25 + $0x6c] sm:$0xf]
        %v4425 = vld [vmem:[#allocation25 + $0x70] sm:$0xf]
        %v4426 = vld [vmem:[#allocation25 + $0x74] sm:$0xf]
        %v4427 = vld [vmem:[#allocation25 + $0x78] sm:$0xf]
        %v4428 = vld [vmem:[#allocation25 + $0x7c] sm:$0xf]
        %v4429 = vld [vmem:[#allocation25 + $0x80] sm:$0xf]
        %v4430 = vld [vmem:[#allocation25 + $0x84] sm:$0xf]
        %v4431 = vld [vmem:[#allocation25 + $0x88] sm:$0xf]
        %v4432 = vld [vmem:[#allocation25 + $0x8c] sm:$0xf]
        %v4433 = vld [vmem:[#allocation25 + $0x90] sm:$0xf]
        %v4434 = vld [vmem:[#allocation25 + $0x94] sm:$0xf]
        %v4435 = vld [vmem:[#allocation25 + $0x98] sm:$0xf]
        %v4436 = vld [vmem:[#allocation25 + $0x9c] sm:$0xf]
        %v4437 = vld [vmem:[#allocation25 + $0xa0] sm:$0xf]
        %v4438 = vld [vmem:[#allocation25 + $0xa4] sm:$0xf]
        %v4439 = vld [vmem:[#allocation25 + $0xa8] sm:$0xf]
        %v4440 = vld [vmem:[#allocation25 + $0xac] sm:$0xf]
        %v4441 = vld [vmem:[#allocation25 + $0xb0] sm:$0xf]
        %v4442 = vld [vmem:[#allocation25 + $0xb4] sm:$0xf]
        %v4443 = vld [vmem:[#allocation25 + $0xb8] sm:$0xf]
        %v4444 = vld [vmem:[#allocation25 + $0xbc] sm:$0xf]
        %v4445 = vld [vmem:[#allocation26] sm:$0x1]
        %v4447 = vlaneseq
        %v4448 = vshrl.u32 %v4447, 7
        %v4449 = vsub.s32 0, %v4448
        %v4450 = vrot.slane %v4445, %v4449
        %v4500 = vunpack.c.l.b16 %v4397
        %v4501 = vunpack.c.l.b16 %v4398
        %v4502 = vunpack.c.l.b16 %v4399
        %v4503 = vunpack.c.l.b16 %v4400
        %v4504 = vunpack.c.l.b16 %v4401
        %v4505 = vunpack.c.l.b16 %v4402
        %v4506 = vunpack.c.l.b16 %v4403
        %v4507 = vunpack.c.l.b16 %v4404
        %v4508 = vunpack.c.l.b16 %v4405
        %v4509 = vunpack.c.l.b16 %v4406
        %v4510 = vunpack.c.l.b16 %v4407
        %v4511 = vunpack.c.l.b16 %v4408
        %v4512 = vunpack.c.l.b16 %v4409
        %v4513 = vunpack.c.l.b16 %v4410
        %v4514 = vunpack.c.l.b16 %v4411
        %v4515 = vunpack.c.l.b16 %v4412
        %v4516 = vunpack.c.l.b16 %v4413
        %v4517 = vunpack.c.l.b16 %v4414
        %v4518 = vunpack.c.l.b16 %v4415
        %v4519 = vunpack.c.l.b16 %v4416
        %v4520 = vunpack.c.l.b16 %v4417
        %v4521 = vunpack.c.l.b16 %v4418
        %v4522 = vunpack.c.l.b16 %v4419
        %v4523 = vunpack.c.l.b16 %v4420
        %v4524 = vunpack.c.l.b16 %v4421
        %v4525 = vunpack.c.l.b16 %v4422
        %v4526 = vunpack.c.l.b16 %v4423
        %v4527 = vunpack.c.l.b16 %v4424
        %v4528 = vunpack.c.l.b16 %v4425
        %v4529 = vunpack.c.l.b16 %v4426
        %v4530 = vunpack.c.l.b16 %v4427
        %v4531 = vunpack.c.l.b16 %v4428
        %v4532 = vunpack.c.l.b16 %v4429
        %v4533 = vunpack.c.l.b16 %v4430
        %v4534 = vunpack.c.l.b16 %v4431
        %v4535 = vunpack.c.l.b16 %v4432
        %v4536 = vunpack.c.l.b16 %v4433
        %v4537 = vunpack.c.l.b16 %v4434
        %v4538 = vunpack.c.l.b16 %v4435
        %v4539 = vunpack.c.l.b16 %v4436
        %v4540 = vunpack.c.l.b16 %v4437
        %v4541 = vunpack.c.l.b16 %v4438
        %v4542 = vunpack.c.l.b16 %v4439
        %v4543 = vunpack.c.l.b16 %v4440
        %v4544 = vunpack.c.l.b16 %v4441
        %v4545 = vunpack.c.l.b16 %v4442
        %v4546 = vunpack.c.l.b16 %v4443
        %v4547 = vunpack.c.l.b16 %v4444
        %v4548 = vpack.c.b16 %v4501, %v4500
        %v4549 = vpack.c.b16 %v4503, %v4502
        %v4550 = vpack.c.b16 %v4505, %v4504
        %v4551 = vpack.c.b16 %v4507, %v4506
        %v4552 = vpack.c.b16 %v4509, %v4508
        %v4553 = vpack.c.b16 %v4511, %v4510
        %v4554 = vpack.c.b16 %v4513, %v4512
        %v4555 = vpack.c.b16 %v4515, %v4514
        %v4556 = vpack.c.b16 %v4517, %v4516
        %v4557 = vpack.c.b16 %v4519, %v4518
        %v4558 = vpack.c.b16 %v4521, %v4520
        %v4559 = vpack.c.b16 %v4523, %v4522
        %v4560 = vpack.c.b16 %v4525, %v4524
        %v4561 = vpack.c.b16 %v4527, %v4526
        %v4562 = vpack.c.b16 %v4529, %v4528
        %v4563 = vpack.c.b16 %v4531, %v4530
        %v4564 = vpack.c.b16 %v4533, %v4532
        %v4565 = vpack.c.b16 %v4535, %v4534
        %v4566 = vpack.c.b16 %v4537, %v4536
        %v4567 = vpack.c.b16 %v4539, %v4538
        %v4568 = vpack.c.b16 %v4541, %v4540
        %v4569 = vpack.c.b16 %v4543, %v4542
        %v4570 = vpack.c.b16 %v4545, %v4544
        %v4571 = vpack.c.b16 %v4547, %v4546
        %4596 = vmatprep.subr.bf16.mxu0 0
        %4597 = vmatpush1.bf16.msra.mxu0 %v4555
        %4598 = vmatprep.subr.bf16.mxu0 0
        %4599 = vmatpush1.bf16.msra.mxu0 %v4554
        %4600 = vmatprep.subr.bf16.mxu0 0
        %4601 = vmatpush1.bf16.msra.mxu0 %v4553
        %4602 = vmatprep.subr.bf16.mxu0 0
        %4603 = vmatpush1.bf16.msra.mxu0 %v4552
        %4604 = vmatprep.subr.bf16.mxu0 0
        %4605 = vmatpush1.bf16.msra.mxu0 %v4551
        %4606 = vmatprep.subr.bf16.mxu0 0
        %4607 = vmatpush1.bf16.msra.mxu0 %v4550
        %4608 = vmatprep.subr.bf16.mxu0 0
        %4609 = vmatpush1.bf16.msra.mxu0 %v4549
        %4610 = vmatprep.subr.bf16.mxu0 0
        %4611 = vmatpush1.bf16.msra.mxu0 %v4548
        %4612 = vmatprep.subr.bf16.mxu0 0
        %4613 = vmatpush2.bf16.msra.mxu0 %v4563
        %4614 = vmatprep.subr.bf16.mxu0 0
        %4615 = vmatpush2.bf16.msra.mxu0 %v4562
        %4616 = vmatprep.subr.bf16.mxu0 0
        %4617 = vmatpush2.bf16.msra.mxu0 %v4561
        %4618 = vmatprep.subr.bf16.mxu0 0
        %4619 = vmatpush2.bf16.msra.mxu0 %v4560
        %4620 = vmatprep.subr.bf16.mxu0 0
        %4621 = vmatpush2.bf16.msra.mxu0 %v4559
        %4622 = vmatprep.subr.bf16.mxu0 0
        %4623 = vmatpush2.bf16.msra.mxu0 %v4558
        %4624 = vmatprep.subr.bf16.mxu0 0
        %4625 = vmatpush2.bf16.msra.mxu0 %v4557
        %4626 = vmatprep.subr.bf16.mxu0 0
        %4627 = vmatpush2.bf16.msra.mxu0 %v4556
        %4628 = vmatprep.mubr.bf16.mxu0 %v4395
        %4629 = vmatmul.mubr.bf16.gmra.mxu0 %v4394
        %v4630 = vpop.f32.mrf.mxu0
        %v4631 = vadd.f32 %v4450, %v4630
        %v4632 = vpop.f32.mrf.mxu0
        %v4633 = vpop.f32.mrf.mxu0
        %v4634 = vpop.f32.mrf.mxu0
        %4635 = vdwg.mxu0
        %4636 = vmatprep.subr.bf16.mxu0 0
        %4637 = vmatpush1.bf16.msra.mxu0 %v4571
        %4638 = vmatprep.subr.bf16.mxu0 0
        %4639 = vmatpush1.bf16.msra.mxu0 %v4570
        %4640 = vmatprep.subr.bf16.mxu0 0
        %4641 = vmatpush1.bf16.msra.mxu0 %v4569
        %4642 = vmatprep.subr.bf16.mxu0 0
        %4643 = vmatpush1.bf16.msra.mxu0 %v4568
        %4644 = vmatprep.subr.bf16.mxu0 0
        %4645 = vmatpush1.bf16.msra.mxu0 %v4567
        %4646 = vmatprep.subr.bf16.mxu0 0
        %4647 = vmatpush1.bf16.msra.mxu0 %v4566
        %4648 = vmatprep.subr.bf16.mxu0 0
        %4649 = vmatpush1.bf16.msra.mxu0 %v4565
        %4650 = vmatprep.subr.bf16.mxu0 0
        %4651 = vmatpush1.bf16.msra.mxu0 %v4564
        %4652 = vmatprep.subr.bf16.mxu0 0
        %4653 = vmatpush2.bf16.msra.mxu0 0
        %4654 = vmatprep.subr.bf16.mxu0 0
        %4655 = vmatpush2.bf16.msra.mxu0 0
        %4656 = vmatprep.subr.bf16.mxu0 0
        %4657 = vmatpush2.bf16.msra.mxu0 0
        %4658 = vmatprep.subr.bf16.mxu0 0
        %4659 = vmatpush2.bf16.msra.mxu0 0
        %4660 = vmatprep.subr.bf16.mxu0 0
        %4661 = vmatpush2.bf16.msra.mxu0 0
        %4662 = vmatprep.subr.bf16.mxu0 0
        %4663 = vmatpush2.bf16.msra.mxu0 0
        %4664 = vmatprep.subr.bf16.mxu0 0
        %4665 = vmatpush2.bf16.msra.mxu0 0
        %4666 = vmatprep.subr.bf16.mxu0 0
        %4667 = vmatpush2.bf16.msra.mxu0 0
        %4668 = vmatprep.mubr.bf16.mxu0 0
        %4669 = vmatmul.mubr.bf16.gmra.mxu0 %v4396
        %v4670 = vpop.f32.mrf.mxu0
        %v4671 = vadd.f32 %v4631, %v4670
        %v4672 = vpop.f32.mrf.mxu0
        %v4673 = vpop.f32.mrf.mxu0
        %v4674 = vpop.f32.mrf.mxu0
        %4675 = vdwg.mxu0
        %v4676 = vpack.c.bf16 %v4227, %v4227
        %v4677 = vld [vmem:[#allocation22] sm:$0xf]
        %v4678 = vld [vmem:[#allocation22 + $0x4] sm:$0xf]
        %v4679 = vld [vmem:[#allocation22 + $0x8] sm:$0xf]
        %v4680 = vld [vmem:[#allocation22 + $0xc] sm:$0xf]
        %v4681 = vld [vmem:[#allocation22 + $0x10] sm:$0xf]
        %v4682 = vld [vmem:[#allocation22 + $0x14] sm:$0xf]
        %v4683 = vld [vmem:[#allocation22 + $0x18] sm:$0xf]
        %v4684 = vld [vmem:[#allocation22 + $0x1c] sm:$0xf]
        %v4685 = vld [vmem:[#allocation23] sm:$0x1]
        %v4687 = vlaneseq
        %v4688 = vshrl.u32 %v4687, 7
        %v4689 = vsub.s32 0, %v4688
        %v4690 = vrot.slane %v4685, %v4689
        %v4700 = vunpack.c.l.b16 %v4677
        %v4701 = vunpack.c.l.b16 %v4678
        %v4702 = vunpack.c.l.b16 %v4679
        %v4703 = vunpack.c.l.b16 %v4680
        %v4704 = vunpack.c.l.b16 %v4681
        %v4705 = vunpack.c.l.b16 %v4682
        %v4706 = vunpack.c.l.b16 %v4683
        %v4707 = vunpack.c.l.b16 %v4684
        %v4708 = vpack.c.b16 %v4701, %v4700
        %v4709 = vpack.c.b16 %v4703, %v4702
        %v4710 = vpack.c.b16 %v4705, %v4704
        %v4711 = vpack.c.b16 %v4707, %v4706
        %v4717 = vsel %vm2531, %v4676, 0
        %4719 = vmatprep.subr.bf16.mxu0 0
        %4720 = vmatpush1.bf16.msra.mxu0 0
        %4721 = vmatprep.subr.bf16.mxu0 0
        %4722 = vmatpush1.bf16.msra.mxu0 0
        %4723 = vmatprep.subr.bf16.mxu0 0
        %4724 = vmatpush1.bf16.msra.mxu0 0
        %4725 = vmatprep.subr.bf16.mxu0 0
        %4726 = vmatpush1.bf16.msra.mxu0 0
        %4727 = vmatprep.subr.bf16.mxu0 0
        %4728 = vmatpush1.bf16.msra.mxu0 %v4711
        %4729 = vmatprep.subr.bf16.mxu0 0
        %4730 = vmatpush1.bf16.msra.mxu0 %v4710
        %4731 = vmatprep.subr.bf16.mxu0 0
        %4732 = vmatpush1.bf16.msra.mxu0 %v4709
        %4733 = vmatprep.subr.bf16.mxu0 0
        %4734 = vmatpush1.bf16.msra.mxu0 %v4708
        %4735 = vmatprep.subr.bf16.mxu0 0
        %4736 = vmatpush2.bf16.msra.mxu0 0
        %4737 = vmatprep.subr.bf16.mxu0 0
        %4738 = vmatpush2.bf16.msra.mxu0 0
        %4739 = vmatprep.subr.bf16.mxu0 0
        %4740 = vmatpush2.bf16.msra.mxu0 0
        %4741 = vmatprep.subr.bf16.mxu0 0
        %4742 = vmatpush2.bf16.msra.mxu0 0
        %4743 = vmatprep.subr.bf16.mxu0 0
        %4744 = vmatpush2.bf16.msra.mxu0 0
        %4745 = vmatprep.subr.bf16.mxu0 0
        %4746 = vmatpush2.bf16.msra.mxu0 0
        %4747 = vmatprep.subr.bf16.mxu0 0
        %4748 = vmatpush2.bf16.msra.mxu0 0
        %4749 = vmatprep.subr.bf16.mxu0 0
        %4750 = vmatpush2.bf16.msra.mxu0 0
        %4751 = vmatprep.mubr.bf16.mxu0 0
        %4752 = vmatmul.mubr.bf16.gmra.mxu0 %v4717
        %v4753 = vpop.f32.mrf.mxu0
        %v4754 = vadd.f32 %v4690, %v4753
        %v4755 = vpop.f32.mrf.mxu0
        %v4756 = vpop.f32.mrf.mxu0
        %v4757 = vpop.f32.mrf.mxu0
        %4758 = vdwg.mxu0
        %v4759 = vadd.f32 %v4671, %v4754
        %v4760 = vmax.f32 %v4759, 0.0
        %v4762 = vrot.slane %v4760, 7
        %v4764 = vsel %vm2218, 0.0, %v4762
        %v4765 = vrot.slane %v4760, 1
        %v4767 = vsel %vm1757, %v4765, 0.0
        %v4768 = vpack.c.bf16 %v4764, %v4764
        %v4769 = vpack.c.bf16 %v4760, %v4760
        %v4770 = vpack.c.bf16 %v4767, %v4767
        %v4771 = vld [vmem:[#allocation28] sm:$0xf]
        %v4772 = vld [vmem:[#allocation28 + $0x4] sm:$0xf]
        %v4773 = vld [vmem:[#allocation28 + $0x8] sm:$0xf]
        %v4774 = vld [vmem:[#allocation28 + $0xc] sm:$0xf]
        %v4775 = vld [vmem:[#allocation28 + $0x10] sm:$0xf]
        %v4776 = vld [vmem:[#allocation28 + $0x14] sm:$0xf]
        %v4777 = vld [vmem:[#allocation28 + $0x18] sm:$0xf]
        %v4778 = vld [vmem:[#allocation28 + $0x1c] sm:$0xf]
        %v4779 = vld [vmem:[#allocation28 + $0x20] sm:$0xf]
        %v4780 = vld [vmem:[#allocation28 + $0x24] sm:$0xf]
        %v4781 = vld [vmem:[#allocation28 + $0x28] sm:$0xf]
        %v4782 = vld [vmem:[#allocation28 + $0x2c] sm:$0xf]
        %v4783 = vld [vmem:[#allocation28 + $0x30] sm:$0xf]
        %v4784 = vld [vmem:[#allocation28 + $0x34] sm:$0xf]
        %v4785 = vld [vmem:[#allocation28 + $0x38] sm:$0xf]
        %v4786 = vld [vmem:[#allocation28 + $0x3c] sm:$0xf]
        %v4787 = vld [vmem:[#allocation28 + $0x40] sm:$0xf]
        %v4788 = vld [vmem:[#allocation28 + $0x44] sm:$0xf]
        %v4789 = vld [vmem:[#allocation28 + $0x48] sm:$0xf]
        %v4790 = vld [vmem:[#allocation28 + $0x4c] sm:$0xf]
        %v4791 = vld [vmem:[#allocation28 + $0x50] sm:$0xf]
        %v4792 = vld [vmem:[#allocation28 + $0x54] sm:$0xf]
        %v4793 = vld [vmem:[#allocation28 + $0x58] sm:$0xf]
        %v4794 = vld [vmem:[#allocation28 + $0x5c] sm:$0xf]
        %v4795 = vld [vmem:[#allocation28 + $0x60] sm:$0xf]
        %v4796 = vld [vmem:[#allocation28 + $0x64] sm:$0xf]
        %v4797 = vld [vmem:[#allocation28 + $0x68] sm:$0xf]
        %v4798 = vld [vmem:[#allocation28 + $0x6c] sm:$0xf]
        %v4799 = vld [vmem:[#allocation28 + $0x70] sm:$0xf]
        %v4800 = vld [vmem:[#allocation28 + $0x74] sm:$0xf]
        %v4801 = vld [vmem:[#allocation28 + $0x78] sm:$0xf]
        %v4802 = vld [vmem:[#allocation28 + $0x7c] sm:$0xf]
        %v4803 = vld [vmem:[#allocation28 + $0x80] sm:$0xf]
        %v4804 = vld [vmem:[#allocation28 + $0x84] sm:$0xf]
        %v4805 = vld [vmem:[#allocation28 + $0x88] sm:$0xf]
        %v4806 = vld [vmem:[#allocation28 + $0x8c] sm:$0xf]
        %v4807 = vld [vmem:[#allocation28 + $0x90] sm:$0xf]
        %v4808 = vld [vmem:[#allocation28 + $0x94] sm:$0xf]
        %v4809 = vld [vmem:[#allocation28 + $0x98] sm:$0xf]
        %v4810 = vld [vmem:[#allocation28 + $0x9c] sm:$0xf]
        %v4811 = vld [vmem:[#allocation28 + $0xa0] sm:$0xf]
        %v4812 = vld [vmem:[#allocation28 + $0xa4] sm:$0xf]
        %v4813 = vld [vmem:[#allocation28 + $0xa8] sm:$0xf]
        %v4814 = vld [vmem:[#allocation28 + $0xac] sm:$0xf]
        %v4815 = vld [vmem:[#allocation28 + $0xb0] sm:$0xf]
        %v4816 = vld [vmem:[#allocation28 + $0xb4] sm:$0xf]
        %v4817 = vld [vmem:[#allocation28 + $0xb8] sm:$0xf]
        %v4818 = vld [vmem:[#allocation28 + $0xbc] sm:$0xf]
        %v4819 = vld [vmem:[#allocation29] sm:$0x1]
        %v4821 = vlaneseq
        %v4822 = vshrl.u32 %v4821, 7
        %v4823 = vsub.s32 0, %v4822
        %v4824 = vrot.slane %v4819, %v4823
        %v4874 = vunpack.c.l.b16 %v4771
        %v4875 = vunpack.c.l.b16 %v4772
        %v4876 = vunpack.c.l.b16 %v4773
        %v4877 = vunpack.c.l.b16 %v4774
        %v4878 = vunpack.c.l.b16 %v4775
        %v4879 = vunpack.c.l.b16 %v4776
        %v4880 = vunpack.c.l.b16 %v4777
        %v4881 = vunpack.c.l.b16 %v4778
        %v4882 = vunpack.c.l.b16 %v4779
        %v4883 = vunpack.c.l.b16 %v4780
        %v4884 = vunpack.c.l.b16 %v4781
        %v4885 = vunpack.c.l.b16 %v4782
        %v4886 = vunpack.c.l.b16 %v4783
        %v4887 = vunpack.c.l.b16 %v4784
        %v4888 = vunpack.c.l.b16 %v4785
        %v4889 = vunpack.c.l.b16 %v4786
        %v4890 = vunpack.c.l.b16 %v4787
        %v4891 = vunpack.c.l.b16 %v4788
        %v4892 = vunpack.c.l.b16 %v4789
        %v4893 = vunpack.c.l.b16 %v4790
        %v4894 = vunpack.c.l.b16 %v4791
        %v4895 = vunpack.c.l.b16 %v4792
        %v4896 = vunpack.c.l.b16 %v4793
        %v4897 = vunpack.c.l.b16 %v4794
        %v4898 = vunpack.c.l.b16 %v4795
        %v4899 = vunpack.c.l.b16 %v4796
        %v4900 = vunpack.c.l.b16 %v4797
        %v4901 = vunpack.c.l.b16 %v4798
        %v4902 = vunpack.c.l.b16 %v4799
        %v4903 = vunpack.c.l.b16 %v4800
        %v4904 = vunpack.c.l.b16 %v4801
        %v4905 = vunpack.c.l.b16 %v4802
        %v4906 = vunpack.c.l.b16 %v4803
        %v4907 = vunpack.c.l.b16 %v4804
        %v4908 = vunpack.c.l.b16 %v4805
        %v4909 = vunpack.c.l.b16 %v4806
        %v4910 = vunpack.c.l.b16 %v4807
        %v4911 = vunpack.c.l.b16 %v4808
        %v4912 = vunpack.c.l.b16 %v4809
        %v4913 = vunpack.c.l.b16 %v4810
        %v4914 = vunpack.c.l.b16 %v4811
        %v4915 = vunpack.c.l.b16 %v4812
        %v4916 = vunpack.c.l.b16 %v4813
        %v4917 = vunpack.c.l.b16 %v4814
        %v4918 = vunpack.c.l.b16 %v4815
        %v4919 = vunpack.c.l.b16 %v4816
        %v4920 = vunpack.c.l.b16 %v4817
        %v4921 = vunpack.c.l.b16 %v4818
        %v4922 = vpack.c.b16 %v4875, %v4874
        %v4923 = vpack.c.b16 %v4877, %v4876
        %v4924 = vpack.c.b16 %v4879, %v4878
        %v4925 = vpack.c.b16 %v4881, %v4880
        %v4926 = vpack.c.b16 %v4883, %v4882
        %v4927 = vpack.c.b16 %v4885, %v4884
        %v4928 = vpack.c.b16 %v4887, %v4886
        %v4929 = vpack.c.b16 %v4889, %v4888
        %v4930 = vpack.c.b16 %v4891, %v4890
        %v4931 = vpack.c.b16 %v4893, %v4892
        %v4932 = vpack.c.b16 %v4895, %v4894
        %v4933 = vpack.c.b16 %v4897, %v4896
        %v4934 = vpack.c.b16 %v4899, %v4898
        %v4935 = vpack.c.b16 %v4901, %v4900
        %v4936 = vpack.c.b16 %v4903, %v4902
        %v4937 = vpack.c.b16 %v4905, %v4904
        %v4938 = vpack.c.b16 %v4907, %v4906
        %v4939 = vpack.c.b16 %v4909, %v4908
        %v4940 = vpack.c.b16 %v4911, %v4910
        %v4941 = vpack.c.b16 %v4913, %v4912
        %v4942 = vpack.c.b16 %v4915, %v4914
        %v4943 = vpack.c.b16 %v4917, %v4916
        %v4944 = vpack.c.b16 %v4919, %v4918
        %v4945 = vpack.c.b16 %v4921, %v4920
        %4970 = vmatprep.subr.bf16.mxu0 0
        %4971 = vmatpush1.bf16.msra.mxu0 %v4929
        %4972 = vmatprep.subr.bf16.mxu0 0
        %4973 = vmatpush1.bf16.msra.mxu0 %v4928
        %4974 = vmatprep.subr.bf16.mxu0 0
        %4975 = vmatpush1.bf16.msra.mxu0 %v4927
        %4976 = vmatprep.subr.bf16.mxu0 0
        %4977 = vmatpush1.bf16.msra.mxu0 %v4926
        %4978 = vmatprep.subr.bf16.mxu0 0
        %4979 = vmatpush1.bf16.msra.mxu0 %v4925
        %4980 = vmatprep.subr.bf16.mxu0 0
        %4981 = vmatpush1.bf16.msra.mxu0 %v4924
        %4982 = vmatprep.subr.bf16.mxu0 0
        %4983 = vmatpush1.bf16.msra.mxu0 %v4923
        %4984 = vmatprep.subr.bf16.mxu0 0
        %4985 = vmatpush1.bf16.msra.mxu0 %v4922
        %4986 = vmatprep.subr.bf16.mxu0 0
        %4987 = vmatpush2.bf16.msra.mxu0 %v4937
        %4988 = vmatprep.subr.bf16.mxu0 0
        %4989 = vmatpush2.bf16.msra.mxu0 %v4936
        %4990 = vmatprep.subr.bf16.mxu0 0
        %4991 = vmatpush2.bf16.msra.mxu0 %v4935
        %4992 = vmatprep.subr.bf16.mxu0 0
        %4993 = vmatpush2.bf16.msra.mxu0 %v4934
        %4994 = vmatprep.subr.bf16.mxu0 0
        %4995 = vmatpush2.bf16.msra.mxu0 %v4933
        %4996 = vmatprep.subr.bf16.mxu0 0
        %4997 = vmatpush2.bf16.msra.mxu0 %v4932
        %4998 = vmatprep.subr.bf16.mxu0 0
        %4999 = vmatpush2.bf16.msra.mxu0 %v4931
        %5000 = vmatprep.subr.bf16.mxu0 0
        %5001 = vmatpush2.bf16.msra.mxu0 %v4930
        %5002 = vmatprep.mubr.bf16.mxu0 %v4769
        %5003 = vmatmul.mubr.bf16.gmra.mxu0 %v4768
        %v5004 = vpop.f32.mrf.mxu0
        %v5005 = vadd.f32 %v4824, %v5004
        %v5006 = vpop.f32.mrf.mxu0
        %v5007 = vpop.f32.mrf.mxu0
        %v5008 = vpop.f32.mrf.mxu0
        %5009 = vdwg.mxu0
        %5010 = vmatprep.subr.bf16.mxu0 0
        %5011 = vmatpush1.bf16.msra.mxu0 %v4945
        %5012 = vmatprep.subr.bf16.mxu0 0
        %5013 = vmatpush1.bf16.msra.mxu0 %v4944
        %5014 = vmatprep.subr.bf16.mxu0 0
        %5015 = vmatpush1.bf16.msra.mxu0 %v4943
        %5016 = vmatprep.subr.bf16.mxu0 0
        %5017 = vmatpush1.bf16.msra.mxu0 %v4942
        %5018 = vmatprep.subr.bf16.mxu0 0
        %5019 = vmatpush1.bf16.msra.mxu0 %v4941
        %5020 = vmatprep.subr.bf16.mxu0 0
        %5021 = vmatpush1.bf16.msra.mxu0 %v4940
        %5022 = vmatprep.subr.bf16.mxu0 0
        %5023 = vmatpush1.bf16.msra.mxu0 %v4939
        %5024 = vmatprep.subr.bf16.mxu0 0
        %5025 = vmatpush1.bf16.msra.mxu0 %v4938
        %5026 = vmatprep.subr.bf16.mxu0 0
        %5027 = vmatpush2.bf16.msra.mxu0 0
        %5028 = vmatprep.subr.bf16.mxu0 0
        %5029 = vmatpush2.bf16.msra.mxu0 0
        %5030 = vmatprep.subr.bf16.mxu0 0
        %5031 = vmatpush2.bf16.msra.mxu0 0
        %5032 = vmatprep.subr.bf16.mxu0 0
        %5033 = vmatpush2.bf16.msra.mxu0 0
        %5034 = vmatprep.subr.bf16.mxu0 0
        %5035 = vmatpush2.bf16.msra.mxu0 0
        %5036 = vmatprep.subr.bf16.mxu0 0
        %5037 = vmatpush2.bf16.msra.mxu0 0
        %5038 = vmatprep.subr.bf16.mxu0 0
        %5039 = vmatpush2.bf16.msra.mxu0 0
        %5040 = vmatprep.subr.bf16.mxu0 0
        %5041 = vmatpush2.bf16.msra.mxu0 0
        %5042 = vmatprep.mubr.bf16.mxu0 0
        %5043 = vmatmul.mubr.bf16.gmra.mxu0 %v4770
        %v5044 = vpop.f32.mrf.mxu0
        %v5045 = vadd.f32 %v5005, %v5044
        %v5046 = vpop.f32.mrf.mxu0
        %v5047 = vpop.f32.mrf.mxu0
        %v5048 = vpop.f32.mrf.mxu0
        %5049 = vdwg.mxu0
        %v5050 = vmax.f32 %v5045, 0.0
        %v5052 = vrot.slane %v5050, 7
        %v5054 = vsel %vm2218, 0.0, %v5052
        %v5055 = vrot.slane %v5050, 1
        %v5057 = vsel %vm1757, %v5055, 0.0
        %v5058 = vpack.c.bf16 %v5054, %v5054
        %v5059 = vpack.c.bf16 %v5050, %v5050
        %v5060 = vpack.c.bf16 %v5057, %v5057
        %v5061 = vld [vmem:[#allocation31] sm:$0xf]
        %v5062 = vld [vmem:[#allocation31 + $0x4] sm:$0xf]
        %v5063 = vld [vmem:[#allocation31 + $0x8] sm:$0xf]
        %v5064 = vld [vmem:[#allocation31 + $0xc] sm:$0xf]
        %v5065 = vld [vmem:[#allocation31 + $0x10] sm:$0xf]
        %v5066 = vld [vmem:[#allocation31 + $0x14] sm:$0xf]
        %v5067 = vld [vmem:[#allocation31 + $0x18] sm:$0xf]
        %v5068 = vld [vmem:[#allocation31 + $0x1c] sm:$0xf]
        %v5069 = vld [vmem:[#allocation31 + $0x20] sm:$0xf]
        %v5070 = vld [vmem:[#allocation31 + $0x24] sm:$0xf]
        %v5071 = vld [vmem:[#allocation31 + $0x28] sm:$0xf]
        %v5072 = vld [vmem:[#allocation31 + $0x2c] sm:$0xf]
        %v5073 = vld [vmem:[#allocation31 + $0x30] sm:$0xf]
        %v5074 = vld [vmem:[#allocation31 + $0x34] sm:$0xf]
        %v5075 = vld [vmem:[#allocation31 + $0x38] sm:$0xf]
        %v5076 = vld [vmem:[#allocation31 + $0x3c] sm:$0xf]
        %v5077 = vld [vmem:[#allocation31 + $0x40] sm:$0xf]
        %v5078 = vld [vmem:[#allocation31 + $0x44] sm:$0xf]
        %v5079 = vld [vmem:[#allocation31 + $0x48] sm:$0xf]
        %v5080 = vld [vmem:[#allocation31 + $0x4c] sm:$0xf]
        %v5081 = vld [vmem:[#allocation31 + $0x50] sm:$0xf]
        %v5082 = vld [vmem:[#allocation31 + $0x54] sm:$0xf]
        %v5083 = vld [vmem:[#allocation31 + $0x58] sm:$0xf]
        %v5084 = vld [vmem:[#allocation31 + $0x5c] sm:$0xf]
        %v5085 = vld [vmem:[#allocation31 + $0x60] sm:$0xf]
        %v5086 = vld [vmem:[#allocation31 + $0x64] sm:$0xf]
        %v5087 = vld [vmem:[#allocation31 + $0x68] sm:$0xf]
        %v5088 = vld [vmem:[#allocation31 + $0x6c] sm:$0xf]
        %v5089 = vld [vmem:[#allocation31 + $0x70] sm:$0xf]
        %v5090 = vld [vmem:[#allocation31 + $0x74] sm:$0xf]
        %v5091 = vld [vmem:[#allocation31 + $0x78] sm:$0xf]
        %v5092 = vld [vmem:[#allocation31 + $0x7c] sm:$0xf]
        %v5093 = vld [vmem:[#allocation31 + $0x80] sm:$0xf]
        %v5094 = vld [vmem:[#allocation31 + $0x84] sm:$0xf]
        %v5095 = vld [vmem:[#allocation31 + $0x88] sm:$0xf]
        %v5096 = vld [vmem:[#allocation31 + $0x8c] sm:$0xf]
        %v5097 = vld [vmem:[#allocation31 + $0x90] sm:$0xf]
        %v5098 = vld [vmem:[#allocation31 + $0x94] sm:$0xf]
        %v5099 = vld [vmem:[#allocation31 + $0x98] sm:$0xf]
        %v5100 = vld [vmem:[#allocation31 + $0x9c] sm:$0xf]
        %v5101 = vld [vmem:[#allocation31 + $0xa0] sm:$0xf]
        %v5102 = vld [vmem:[#allocation31 + $0xa4] sm:$0xf]
        %v5103 = vld [vmem:[#allocation31 + $0xa8] sm:$0xf]
        %v5104 = vld [vmem:[#allocation31 + $0xac] sm:$0xf]
        %v5105 = vld [vmem:[#allocation31 + $0xb0] sm:$0xf]
        %v5106 = vld [vmem:[#allocation31 + $0xb4] sm:$0xf]
        %v5107 = vld [vmem:[#allocation31 + $0xb8] sm:$0xf]
        %v5108 = vld [vmem:[#allocation31 + $0xbc] sm:$0xf]
        %v5109 = vld [vmem:[#allocation32] sm:$0x1]
        %v5111 = vlaneseq
        %v5112 = vshrl.u32 %v5111, 7
        %v5113 = vsub.s32 0, %v5112
        %v5114 = vrot.slane %v5109, %v5113
        %v5164 = vunpack.c.l.b16 %v5061
        %v5165 = vunpack.c.l.b16 %v5062
        %v5166 = vunpack.c.l.b16 %v5063
        %v5167 = vunpack.c.l.b16 %v5064
        %v5168 = vunpack.c.l.b16 %v5065
        %v5169 = vunpack.c.l.b16 %v5066
        %v5170 = vunpack.c.l.b16 %v5067
        %v5171 = vunpack.c.l.b16 %v5068
        %v5172 = vunpack.c.l.b16 %v5069
        %v5173 = vunpack.c.l.b16 %v5070
        %v5174 = vunpack.c.l.b16 %v5071
        %v5175 = vunpack.c.l.b16 %v5072
        %v5176 = vunpack.c.l.b16 %v5073
        %v5177 = vunpack.c.l.b16 %v5074
        %v5178 = vunpack.c.l.b16 %v5075
        %v5179 = vunpack.c.l.b16 %v5076
        %v5180 = vunpack.c.l.b16 %v5077
        %v5181 = vunpack.c.l.b16 %v5078
        %v5182 = vunpack.c.l.b16 %v5079
        %v5183 = vunpack.c.l.b16 %v5080
        %v5184 = vunpack.c.l.b16 %v5081
        %v5185 = vunpack.c.l.b16 %v5082
        %v5186 = vunpack.c.l.b16 %v5083
        %v5187 = vunpack.c.l.b16 %v5084
        %v5188 = vunpack.c.l.b16 %v5085
        %v5189 = vunpack.c.l.b16 %v5086
        %v5190 = vunpack.c.l.b16 %v5087
        %v5191 = vunpack.c.l.b16 %v5088
        %v5192 = vunpack.c.l.b16 %v5089
        %v5193 = vunpack.c.l.b16 %v5090
        %v5194 = vunpack.c.l.b16 %v5091
        %v5195 = vunpack.c.l.b16 %v5092
        %v5196 = vunpack.c.l.b16 %v5093
        %v5197 = vunpack.c.l.b16 %v5094
        %v5198 = vunpack.c.l.b16 %v5095
        %v5199 = vunpack.c.l.b16 %v5096
        %v5200 = vunpack.c.l.b16 %v5097
        %v5201 = vunpack.c.l.b16 %v5098
        %v5202 = vunpack.c.l.b16 %v5099
        %v5203 = vunpack.c.l.b16 %v5100
        %v5204 = vunpack.c.l.b16 %v5101
        %v5205 = vunpack.c.l.b16 %v5102
        %v5206 = vunpack.c.l.b16 %v5103
        %v5207 = vunpack.c.l.b16 %v5104
        %v5208 = vunpack.c.l.b16 %v5105
        %v5209 = vunpack.c.l.b16 %v5106
        %v5210 = vunpack.c.l.b16 %v5107
        %v5211 = vunpack.c.l.b16 %v5108
        %v5212 = vpack.c.b16 %v5165, %v5164
        %v5213 = vpack.c.b16 %v5167, %v5166
        %v5214 = vpack.c.b16 %v5169, %v5168
        %v5215 = vpack.c.b16 %v5171, %v5170
        %v5216 = vpack.c.b16 %v5173, %v5172
        %v5217 = vpack.c.b16 %v5175, %v5174
        %v5218 = vpack.c.b16 %v5177, %v5176
        %v5219 = vpack.c.b16 %v5179, %v5178
        %v5220 = vpack.c.b16 %v5181, %v5180
        %v5221 = vpack.c.b16 %v5183, %v5182
        %v5222 = vpack.c.b16 %v5185, %v5184
        %v5223 = vpack.c.b16 %v5187, %v5186
        %v5224 = vpack.c.b16 %v5189, %v5188
        %v5225 = vpack.c.b16 %v5191, %v5190
        %v5226 = vpack.c.b16 %v5193, %v5192
        %v5227 = vpack.c.b16 %v5195, %v5194
        %v5228 = vpack.c.b16 %v5197, %v5196
        %v5229 = vpack.c.b16 %v5199, %v5198
        %v5230 = vpack.c.b16 %v5201, %v5200
        %v5231 = vpack.c.b16 %v5203, %v5202
        %v5232 = vpack.c.b16 %v5205, %v5204
        %v5233 = vpack.c.b16 %v5207, %v5206
        %v5234 = vpack.c.b16 %v5209, %v5208
        %v5235 = vpack.c.b16 %v5211, %v5210
        %5260 = vmatprep.subr.bf16.mxu0 0
        %5261 = vmatpush1.bf16.msra.mxu0 %v5219
        %5262 = vmatprep.subr.bf16.mxu0 0
        %5263 = vmatpush1.bf16.msra.mxu0 %v5218
        %5264 = vmatprep.subr.bf16.mxu0 0
        %5265 = vmatpush1.bf16.msra.mxu0 %v5217
        %5266 = vmatprep.subr.bf16.mxu0 0
        %5267 = vmatpush1.bf16.msra.mxu0 %v5216
        %5268 = vmatprep.subr.bf16.mxu0 0
        %5269 = vmatpush1.bf16.msra.mxu0 %v5215
        %5270 = vmatprep.subr.bf16.mxu0 0
        %5271 = vmatpush1.bf16.msra.mxu0 %v5214
        %5272 = vmatprep.subr.bf16.mxu0 0
        %5273 = vmatpush1.bf16.msra.mxu0 %v5213
        %5274 = vmatprep.subr.bf16.mxu0 0
        %5275 = vmatpush1.bf16.msra.mxu0 %v5212
        %5276 = vmatprep.subr.bf16.mxu0 0
        %5277 = vmatpush2.bf16.msra.mxu0 %v5227
        %5278 = vmatprep.subr.bf16.mxu0 0
        %5279 = vmatpush2.bf16.msra.mxu0 %v5226
        %5280 = vmatprep.subr.bf16.mxu0 0
        %5281 = vmatpush2.bf16.msra.mxu0 %v5225
        %5282 = vmatprep.subr.bf16.mxu0 0
        %5283 = vmatpush2.bf16.msra.mxu0 %v5224
        %5284 = vmatprep.subr.bf16.mxu0 0
        %5285 = vmatpush2.bf16.msra.mxu0 %v5223
        %5286 = vmatprep.subr.bf16.mxu0 0
        %5287 = vmatpush2.bf16.msra.mxu0 %v5222
        %5288 = vmatprep.subr.bf16.mxu0 0
        %5289 = vmatpush2.bf16.msra.mxu0 %v5221
        %5290 = vmatprep.subr.bf16.mxu0 0
        %5291 = vmatpush2.bf16.msra.mxu0 %v5220
        %5292 = vmatprep.mubr.bf16.mxu0 %v5059
        %5293 = vmatmul.mubr.bf16.gmra.mxu0 %v5058
        %v5294 = vpop.f32.mrf.mxu0
        %v5295 = vadd.f32 %v5114, %v5294
        %v5296 = vpop.f32.mrf.mxu0
        %v5297 = vpop.f32.mrf.mxu0
        %v5298 = vpop.f32.mrf.mxu0
        %5299 = vdwg.mxu0
        %5300 = vmatprep.subr.bf16.mxu0 0
        %5301 = vmatpush1.bf16.msra.mxu0 %v5235
        %5302 = vmatprep.subr.bf16.mxu0 0
        %5303 = vmatpush1.bf16.msra.mxu0 %v5234
        %5304 = vmatprep.subr.bf16.mxu0 0
        %5305 = vmatpush1.bf16.msra.mxu0 %v5233
        %5306 = vmatprep.subr.bf16.mxu0 0
        %5307 = vmatpush1.bf16.msra.mxu0 %v5232
        %5308 = vmatprep.subr.bf16.mxu0 0
        %5309 = vmatpush1.bf16.msra.mxu0 %v5231
        %5310 = vmatprep.subr.bf16.mxu0 0
        %5311 = vmatpush1.bf16.msra.mxu0 %v5230
        %5312 = vmatprep.subr.bf16.mxu0 0
        %5313 = vmatpush1.bf16.msra.mxu0 %v5229
        %5314 = vmatprep.subr.bf16.mxu0 0
        %5315 = vmatpush1.bf16.msra.mxu0 %v5228
        %5316 = vmatprep.subr.bf16.mxu0 0
        %5317 = vmatpush2.bf16.msra.mxu0 0
        %5318 = vmatprep.subr.bf16.mxu0 0
        %5319 = vmatpush2.bf16.msra.mxu0 0
        %5320 = vmatprep.subr.bf16.mxu0 0
        %5321 = vmatpush2.bf16.msra.mxu0 0
        %5322 = vmatprep.subr.bf16.mxu0 0
        %5323 = vmatpush2.bf16.msra.mxu0 0
        %5324 = vmatprep.subr.bf16.mxu0 0
        %5325 = vmatpush2.bf16.msra.mxu0 0
        %5326 = vmatprep.subr.bf16.mxu0 0
        %5327 = vmatpush2.bf16.msra.mxu0 0
        %5328 = vmatprep.subr.bf16.mxu0 0
        %5329 = vmatpush2.bf16.msra.mxu0 0
        %5330 = vmatprep.subr.bf16.mxu0 0
        %5331 = vmatpush2.bf16.msra.mxu0 0
        %5332 = vmatprep.mubr.bf16.mxu0 0
        %5333 = vmatmul.mubr.bf16.gmra.mxu0 %v5060
        %v5334 = vpop.f32.mrf.mxu0
        %v5335 = vadd.f32 %v5295, %v5334
        %v5336 = vpop.f32.mrf.mxu0
        %v5337 = vpop.f32.mrf.mxu0
        %v5338 = vpop.f32.mrf.mxu0
        %5339 = vdwg.mxu0
        %v5340 = vadd.f32 %v5335, %v4760
        %v5341 = vmax.f32 %v5340, 0.0
        %v5343 = vrot.slane %v5341, 7
        %v5345 = vsel %vm2218, 0.0, %v5343
        %vm5346 = vcmask 72704
        %v5347 = vsel %vm5346, %v1716, 0
        %v5350 = vsel %vm2218, 0.0, 0
        %5352 = vmatprep.subr.mxu0 0.0
        %5353 = vmatpush1.msra.mxu0 0.0
        %5354 = vmatprep.subr.mxu0 0.0
        %5355 = vmatpush1.msra.mxu0 0.0
        %5356 = vmatprep.subr.mxu0 0.0
        %5357 = vmatpush1.msra.mxu0 0.0
        %5358 = vmatprep.subr.mxu0 0.0
        %5359 = vmatpush1.msra.mxu0 0.0
        %5360 = vmatprep.subr.mxu0 0.0
        %5361 = vmatpush1.msra.mxu0 0.0
        %5362 = vmatprep.subr.mxu0 0.0
        %5363 = vmatpush1.msra.mxu0 0.0
        %5364 = vmatprep.subr.mxu0 0.0
        %5365 = vmatpush1.msra.mxu0 0.0
        %5366 = vmatprep.subr.mxu0 0.0
        %5367 = vmatpush1.msra.mxu0 0.0
        %5368 = vmatprep.subr.mxu0 0.0
        %5369 = vmatpush1.msra.mxu0 0.0
        %5370 = vmatprep.subr.mxu0 0.0
        %5371 = vmatpush1.msra.mxu0 0.0
        %5372 = vmatprep.subr.mxu0 0.0
        %5373 = vmatpush1.msra.mxu0 0.0
        %5374 = vmatprep.subr.mxu0 0.0
        %5375 = vmatpush1.msra.mxu0 0.0
        %5376 = vmatprep.subr.mxu0 0.0
        %5377 = vmatpush1.msra.mxu0 0.0
        %5378 = vmatprep.subr.mxu0 0.0
        %5379 = vmatpush1.msra.mxu0 0.0
        %5380 = vmatprep.subr.mxu0 0.0
        %5381 = vmatpush1.msra.mxu0 %v5350
        %5382 = vmatprep.subr.mxu0 0.0
        %5383 = vmatpush1.msra.mxu0 %v5345
        %5384 = vmatprep.subr.mxu0 0.0
        %5385 = vmatpush2.msra.mxu0 0.0
        %5386 = vmatprep.subr.mxu0 0.0
        %5387 = vmatpush2.msra.mxu0 0.0
        %5388 = vmatprep.subr.mxu0 0.0
        %5389 = vmatpush2.msra.mxu0 0.0
        %5390 = vmatprep.subr.mxu0 0.0
        %5391 = vmatpush2.msra.mxu0 0.0
        %5392 = vmatprep.subr.mxu0 0.0
        %5393 = vmatpush2.msra.mxu0 0.0
        %5394 = vmatprep.subr.mxu0 0.0
        %5395 = vmatpush2.msra.mxu0 0.0
        %5396 = vmatprep.subr.mxu0 0.0
        %5397 = vmatpush2.msra.mxu0 0.0
        %5398 = vmatprep.subr.mxu0 0.0
        %5399 = vmatpush2.msra.mxu0 0.0
        %5400 = vmatprep.subr.mxu0 0.0
        %5401 = vmatpush2.msra.mxu0 0.0
        %5402 = vmatprep.subr.mxu0 0.0
        %5403 = vmatpush2.msra.mxu0 0.0
        %5404 = vmatprep.subr.mxu0 0.0
        %5405 = vmatpush2.msra.mxu0 0.0
        %5406 = vmatprep.subr.mxu0 0.0
        %5407 = vmatpush2.msra.mxu0 0.0
        %5408 = vmatprep.subr.mxu0 0.0
        %5409 = vmatpush2.msra.mxu0 0.0
        %5410 = vmatprep.subr.mxu0 0.0
        %5411 = vmatpush2.msra.mxu0 0.0
        %5412 = vmatprep.subr.mxu0 0.0
        %5413 = vmatpush2.msra.mxu0 0.0
        %5414 = vmatprep.subr.mxu0 0.0
        %5415 = vmatpush2.msra.mxu0 0.0
        %5416 = vmatprep.mubr.f32.mxu0 0.0
        %5417 = vmatmul.mubr.f32.gmra.mxu0 %v5347
        %v5418 = vpop.f32.mrf.mxu0
        %v5419 = vadd.f32 0.0, %v5418
        %v5420 = vpop.f32.mrf.mxu0
        %5421 = vdwg.mxu0
        %v5422 = vsel %vm5346, %v1736, 0
        %5424 = vmatprep.subr.mxu0 0.0
        %5425 = vmatpush1.msra.mxu0 0.0
        %5426 = vmatprep.subr.mxu0 0.0
        %5427 = vmatpush1.msra.mxu0 0.0
        %5428 = vmatprep.subr.mxu0 0.0
        %5429 = vmatpush1.msra.mxu0 0.0
        %5430 = vmatprep.subr.mxu0 0.0
        %5431 = vmatpush1.msra.mxu0 0.0
        %5432 = vmatprep.subr.mxu0 0.0
        %5433 = vmatpush1.msra.mxu0 0.0
        %5434 = vmatprep.subr.mxu0 0.0
        %5435 = vmatpush1.msra.mxu0 0.0
        %5436 = vmatprep.subr.mxu0 0.0
        %5437 = vmatpush1.msra.mxu0 0.0
        %5438 = vmatprep.subr.mxu0 0.0
        %5439 = vmatpush1.msra.mxu0 0.0
        %5440 = vmatprep.subr.mxu0 0.0
        %5441 = vmatpush1.msra.mxu0 0.0
        %5442 = vmatprep.subr.mxu0 0.0
        %5443 = vmatpush1.msra.mxu0 0.0
        %5444 = vmatprep.subr.mxu0 0.0
        %5445 = vmatpush1.msra.mxu0 0.0
        %5446 = vmatprep.subr.mxu0 0.0
        %5447 = vmatpush1.msra.mxu0 0.0
        %5448 = vmatprep.subr.mxu0 0.0
        %5449 = vmatpush1.msra.mxu0 0.0
        %5450 = vmatprep.subr.mxu0 0.0
        %5451 = vmatpush1.msra.mxu0 0.0
        %5452 = vmatprep.subr.mxu0 0.0
        %5453 = vmatpush1.msra.mxu0 %v5350
        %5454 = vmatprep.subr.mxu0 0.0
        %5455 = vmatpush1.msra.mxu0 %v5345
        %5456 = vmatprep.subr.mxu0 0.0
        %5457 = vmatpush2.msra.mxu0 0.0
        %5458 = vmatprep.subr.mxu0 0.0
        %5459 = vmatpush2.msra.mxu0 0.0
        %5460 = vmatprep.subr.mxu0 0.0
        %5461 = vmatpush2.msra.mxu0 0.0
        %5462 = vmatprep.subr.mxu0 0.0
        %5463 = vmatpush2.msra.mxu0 0.0
        %5464 = vmatprep.subr.mxu0 0.0
        %5465 = vmatpush2.msra.mxu0 0.0
        %5466 = vmatprep.subr.mxu0 0.0
        %5467 = vmatpush2.msra.mxu0 0.0
        %5468 = vmatprep.subr.mxu0 0.0
        %5469 = vmatpush2.msra.mxu0 0.0
        %5470 = vmatprep.subr.mxu0 0.0
        %5471 = vmatpush2.msra.mxu0 0.0
        %5472 = vmatprep.subr.mxu0 0.0
        %5473 = vmatpush2.msra.mxu0 0.0
        %5474 = vmatprep.subr.mxu0 0.0
        %5475 = vmatpush2.msra.mxu0 0.0
        %5476 = vmatprep.subr.mxu0 0.0
        %5477 = vmatpush2.msra.mxu0 0.0
        %5478 = vmatprep.subr.mxu0 0.0
        %5479 = vmatpush2.msra.mxu0 0.0
        %5480 = vmatprep.subr.mxu0 0.0
        %5481 = vmatpush2.msra.mxu0 0.0
        %5482 = vmatprep.subr.mxu0 0.0
        %5483 = vmatpush2.msra.mxu0 0.0
        %5484 = vmatprep.subr.mxu0 0.0
        %5485 = vmatpush2.msra.mxu0 0.0
        %5486 = vmatprep.subr.mxu0 0.0
        %5487 = vmatpush2.msra.mxu0 0.0
        %5488 = vmatprep.mubr.f32.mxu0 0.0
        %5489 = vmatmul.mubr.f32.gmra.mxu0 %v5422
        %v5490 = vpop.f32.mrf.mxu0
        %v5491 = vadd.f32 0.0, %v5490
        %v5492 = vpop.f32.mrf.mxu0
        %5493 = vdwg.mxu0
        %v5495 = vrot.slane %v5419, 1
        %v5497 = vpack.c.bf16 %v5419, %v5419
        %v5498 = vpack.c.bf16 %v5491, %v5491
        %v5499 = vpack.c.bf16 %v5495, %v5495
        %v5500 = vld [vmem:[%s63] sm:$0xff]
        %v5501 = vld [vmem:[%s63 + $0x8] sm:$0xff]
        %v5502 = vld [vmem:[%s63 + $0x10] sm:$0xff]
        %v5503 = vld [vmem:[%s63 + $0x18] sm:$0xff]
        %v5504 = vld [vmem:[%s63 + $0x20] sm:$0xff]
        %v5505 = vld [vmem:[%s63 + $0x28] sm:$0xff]
        %v5506 = vld [vmem:[%s63 + $0x30] sm:$0xff]
        %v5507 = vld [vmem:[%s63 + $0x38] sm:$0xff]
        %v5508 = vld [vmem:[%s63 + $0x40] sm:$0xff]
        %v5509 = vld [vmem:[%s63 + $0x48] sm:$0xff]
        %v5510 = vld [vmem:[%s63 + $0x50] sm:$0xff]
        %v5511 = vld [vmem:[%s63 + $0x58] sm:$0xff]
        %v5512 = vld [vmem:[%s63 + $0x60] sm:$0xff]
        %v5513 = vld [vmem:[%s63 + $0x68] sm:$0xff]
        %v5514 = vld [vmem:[%s63 + $0x70] sm:$0xff]
        %v5515 = vld [vmem:[%s63 + $0x78] sm:$0xff]
        %v5516 = vld [vmem:[%s63 + $0x80] sm:$0xff]
        %v5517 = vld [vmem:[%s63 + $0x88] sm:$0xff]
        %v5518 = vld [vmem:[%s63 + $0x90] sm:$0xff]
        %v5519 = vld [vmem:[%s63 + $0x98] sm:$0xff]
        %v5520 = vld [vmem:[%s63 + $0xa0] sm:$0xff]
        %v5521 = vld [vmem:[%s63 + $0xa8] sm:$0xff]
        %v5522 = vld [vmem:[%s63 + $0xb0] sm:$0xff]
        %v5523 = vld [vmem:[%s63 + $0xb8] sm:$0xff]
        %v5524 = vld [vmem:[%s63 + $0xc0] sm:$0xff]
        %v5525 = vld [vmem:[%s63 + $0xc8] sm:$0xff]
        %v5526 = vld [vmem:[%s63 + $0xd0] sm:$0xff]
        %v5527 = vld [vmem:[%s63 + $0xd8] sm:$0xff]
        %v5528 = vld [vmem:[%s63 + $0xe0] sm:$0xff]
        %v5529 = vld [vmem:[%s63 + $0xe8] sm:$0xff]
        %v5530 = vld [vmem:[%s63 + $0xf0] sm:$0xff]
        %v5531 = vld [vmem:[%s63 + $0xf8] sm:$0xff]
        %v5532 = vld [vmem:[%s63 + $0x100] sm:$0xff]
        %v5533 = vld [vmem:[%s63 + $0x108] sm:$0xff]
        %v5534 = vld [vmem:[%s63 + $0x110] sm:$0xff]
        %v5535 = vld [vmem:[%s63 + $0x118] sm:$0xff]
        %v5536 = vld [vmem:[%s63 + $0x120] sm:$0xff]
        %v5537 = vld [vmem:[%s63 + $0x128] sm:$0xff]
        %v5538 = vld [vmem:[%s63 + $0x130] sm:$0xff]
        %v5539 = vld [vmem:[%s63 + $0x138] sm:$0xff]
        %v5540 = vld [vmem:[%s63 + $0x140] sm:$0xff]
        %v5541 = vld [vmem:[%s63 + $0x148] sm:$0xff]
        %v5542 = vld [vmem:[%s63 + $0x150] sm:$0xff]
        %v5543 = vld [vmem:[%s63 + $0x158] sm:$0xff]
        %v5544 = vld [vmem:[%s63 + $0x160] sm:$0xff]
        %v5545 = vld [vmem:[%s63 + $0x168] sm:$0xff]
        %v5546 = vld [vmem:[%s63 + $0x170] sm:$0xff]
        %v5547 = vld [vmem:[%s63 + $0x178] sm:$0xff]
        %v5548 = vld [vmem:[%s65] sm:$0x3]
        %v5550 = vlaneseq
        %v5551 = vshrl.u32 %v5550, 7
        %v5552 = vsub.s32 0, %v5551
        %v5553 = vrot.slane %v5548, %v5552
        %v5554 = vlaneseq
        %v5555 = vshrl.u32 %v5554, 7
        %v5556 = vsub.s32 1, %v5555
        %v5557 = vrot.slane %v5548, %v5556
        %v5608 = vunpack.c.l.b16 %v5500
        %v5609 = vunpack.c.h.b16 %v5500
        %v5610 = vunpack.c.l.b16 %v5501
        %v5611 = vunpack.c.h.b16 %v5501
        %v5612 = vunpack.c.l.b16 %v5502
        %v5613 = vunpack.c.h.b16 %v5502
        %v5614 = vunpack.c.l.b16 %v5503
        %v5615 = vunpack.c.h.b16 %v5503
        %v5616 = vunpack.c.l.b16 %v5504
        %v5617 = vunpack.c.h.b16 %v5504
        %v5618 = vunpack.c.l.b16 %v5505
        %v5619 = vunpack.c.h.b16 %v5505
        %v5620 = vunpack.c.l.b16 %v5506
        %v5621 = vunpack.c.h.b16 %v5506
        %v5622 = vunpack.c.l.b16 %v5507
        %v5623 = vunpack.c.h.b16 %v5507
        %v5624 = vunpack.c.l.b16 %v5508
        %v5625 = vunpack.c.h.b16 %v5508
        %v5626 = vunpack.c.l.b16 %v5509
        %v5627 = vunpack.c.h.b16 %v5509
        %v5628 = vunpack.c.l.b16 %v5510
        %v5629 = vunpack.c.h.b16 %v5510
        %v5630 = vunpack.c.l.b16 %v5511
        %v5631 = vunpack.c.h.b16 %v5511
        %v5632 = vunpack.c.l.b16 %v5512
        %v5633 = vunpack.c.h.b16 %v5512
        %v5634 = vunpack.c.l.b16 %v5513
        %v5635 = vunpack.c.h.b16 %v5513
        %v5636 = vunpack.c.l.b16 %v5514
        %v5637 = vunpack.c.h.b16 %v5514
        %v5638 = vunpack.c.l.b16 %v5515
        %v5639 = vunpack.c.h.b16 %v5515
        %v5640 = vunpack.c.l.b16 %v5516
        %v5641 = vunpack.c.h.b16 %v5516
        %v5642 = vunpack.c.l.b16 %v5517
        %v5643 = vunpack.c.h.b16 %v5517
        %v5644 = vunpack.c.l.b16 %v5518
        %v5645 = vunpack.c.h.b16 %v5518
        %v5646 = vunpack.c.l.b16 %v5519
        %v5647 = vunpack.c.h.b16 %v5519
        %v5648 = vunpack.c.l.b16 %v5520
        %v5649 = vunpack.c.h.b16 %v5520
        %v5650 = vunpack.c.l.b16 %v5521
        %v5651 = vunpack.c.h.b16 %v5521
        %v5652 = vunpack.c.l.b16 %v5522
        %v5653 = vunpack.c.h.b16 %v5522
        %v5654 = vunpack.c.l.b16 %v5523
        %v5655 = vunpack.c.h.b16 %v5523
        %v5656 = vunpack.c.l.b16 %v5524
        %v5657 = vunpack.c.h.b16 %v5524
        %v5658 = vunpack.c.l.b16 %v5525
        %v5659 = vunpack.c.h.b16 %v5525
        %v5660 = vunpack.c.l.b16 %v5526
        %v5661 = vunpack.c.h.b16 %v5526
        %v5662 = vunpack.c.l.b16 %v5527
        %v5663 = vunpack.c.h.b16 %v5527
        %v5664 = vunpack.c.l.b16 %v5528
        %v5665 = vunpack.c.h.b16 %v5528
        %v5666 = vunpack.c.l.b16 %v5529
        %v5667 = vunpack.c.h.b16 %v5529
        %v5668 = vunpack.c.l.b16 %v5530
        %v5669 = vunpack.c.h.b16 %v5530
        %v5670 = vunpack.c.l.b16 %v5531
        %v5671 = vunpack.c.h.b16 %v5531
        %v5672 = vunpack.c.l.b16 %v5532
        %v5673 = vunpack.c.h.b16 %v5532
        %v5674 = vunpack.c.l.b16 %v5533
        %v5675 = vunpack.c.h.b16 %v5533
        %v5676 = vunpack.c.l.b16 %v5534
        %v5677 = vunpack.c.h.b16 %v5534
        %v5678 = vunpack.c.l.b16 %v5535
        %v5679 = vunpack.c.h.b16 %v5535
        %v5680 = vunpack.c.l.b16 %v5536
        %v5681 = vunpack.c.h.b16 %v5536
        %v5682 = vunpack.c.l.b16 %v5537
        %v5683 = vunpack.c.h.b16 %v5537
        %v5684 = vunpack.c.l.b16 %v5538
        %v5685 = vunpack.c.h.b16 %v5538
        %v5686 = vunpack.c.l.b16 %v5539
        %v5687 = vunpack.c.h.b16 %v5539
        %v5688 = vunpack.c.l.b16 %v5540
        %v5689 = vunpack.c.h.b16 %v5540
        %v5690 = vunpack.c.l.b16 %v5541
        %v5691 = vunpack.c.h.b16 %v5541
        %v5692 = vunpack.c.l.b16 %v5542
        %v5693 = vunpack.c.h.b16 %v5542
        %v5694 = vunpack.c.l.b16 %v5543
        %v5695 = vunpack.c.h.b16 %v5543
        %v5696 = vunpack.c.l.b16 %v5544
        %v5697 = vunpack.c.h.b16 %v5544
        %v5698 = vunpack.c.l.b16 %v5545
        %v5699 = vunpack.c.h.b16 %v5545
        %v5700 = vunpack.c.l.b16 %v5546
        %v5701 = vunpack.c.h.b16 %v5546
        %v5702 = vunpack.c.l.b16 %v5547
        %v5703 = vunpack.c.h.b16 %v5547
        %v5704 = vpack.c.b16 %v5610, %v5608
        %v5705 = vpack.c.b16 %v5611, %v5609
        %v5706 = vpack.c.b16 %v5614, %v5612
        %v5707 = vpack.c.b16 %v5615, %v5613
        %v5708 = vpack.c.b16 %v5618, %v5616
        %v5709 = vpack.c.b16 %v5619, %v5617
        %v5710 = vpack.c.b16 %v5622, %v5620
        %v5711 = vpack.c.b16 %v5623, %v5621
        %v5712 = vpack.c.b16 %v5626, %v5624
        %v5713 = vpack.c.b16 %v5627, %v5625
        %v5714 = vpack.c.b16 %v5630, %v5628
        %v5715 = vpack.c.b16 %v5631, %v5629
        %v5716 = vpack.c.b16 %v5634, %v5632
        %v5717 = vpack.c.b16 %v5635, %v5633
        %v5718 = vpack.c.b16 %v5638, %v5636
        %v5719 = vpack.c.b16 %v5639, %v5637
        %v5720 = vpack.c.b16 %v5642, %v5640
        %v5721 = vpack.c.b16 %v5643, %v5641
        %v5722 = vpack.c.b16 %v5646, %v5644
        %v5723 = vpack.c.b16 %v5647, %v5645
        %v5724 = vpack.c.b16 %v5650, %v5648
        %v5725 = vpack.c.b16 %v5651, %v5649
        %v5726 = vpack.c.b16 %v5654, %v5652
        %v5727 = vpack.c.b16 %v5655, %v5653
        %v5728 = vpack.c.b16 %v5658, %v5656
        %v5729 = vpack.c.b16 %v5659, %v5657
        %v5730 = vpack.c.b16 %v5662, %v5660
        %v5731 = vpack.c.b16 %v5663, %v5661
        %v5732 = vpack.c.b16 %v5666, %v5664
        %v5733 = vpack.c.b16 %v5667, %v5665
        %v5734 = vpack.c.b16 %v5670, %v5668
        %v5735 = vpack.c.b16 %v5671, %v5669
        %v5736 = vpack.c.b16 %v5674, %v5672
        %v5737 = vpack.c.b16 %v5675, %v5673
        %v5738 = vpack.c.b16 %v5678, %v5676
        %v5739 = vpack.c.b16 %v5679, %v5677
        %v5740 = vpack.c.b16 %v5682, %v5680
        %v5741 = vpack.c.b16 %v5683, %v5681
        %v5742 = vpack.c.b16 %v5686, %v5684
        %v5743 = vpack.c.b16 %v5687, %v5685
        %v5744 = vpack.c.b16 %v5690, %v5688
        %v5745 = vpack.c.b16 %v5691, %v5689
        %v5746 = vpack.c.b16 %v5694, %v5692
        %v5747 = vpack.c.b16 %v5695, %v5693
        %v5748 = vpack.c.b16 %v5698, %v5696
        %v5749 = vpack.c.b16 %v5699, %v5697
        %v5750 = vpack.c.b16 %v5702, %v5700
        %v5751 = vpack.c.b16 %v5703, %v5701
        %5800 = vmatprep.subr.bf16.mxu0 %v5719
        %5801 = vmatpush1.bf16.msra.mxu0 %v5718
        %5802 = vmatprep.subr.bf16.mxu0 %v5717
        %5803 = vmatpush1.bf16.msra.mxu0 %v5716
        %5804 = vmatprep.subr.bf16.mxu0 %v5715
        %5805 = vmatpush1.bf16.msra.mxu0 %v5714
        %5806 = vmatprep.subr.bf16.mxu0 %v5713
        %5807 = vmatpush1.bf16.msra.mxu0 %v5712
        %5808 = vmatprep.subr.bf16.mxu0 %v5711
        %5809 = vmatpush1.bf16.msra.mxu0 %v5710
        %5810 = vmatprep.subr.bf16.mxu0 %v5709
        %5811 = vmatpush1.bf16.msra.mxu0 %v5708
        %5812 = vmatprep.subr.bf16.mxu0 %v5707
        %5813 = vmatpush1.bf16.msra.mxu0 %v5706
        %5814 = vmatprep.subr.bf16.mxu0 %v5705
        %5815 = vmatpush1.bf16.msra.mxu0 %v5704
        %5816 = vmatprep.subr.bf16.mxu0 %v5735
        %5817 = vmatpush2.bf16.msra.mxu0 %v5734
        %5818 = vmatprep.subr.bf16.mxu0 %v5733
        %5819 = vmatpush2.bf16.msra.mxu0 %v5732
        %5820 = vmatprep.subr.bf16.mxu0 %v5731
        %5821 = vmatpush2.bf16.msra.mxu0 %v5730
        %5822 = vmatprep.subr.bf16.mxu0 %v5729
        %5823 = vmatpush2.bf16.msra.mxu0 %v5728
        %5824 = vmatprep.subr.bf16.mxu0 %v5727
        %5825 = vmatpush2.bf16.msra.mxu0 %v5726
        %5826 = vmatprep.subr.bf16.mxu0 %v5725
        %5827 = vmatpush2.bf16.msra.mxu0 %v5724
        %5828 = vmatprep.subr.bf16.mxu0 %v5723
        %5829 = vmatpush2.bf16.msra.mxu0 %v5722
        %5830 = vmatprep.subr.bf16.mxu0 %v5721
        %5831 = vmatpush2.bf16.msra.mxu0 %v5720
        %5832 = vmatprep.mubr.bf16.mxu0 %v5498
        %5833 = vmatmul.mubr.bf16.gmra.mxu0 %v5497
        %v5834 = vpop.f32.mrf.mxu0
        %v5835 = vadd.f32 %v5553, %v5834
        %v5836 = vpop.f32.mrf.mxu0
        %v5837 = vadd.f32 %v5557, %v5836
        %v5838 = vpop.f32.mrf.mxu0
        %v5839 = vpop.f32.mrf.mxu0
        %5840 = vdwg.mxu0
        %5841 = vmatprep.subr.bf16.mxu0 %v5751
        %5842 = vmatpush1.bf16.msra.mxu0 %v5750
        %5843 = vmatprep.subr.bf16.mxu0 %v5749
        %5844 = vmatpush1.bf16.msra.mxu0 %v5748
        %5845 = vmatprep.subr.bf16.mxu0 %v5747
        %5846 = vmatpush1.bf16.msra.mxu0 %v5746
        %5847 = vmatprep.subr.bf16.mxu0 %v5745
        %5848 = vmatpush1.bf16.msra.mxu0 %v5744
        %5849 = vmatprep.subr.bf16.mxu0 %v5743
        %5850 = vmatpush1.bf16.msra.mxu0 %v5742
        %5851 = vmatprep.subr.bf16.mxu0 %v5741
        %5852 = vmatpush1.bf16.msra.mxu0 %v5740
        %5853 = vmatprep.subr.bf16.mxu0 %v5739
        %5854 = vmatpush1.bf16.msra.mxu0 %v5738
        %5855 = vmatprep.subr.bf16.mxu0 %v5737
        %5856 = vmatpush1.bf16.msra.mxu0 %v5736
        %5857 = vmatprep.subr.bf16.mxu0 0
        %5858 = vmatpush2.bf16.msra.mxu0 0
        %5859 = vmatprep.subr.bf16.mxu0 0
        %5860 = vmatpush2.bf16.msra.mxu0 0
        %5861 = vmatprep.subr.bf16.mxu0 0
        %5862 = vmatpush2.bf16.msra.mxu0 0
        %5863 = vmatprep.subr.bf16.mxu0 0
        %5864 = vmatpush2.bf16.msra.mxu0 0
        %5865 = vmatprep.subr.bf16.mxu0 0
        %5866 = vmatpush2.bf16.msra.mxu0 0
        %5867 = vmatprep.subr.bf16.mxu0 0
        %5868 = vmatpush2.bf16.msra.mxu0 0
        %5869 = vmatprep.subr.bf16.mxu0 0
        %5870 = vmatpush2.bf16.msra.mxu0 0
        %5871 = vmatprep.subr.bf16.mxu0 0
        %5872 = vmatpush2.bf16.msra.mxu0 0
        %5873 = vmatprep.mubr.bf16.mxu0 0
        %5874 = vmatmul.mubr.bf16.gmra.mxu0 %v5499
        %v5875 = vpop.f32.mrf.mxu0
        %v5876 = vadd.f32 %v5835, %v5875
        %v5877 = vpop.f32.mrf.mxu0
        %v5878 = vadd.f32 %v5837, %v5877
        %v5879 = vpop.f32.mrf.mxu0
        %v5880 = vpop.f32.mrf.mxu0
        %5881 = vdwg.mxu0
        %v5882 = vmax.f32 %v5876, 0.0
        %v5883 = vmax.f32 %v5878, 0.0
        %v5886 = vrot.slane %v5882, 7
        %v5887 = vrot.slane %v5883, 7
        %v5890 = vsel %vm2218, 0.0, %v5886
        %v5891 = vsel %vm2218, 0.0, %v5887
        %v5892 = vrot.slane %v5882, 1
        %v5893 = vrot.slane %v5883, 1
        %v5896 = vsel %vm1666, %v5892, 0.0
        %v5897 = vsel %vm1666, %v5893, 0.0
        %v5898 = vpack.c.bf16 %v5890, %v5890
        %v5899 = vpack.c.bf16 %v5891, %v5891
        %v5900 = vpack.c.bf16 %v5882, %v5882
        %v5901 = vpack.c.bf16 %v5883, %v5883
        %v5902 = vpack.c.bf16 %v5896, %v5896
        %v5903 = vpack.c.bf16 %v5897, %v5897
        %v5904 = vld [vmem:[%s71] sm:$0xff]
        %v5905 = vld [vmem:[%s71 + $0x8] sm:$0xff]
        %v5906 = vld [vmem:[%s71 + $0x10] sm:$0xff]
        %v5907 = vld [vmem:[%s71 + $0x18] sm:$0xff]
        %v5908 = vld [vmem:[%s71 + $0x20] sm:$0xff]
        %v5909 = vld [vmem:[%s71 + $0x28] sm:$0xff]
        %v5910 = vld [vmem:[%s71 + $0x30] sm:$0xff]
        %v5911 = vld [vmem:[%s71 + $0x38] sm:$0xff]
        %v5912 = vld [vmem:[%s71 + $0x40] sm:$0xff]
        %v5913 = vld [vmem:[%s71 + $0x48] sm:$0xff]
        %v5914 = vld [vmem:[%s71 + $0x50] sm:$0xff]
        %v5915 = vld [vmem:[%s71 + $0x58] sm:$0xff]
        %v5916 = vld [vmem:[%s71 + $0x60] sm:$0xff]
        %v5917 = vld [vmem:[%s71 + $0x68] sm:$0xff]
        %v5918 = vld [vmem:[%s71 + $0x70] sm:$0xff]
        %v5919 = vld [vmem:[%s71 + $0x78] sm:$0xff]
        %v5920 = vld [vmem:[%s71 + $0x80] sm:$0xff]
        %v5921 = vld [vmem:[%s71 + $0x88] sm:$0xff]
        %v5922 = vld [vmem:[%s71 + $0x90] sm:$0xff]
        %v5923 = vld [vmem:[%s71 + $0x98] sm:$0xff]
        %v5924 = vld [vmem:[%s71 + $0xa0] sm:$0xff]
        %v5925 = vld [vmem:[%s71 + $0xa8] sm:$0xff]
        %v5926 = vld [vmem:[%s71 + $0xb0] sm:$0xff]
        %v5927 = vld [vmem:[%s71 + $0xb8] sm:$0xff]
        %v5928 = vld [vmem:[%s71 + $0xc0] sm:$0xff]
        %v5929 = vld [vmem:[%s71 + $0xc8] sm:$0xff]
        %v5930 = vld [vmem:[%s71 + $0xd0] sm:$0xff]
        %v5931 = vld [vmem:[%s71 + $0xd8] sm:$0xff]
        %v5932 = vld [vmem:[%s71 + $0xe0] sm:$0xff]
        %v5933 = vld [vmem:[%s71 + $0xe8] sm:$0xff]
        %v5934 = vld [vmem:[%s71 + $0xf0] sm:$0xff]
        %v5935 = vld [vmem:[%s71 + $0xf8] sm:$0xff]
        %v5936 = vld [vmem:[%s71 + $0x100] sm:$0xff]
        %v5937 = vld [vmem:[%s71 + $0x108] sm:$0xff]
        %v5938 = vld [vmem:[%s71 + $0x110] sm:$0xff]
        %v5939 = vld [vmem:[%s71 + $0x118] sm:$0xff]
        %v5940 = vld [vmem:[%s71 + $0x120] sm:$0xff]
        %v5941 = vld [vmem:[%s71 + $0x128] sm:$0xff]
        %v5942 = vld [vmem:[%s71 + $0x130] sm:$0xff]
        %v5943 = vld [vmem:[%s71 + $0x138] sm:$0xff]
        %v5944 = vld [vmem:[%s71 + $0x140] sm:$0xff]
        %v5945 = vld [vmem:[%s71 + $0x148] sm:$0xff]
        %v5946 = vld [vmem:[%s71 + $0x150] sm:$0xff]
        %v5947 = vld [vmem:[%s71 + $0x158] sm:$0xff]
        %v5948 = vld [vmem:[%s71 + $0x160] sm:$0xff]
        %v5949 = vld [vmem:[%s71 + $0x168] sm:$0xff]
        %v5950 = vld [vmem:[%s71 + $0x170] sm:$0xff]
        %v5951 = vld [vmem:[%s71 + $0x178] sm:$0xff]
        %v5952 = vld [vmem:[%s71 + $0x180] sm:$0xff]
        %v5953 = vld [vmem:[%s71 + $0x188] sm:$0xff]
        %v5954 = vld [vmem:[%s71 + $0x190] sm:$0xff]
        %v5955 = vld [vmem:[%s71 + $0x198] sm:$0xff]
        %v5956 = vld [vmem:[%s71 + $0x1a0] sm:$0xff]
        %v5957 = vld [vmem:[%s71 + $0x1a8] sm:$0xff]
        %v5958 = vld [vmem:[%s71 + $0x1b0] sm:$0xff]
        %v5959 = vld [vmem:[%s71 + $0x1b8] sm:$0xff]
        %v5960 = vld [vmem:[%s71 + $0x1c0] sm:$0xff]
        %v5961 = vld [vmem:[%s71 + $0x1c8] sm:$0xff]
        %v5962 = vld [vmem:[%s71 + $0x1d0] sm:$0xff]
        %v5963 = vld [vmem:[%s71 + $0x1d8] sm:$0xff]
        %v5964 = vld [vmem:[%s71 + $0x1e0] sm:$0xff]
        %v5965 = vld [vmem:[%s71 + $0x1e8] sm:$0xff]
        %v5966 = vld [vmem:[%s71 + $0x1f0] sm:$0xff]
        %v5967 = vld [vmem:[%s71 + $0x1f8] sm:$0xff]
        %v5968 = vld [vmem:[%s71 + $0x200] sm:$0xff]
        %v5969 = vld [vmem:[%s71 + $0x208] sm:$0xff]
        %v5970 = vld [vmem:[%s71 + $0x210] sm:$0xff]
        %v5971 = vld [vmem:[%s71 + $0x218] sm:$0xff]
        %v5972 = vld [vmem:[%s71 + $0x220] sm:$0xff]
        %v5973 = vld [vmem:[%s71 + $0x228] sm:$0xff]
        %v5974 = vld [vmem:[%s71 + $0x230] sm:$0xff]
        %v5975 = vld [vmem:[%s71 + $0x238] sm:$0xff]
        %v5976 = vld [vmem:[%s71 + $0x240] sm:$0xff]
        %v5977 = vld [vmem:[%s71 + $0x248] sm:$0xff]
        %v5978 = vld [vmem:[%s71 + $0x250] sm:$0xff]
        %v5979 = vld [vmem:[%s71 + $0x258] sm:$0xff]
        %v5980 = vld [vmem:[%s71 + $0x260] sm:$0xff]
        %v5981 = vld [vmem:[%s71 + $0x268] sm:$0xff]
        %v5982 = vld [vmem:[%s71 + $0x270] sm:$0xff]
        %v5983 = vld [vmem:[%s71 + $0x278] sm:$0xff]
        %v5984 = vld [vmem:[%s71 + $0x280] sm:$0xff]
        %v5985 = vld [vmem:[%s71 + $0x288] sm:$0xff]
        %v5986 = vld [vmem:[%s71 + $0x290] sm:$0xff]
        %v5987 = vld [vmem:[%s71 + $0x298] sm:$0xff]
        %v5988 = vld [vmem:[%s71 + $0x2a0] sm:$0xff]
        %v5989 = vld [vmem:[%s71 + $0x2a8] sm:$0xff]
        %v5990 = vld [vmem:[%s71 + $0x2b0] sm:$0xff]
        %v5991 = vld [vmem:[%s71 + $0x2b8] sm:$0xff]
        %v5992 = vld [vmem:[%s71 + $0x2c0] sm:$0xff]
        %v5993 = vld [vmem:[%s71 + $0x2c8] sm:$0xff]
        %v5994 = vld [vmem:[%s71 + $0x2d0] sm:$0xff]
        %v5995 = vld [vmem:[%s71 + $0x2d8] sm:$0xff]
        %v5996 = vld [vmem:[%s71 + $0x2e0] sm:$0xff]
        %v5997 = vld [vmem:[%s71 + $0x2e8] sm:$0xff]
        %v5998 = vld [vmem:[%s71 + $0x2f0] sm:$0xff]
        %v5999 = vld [vmem:[%s71 + $0x2f8] sm:$0xff]
        %v6000 = vld [vmem:[#allocation37] sm:$0x3]
        %v6002 = vlaneseq
        %v6003 = vshrl.u32 %v6002, 7
        %v6004 = vsub.s32 0, %v6003
        %v6005 = vrot.slane %v6000, %v6004
        %v6006 = vlaneseq
        %v6007 = vshrl.u32 %v6006, 7
        %v6008 = vsub.s32 1, %v6007
        %v6009 = vrot.slane %v6000, %v6008
        %v6108 = vunpack.c.l.b16 %v5904
        %v6109 = vunpack.c.h.b16 %v5904
        %v6110 = vunpack.c.l.b16 %v5905
        %v6111 = vunpack.c.h.b16 %v5905
        %v6112 = vunpack.c.l.b16 %v5906
        %v6113 = vunpack.c.h.b16 %v5906
        %v6114 = vunpack.c.l.b16 %v5907
        %v6115 = vunpack.c.h.b16 %v5907
        %v6116 = vunpack.c.l.b16 %v5908
        %v6117 = vunpack.c.h.b16 %v5908
        %v6118 = vunpack.c.l.b16 %v5909
        %v6119 = vunpack.c.h.b16 %v5909
        %v6120 = vunpack.c.l.b16 %v5910
        %v6121 = vunpack.c.h.b16 %v5910
        %v6122 = vunpack.c.l.b16 %v5911
        %v6123 = vunpack.c.h.b16 %v5911
        %v6124 = vunpack.c.l.b16 %v5912
        %v6125 = vunpack.c.h.b16 %v5912
        %v6126 = vunpack.c.l.b16 %v5913
        %v6127 = vunpack.c.h.b16 %v5913
        %v6128 = vunpack.c.l.b16 %v5914
        %v6129 = vunpack.c.h.b16 %v5914
        %v6130 = vunpack.c.l.b16 %v5915
        %v6131 = vunpack.c.h.b16 %v5915
        %v6132 = vunpack.c.l.b16 %v5916
        %v6133 = vunpack.c.h.b16 %v5916
        %v6134 = vunpack.c.l.b16 %v5917
        %v6135 = vunpack.c.h.b16 %v5917
        %v6136 = vunpack.c.l.b16 %v5918
        %v6137 = vunpack.c.h.b16 %v5918
        %v6138 = vunpack.c.l.b16 %v5919
        %v6139 = vunpack.c.h.b16 %v5919
        %v6140 = vunpack.c.l.b16 %v5920
        %v6141 = vunpack.c.h.b16 %v5920
        %v6142 = vunpack.c.l.b16 %v5921
        %v6143 = vunpack.c.h.b16 %v5921
        %v6144 = vunpack.c.l.b16 %v5922
        %v6145 = vunpack.c.h.b16 %v5922
        %v6146 = vunpack.c.l.b16 %v5923
        %v6147 = vunpack.c.h.b16 %v5923
        %v6148 = vunpack.c.l.b16 %v5924
        %v6149 = vunpack.c.h.b16 %v5924
        %v6150 = vunpack.c.l.b16 %v5925
        %v6151 = vunpack.c.h.b16 %v5925
        %v6152 = vunpack.c.l.b16 %v5926
        %v6153 = vunpack.c.h.b16 %v5926
        %v6154 = vunpack.c.l.b16 %v5927
        %v6155 = vunpack.c.h.b16 %v5927
        %v6156 = vunpack.c.l.b16 %v5928
        %v6157 = vunpack.c.h.b16 %v5928
        %v6158 = vunpack.c.l.b16 %v5929
        %v6159 = vunpack.c.h.b16 %v5929
        %v6160 = vunpack.c.l.b16 %v5930
        %v6161 = vunpack.c.h.b16 %v5930
        %v6162 = vunpack.c.l.b16 %v5931
        %v6163 = vunpack.c.h.b16 %v5931
        %v6164 = vunpack.c.l.b16 %v5932
        %v6165 = vunpack.c.h.b16 %v5932
        %v6166 = vunpack.c.l.b16 %v5933
        %v6167 = vunpack.c.h.b16 %v5933
        %v6168 = vunpack.c.l.b16 %v5934
        %v6169 = vunpack.c.h.b16 %v5934
        %v6170 = vunpack.c.l.b16 %v5935
        %v6171 = vunpack.c.h.b16 %v5935
        %v6172 = vunpack.c.l.b16 %v5936
        %v6173 = vunpack.c.h.b16 %v5936
        %v6174 = vunpack.c.l.b16 %v5937
        %v6175 = vunpack.c.h.b16 %v5937
        %v6176 = vunpack.c.l.b16 %v5938
        %v6177 = vunpack.c.h.b16 %v5938
        %v6178 = vunpack.c.l.b16 %v5939
        %v6179 = vunpack.c.h.b16 %v5939
        %v6180 = vunpack.c.l.b16 %v5940
        %v6181 = vunpack.c.h.b16 %v5940
        %v6182 = vunpack.c.l.b16 %v5941
        %v6183 = vunpack.c.h.b16 %v5941
        %v6184 = vunpack.c.l.b16 %v5942
        %v6185 = vunpack.c.h.b16 %v5942
        %v6186 = vunpack.c.l.b16 %v5943
        %v6187 = vunpack.c.h.b16 %v5943
        %v6188 = vunpack.c.l.b16 %v5944
        %v6189 = vunpack.c.h.b16 %v5944
        %v6190 = vunpack.c.l.b16 %v5945
        %v6191 = vunpack.c.h.b16 %v5945
        %v6192 = vunpack.c.l.b16 %v5946
        %v6193 = vunpack.c.h.b16 %v5946
        %v6194 = vunpack.c.l.b16 %v5947
        %v6195 = vunpack.c.h.b16 %v5947
        %v6196 = vunpack.c.l.b16 %v5948
        %v6197 = vunpack.c.h.b16 %v5948
        %v6198 = vunpack.c.l.b16 %v5949
        %v6199 = vunpack.c.h.b16 %v5949
        %v6200 = vunpack.c.l.b16 %v5950
        %v6201 = vunpack.c.h.b16 %v5950
        %v6202 = vunpack.c.l.b16 %v5951
        %v6203 = vunpack.c.h.b16 %v5951
        %v6204 = vunpack.c.l.b16 %v5952
        %v6205 = vunpack.c.h.b16 %v5952
        %v6206 = vunpack.c.l.b16 %v5953
        %v6207 = vunpack.c.h.b16 %v5953
        %v6208 = vunpack.c.l.b16 %v5954
        %v6209 = vunpack.c.h.b16 %v5954
        %v6210 = vunpack.c.l.b16 %v5955
        %v6211 = vunpack.c.h.b16 %v5955
        %v6212 = vunpack.c.l.b16 %v5956
        %v6213 = vunpack.c.h.b16 %v5956
        %v6214 = vunpack.c.l.b16 %v5957
        %v6215 = vunpack.c.h.b16 %v5957
        %v6216 = vunpack.c.l.b16 %v5958
        %v6217 = vunpack.c.h.b16 %v5958
        %v6218 = vunpack.c.l.b16 %v5959
        %v6219 = vunpack.c.h.b16 %v5959
        %v6220 = vunpack.c.l.b16 %v5960
        %v6221 = vunpack.c.h.b16 %v5960
        %v6222 = vunpack.c.l.b16 %v5961
        %v6223 = vunpack.c.h.b16 %v5961
        %v6224 = vunpack.c.l.b16 %v5962
        %v6225 = vunpack.c.h.b16 %v5962
        %v6226 = vunpack.c.l.b16 %v5963
        %v6227 = vunpack.c.h.b16 %v5963
        %v6228 = vunpack.c.l.b16 %v5964
        %v6229 = vunpack.c.h.b16 %v5964
        %v6230 = vunpack.c.l.b16 %v5965
        %v6231 = vunpack.c.h.b16 %v5965
        %v6232 = vunpack.c.l.b16 %v5966
        %v6233 = vunpack.c.h.b16 %v5966
        %v6234 = vunpack.c.l.b16 %v5967
        %v6235 = vunpack.c.h.b16 %v5967
        %v6236 = vunpack.c.l.b16 %v5968
        %v6237 = vunpack.c.h.b16 %v5968
        %v6238 = vunpack.c.l.b16 %v5969
        %v6239 = vunpack.c.h.b16 %v5969
        %v6240 = vunpack.c.l.b16 %v5970
        %v6241 = vunpack.c.h.b16 %v5970
        %v6242 = vunpack.c.l.b16 %v5971
        %v6243 = vunpack.c.h.b16 %v5971
        %v6244 = vunpack.c.l.b16 %v5972
        %v6245 = vunpack.c.h.b16 %v5972
        %v6246 = vunpack.c.l.b16 %v5973
        %v6247 = vunpack.c.h.b16 %v5973
        %v6248 = vunpack.c.l.b16 %v5974
        %v6249 = vunpack.c.h.b16 %v5974
        %v6250 = vunpack.c.l.b16 %v5975
        %v6251 = vunpack.c.h.b16 %v5975
        %v6252 = vunpack.c.l.b16 %v5976
        %v6253 = vunpack.c.h.b16 %v5976
        %v6254 = vunpack.c.l.b16 %v5977
        %v6255 = vunpack.c.h.b16 %v5977
        %v6256 = vunpack.c.l.b16 %v5978
        %v6257 = vunpack.c.h.b16 %v5978
        %v6258 = vunpack.c.l.b16 %v5979
        %v6259 = vunpack.c.h.b16 %v5979
        %v6260 = vunpack.c.l.b16 %v5980
        %v6261 = vunpack.c.h.b16 %v5980
        %v6262 = vunpack.c.l.b16 %v5981
        %v6263 = vunpack.c.h.b16 %v5981
        %v6264 = vunpack.c.l.b16 %v5982
        %v6265 = vunpack.c.h.b16 %v5982
        %v6266 = vunpack.c.l.b16 %v5983
        %v6267 = vunpack.c.h.b16 %v5983
        %v6268 = vunpack.c.l.b16 %v5984
        %v6269 = vunpack.c.h.b16 %v5984
        %v6270 = vunpack.c.l.b16 %v5985
        %v6271 = vunpack.c.h.b16 %v5985
        %v6272 = vunpack.c.l.b16 %v5986
        %v6273 = vunpack.c.h.b16 %v5986
        %v6274 = vunpack.c.l.b16 %v5987
        %v6275 = vunpack.c.h.b16 %v5987
        %v6276 = vunpack.c.l.b16 %v5988
        %v6277 = vunpack.c.h.b16 %v5988
        %v6278 = vunpack.c.l.b16 %v5989
        %v6279 = vunpack.c.h.b16 %v5989
        %v6280 = vunpack.c.l.b16 %v5990
        %v6281 = vunpack.c.h.b16 %v5990
        %v6282 = vunpack.c.l.b16 %v5991
        %v6283 = vunpack.c.h.b16 %v5991
        %v6284 = vunpack.c.l.b16 %v5992
        %v6285 = vunpack.c.h.b16 %v5992
        %v6286 = vunpack.c.l.b16 %v5993
        %v6287 = vunpack.c.h.b16 %v5993
        %v6288 = vunpack.c.l.b16 %v5994
        %v6289 = vunpack.c.h.b16 %v5994
        %v6290 = vunpack.c.l.b16 %v5995
        %v6291 = vunpack.c.h.b16 %v5995
        %v6292 = vunpack.c.l.b16 %v5996
        %v6293 = vunpack.c.h.b16 %v5996
        %v6294 = vunpack.c.l.b16 %v5997
        %v6295 = vunpack.c.h.b16 %v5997
        %v6296 = vunpack.c.l.b16 %v5998
        %v6297 = vunpack.c.h.b16 %v5998
        %v6298 = vunpack.c.l.b16 %v5999
        %v6299 = vunpack.c.h.b16 %v5999
        %v6300 = vpack.c.b16 %v6110, %v6108
        %v6301 = vpack.c.b16 %v6111, %v6109
        %v6302 = vpack.c.b16 %v6114, %v6112
        %v6303 = vpack.c.b16 %v6115, %v6113
        %v6304 = vpack.c.b16 %v6118, %v6116
        %v6305 = vpack.c.b16 %v6119, %v6117
        %v6306 = vpack.c.b16 %v6122, %v6120
        %v6307 = vpack.c.b16 %v6123, %v6121
        %v6308 = vpack.c.b16 %v6126, %v6124
        %v6309 = vpack.c.b16 %v6127, %v6125
        %v6310 = vpack.c.b16 %v6130, %v6128
        %v6311 = vpack.c.b16 %v6131, %v6129
        %v6312 = vpack.c.b16 %v6134, %v6132
        %v6313 = vpack.c.b16 %v6135, %v6133
        %v6314 = vpack.c.b16 %v6138, %v6136
        %v6315 = vpack.c.b16 %v6139, %v6137
        %v6316 = vpack.c.b16 %v6142, %v6140
        %v6317 = vpack.c.b16 %v6143, %v6141
        %v6318 = vpack.c.b16 %v6146, %v6144
        %v6319 = vpack.c.b16 %v6147, %v6145
        %v6320 = vpack.c.b16 %v6150, %v6148
        %v6321 = vpack.c.b16 %v6151, %v6149
        %v6322 = vpack.c.b16 %v6154, %v6152
        %v6323 = vpack.c.b16 %v6155, %v6153
        %v6324 = vpack.c.b16 %v6158, %v6156
        %v6325 = vpack.c.b16 %v6159, %v6157
        %v6326 = vpack.c.b16 %v6162, %v6160
        %v6327 = vpack.c.b16 %v6163, %v6161
        %v6328 = vpack.c.b16 %v6166, %v6164
        %v6329 = vpack.c.b16 %v6167, %v6165
        %v6330 = vpack.c.b16 %v6170, %v6168
        %v6331 = vpack.c.b16 %v6171, %v6169
        %v6332 = vpack.c.b16 %v6174, %v6172
        %v6333 = vpack.c.b16 %v6175, %v6173
        %v6334 = vpack.c.b16 %v6178, %v6176
        %v6335 = vpack.c.b16 %v6179, %v6177
        %v6336 = vpack.c.b16 %v6182, %v6180
        %v6337 = vpack.c.b16 %v6183, %v6181
        %v6338 = vpack.c.b16 %v6186, %v6184
        %v6339 = vpack.c.b16 %v6187, %v6185
        %v6340 = vpack.c.b16 %v6190, %v6188
        %v6341 = vpack.c.b16 %v6191, %v6189
        %v6342 = vpack.c.b16 %v6194, %v6192
        %v6343 = vpack.c.b16 %v6195, %v6193
        %v6344 = vpack.c.b16 %v6198, %v6196
        %v6345 = vpack.c.b16 %v6199, %v6197
        %v6346 = vpack.c.b16 %v6202, %v6200
        %v6347 = vpack.c.b16 %v6203, %v6201
        %v6348 = vpack.c.b16 %v6206, %v6204
        %v6349 = vpack.c.b16 %v6207, %v6205
        %v6350 = vpack.c.b16 %v6210, %v6208
        %v6351 = vpack.c.b16 %v6211, %v6209
        %v6352 = vpack.c.b16 %v6214, %v6212
        %v6353 = vpack.c.b16 %v6215, %v6213
        %v6354 = vpack.c.b16 %v6218, %v6216
        %v6355 = vpack.c.b16 %v6219, %v6217
        %v6356 = vpack.c.b16 %v6222, %v6220
        %v6357 = vpack.c.b16 %v6223, %v6221
        %v6358 = vpack.c.b16 %v6226, %v6224
        %v6359 = vpack.c.b16 %v6227, %v6225
        %v6360 = vpack.c.b16 %v6230, %v6228
        %v6361 = vpack.c.b16 %v6231, %v6229
        %v6362 = vpack.c.b16 %v6234, %v6232
        %v6363 = vpack.c.b16 %v6235, %v6233
        %v6364 = vpack.c.b16 %v6238, %v6236
        %v6365 = vpack.c.b16 %v6239, %v6237
        %v6366 = vpack.c.b16 %v6242, %v6240
        %v6367 = vpack.c.b16 %v6243, %v6241
        %v6368 = vpack.c.b16 %v6246, %v6244
        %v6369 = vpack.c.b16 %v6247, %v6245
        %v6370 = vpack.c.b16 %v6250, %v6248
        %v6371 = vpack.c.b16 %v6251, %v6249
        %v6372 = vpack.c.b16 %v6254, %v6252
        %v6373 = vpack.c.b16 %v6255, %v6253
        %v6374 = vpack.c.b16 %v6258, %v6256
        %v6375 = vpack.c.b16 %v6259, %v6257
        %v6376 = vpack.c.b16 %v6262, %v6260
        %v6377 = vpack.c.b16 %v6263, %v6261
        %v6378 = vpack.c.b16 %v6266, %v6264
        %v6379 = vpack.c.b16 %v6267, %v6265
        %v6380 = vpack.c.b16 %v6270, %v6268
        %v6381 = vpack.c.b16 %v6271, %v6269
        %v6382 = vpack.c.b16 %v6274, %v6272
        %v6383 = vpack.c.b16 %v6275, %v6273
        %v6384 = vpack.c.b16 %v6278, %v6276
        %v6385 = vpack.c.b16 %v6279, %v6277
        %v6386 = vpack.c.b16 %v6282, %v6280
        %v6387 = vpack.c.b16 %v6283, %v6281
        %v6388 = vpack.c.b16 %v6286, %v6284
        %v6389 = vpack.c.b16 %v6287, %v6285
        %v6390 = vpack.c.b16 %v6290, %v6288
        %v6391 = vpack.c.b16 %v6291, %v6289
        %v6392 = vpack.c.b16 %v6294, %v6292
        %v6393 = vpack.c.b16 %v6295, %v6293
        %v6394 = vpack.c.b16 %v6298, %v6296
        %v6395 = vpack.c.b16 %v6299, %v6297
        %6492 = vmatprep.subr.bf16.mxu0 %v6315
        %6493 = vmatpush1.bf16.msra.mxu0 %v6314
        %6494 = vmatprep.subr.bf16.mxu0 %v6313
        %6495 = vmatpush1.bf16.msra.mxu0 %v6312
        %6496 = vmatprep.subr.bf16.mxu0 %v6311
        %6497 = vmatpush1.bf16.msra.mxu0 %v6310
        %6498 = vmatprep.subr.bf16.mxu0 %v6309
        %6499 = vmatpush1.bf16.msra.mxu0 %v6308
        %6500 = vmatprep.subr.bf16.mxu0 %v6307
        %6501 = vmatpush1.bf16.msra.mxu0 %v6306
        %6502 = vmatprep.subr.bf16.mxu0 %v6305
        %6503 = vmatpush1.bf16.msra.mxu0 %v6304
        %6504 = vmatprep.subr.bf16.mxu0 %v6303
        %6505 = vmatpush1.bf16.msra.mxu0 %v6302
        %6506 = vmatprep.subr.bf16.mxu0 %v6301
        %6507 = vmatpush1.bf16.msra.mxu0 %v6300
        %6508 = vmatprep.subr.bf16.mxu0 %v6331
        %6509 = vmatpush2.bf16.msra.mxu0 %v6330
        %6510 = vmatprep.subr.bf16.mxu0 %v6329
        %6511 = vmatpush2.bf16.msra.mxu0 %v6328
        %6512 = vmatprep.subr.bf16.mxu0 %v6327
        %6513 = vmatpush2.bf16.msra.mxu0 %v6326
        %6514 = vmatprep.subr.bf16.mxu0 %v6325
        %6515 = vmatpush2.bf16.msra.mxu0 %v6324
        %6516 = vmatprep.subr.bf16.mxu0 %v6323
        %6517 = vmatpush2.bf16.msra.mxu0 %v6322
        %6518 = vmatprep.subr.bf16.mxu0 %v6321
        %6519 = vmatpush2.bf16.msra.mxu0 %v6320
        %6520 = vmatprep.subr.bf16.mxu0 %v6319
        %6521 = vmatpush2.bf16.msra.mxu0 %v6318
        %6522 = vmatprep.subr.bf16.mxu0 %v6317
        %6523 = vmatpush2.bf16.msra.mxu0 %v6316
        %6524 = vmatprep.mubr.bf16.mxu0 %v5899
        %6525 = vmatmul.mubr.bf16.gmra.mxu0 %v5898
        %v6526 = vpop.f32.mrf.mxu0
        %v6527 = vadd.f32 %v6005, %v6526
        %v6528 = vpop.f32.mrf.mxu0
        %v6529 = vadd.f32 %v6009, %v6528
        %v6530 = vpop.f32.mrf.mxu0
        %v6531 = vpop.f32.mrf.mxu0
        %6532 = vdwg.mxu0
        %6533 = vmatprep.subr.bf16.mxu0 %v6347
        %6534 = vmatpush1.bf16.msra.mxu0 %v6346
        %6535 = vmatprep.subr.bf16.mxu0 %v6345
        %6536 = vmatpush1.bf16.msra.mxu0 %v6344
        %6537 = vmatprep.subr.bf16.mxu0 %v6343
        %6538 = vmatpush1.bf16.msra.mxu0 %v6342
        %6539 = vmatprep.subr.bf16.mxu0 %v6341
        %6540 = vmatpush1.bf16.msra.mxu0 %v6340
        %6541 = vmatprep.subr.bf16.mxu0 %v6339
        %6542 = vmatpush1.bf16.msra.mxu0 %v6338
        %6543 = vmatprep.subr.bf16.mxu0 %v6337
        %6544 = vmatpush1.bf16.msra.mxu0 %v6336
        %6545 = vmatprep.subr.bf16.mxu0 %v6335
        %6546 = vmatpush1.bf16.msra.mxu0 %v6334
        %6547 = vmatprep.subr.bf16.mxu0 %v6333
        %6548 = vmatpush1.bf16.msra.mxu0 %v6332
        %6549 = vmatprep.subr.bf16.mxu0 %v6363
        %6550 = vmatpush2.bf16.msra.mxu0 %v6362
        %6551 = vmatprep.subr.bf16.mxu0 %v6361
        %6552 = vmatpush2.bf16.msra.mxu0 %v6360
        %6553 = vmatprep.subr.bf16.mxu0 %v6359
        %6554 = vmatpush2.bf16.msra.mxu0 %v6358
        %6555 = vmatprep.subr.bf16.mxu0 %v6357
        %6556 = vmatpush2.bf16.msra.mxu0 %v6356
        %6557 = vmatprep.subr.bf16.mxu0 %v6355
        %6558 = vmatpush2.bf16.msra.mxu0 %v6354
        %6559 = vmatprep.subr.bf16.mxu0 %v6353
        %6560 = vmatpush2.bf16.msra.mxu0 %v6352
        %6561 = vmatprep.subr.bf16.mxu0 %v6351
        %6562 = vmatpush2.bf16.msra.mxu0 %v6350
        %6563 = vmatprep.subr.bf16.mxu0 %v6349
        %6564 = vmatpush2.bf16.msra.mxu0 %v6348
        %6565 = vmatprep.mubr.bf16.mxu0 %v5901
        %6566 = vmatmul.mubr.bf16.gmra.mxu0 %v5900
        %v6567 = vpop.f32.mrf.mxu0
        %v6568 = vadd.f32 %v6527, %v6567
        %v6569 = vpop.f32.mrf.mxu0
        %v6570 = vadd.f32 %v6529, %v6569
        %v6571 = vpop.f32.mrf.mxu0
        %v6572 = vpop.f32.mrf.mxu0
        %6573 = vdwg.mxu0
        %6574 = vmatprep.subr.bf16.mxu0 %v6379
        %6575 = vmatpush1.bf16.msra.mxu0 %v6378
        %6576 = vmatprep.subr.bf16.mxu0 %v6377
        %6577 = vmatpush1.bf16.msra.mxu0 %v6376
        %6578 = vmatprep.subr.bf16.mxu0 %v6375
        %6579 = vmatpush1.bf16.msra.mxu0 %v6374
        %6580 = vmatprep.subr.bf16.mxu0 %v6373
        %6581 = vmatpush1.bf16.msra.mxu0 %v6372
        %6582 = vmatprep.subr.bf16.mxu0 %v6371
        %6583 = vmatpush1.bf16.msra.mxu0 %v6370
        %6584 = vmatprep.subr.bf16.mxu0 %v6369
        %6585 = vmatpush1.bf16.msra.mxu0 %v6368
        %6586 = vmatprep.subr.bf16.mxu0 %v6367
        %6587 = vmatpush1.bf16.msra.mxu0 %v6366
        %6588 = vmatprep.subr.bf16.mxu0 %v6365
        %6589 = vmatpush1.bf16.msra.mxu0 %v6364
        %6590 = vmatprep.subr.bf16.mxu0 %v6395
        %6591 = vmatpush2.bf16.msra.mxu0 %v6394
        %6592 = vmatprep.subr.bf16.mxu0 %v6393
        %6593 = vmatpush2.bf16.msra.mxu0 %v6392
        %6594 = vmatprep.subr.bf16.mxu0 %v6391
        %6595 = vmatpush2.bf16.msra.mxu0 %v6390
        %6596 = vmatprep.subr.bf16.mxu0 %v6389
        %6597 = vmatpush2.bf16.msra.mxu0 %v6388
        %6598 = vmatprep.subr.bf16.mxu0 %v6387
        %6599 = vmatpush2.bf16.msra.mxu0 %v6386
        %6600 = vmatprep.subr.bf16.mxu0 %v6385
        %6601 = vmatpush2.bf16.msra.mxu0 %v6384
        %6602 = vmatprep.subr.bf16.mxu0 %v6383
        %6603 = vmatpush2.bf16.msra.mxu0 %v6382
        %6604 = vmatprep.subr.bf16.mxu0 %v6381
        %6605 = vmatpush2.bf16.msra.mxu0 %v6380
        %6606 = vmatprep.mubr.bf16.mxu0 %v5903
        %6607 = vmatmul.mubr.bf16.gmra.mxu0 %v5902
        %v6608 = vpop.f32.mrf.mxu0
        %v6609 = vadd.f32 %v6568, %v6608
        %v6610 = vpop.f32.mrf.mxu0
        %v6611 = vadd.f32 %v6570, %v6610
        %v6612 = vpop.f32.mrf.mxu0
        %v6613 = vpop.f32.mrf.mxu0
        %6614 = vdwg.mxu0
        %v6615 = vld [vmem:[#allocation34] sm:$0xff]
        %v6616 = vld [vmem:[#allocation34 + $0x8] sm:$0xff]
        %v6617 = vld [vmem:[#allocation34 + $0x10] sm:$0xff]
        %v6618 = vld [vmem:[#allocation34 + $0x18] sm:$0xff]
        %v6619 = vld [vmem:[#allocation34 + $0x20] sm:$0xff]
        %v6620 = vld [vmem:[#allocation34 + $0x28] sm:$0xff]
        %v6621 = vld [vmem:[#allocation34 + $0x30] sm:$0xff]
        %v6622 = vld [vmem:[#allocation34 + $0x38] sm:$0xff]
        %v6623 = vld [vmem:[#allocation34 + $0x40] sm:$0xff]
        %v6624 = vld [vmem:[#allocation34 + $0x48] sm:$0xff]
        %v6625 = vld [vmem:[#allocation34 + $0x50] sm:$0xff]
        %v6626 = vld [vmem:[#allocation34 + $0x58] sm:$0xff]
        %v6627 = vld [vmem:[#allocation34 + $0x60] sm:$0xff]
        %v6628 = vld [vmem:[#allocation34 + $0x68] sm:$0xff]
        %v6629 = vld [vmem:[#allocation34 + $0x70] sm:$0xff]
        %v6630 = vld [vmem:[#allocation34 + $0x78] sm:$0xff]
        %v6631 = vld [vmem:[#allocation35] sm:$0x3]
        %v6633 = vlaneseq
        %v6634 = vshrl.u32 %v6633, 7
        %v6635 = vsub.s32 0, %v6634
        %v6636 = vrot.slane %v6631, %v6635
        %v6637 = vlaneseq
        %v6638 = vshrl.u32 %v6637, 7
        %v6639 = vsub.s32 1, %v6638
        %v6640 = vrot.slane %v6631, %v6639
        %v6659 = vunpack.c.l.b16 %v6615
        %v6660 = vunpack.c.h.b16 %v6615
        %v6661 = vunpack.c.l.b16 %v6616
        %v6662 = vunpack.c.h.b16 %v6616
        %v6663 = vunpack.c.l.b16 %v6617
        %v6664 = vunpack.c.h.b16 %v6617
        %v6665 = vunpack.c.l.b16 %v6618
        %v6666 = vunpack.c.h.b16 %v6618
        %v6667 = vunpack.c.l.b16 %v6619
        %v6668 = vunpack.c.h.b16 %v6619
        %v6669 = vunpack.c.l.b16 %v6620
        %v6670 = vunpack.c.h.b16 %v6620
        %v6671 = vunpack.c.l.b16 %v6621
        %v6672 = vunpack.c.h.b16 %v6621
        %v6673 = vunpack.c.l.b16 %v6622
        %v6674 = vunpack.c.h.b16 %v6622
        %v6675 = vunpack.c.l.b16 %v6623
        %v6676 = vunpack.c.h.b16 %v6623
        %v6677 = vunpack.c.l.b16 %v6624
        %v6678 = vunpack.c.h.b16 %v6624
        %v6679 = vunpack.c.l.b16 %v6625
        %v6680 = vunpack.c.h.b16 %v6625
        %v6681 = vunpack.c.l.b16 %v6626
        %v6682 = vunpack.c.h.b16 %v6626
        %v6683 = vunpack.c.l.b16 %v6627
        %v6684 = vunpack.c.h.b16 %v6627
        %v6685 = vunpack.c.l.b16 %v6628
        %v6686 = vunpack.c.h.b16 %v6628
        %v6687 = vunpack.c.l.b16 %v6629
        %v6688 = vunpack.c.h.b16 %v6629
        %v6689 = vunpack.c.l.b16 %v6630
        %v6690 = vunpack.c.h.b16 %v6630
        %v6691 = vpack.c.b16 %v6661, %v6659
        %v6692 = vpack.c.b16 %v6662, %v6660
        %v6693 = vpack.c.b16 %v6665, %v6663
        %v6694 = vpack.c.b16 %v6666, %v6664
        %v6695 = vpack.c.b16 %v6669, %v6667
        %v6696 = vpack.c.b16 %v6670, %v6668
        %v6697 = vpack.c.b16 %v6673, %v6671
        %v6698 = vpack.c.b16 %v6674, %v6672
        %v6699 = vpack.c.b16 %v6677, %v6675
        %v6700 = vpack.c.b16 %v6678, %v6676
        %v6701 = vpack.c.b16 %v6681, %v6679
        %v6702 = vpack.c.b16 %v6682, %v6680
        %v6703 = vpack.c.b16 %v6685, %v6683
        %v6704 = vpack.c.b16 %v6686, %v6684
        %v6705 = vpack.c.b16 %v6689, %v6687
        %v6706 = vpack.c.b16 %v6690, %v6688
        %6723 = vmatprep.subr.bf16.mxu0 %v6706
        %6724 = vmatpush1.bf16.msra.mxu0 %v6705
        %6725 = vmatprep.subr.bf16.mxu0 %v6704
        %6726 = vmatpush1.bf16.msra.mxu0 %v6703
        %6727 = vmatprep.subr.bf16.mxu0 %v6702
        %6728 = vmatpush1.bf16.msra.mxu0 %v6701
        %6729 = vmatprep.subr.bf16.mxu0 %v6700
        %6730 = vmatpush1.bf16.msra.mxu0 %v6699
        %6731 = vmatprep.subr.bf16.mxu0 %v6698
        %6732 = vmatpush1.bf16.msra.mxu0 %v6697
        %6733 = vmatprep.subr.bf16.mxu0 %v6696
        %6734 = vmatpush1.bf16.msra.mxu0 %v6695
        %6735 = vmatprep.subr.bf16.mxu0 %v6694
        %6736 = vmatpush1.bf16.msra.mxu0 %v6693
        %6737 = vmatprep.subr.bf16.mxu0 %v6692
        %6738 = vmatpush1.bf16.msra.mxu0 %v6691
        %6739 = vmatprep.subr.bf16.mxu0 0
        %6740 = vmatpush2.bf16.msra.mxu0 0
        %6741 = vmatprep.subr.bf16.mxu0 0
        %6742 = vmatpush2.bf16.msra.mxu0 0
        %6743 = vmatprep.subr.bf16.mxu0 0
        %6744 = vmatpush2.bf16.msra.mxu0 0
        %6745 = vmatprep.subr.bf16.mxu0 0
        %6746 = vmatpush2.bf16.msra.mxu0 0
        %6747 = vmatprep.subr.bf16.mxu0 0
        %6748 = vmatpush2.bf16.msra.mxu0 0
        %6749 = vmatprep.subr.bf16.mxu0 0
        %6750 = vmatpush2.bf16.msra.mxu0 0
        %6751 = vmatprep.subr.bf16.mxu0 0
        %6752 = vmatpush2.bf16.msra.mxu0 0
        %6753 = vmatprep.subr.bf16.mxu0 0
        %6754 = vmatpush2.bf16.msra.mxu0 0
        %6755 = vmatprep.mubr.bf16.mxu0 0
        %6756 = vmatmul.mubr.bf16.gmra.mxu0 %v5498
        %v6757 = vpop.f32.mrf.mxu0
        %v6758 = vadd.f32 %v6636, %v6757
        %v6759 = vpop.f32.mrf.mxu0
        %v6760 = vadd.f32 %v6640, %v6759
        %v6761 = vpop.f32.mrf.mxu0
        %v6762 = vpop.f32.mrf.mxu0
        %6763 = vdwg.mxu0
        %v6764 = vadd.f32 %v6609, %v6758
        %v6765 = vadd.f32 %v6611, %v6760
        %v6766 = vmax.f32 %v6764, 0.0
        %v6767 = vmax.f32 %v6765, 0.0
        %v6770 = vrot.slane %v6766, 7
        %v6771 = vrot.slane %v6767, 7
        %v6774 = vsel %vm2218, 0.0, %v6770
        %v6775 = vsel %vm2218, 0.0, %v6771
        %v6776 = vrot.slane %v6766, 1
        %v6777 = vrot.slane %v6767, 1
        %v6780 = vsel %vm1666, %v6776, 0.0
        %v6781 = vsel %vm1666, %v6777, 0.0
        %v6782 = vpack.c.bf16 %v6774, %v6774
        %v6783 = vpack.c.bf16 %v6775, %v6775
        %v6784 = vpack.c.bf16 %v6766, %v6766
        %v6785 = vpack.c.bf16 %v6767, %v6767
        %v6786 = vpack.c.bf16 %v6780, %v6780
        %v6787 = vpack.c.bf16 %v6781, %v6781
        %v6788 = vld [vmem:[#allocation38] sm:$0xff]
        %v6789 = vld [vmem:[#allocation38 + $0x8] sm:$0xff]
        %v6790 = vld [vmem:[#allocation38 + $0x10] sm:$0xff]
        %v6791 = vld [vmem:[#allocation38 + $0x18] sm:$0xff]
        %v6792 = vld [vmem:[#allocation38 + $0x20] sm:$0xff]
        %v6793 = vld [vmem:[#allocation38 + $0x28] sm:$0xff]
        %v6794 = vld [vmem:[#allocation38 + $0x30] sm:$0xff]
        %v6795 = vld [vmem:[#allocation38 + $0x38] sm:$0xff]
        %v6796 = vld [vmem:[#allocation38 + $0x40] sm:$0xff]
        %v6797 = vld [vmem:[#allocation38 + $0x48] sm:$0xff]
        %v6798 = vld [vmem:[#allocation38 + $0x50] sm:$0xff]
        %v6799 = vld [vmem:[#allocation38 + $0x58] sm:$0xff]
        %v6800 = vld [vmem:[#allocation38 + $0x60] sm:$0xff]
        %v6801 = vld [vmem:[#allocation38 + $0x68] sm:$0xff]
        %v6802 = vld [vmem:[#allocation38 + $0x70] sm:$0xff]
        %v6803 = vld [vmem:[#allocation38 + $0x78] sm:$0xff]
        %v6804 = vld [vmem:[#allocation38 + $0x80] sm:$0xff]
        %v6805 = vld [vmem:[#allocation38 + $0x88] sm:$0xff]
        %v6806 = vld [vmem:[#allocation38 + $0x90] sm:$0xff]
        %v6807 = vld [vmem:[#allocation38 + $0x98] sm:$0xff]
        %v6808 = vld [vmem:[#allocation38 + $0xa0] sm:$0xff]
        %v6809 = vld [vmem:[#allocation38 + $0xa8] sm:$0xff]
        %v6810 = vld [vmem:[#allocation38 + $0xb0] sm:$0xff]
        %v6811 = vld [vmem:[#allocation38 + $0xb8] sm:$0xff]
        %v6812 = vld [vmem:[#allocation38 + $0xc0] sm:$0xff]
        %v6813 = vld [vmem:[#allocation38 + $0xc8] sm:$0xff]
        %v6814 = vld [vmem:[#allocation38 + $0xd0] sm:$0xff]
        %v6815 = vld [vmem:[#allocation38 + $0xd8] sm:$0xff]
        %v6816 = vld [vmem:[#allocation38 + $0xe0] sm:$0xff]
        %v6817 = vld [vmem:[#allocation38 + $0xe8] sm:$0xff]
        %v6818 = vld [vmem:[#allocation38 + $0xf0] sm:$0xff]
        %v6819 = vld [vmem:[#allocation38 + $0xf8] sm:$0xff]
        %v6820 = vld [vmem:[#allocation38 + $0x100] sm:$0xff]
        %v6821 = vld [vmem:[#allocation38 + $0x108] sm:$0xff]
        %v6822 = vld [vmem:[#allocation38 + $0x110] sm:$0xff]
        %v6823 = vld [vmem:[#allocation38 + $0x118] sm:$0xff]
        %v6824 = vld [vmem:[#allocation38 + $0x120] sm:$0xff]
        %v6825 = vld [vmem:[#allocation38 + $0x128] sm:$0xff]
        %v6826 = vld [vmem:[#allocation38 + $0x130] sm:$0xff]
        %v6827 = vld [vmem:[#allocation38 + $0x138] sm:$0xff]
        %v6828 = vld [vmem:[#allocation38 + $0x140] sm:$0xff]
        %v6829 = vld [vmem:[#allocation38 + $0x148] sm:$0xff]
        %v6830 = vld [vmem:[#allocation38 + $0x150] sm:$0xff]
        %v6831 = vld [vmem:[#allocation38 + $0x158] sm:$0xff]
        %v6832 = vld [vmem:[#allocation38 + $0x160] sm:$0xff]
        %v6833 = vld [vmem:[#allocation38 + $0x168] sm:$0xff]
        %v6834 = vld [vmem:[#allocation38 + $0x170] sm:$0xff]
        %v6835 = vld [vmem:[#allocation38 + $0x178] sm:$0xff]
        %v6836 = vld [vmem:[#allocation38 + $0x180] sm:$0xff]
        %v6837 = vld [vmem:[#allocation38 + $0x188] sm:$0xff]
        %v6838 = vld [vmem:[#allocation38 + $0x190] sm:$0xff]
        %v6839 = vld [vmem:[#allocation38 + $0x198] sm:$0xff]
        %v6840 = vld [vmem:[#allocation38 + $0x1a0] sm:$0xff]
        %v6841 = vld [vmem:[#allocation38 + $0x1a8] sm:$0xff]
        %v6842 = vld [vmem:[#allocation38 + $0x1b0] sm:$0xff]
        %v6843 = vld [vmem:[#allocation38 + $0x1b8] sm:$0xff]
        %v6844 = vld [vmem:[#allocation38 + $0x1c0] sm:$0xff]
        %v6845 = vld [vmem:[#allocation38 + $0x1c8] sm:$0xff]
        %v6846 = vld [vmem:[#allocation38 + $0x1d0] sm:$0xff]
        %v6847 = vld [vmem:[#allocation38 + $0x1d8] sm:$0xff]
        %v6848 = vld [vmem:[#allocation38 + $0x1e0] sm:$0xff]
        %v6849 = vld [vmem:[#allocation38 + $0x1e8] sm:$0xff]
        %v6850 = vld [vmem:[#allocation38 + $0x1f0] sm:$0xff]
        %v6851 = vld [vmem:[#allocation38 + $0x1f8] sm:$0xff]
        %v6852 = vld [vmem:[#allocation38 + $0x200] sm:$0xff]
        %v6853 = vld [vmem:[#allocation38 + $0x208] sm:$0xff]
        %v6854 = vld [vmem:[#allocation38 + $0x210] sm:$0xff]
        %v6855 = vld [vmem:[#allocation38 + $0x218] sm:$0xff]
        %v6856 = vld [vmem:[#allocation38 + $0x220] sm:$0xff]
        %v6857 = vld [vmem:[#allocation38 + $0x228] sm:$0xff]
        %v6858 = vld [vmem:[#allocation38 + $0x230] sm:$0xff]
        %v6859 = vld [vmem:[#allocation38 + $0x238] sm:$0xff]
        %v6860 = vld [vmem:[#allocation38 + $0x240] sm:$0xff]
        %v6861 = vld [vmem:[#allocation38 + $0x248] sm:$0xff]
        %v6862 = vld [vmem:[#allocation38 + $0x250] sm:$0xff]
        %v6863 = vld [vmem:[#allocation38 + $0x258] sm:$0xff]
        %v6864 = vld [vmem:[#allocation38 + $0x260] sm:$0xff]
        %v6865 = vld [vmem:[#allocation38 + $0x268] sm:$0xff]
        %v6866 = vld [vmem:[#allocation38 + $0x270] sm:$0xff]
        %v6867 = vld [vmem:[#allocation38 + $0x278] sm:$0xff]
        %v6868 = vld [vmem:[#allocation38 + $0x280] sm:$0xff]
        %v6869 = vld [vmem:[#allocation38 + $0x288] sm:$0xff]
        %v6870 = vld [vmem:[#allocation38 + $0x290] sm:$0xff]
        %v6871 = vld [vmem:[#allocation38 + $0x298] sm:$0xff]
        %v6872 = vld [vmem:[#allocation38 + $0x2a0] sm:$0xff]
        %v6873 = vld [vmem:[#allocation38 + $0x2a8] sm:$0xff]
        %v6874 = vld [vmem:[#allocation38 + $0x2b0] sm:$0xff]
        %v6875 = vld [vmem:[#allocation38 + $0x2b8] sm:$0xff]
        %v6876 = vld [vmem:[#allocation38 + $0x2c0] sm:$0xff]
        %v6877 = vld [vmem:[#allocation38 + $0x2c8] sm:$0xff]
        %v6878 = vld [vmem:[#allocation38 + $0x2d0] sm:$0xff]
        %v6879 = vld [vmem:[#allocation38 + $0x2d8] sm:$0xff]
        %v6880 = vld [vmem:[#allocation38 + $0x2e0] sm:$0xff]
        %v6881 = vld [vmem:[#allocation38 + $0x2e8] sm:$0xff]
        %v6882 = vld [vmem:[#allocation38 + $0x2f0] sm:$0xff]
        %v6883 = vld [vmem:[#allocation38 + $0x2f8] sm:$0xff]
        %v6884 = vld [vmem:[%s77] sm:$0x3]
        %v6886 = vlaneseq
        %v6887 = vshrl.u32 %v6886, 7
        %v6888 = vsub.s32 0, %v6887
        %v6889 = vrot.slane %v6884, %v6888
        %v6890 = vlaneseq
        %v6891 = vshrl.u32 %v6890, 7
        %v6892 = vsub.s32 1, %v6891
        %v6893 = vrot.slane %v6884, %v6892
        %v6992 = vunpack.c.l.b16 %v6788
        %v6993 = vunpack.c.h.b16 %v6788
        %v6994 = vunpack.c.l.b16 %v6789
        %v6995 = vunpack.c.h.b16 %v6789
        %v6996 = vunpack.c.l.b16 %v6790
        %v6997 = vunpack.c.h.b16 %v6790
        %v6998 = vunpack.c.l.b16 %v6791
        %v6999 = vunpack.c.h.b16 %v6791
        %v7000 = vunpack.c.l.b16 %v6792
        %v7001 = vunpack.c.h.b16 %v6792
        %v7002 = vunpack.c.l.b16 %v6793
        %v7003 = vunpack.c.h.b16 %v6793
        %v7004 = vunpack.c.l.b16 %v6794
        %v7005 = vunpack.c.h.b16 %v6794
        %v7006 = vunpack.c.l.b16 %v6795
        %v7007 = vunpack.c.h.b16 %v6795
        %v7008 = vunpack.c.l.b16 %v6796
        %v7009 = vunpack.c.h.b16 %v6796
        %v7010 = vunpack.c.l.b16 %v6797
        %v7011 = vunpack.c.h.b16 %v6797
        %v7012 = vunpack.c.l.b16 %v6798
        %v7013 = vunpack.c.h.b16 %v6798
        %v7014 = vunpack.c.l.b16 %v6799
        %v7015 = vunpack.c.h.b16 %v6799
        %v7016 = vunpack.c.l.b16 %v6800
        %v7017 = vunpack.c.h.b16 %v6800
        %v7018 = vunpack.c.l.b16 %v6801
        %v7019 = vunpack.c.h.b16 %v6801
        %v7020 = vunpack.c.l.b16 %v6802
        %v7021 = vunpack.c.h.b16 %v6802
        %v7022 = vunpack.c.l.b16 %v6803
        %v7023 = vunpack.c.h.b16 %v6803
        %v7024 = vunpack.c.l.b16 %v6804
        %v7025 = vunpack.c.h.b16 %v6804
        %v7026 = vunpack.c.l.b16 %v6805
        %v7027 = vunpack.c.h.b16 %v6805
        %v7028 = vunpack.c.l.b16 %v6806
        %v7029 = vunpack.c.h.b16 %v6806
        %v7030 = vunpack.c.l.b16 %v6807
        %v7031 = vunpack.c.h.b16 %v6807
        %v7032 = vunpack.c.l.b16 %v6808
        %v7033 = vunpack.c.h.b16 %v6808
        %v7034 = vunpack.c.l.b16 %v6809
        %v7035 = vunpack.c.h.b16 %v6809
        %v7036 = vunpack.c.l.b16 %v6810
        %v7037 = vunpack.c.h.b16 %v6810
        %v7038 = vunpack.c.l.b16 %v6811
        %v7039 = vunpack.c.h.b16 %v6811
        %v7040 = vunpack.c.l.b16 %v6812
        %v7041 = vunpack.c.h.b16 %v6812
        %v7042 = vunpack.c.l.b16 %v6813
        %v7043 = vunpack.c.h.b16 %v6813
        %v7044 = vunpack.c.l.b16 %v6814
        %v7045 = vunpack.c.h.b16 %v6814
        %v7046 = vunpack.c.l.b16 %v6815
        %v7047 = vunpack.c.h.b16 %v6815
        %v7048 = vunpack.c.l.b16 %v6816
        %v7049 = vunpack.c.h.b16 %v6816
        %v7050 = vunpack.c.l.b16 %v6817
        %v7051 = vunpack.c.h.b16 %v6817
        %v7052 = vunpack.c.l.b16 %v6818
        %v7053 = vunpack.c.h.b16 %v6818
        %v7054 = vunpack.c.l.b16 %v6819
        %v7055 = vunpack.c.h.b16 %v6819
        %v7056 = vunpack.c.l.b16 %v6820
        %v7057 = vunpack.c.h.b16 %v6820
        %v7058 = vunpack.c.l.b16 %v6821
        %v7059 = vunpack.c.h.b16 %v6821
        %v7060 = vunpack.c.l.b16 %v6822
        %v7061 = vunpack.c.h.b16 %v6822
        %v7062 = vunpack.c.l.b16 %v6823
        %v7063 = vunpack.c.h.b16 %v6823
        %v7064 = vunpack.c.l.b16 %v6824
        %v7065 = vunpack.c.h.b16 %v6824
        %v7066 = vunpack.c.l.b16 %v6825
        %v7067 = vunpack.c.h.b16 %v6825
        %v7068 = vunpack.c.l.b16 %v6826
        %v7069 = vunpack.c.h.b16 %v6826
        %v7070 = vunpack.c.l.b16 %v6827
        %v7071 = vunpack.c.h.b16 %v6827
        %v7072 = vunpack.c.l.b16 %v6828
        %v7073 = vunpack.c.h.b16 %v6828
        %v7074 = vunpack.c.l.b16 %v6829
        %v7075 = vunpack.c.h.b16 %v6829
        %v7076 = vunpack.c.l.b16 %v6830
        %v7077 = vunpack.c.h.b16 %v6830
        %v7078 = vunpack.c.l.b16 %v6831
        %v7079 = vunpack.c.h.b16 %v6831
        %v7080 = vunpack.c.l.b16 %v6832
        %v7081 = vunpack.c.h.b16 %v6832
        %v7082 = vunpack.c.l.b16 %v6833
        %v7083 = vunpack.c.h.b16 %v6833
        %v7084 = vunpack.c.l.b16 %v6834
        %v7085 = vunpack.c.h.b16 %v6834
        %v7086 = vunpack.c.l.b16 %v6835
        %v7087 = vunpack.c.h.b16 %v6835
        %v7088 = vunpack.c.l.b16 %v6836
        %v7089 = vunpack.c.h.b16 %v6836
        %v7090 = vunpack.c.l.b16 %v6837
        %v7091 = vunpack.c.h.b16 %v6837
        %v7092 = vunpack.c.l.b16 %v6838
        %v7093 = vunpack.c.h.b16 %v6838
        %v7094 = vunpack.c.l.b16 %v6839
        %v7095 = vunpack.c.h.b16 %v6839
        %v7096 = vunpack.c.l.b16 %v6840
        %v7097 = vunpack.c.h.b16 %v6840
        %v7098 = vunpack.c.l.b16 %v6841
        %v7099 = vunpack.c.h.b16 %v6841
        %v7100 = vunpack.c.l.b16 %v6842
        %v7101 = vunpack.c.h.b16 %v6842
        %v7102 = vunpack.c.l.b16 %v6843
        %v7103 = vunpack.c.h.b16 %v6843
        %v7104 = vunpack.c.l.b16 %v6844
        %v7105 = vunpack.c.h.b16 %v6844
        %v7106 = vunpack.c.l.b16 %v6845
        %v7107 = vunpack.c.h.b16 %v6845
        %v7108 = vunpack.c.l.b16 %v6846
        %v7109 = vunpack.c.h.b16 %v6846
        %v7110 = vunpack.c.l.b16 %v6847
        %v7111 = vunpack.c.h.b16 %v6847
        %v7112 = vunpack.c.l.b16 %v6848
        %v7113 = vunpack.c.h.b16 %v6848
        %v7114 = vunpack.c.l.b16 %v6849
        %v7115 = vunpack.c.h.b16 %v6849
        %v7116 = vunpack.c.l.b16 %v6850
        %v7117 = vunpack.c.h.b16 %v6850
        %v7118 = vunpack.c.l.b16 %v6851
        %v7119 = vunpack.c.h.b16 %v6851
        %v7120 = vunpack.c.l.b16 %v6852
        %v7121 = vunpack.c.h.b16 %v6852
        %v7122 = vunpack.c.l.b16 %v6853
        %v7123 = vunpack.c.h.b16 %v6853
        %v7124 = vunpack.c.l.b16 %v6854
        %v7125 = vunpack.c.h.b16 %v6854
        %v7126 = vunpack.c.l.b16 %v6855
        %v7127 = vunpack.c.h.b16 %v6855
        %v7128 = vunpack.c.l.b16 %v6856
        %v7129 = vunpack.c.h.b16 %v6856
        %v7130 = vunpack.c.l.b16 %v6857
        %v7131 = vunpack.c.h.b16 %v6857
        %v7132 = vunpack.c.l.b16 %v6858
        %v7133 = vunpack.c.h.b16 %v6858
        %v7134 = vunpack.c.l.b16 %v6859
        %v7135 = vunpack.c.h.b16 %v6859
        %v7136 = vunpack.c.l.b16 %v6860
        %v7137 = vunpack.c.h.b16 %v6860
        %v7138 = vunpack.c.l.b16 %v6861
        %v7139 = vunpack.c.h.b16 %v6861
        %v7140 = vunpack.c.l.b16 %v6862
        %v7141 = vunpack.c.h.b16 %v6862
        %v7142 = vunpack.c.l.b16 %v6863
        %v7143 = vunpack.c.h.b16 %v6863
        %v7144 = vunpack.c.l.b16 %v6864
        %v7145 = vunpack.c.h.b16 %v6864
        %v7146 = vunpack.c.l.b16 %v6865
        %v7147 = vunpack.c.h.b16 %v6865
        %v7148 = vunpack.c.l.b16 %v6866
        %v7149 = vunpack.c.h.b16 %v6866
        %v7150 = vunpack.c.l.b16 %v6867
        %v7151 = vunpack.c.h.b16 %v6867
        %v7152 = vunpack.c.l.b16 %v6868
        %v7153 = vunpack.c.h.b16 %v6868
        %v7154 = vunpack.c.l.b16 %v6869
        %v7155 = vunpack.c.h.b16 %v6869
        %v7156 = vunpack.c.l.b16 %v6870
        %v7157 = vunpack.c.h.b16 %v6870
        %v7158 = vunpack.c.l.b16 %v6871
        %v7159 = vunpack.c.h.b16 %v6871
        %v7160 = vunpack.c.l.b16 %v6872
        %v7161 = vunpack.c.h.b16 %v6872
        %v7162 = vunpack.c.l.b16 %v6873
        %v7163 = vunpack.c.h.b16 %v6873
        %v7164 = vunpack.c.l.b16 %v6874
        %v7165 = vunpack.c.h.b16 %v6874
        %v7166 = vunpack.c.l.b16 %v6875
        %v7167 = vunpack.c.h.b16 %v6875
        %v7168 = vunpack.c.l.b16 %v6876
        %v7169 = vunpack.c.h.b16 %v6876
        %v7170 = vunpack.c.l.b16 %v6877
        %v7171 = vunpack.c.h.b16 %v6877
        %v7172 = vunpack.c.l.b16 %v6878
        %v7173 = vunpack.c.h.b16 %v6878
        %v7174 = vunpack.c.l.b16 %v6879
        %v7175 = vunpack.c.h.b16 %v6879
        %v7176 = vunpack.c.l.b16 %v6880
        %v7177 = vunpack.c.h.b16 %v6880
        %v7178 = vunpack.c.l.b16 %v6881
        %v7179 = vunpack.c.h.b16 %v6881
        %v7180 = vunpack.c.l.b16 %v6882
        %v7181 = vunpack.c.h.b16 %v6882
        %v7182 = vunpack.c.l.b16 %v6883
        %v7183 = vunpack.c.h.b16 %v6883
        %v7184 = vpack.c.b16 %v6994, %v6992
        %v7185 = vpack.c.b16 %v6995, %v6993
        %v7186 = vpack.c.b16 %v6998, %v6996
        %v7187 = vpack.c.b16 %v6999, %v6997
        %v7188 = vpack.c.b16 %v7002, %v7000
        %v7189 = vpack.c.b16 %v7003, %v7001
        %v7190 = vpack.c.b16 %v7006, %v7004
        %v7191 = vpack.c.b16 %v7007, %v7005
        %v7192 = vpack.c.b16 %v7010, %v7008
        %v7193 = vpack.c.b16 %v7011, %v7009
        %v7194 = vpack.c.b16 %v7014, %v7012
        %v7195 = vpack.c.b16 %v7015, %v7013
        %v7196 = vpack.c.b16 %v7018, %v7016
        %v7197 = vpack.c.b16 %v7019, %v7017
        %v7198 = vpack.c.b16 %v7022, %v7020
        %v7199 = vpack.c.b16 %v7023, %v7021
        %v7200 = vpack.c.b16 %v7026, %v7024
        %v7201 = vpack.c.b16 %v7027, %v7025
        %v7202 = vpack.c.b16 %v7030, %v7028
        %v7203 = vpack.c.b16 %v7031, %v7029
        %v7204 = vpack.c.b16 %v7034, %v7032
        %v7205 = vpack.c.b16 %v7035, %v7033
        %v7206 = vpack.c.b16 %v7038, %v7036
        %v7207 = vpack.c.b16 %v7039, %v7037
        %v7208 = vpack.c.b16 %v7042, %v7040
        %v7209 = vpack.c.b16 %v7043, %v7041
        %v7210 = vpack.c.b16 %v7046, %v7044
        %v7211 = vpack.c.b16 %v7047, %v7045
        %v7212 = vpack.c.b16 %v7050, %v7048
        %v7213 = vpack.c.b16 %v7051, %v7049
        %v7214 = vpack.c.b16 %v7054, %v7052
        %v7215 = vpack.c.b16 %v7055, %v7053
        %v7216 = vpack.c.b16 %v7058, %v7056
        %v7217 = vpack.c.b16 %v7059, %v7057
        %v7218 = vpack.c.b16 %v7062, %v7060
        %v7219 = vpack.c.b16 %v7063, %v7061
        %v7220 = vpack.c.b16 %v7066, %v7064
        %v7221 = vpack.c.b16 %v7067, %v7065
        %v7222 = vpack.c.b16 %v7070, %v7068
        %v7223 = vpack.c.b16 %v7071, %v7069
        %v7224 = vpack.c.b16 %v7074, %v7072
        %v7225 = vpack.c.b16 %v7075, %v7073
        %v7226 = vpack.c.b16 %v7078, %v7076
        %v7227 = vpack.c.b16 %v7079, %v7077
        %v7228 = vpack.c.b16 %v7082, %v7080
        %v7229 = vpack.c.b16 %v7083, %v7081
        %v7230 = vpack.c.b16 %v7086, %v7084
        %v7231 = vpack.c.b16 %v7087, %v7085
        %v7232 = vpack.c.b16 %v7090, %v7088
        %v7233 = vpack.c.b16 %v7091, %v7089
        %v7234 = vpack.c.b16 %v7094, %v7092
        %v7235 = vpack.c.b16 %v7095, %v7093
        %v7236 = vpack.c.b16 %v7098, %v7096
        %v7237 = vpack.c.b16 %v7099, %v7097
        %v7238 = vpack.c.b16 %v7102, %v7100
        %v7239 = vpack.c.b16 %v7103, %v7101
        %v7240 = vpack.c.b16 %v7106, %v7104
        %v7241 = vpack.c.b16 %v7107, %v7105
        %v7242 = vpack.c.b16 %v7110, %v7108
        %v7243 = vpack.c.b16 %v7111, %v7109
        %v7244 = vpack.c.b16 %v7114, %v7112
        %v7245 = vpack.c.b16 %v7115, %v7113
        %v7246 = vpack.c.b16 %v7118, %v7116
        %v7247 = vpack.c.b16 %v7119, %v7117
        %v7248 = vpack.c.b16 %v7122, %v7120
        %v7249 = vpack.c.b16 %v7123, %v7121
        %v7250 = vpack.c.b16 %v7126, %v7124
        %v7251 = vpack.c.b16 %v7127, %v7125
        %v7252 = vpack.c.b16 %v7130, %v7128
        %v7253 = vpack.c.b16 %v7131, %v7129
        %v7254 = vpack.c.b16 %v7134, %v7132
        %v7255 = vpack.c.b16 %v7135, %v7133
        %v7256 = vpack.c.b16 %v7138, %v7136
        %v7257 = vpack.c.b16 %v7139, %v7137
        %v7258 = vpack.c.b16 %v7142, %v7140
        %v7259 = vpack.c.b16 %v7143, %v7141
        %v7260 = vpack.c.b16 %v7146, %v7144
        %v7261 = vpack.c.b16 %v7147, %v7145
        %v7262 = vpack.c.b16 %v7150, %v7148
        %v7263 = vpack.c.b16 %v7151, %v7149
        %v7264 = vpack.c.b16 %v7154, %v7152
        %v7265 = vpack.c.b16 %v7155, %v7153
        %v7266 = vpack.c.b16 %v7158, %v7156
        %v7267 = vpack.c.b16 %v7159, %v7157
        %v7268 = vpack.c.b16 %v7162, %v7160
        %v7269 = vpack.c.b16 %v7163, %v7161
        %v7270 = vpack.c.b16 %v7166, %v7164
        %v7271 = vpack.c.b16 %v7167, %v7165
        %v7272 = vpack.c.b16 %v7170, %v7168
        %v7273 = vpack.c.b16 %v7171, %v7169
        %v7274 = vpack.c.b16 %v7174, %v7172
        %v7275 = vpack.c.b16 %v7175, %v7173
        %v7276 = vpack.c.b16 %v7178, %v7176
        %v7277 = vpack.c.b16 %v7179, %v7177
        %v7278 = vpack.c.b16 %v7182, %v7180
        %v7279 = vpack.c.b16 %v7183, %v7181
        %7376 = vmatprep.subr.bf16.mxu0 %v7199
        %7377 = vmatpush1.bf16.msra.mxu0 %v7198
        %7378 = vmatprep.subr.bf16.mxu0 %v7197
        %7379 = vmatpush1.bf16.msra.mxu0 %v7196
        %7380 = vmatprep.subr.bf16.mxu0 %v7195
        %7381 = vmatpush1.bf16.msra.mxu0 %v7194
        %7382 = vmatprep.subr.bf16.mxu0 %v7193
        %7383 = vmatpush1.bf16.msra.mxu0 %v7192
        %7384 = vmatprep.subr.bf16.mxu0 %v7191
        %7385 = vmatpush1.bf16.msra.mxu0 %v7190
        %7386 = vmatprep.subr.bf16.mxu0 %v7189
        %7387 = vmatpush1.bf16.msra.mxu0 %v7188
        %7388 = vmatprep.subr.bf16.mxu0 %v7187
        %7389 = vmatpush1.bf16.msra.mxu0 %v7186
        %7390 = vmatprep.subr.bf16.mxu0 %v7185
        %7391 = vmatpush1.bf16.msra.mxu0 %v7184
        %7392 = vmatprep.subr.bf16.mxu0 %v7215
        %7393 = vmatpush2.bf16.msra.mxu0 %v7214
        %7394 = vmatprep.subr.bf16.mxu0 %v7213
        %7395 = vmatpush2.bf16.msra.mxu0 %v7212
        %7396 = vmatprep.subr.bf16.mxu0 %v7211
        %7397 = vmatpush2.bf16.msra.mxu0 %v7210
        %7398 = vmatprep.subr.bf16.mxu0 %v7209
        %7399 = vmatpush2.bf16.msra.mxu0 %v7208
        %7400 = vmatprep.subr.bf16.mxu0 %v7207
        %7401 = vmatpush2.bf16.msra.mxu0 %v7206
        %7402 = vmatprep.subr.bf16.mxu0 %v7205
        %7403 = vmatpush2.bf16.msra.mxu0 %v7204
        %7404 = vmatprep.subr.bf16.mxu0 %v7203
        %7405 = vmatpush2.bf16.msra.mxu0 %v7202
        %7406 = vmatprep.subr.bf16.mxu0 %v7201
        %7407 = vmatpush2.bf16.msra.mxu0 %v7200
        %7408 = vmatprep.mubr.bf16.mxu0 %v6783
        %7409 = vmatmul.mubr.bf16.gmra.mxu0 %v6782
        %v7410 = vpop.f32.mrf.mxu0
        %v7411 = vadd.f32 %v6889, %v7410
        %v7412 = vpop.f32.mrf.mxu0
        %v7413 = vadd.f32 %v6893, %v7412
        %v7414 = vpop.f32.mrf.mxu0
        %v7415 = vpop.f32.mrf.mxu0
        %7416 = vdwg.mxu0
        %7417 = vmatprep.subr.bf16.mxu0 %v7231
        %7418 = vmatpush1.bf16.msra.mxu0 %v7230
        %7419 = vmatprep.subr.bf16.mxu0 %v7229
        %7420 = vmatpush1.bf16.msra.mxu0 %v7228
        %7421 = vmatprep.subr.bf16.mxu0 %v7227
        %7422 = vmatpush1.bf16.msra.mxu0 %v7226
        %7423 = vmatprep.subr.bf16.mxu0 %v7225
        %7424 = vmatpush1.bf16.msra.mxu0 %v7224
        %7425 = vmatprep.subr.bf16.mxu0 %v7223
        %7426 = vmatpush1.bf16.msra.mxu0 %v7222
        %7427 = vmatprep.subr.bf16.mxu0 %v7221
        %7428 = vmatpush1.bf16.msra.mxu0 %v7220
        %7429 = vmatprep.subr.bf16.mxu0 %v7219
        %7430 = vmatpush1.bf16.msra.mxu0 %v7218
        %7431 = vmatprep.subr.bf16.mxu0 %v7217
        %7432 = vmatpush1.bf16.msra.mxu0 %v7216
        %7433 = vmatprep.subr.bf16.mxu0 %v7247
        %7434 = vmatpush2.bf16.msra.mxu0 %v7246
        %7435 = vmatprep.subr.bf16.mxu0 %v7245
        %7436 = vmatpush2.bf16.msra.mxu0 %v7244
        %7437 = vmatprep.subr.bf16.mxu0 %v7243
        %7438 = vmatpush2.bf16.msra.mxu0 %v7242
        %7439 = vmatprep.subr.bf16.mxu0 %v7241
        %7440 = vmatpush2.bf16.msra.mxu0 %v7240
        %7441 = vmatprep.subr.bf16.mxu0 %v7239
        %7442 = vmatpush2.bf16.msra.mxu0 %v7238
        %7443 = vmatprep.subr.bf16.mxu0 %v7237
        %7444 = vmatpush2.bf16.msra.mxu0 %v7236
        %7445 = vmatprep.subr.bf16.mxu0 %v7235
        %7446 = vmatpush2.bf16.msra.mxu0 %v7234
        %7447 = vmatprep.subr.bf16.mxu0 %v7233
        %7448 = vmatpush2.bf16.msra.mxu0 %v7232
        %7449 = vmatprep.mubr.bf16.mxu0 %v6785
        %7450 = vmatmul.mubr.bf16.gmra.mxu0 %v6784
        %v7451 = vpop.f32.mrf.mxu0
        %v7452 = vadd.f32 %v7411, %v7451
        %v7453 = vpop.f32.mrf.mxu0
        %v7454 = vadd.f32 %v7413, %v7453
        %v7455 = vpop.f32.mrf.mxu0
        %v7456 = vpop.f32.mrf.mxu0
        %7457 = vdwg.mxu0
        %7458 = vmatprep.subr.bf16.mxu0 %v7263
        %7459 = vmatpush1.bf16.msra.mxu0 %v7262
        %7460 = vmatprep.subr.bf16.mxu0 %v7261
        %7461 = vmatpush1.bf16.msra.mxu0 %v7260
        %7462 = vmatprep.subr.bf16.mxu0 %v7259
        %7463 = vmatpush1.bf16.msra.mxu0 %v7258
        %7464 = vmatprep.subr.bf16.mxu0 %v7257
        %7465 = vmatpush1.bf16.msra.mxu0 %v7256
        %7466 = vmatprep.subr.bf16.mxu0 %v7255
        %7467 = vmatpush1.bf16.msra.mxu0 %v7254
        %7468 = vmatprep.subr.bf16.mxu0 %v7253
        %7469 = vmatpush1.bf16.msra.mxu0 %v7252
        %7470 = vmatprep.subr.bf16.mxu0 %v7251
        %7471 = vmatpush1.bf16.msra.mxu0 %v7250
        %7472 = vmatprep.subr.bf16.mxu0 %v7249
        %7473 = vmatpush1.bf16.msra.mxu0 %v7248
        %7474 = vmatprep.subr.bf16.mxu0 %v7279
        %7475 = vmatpush2.bf16.msra.mxu0 %v7278
        %7476 = vmatprep.subr.bf16.mxu0 %v7277
        %7477 = vmatpush2.bf16.msra.mxu0 %v7276
        %7478 = vmatprep.subr.bf16.mxu0 %v7275
        %7479 = vmatpush2.bf16.msra.mxu0 %v7274
        %7480 = vmatprep.subr.bf16.mxu0 %v7273
        %7481 = vmatpush2.bf16.msra.mxu0 %v7272
        %7482 = vmatprep.subr.bf16.mxu0 %v7271
        %7483 = vmatpush2.bf16.msra.mxu0 %v7270
        %7484 = vmatprep.subr.bf16.mxu0 %v7269
        %7485 = vmatpush2.bf16.msra.mxu0 %v7268
        %7486 = vmatprep.subr.bf16.mxu0 %v7267
        %7487 = vmatpush2.bf16.msra.mxu0 %v7266
        %7488 = vmatprep.subr.bf16.mxu0 %v7265
        %7489 = vmatpush2.bf16.msra.mxu0 %v7264
        %7490 = vmatprep.mubr.bf16.mxu0 %v6787
        %7491 = vmatmul.mubr.bf16.gmra.mxu0 %v6786
        %v7492 = vpop.f32.mrf.mxu0
        %v7493 = vadd.f32 %v7452, %v7492
        %v7494 = vpop.f32.mrf.mxu0
        %v7495 = vadd.f32 %v7454, %v7494
        %v7496 = vpop.f32.mrf.mxu0
        %v7497 = vpop.f32.mrf.mxu0
        %7498 = vdwg.mxu0
        %v7499 = vmax.f32 %v7493, 0.0
        %v7500 = vmax.f32 %v7495, 0.0
        %v7503 = vrot.slane %v7499, 7
        %v7504 = vrot.slane %v7500, 7
        %v7507 = vsel %vm2218, 0.0, %v7503
        %v7508 = vsel %vm2218, 0.0, %v7504
        %v7509 = vrot.slane %v7499, 1
        %v7510 = vrot.slane %v7500, 1
        %v7513 = vsel %vm1666, %v7509, 0.0
        %v7514 = vsel %vm1666, %v7510, 0.0
        %v7515 = vpack.c.bf16 %v7507, %v7507
        %v7516 = vpack.c.bf16 %v7508, %v7508
        %v7517 = vpack.c.bf16 %v7499, %v7499
        %v7518 = vpack.c.bf16 %v7500, %v7500
        %v7519 = vpack.c.bf16 %v7513, %v7513
        %v7520 = vpack.c.bf16 %v7514, %v7514
        %v7521 = vld [vmem:[#allocation40] sm:$0xff]
        %v7522 = vld [vmem:[#allocation40 + $0x8] sm:$0xff]
        %v7523 = vld [vmem:[#allocation40 + $0x10] sm:$0xff]
        %v7524 = vld [vmem:[#allocation40 + $0x18] sm:$0xff]
        %v7525 = vld [vmem:[#allocation40 + $0x20] sm:$0xff]
        %v7526 = vld [vmem:[#allocation40 + $0x28] sm:$0xff]
        %v7527 = vld [vmem:[#allocation40 + $0x30] sm:$0xff]
        %v7528 = vld [vmem:[#allocation40 + $0x38] sm:$0xff]
        %v7529 = vld [vmem:[#allocation40 + $0x40] sm:$0xff]
        %v7530 = vld [vmem:[#allocation40 + $0x48] sm:$0xff]
        %v7531 = vld [vmem:[#allocation40 + $0x50] sm:$0xff]
        %v7532 = vld [vmem:[#allocation40 + $0x58] sm:$0xff]
        %v7533 = vld [vmem:[#allocation40 + $0x60] sm:$0xff]
        %v7534 = vld [vmem:[#allocation40 + $0x68] sm:$0xff]
        %v7535 = vld [vmem:[#allocation40 + $0x70] sm:$0xff]
        %v7536 = vld [vmem:[#allocation40 + $0x78] sm:$0xff]
        %v7537 = vld [vmem:[#allocation40 + $0x80] sm:$0xff]
        %v7538 = vld [vmem:[#allocation40 + $0x88] sm:$0xff]
        %v7539 = vld [vmem:[#allocation40 + $0x90] sm:$0xff]
        %v7540 = vld [vmem:[#allocation40 + $0x98] sm:$0xff]
        %v7541 = vld [vmem:[#allocation40 + $0xa0] sm:$0xff]
        %v7542 = vld [vmem:[#allocation40 + $0xa8] sm:$0xff]
        %v7543 = vld [vmem:[#allocation40 + $0xb0] sm:$0xff]
        %v7544 = vld [vmem:[#allocation40 + $0xb8] sm:$0xff]
        %v7545 = vld [vmem:[#allocation40 + $0xc0] sm:$0xff]
        %v7546 = vld [vmem:[#allocation40 + $0xc8] sm:$0xff]
        %v7547 = vld [vmem:[#allocation40 + $0xd0] sm:$0xff]
        %v7548 = vld [vmem:[#allocation40 + $0xd8] sm:$0xff]
        %v7549 = vld [vmem:[#allocation40 + $0xe0] sm:$0xff]
        %v7550 = vld [vmem:[#allocation40 + $0xe8] sm:$0xff]
        %v7551 = vld [vmem:[#allocation40 + $0xf0] sm:$0xff]
        %v7552 = vld [vmem:[#allocation40 + $0xf8] sm:$0xff]
        %v7553 = vld [vmem:[#allocation40 + $0x100] sm:$0xff]
        %v7554 = vld [vmem:[#allocation40 + $0x108] sm:$0xff]
        %v7555 = vld [vmem:[#allocation40 + $0x110] sm:$0xff]
        %v7556 = vld [vmem:[#allocation40 + $0x118] sm:$0xff]
        %v7557 = vld [vmem:[#allocation40 + $0x120] sm:$0xff]
        %v7558 = vld [vmem:[#allocation40 + $0x128] sm:$0xff]
        %v7559 = vld [vmem:[#allocation40 + $0x130] sm:$0xff]
        %v7560 = vld [vmem:[#allocation40 + $0x138] sm:$0xff]
        %v7561 = vld [vmem:[#allocation40 + $0x140] sm:$0xff]
        %v7562 = vld [vmem:[#allocation40 + $0x148] sm:$0xff]
        %v7563 = vld [vmem:[#allocation40 + $0x150] sm:$0xff]
        %v7564 = vld [vmem:[#allocation40 + $0x158] sm:$0xff]
        %v7565 = vld [vmem:[#allocation40 + $0x160] sm:$0xff]
        %v7566 = vld [vmem:[#allocation40 + $0x168] sm:$0xff]
        %v7567 = vld [vmem:[#allocation40 + $0x170] sm:$0xff]
        %v7568 = vld [vmem:[#allocation40 + $0x178] sm:$0xff]
        %v7569 = vld [vmem:[#allocation40 + $0x180] sm:$0xff]
        %v7570 = vld [vmem:[#allocation40 + $0x188] sm:$0xff]
        %v7571 = vld [vmem:[#allocation40 + $0x190] sm:$0xff]
        %v7572 = vld [vmem:[#allocation40 + $0x198] sm:$0xff]
        %v7573 = vld [vmem:[#allocation40 + $0x1a0] sm:$0xff]
        %v7574 = vld [vmem:[#allocation40 + $0x1a8] sm:$0xff]
        %v7575 = vld [vmem:[#allocation40 + $0x1b0] sm:$0xff]
        %v7576 = vld [vmem:[#allocation40 + $0x1b8] sm:$0xff]
        %v7577 = vld [vmem:[#allocation40 + $0x1c0] sm:$0xff]
        %v7578 = vld [vmem:[#allocation40 + $0x1c8] sm:$0xff]
        %v7579 = vld [vmem:[#allocation40 + $0x1d0] sm:$0xff]
        %v7580 = vld [vmem:[#allocation40 + $0x1d8] sm:$0xff]
        %v7581 = vld [vmem:[#allocation40 + $0x1e0] sm:$0xff]
        %v7582 = vld [vmem:[#allocation40 + $0x1e8] sm:$0xff]
        %v7583 = vld [vmem:[#allocation40 + $0x1f0] sm:$0xff]
        %v7584 = vld [vmem:[#allocation40 + $0x1f8] sm:$0xff]
        %v7585 = vld [vmem:[#allocation40 + $0x200] sm:$0xff]
        %v7586 = vld [vmem:[#allocation40 + $0x208] sm:$0xff]
        %v7587 = vld [vmem:[#allocation40 + $0x210] sm:$0xff]
        %v7588 = vld [vmem:[#allocation40 + $0x218] sm:$0xff]
        %v7589 = vld [vmem:[#allocation40 + $0x220] sm:$0xff]
        %v7590 = vld [vmem:[#allocation40 + $0x228] sm:$0xff]
        %v7591 = vld [vmem:[#allocation40 + $0x230] sm:$0xff]
        %v7592 = vld [vmem:[#allocation40 + $0x238] sm:$0xff]
        %v7593 = vld [vmem:[#allocation40 + $0x240] sm:$0xff]
        %v7594 = vld [vmem:[#allocation40 + $0x248] sm:$0xff]
        %v7595 = vld [vmem:[#allocation40 + $0x250] sm:$0xff]
        %v7596 = vld [vmem:[#allocation40 + $0x258] sm:$0xff]
        %v7597 = vld [vmem:[#allocation40 + $0x260] sm:$0xff]
        %v7598 = vld [vmem:[#allocation40 + $0x268] sm:$0xff]
        %v7599 = vld [vmem:[#allocation40 + $0x270] sm:$0xff]
        %v7600 = vld [vmem:[#allocation40 + $0x278] sm:$0xff]
        %v7601 = vld [vmem:[#allocation40 + $0x280] sm:$0xff]
        %v7602 = vld [vmem:[#allocation40 + $0x288] sm:$0xff]
        %v7603 = vld [vmem:[#allocation40 + $0x290] sm:$0xff]
        %v7604 = vld [vmem:[#allocation40 + $0x298] sm:$0xff]
        %v7605 = vld [vmem:[#allocation40 + $0x2a0] sm:$0xff]
        %v7606 = vld [vmem:[#allocation40 + $0x2a8] sm:$0xff]
        %v7607 = vld [vmem:[#allocation40 + $0x2b0] sm:$0xff]
        %v7608 = vld [vmem:[#allocation40 + $0x2b8] sm:$0xff]
        %v7609 = vld [vmem:[#allocation40 + $0x2c0] sm:$0xff]
        %v7610 = vld [vmem:[#allocation40 + $0x2c8] sm:$0xff]
        %v7611 = vld [vmem:[#allocation40 + $0x2d0] sm:$0xff]
        %v7612 = vld [vmem:[#allocation40 + $0x2d8] sm:$0xff]
        %v7613 = vld [vmem:[#allocation40 + $0x2e0] sm:$0xff]
        %v7614 = vld [vmem:[#allocation40 + $0x2e8] sm:$0xff]
        %v7615 = vld [vmem:[#allocation40 + $0x2f0] sm:$0xff]
        %v7616 = vld [vmem:[#allocation40 + $0x2f8] sm:$0xff]
        %v7617 = vld [vmem:[#allocation41] sm:$0x3]
        %v7619 = vlaneseq
        %v7620 = vshrl.u32 %v7619, 7
        %v7621 = vsub.s32 0, %v7620
        %v7622 = vrot.slane %v7617, %v7621
        %v7623 = vlaneseq
        %v7624 = vshrl.u32 %v7623, 7
        %v7625 = vsub.s32 1, %v7624
        %v7626 = vrot.slane %v7617, %v7625
        %v7725 = vunpack.c.l.b16 %v7521
        %v7726 = vunpack.c.h.b16 %v7521
        %v7727 = vunpack.c.l.b16 %v7522
        %v7728 = vunpack.c.h.b16 %v7522
        %v7729 = vunpack.c.l.b16 %v7523
        %v7730 = vunpack.c.h.b16 %v7523
        %v7731 = vunpack.c.l.b16 %v7524
        %v7732 = vunpack.c.h.b16 %v7524
        %v7733 = vunpack.c.l.b16 %v7525
        %v7734 = vunpack.c.h.b16 %v7525
        %v7735 = vunpack.c.l.b16 %v7526
        %v7736 = vunpack.c.h.b16 %v7526
        %v7737 = vunpack.c.l.b16 %v7527
        %v7738 = vunpack.c.h.b16 %v7527
        %v7739 = vunpack.c.l.b16 %v7528
        %v7740 = vunpack.c.h.b16 %v7528
        %v7741 = vunpack.c.l.b16 %v7529
        %v7742 = vunpack.c.h.b16 %v7529
        %v7743 = vunpack.c.l.b16 %v7530
        %v7744 = vunpack.c.h.b16 %v7530
        %v7745 = vunpack.c.l.b16 %v7531
        %v7746 = vunpack.c.h.b16 %v7531
        %v7747 = vunpack.c.l.b16 %v7532
        %v7748 = vunpack.c.h.b16 %v7532
        %v7749 = vunpack.c.l.b16 %v7533
        %v7750 = vunpack.c.h.b16 %v7533
        %v7751 = vunpack.c.l.b16 %v7534
        %v7752 = vunpack.c.h.b16 %v7534
        %v7753 = vunpack.c.l.b16 %v7535
        %v7754 = vunpack.c.h.b16 %v7535
        %v7755 = vunpack.c.l.b16 %v7536
        %v7756 = vunpack.c.h.b16 %v7536
        %v7757 = vunpack.c.l.b16 %v7537
        %v7758 = vunpack.c.h.b16 %v7537
        %v7759 = vunpack.c.l.b16 %v7538
        %v7760 = vunpack.c.h.b16 %v7538
        %v7761 = vunpack.c.l.b16 %v7539
        %v7762 = vunpack.c.h.b16 %v7539
        %v7763 = vunpack.c.l.b16 %v7540
        %v7764 = vunpack.c.h.b16 %v7540
        %v7765 = vunpack.c.l.b16 %v7541
        %v7766 = vunpack.c.h.b16 %v7541
        %v7767 = vunpack.c.l.b16 %v7542
        %v7768 = vunpack.c.h.b16 %v7542
        %v7769 = vunpack.c.l.b16 %v7543
        %v7770 = vunpack.c.h.b16 %v7543
        %v7771 = vunpack.c.l.b16 %v7544
        %v7772 = vunpack.c.h.b16 %v7544
        %v7773 = vunpack.c.l.b16 %v7545
        %v7774 = vunpack.c.h.b16 %v7545
        %v7775 = vunpack.c.l.b16 %v7546
        %v7776 = vunpack.c.h.b16 %v7546
        %v7777 = vunpack.c.l.b16 %v7547
        %v7778 = vunpack.c.h.b16 %v7547
        %v7779 = vunpack.c.l.b16 %v7548
        %v7780 = vunpack.c.h.b16 %v7548
        %v7781 = vunpack.c.l.b16 %v7549
        %v7782 = vunpack.c.h.b16 %v7549
        %v7783 = vunpack.c.l.b16 %v7550
        %v7784 = vunpack.c.h.b16 %v7550
        %v7785 = vunpack.c.l.b16 %v7551
        %v7786 = vunpack.c.h.b16 %v7551
        %v7787 = vunpack.c.l.b16 %v7552
        %v7788 = vunpack.c.h.b16 %v7552
        %v7789 = vunpack.c.l.b16 %v7553
        %v7790 = vunpack.c.h.b16 %v7553
        %v7791 = vunpack.c.l.b16 %v7554
        %v7792 = vunpack.c.h.b16 %v7554
        %v7793 = vunpack.c.l.b16 %v7555
        %v7794 = vunpack.c.h.b16 %v7555
        %v7795 = vunpack.c.l.b16 %v7556
        %v7796 = vunpack.c.h.b16 %v7556
        %v7797 = vunpack.c.l.b16 %v7557
        %v7798 = vunpack.c.h.b16 %v7557
        %v7799 = vunpack.c.l.b16 %v7558
        %v7800 = vunpack.c.h.b16 %v7558
        %v7801 = vunpack.c.l.b16 %v7559
        %v7802 = vunpack.c.h.b16 %v7559
        %v7803 = vunpack.c.l.b16 %v7560
        %v7804 = vunpack.c.h.b16 %v7560
        %v7805 = vunpack.c.l.b16 %v7561
        %v7806 = vunpack.c.h.b16 %v7561
        %v7807 = vunpack.c.l.b16 %v7562
        %v7808 = vunpack.c.h.b16 %v7562
        %v7809 = vunpack.c.l.b16 %v7563
        %v7810 = vunpack.c.h.b16 %v7563
        %v7811 = vunpack.c.l.b16 %v7564
        %v7812 = vunpack.c.h.b16 %v7564
        %v7813 = vunpack.c.l.b16 %v7565
        %v7814 = vunpack.c.h.b16 %v7565
        %v7815 = vunpack.c.l.b16 %v7566
        %v7816 = vunpack.c.h.b16 %v7566
        %v7817 = vunpack.c.l.b16 %v7567
        %v7818 = vunpack.c.h.b16 %v7567
        %v7819 = vunpack.c.l.b16 %v7568
        %v7820 = vunpack.c.h.b16 %v7568
        %v7821 = vunpack.c.l.b16 %v7569
        %v7822 = vunpack.c.h.b16 %v7569
        %v7823 = vunpack.c.l.b16 %v7570
        %v7824 = vunpack.c.h.b16 %v7570
        %v7825 = vunpack.c.l.b16 %v7571
        %v7826 = vunpack.c.h.b16 %v7571
        %v7827 = vunpack.c.l.b16 %v7572
        %v7828 = vunpack.c.h.b16 %v7572
        %v7829 = vunpack.c.l.b16 %v7573
        %v7830 = vunpack.c.h.b16 %v7573
        %v7831 = vunpack.c.l.b16 %v7574
        %v7832 = vunpack.c.h.b16 %v7574
        %v7833 = vunpack.c.l.b16 %v7575
        %v7834 = vunpack.c.h.b16 %v7575
        %v7835 = vunpack.c.l.b16 %v7576
        %v7836 = vunpack.c.h.b16 %v7576
        %v7837 = vunpack.c.l.b16 %v7577
        %v7838 = vunpack.c.h.b16 %v7577
        %v7839 = vunpack.c.l.b16 %v7578
        %v7840 = vunpack.c.h.b16 %v7578
        %v7841 = vunpack.c.l.b16 %v7579
        %v7842 = vunpack.c.h.b16 %v7579
        %v7843 = vunpack.c.l.b16 %v7580
        %v7844 = vunpack.c.h.b16 %v7580
        %v7845 = vunpack.c.l.b16 %v7581
        %v7846 = vunpack.c.h.b16 %v7581
        %v7847 = vunpack.c.l.b16 %v7582
        %v7848 = vunpack.c.h.b16 %v7582
        %v7849 = vunpack.c.l.b16 %v7583
        %v7850 = vunpack.c.h.b16 %v7583
        %v7851 = vunpack.c.l.b16 %v7584
        %v7852 = vunpack.c.h.b16 %v7584
        %v7853 = vunpack.c.l.b16 %v7585
        %v7854 = vunpack.c.h.b16 %v7585
        %v7855 = vunpack.c.l.b16 %v7586
        %v7856 = vunpack.c.h.b16 %v7586
        %v7857 = vunpack.c.l.b16 %v7587
        %v7858 = vunpack.c.h.b16 %v7587
        %v7859 = vunpack.c.l.b16 %v7588
        %v7860 = vunpack.c.h.b16 %v7588
        %v7861 = vunpack.c.l.b16 %v7589
        %v7862 = vunpack.c.h.b16 %v7589
        %v7863 = vunpack.c.l.b16 %v7590
        %v7864 = vunpack.c.h.b16 %v7590
        %v7865 = vunpack.c.l.b16 %v7591
        %v7866 = vunpack.c.h.b16 %v7591
        %v7867 = vunpack.c.l.b16 %v7592
        %v7868 = vunpack.c.h.b16 %v7592
        %v7869 = vunpack.c.l.b16 %v7593
        %v7870 = vunpack.c.h.b16 %v7593
        %v7871 = vunpack.c.l.b16 %v7594
        %v7872 = vunpack.c.h.b16 %v7594
        %v7873 = vunpack.c.l.b16 %v7595
        %v7874 = vunpack.c.h.b16 %v7595
        %v7875 = vunpack.c.l.b16 %v7596
        %v7876 = vunpack.c.h.b16 %v7596
        %v7877 = vunpack.c.l.b16 %v7597
        %v7878 = vunpack.c.h.b16 %v7597
        %v7879 = vunpack.c.l.b16 %v7598
        %v7880 = vunpack.c.h.b16 %v7598
        %v7881 = vunpack.c.l.b16 %v7599
        %v7882 = vunpack.c.h.b16 %v7599
        %v7883 = vunpack.c.l.b16 %v7600
        %v7884 = vunpack.c.h.b16 %v7600
        %v7885 = vunpack.c.l.b16 %v7601
        %v7886 = vunpack.c.h.b16 %v7601
        %v7887 = vunpack.c.l.b16 %v7602
        %v7888 = vunpack.c.h.b16 %v7602
        %v7889 = vunpack.c.l.b16 %v7603
        %v7890 = vunpack.c.h.b16 %v7603
        %v7891 = vunpack.c.l.b16 %v7604
        %v7892 = vunpack.c.h.b16 %v7604
        %v7893 = vunpack.c.l.b16 %v7605
        %v7894 = vunpack.c.h.b16 %v7605
        %v7895 = vunpack.c.l.b16 %v7606
        %v7896 = vunpack.c.h.b16 %v7606
        %v7897 = vunpack.c.l.b16 %v7607
        %v7898 = vunpack.c.h.b16 %v7607
        %v7899 = vunpack.c.l.b16 %v7608
        %v7900 = vunpack.c.h.b16 %v7608
        %v7901 = vunpack.c.l.b16 %v7609
        %v7902 = vunpack.c.h.b16 %v7609
        %v7903 = vunpack.c.l.b16 %v7610
        %v7904 = vunpack.c.h.b16 %v7610
        %v7905 = vunpack.c.l.b16 %v7611
        %v7906 = vunpack.c.h.b16 %v7611
        %v7907 = vunpack.c.l.b16 %v7612
        %v7908 = vunpack.c.h.b16 %v7612
        %v7909 = vunpack.c.l.b16 %v7613
        %v7910 = vunpack.c.h.b16 %v7613
        %v7911 = vunpack.c.l.b16 %v7614
        %v7912 = vunpack.c.h.b16 %v7614
        %v7913 = vunpack.c.l.b16 %v7615
        %v7914 = vunpack.c.h.b16 %v7615
        %v7915 = vunpack.c.l.b16 %v7616
        %v7916 = vunpack.c.h.b16 %v7616
        %v7917 = vpack.c.b16 %v7727, %v7725
        %v7918 = vpack.c.b16 %v7728, %v7726
        %v7919 = vpack.c.b16 %v7731, %v7729
        %v7920 = vpack.c.b16 %v7732, %v7730
        %v7921 = vpack.c.b16 %v7735, %v7733
        %v7922 = vpack.c.b16 %v7736, %v7734
        %v7923 = vpack.c.b16 %v7739, %v7737
        %v7924 = vpack.c.b16 %v7740, %v7738
        %v7925 = vpack.c.b16 %v7743, %v7741
        %v7926 = vpack.c.b16 %v7744, %v7742
        %v7927 = vpack.c.b16 %v7747, %v7745
        %v7928 = vpack.c.b16 %v7748, %v7746
        %v7929 = vpack.c.b16 %v7751, %v7749
        %v7930 = vpack.c.b16 %v7752, %v7750
        %v7931 = vpack.c.b16 %v7755, %v7753
        %v7932 = vpack.c.b16 %v7756, %v7754
        %v7933 = vpack.c.b16 %v7759, %v7757
        %v7934 = vpack.c.b16 %v7760, %v7758
        %v7935 = vpack.c.b16 %v7763, %v7761
        %v7936 = vpack.c.b16 %v7764, %v7762
        %v7937 = vpack.c.b16 %v7767, %v7765
        %v7938 = vpack.c.b16 %v7768, %v7766
        %v7939 = vpack.c.b16 %v7771, %v7769
        %v7940 = vpack.c.b16 %v7772, %v7770
        %v7941 = vpack.c.b16 %v7775, %v7773
        %v7942 = vpack.c.b16 %v7776, %v7774
        %v7943 = vpack.c.b16 %v7779, %v7777
        %v7944 = vpack.c.b16 %v7780, %v7778
        %v7945 = vpack.c.b16 %v7783, %v7781
        %v7946 = vpack.c.b16 %v7784, %v7782
        %v7947 = vpack.c.b16 %v7787, %v7785
        %v7948 = vpack.c.b16 %v7788, %v7786
        %v7949 = vpack.c.b16 %v7791, %v7789
        %v7950 = vpack.c.b16 %v7792, %v7790
        %v7951 = vpack.c.b16 %v7795, %v7793
        %v7952 = vpack.c.b16 %v7796, %v7794
        %v7953 = vpack.c.b16 %v7799, %v7797
        %v7954 = vpack.c.b16 %v7800, %v7798
        %v7955 = vpack.c.b16 %v7803, %v7801
        %v7956 = vpack.c.b16 %v7804, %v7802
        %v7957 = vpack.c.b16 %v7807, %v7805
        %v7958 = vpack.c.b16 %v7808, %v7806
        %v7959 = vpack.c.b16 %v7811, %v7809
        %v7960 = vpack.c.b16 %v7812, %v7810
        %v7961 = vpack.c.b16 %v7815, %v7813
        %v7962 = vpack.c.b16 %v7816, %v7814
        %v7963 = vpack.c.b16 %v7819, %v7817
        %v7964 = vpack.c.b16 %v7820, %v7818
        %v7965 = vpack.c.b16 %v7823, %v7821
        %v7966 = vpack.c.b16 %v7824, %v7822
        %v7967 = vpack.c.b16 %v7827, %v7825
        %v7968 = vpack.c.b16 %v7828, %v7826
        %v7969 = vpack.c.b16 %v7831, %v7829
        %v7970 = vpack.c.b16 %v7832, %v7830
        %v7971 = vpack.c.b16 %v7835, %v7833
        %v7972 = vpack.c.b16 %v7836, %v7834
        %v7973 = vpack.c.b16 %v7839, %v7837
        %v7974 = vpack.c.b16 %v7840, %v7838
        %v7975 = vpack.c.b16 %v7843, %v7841
        %v7976 = vpack.c.b16 %v7844, %v7842
        %v7977 = vpack.c.b16 %v7847, %v7845
        %v7978 = vpack.c.b16 %v7848, %v7846
        %v7979 = vpack.c.b16 %v7851, %v7849
        %v7980 = vpack.c.b16 %v7852, %v7850
        %v7981 = vpack.c.b16 %v7855, %v7853
        %v7982 = vpack.c.b16 %v7856, %v7854
        %v7983 = vpack.c.b16 %v7859, %v7857
        %v7984 = vpack.c.b16 %v7860, %v7858
        %v7985 = vpack.c.b16 %v7863, %v7861
        %v7986 = vpack.c.b16 %v7864, %v7862
        %v7987 = vpack.c.b16 %v7867, %v7865
        %v7988 = vpack.c.b16 %v7868, %v7866
        %v7989 = vpack.c.b16 %v7871, %v7869
        %v7990 = vpack.c.b16 %v7872, %v7870
        %v7991 = vpack.c.b16 %v7875, %v7873
        %v7992 = vpack.c.b16 %v7876, %v7874
        %v7993 = vpack.c.b16 %v7879, %v7877
        %v7994 = vpack.c.b16 %v7880, %v7878
        %v7995 = vpack.c.b16 %v7883, %v7881
        %v7996 = vpack.c.b16 %v7884, %v7882
        %v7997 = vpack.c.b16 %v7887, %v7885
        %v7998 = vpack.c.b16 %v7888, %v7886
        %v7999 = vpack.c.b16 %v7891, %v7889
        %v8000 = vpack.c.b16 %v7892, %v7890
        %v8001 = vpack.c.b16 %v7895, %v7893
        %v8002 = vpack.c.b16 %v7896, %v7894
        %v8003 = vpack.c.b16 %v7899, %v7897
        %v8004 = vpack.c.b16 %v7900, %v7898
        %v8005 = vpack.c.b16 %v7903, %v7901
        %v8006 = vpack.c.b16 %v7904, %v7902
        %v8007 = vpack.c.b16 %v7907, %v7905
        %v8008 = vpack.c.b16 %v7908, %v7906
        %v8009 = vpack.c.b16 %v7911, %v7909
        %v8010 = vpack.c.b16 %v7912, %v7910
        %v8011 = vpack.c.b16 %v7915, %v7913
        %v8012 = vpack.c.b16 %v7916, %v7914
        %8109 = vmatprep.subr.bf16.mxu0 %v7932
        %8110 = vmatpush1.bf16.msra.mxu0 %v7931
        %8111 = vmatprep.subr.bf16.mxu0 %v7930
        %8112 = vmatpush1.bf16.msra.mxu0 %v7929
        %8113 = vmatprep.subr.bf16.mxu0 %v7928
        %8114 = vmatpush1.bf16.msra.mxu0 %v7927
        %8115 = vmatprep.subr.bf16.mxu0 %v7926
        %8116 = vmatpush1.bf16.msra.mxu0 %v7925
        %8117 = vmatprep.subr.bf16.mxu0 %v7924
        %8118 = vmatpush1.bf16.msra.mxu0 %v7923
        %8119 = vmatprep.subr.bf16.mxu0 %v7922
        %8120 = vmatpush1.bf16.msra.mxu0 %v7921
        %8121 = vmatprep.subr.bf16.mxu0 %v7920
        %8122 = vmatpush1.bf16.msra.mxu0 %v7919
        %8123 = vmatprep.subr.bf16.mxu0 %v7918
        %8124 = vmatpush1.bf16.msra.mxu0 %v7917
        %8125 = vmatprep.subr.bf16.mxu0 %v7948
        %8126 = vmatpush2.bf16.msra.mxu0 %v7947
        %8127 = vmatprep.subr.bf16.mxu0 %v7946
        %8128 = vmatpush2.bf16.msra.mxu0 %v7945
        %8129 = vmatprep.subr.bf16.mxu0 %v7944
        %8130 = vmatpush2.bf16.msra.mxu0 %v7943
        %8131 = vmatprep.subr.bf16.mxu0 %v7942
        %8132 = vmatpush2.bf16.msra.mxu0 %v7941
        %8133 = vmatprep.subr.bf16.mxu0 %v7940
        %8134 = vmatpush2.bf16.msra.mxu0 %v7939
        %8135 = vmatprep.subr.bf16.mxu0 %v7938
        %8136 = vmatpush2.bf16.msra.mxu0 %v7937
        %8137 = vmatprep.subr.bf16.mxu0 %v7936
        %8138 = vmatpush2.bf16.msra.mxu0 %v7935
        %8139 = vmatprep.subr.bf16.mxu0 %v7934
        %8140 = vmatpush2.bf16.msra.mxu0 %v7933
        %8141 = vmatprep.mubr.bf16.mxu0 %v7516
        %8142 = vmatmul.mubr.bf16.gmra.mxu0 %v7515
        %v8143 = vpop.f32.mrf.mxu0
        %v8144 = vadd.f32 %v7622, %v8143
        %v8145 = vpop.f32.mrf.mxu0
        %v8146 = vadd.f32 %v7626, %v8145
        %v8147 = vpop.f32.mrf.mxu0
        %v8148 = vpop.f32.mrf.mxu0
        %8149 = vdwg.mxu0
        %8150 = vmatprep.subr.bf16.mxu0 %v7964
        %8151 = vmatpush1.bf16.msra.mxu0 %v7963
        %8152 = vmatprep.subr.bf16.mxu0 %v7962
        %8153 = vmatpush1.bf16.msra.mxu0 %v7961
        %8154 = vmatprep.subr.bf16.mxu0 %v7960
        %8155 = vmatpush1.bf16.msra.mxu0 %v7959
        %8156 = vmatprep.subr.bf16.mxu0 %v7958
        %8157 = vmatpush1.bf16.msra.mxu0 %v7957
        %8158 = vmatprep.subr.bf16.mxu0 %v7956
        %8159 = vmatpush1.bf16.msra.mxu0 %v7955
        %8160 = vmatprep.subr.bf16.mxu0 %v7954
        %8161 = vmatpush1.bf16.msra.mxu0 %v7953
        %8162 = vmatprep.subr.bf16.mxu0 %v7952
        %8163 = vmatpush1.bf16.msra.mxu0 %v7951
        %8164 = vmatprep.subr.bf16.mxu0 %v7950
        %8165 = vmatpush1.bf16.msra.mxu0 %v7949
        %8166 = vmatprep.subr.bf16.mxu0 %v7980
        %8167 = vmatpush2.bf16.msra.mxu0 %v7979
        %8168 = vmatprep.subr.bf16.mxu0 %v7978
        %8169 = vmatpush2.bf16.msra.mxu0 %v7977
        %8170 = vmatprep.subr.bf16.mxu0 %v7976
        %8171 = vmatpush2.bf16.msra.mxu0 %v7975
        %8172 = vmatprep.subr.bf16.mxu0 %v7974
        %8173 = vmatpush2.bf16.msra.mxu0 %v7973
        %8174 = vmatprep.subr.bf16.mxu0 %v7972
        %8175 = vmatpush2.bf16.msra.mxu0 %v7971
        %8176 = vmatprep.subr.bf16.mxu0 %v7970
        %8177 = vmatpush2.bf16.msra.mxu0 %v7969
        %8178 = vmatprep.subr.bf16.mxu0 %v7968
        %8179 = vmatpush2.bf16.msra.mxu0 %v7967
        %8180 = vmatprep.subr.bf16.mxu0 %v7966
        %8181 = vmatpush2.bf16.msra.mxu0 %v7965
        %8182 = vmatprep.mubr.bf16.mxu0 %v7518
        %8183 = vmatmul.mubr.bf16.gmra.mxu0 %v7517
        %v8184 = vpop.f32.mrf.mxu0
        %v8185 = vadd.f32 %v8144, %v8184
        %v8186 = vpop.f32.mrf.mxu0
        %v8187 = vadd.f32 %v8146, %v8186
        %v8188 = vpop.f32.mrf.mxu0
        %v8189 = vpop.f32.mrf.mxu0
        %8190 = vdwg.mxu0
        %8191 = vmatprep.subr.bf16.mxu0 %v7996
        %8192 = vmatpush1.bf16.msra.mxu0 %v7995
        %8193 = vmatprep.subr.bf16.mxu0 %v7994
        %8194 = vmatpush1.bf16.msra.mxu0 %v7993
        %8195 = vmatprep.subr.bf16.mxu0 %v7992
        %8196 = vmatpush1.bf16.msra.mxu0 %v7991
        %8197 = vmatprep.subr.bf16.mxu0 %v7990
        %8198 = vmatpush1.bf16.msra.mxu0 %v7989
        %8199 = vmatprep.subr.bf16.mxu0 %v7988
        %8200 = vmatpush1.bf16.msra.mxu0 %v7987
        %8201 = vmatprep.subr.bf16.mxu0 %v7986
        %8202 = vmatpush1.bf16.msra.mxu0 %v7985
        %8203 = vmatprep.subr.bf16.mxu0 %v7984
        %8204 = vmatpush1.bf16.msra.mxu0 %v7983
        %8205 = vmatprep.subr.bf16.mxu0 %v7982
        %8206 = vmatpush1.bf16.msra.mxu0 %v7981
        %8207 = vmatprep.subr.bf16.mxu0 %v8012
        %8208 = vmatpush2.bf16.msra.mxu0 %v8011
        %8209 = vmatprep.subr.bf16.mxu0 %v8010
        %8210 = vmatpush2.bf16.msra.mxu0 %v8009
        %8211 = vmatprep.subr.bf16.mxu0 %v8008
        %8212 = vmatpush2.bf16.msra.mxu0 %v8007
        %8213 = vmatprep.subr.bf16.mxu0 %v8006
        %8214 = vmatpush2.bf16.msra.mxu0 %v8005
        %8215 = vmatprep.subr.bf16.mxu0 %v8004
        %8216 = vmatpush2.bf16.msra.mxu0 %v8003
        %8217 = vmatprep.subr.bf16.mxu0 %v8002
        %8218 = vmatpush2.bf16.msra.mxu0 %v8001
        %8219 = vmatprep.subr.bf16.mxu0 %v8000
        %8220 = vmatpush2.bf16.msra.mxu0 %v7999
        %8221 = vmatprep.subr.bf16.mxu0 %v7998
        %8222 = vmatpush2.bf16.msra.mxu0 %v7997
        %8223 = vmatprep.mubr.bf16.mxu0 %v7520
        %8224 = vmatmul.mubr.bf16.gmra.mxu0 %v7519
        %v8225 = vpop.f32.mrf.mxu0
        %v8226 = vadd.f32 %v8185, %v8225
        %v8227 = vpop.f32.mrf.mxu0
        %v8228 = vadd.f32 %v8187, %v8227
        %v8229 = vpop.f32.mrf.mxu0
        %v8230 = vpop.f32.mrf.mxu0
        %8231 = vdwg.mxu0
        %v8232 = vadd.f32 %v8226, %v6766
        %v8233 = vadd.f32 %v8228, %v6767
        %v8234 = vmax.f32 %v8232, 0.0
        %v8235 = vmax.f32 %v8233, 0.0
        %v8236 = vsel %vm2092, %v8234, 0.0
        %v8237 = vrot.slane %v8236, 4
        %v8238 = vadd.f32 %v8236, %v8237
        %v8239 = vrot.slane %v8238, 2
        %v8240 = vadd.f32 %v8238, %v8239
        %v8241 = vrot.slane %v8240, 1
        %v8242 = vadd.f32 %v8240, %v8241
        %v8243 = vsel %vm2092, %v8235, 0.0
        %v8244 = vrot.slane %v8243, 4
        %v8245 = vadd.f32 %v8243, %v8244
        %v8246 = vrot.slane %v8245, 2
        %v8247 = vadd.f32 %v8245, %v8246
        %v8248 = vrot.slane %v8247, 1
        %v8249 = vadd.f32 %v8247, %v8248
        %v8250 = vrcp.pop 4.0
        %v8251 = vmul.f32 %v8242, %v8250
        %v8252 = vmul.f32 %v8249, %v8250
        %v8253 = vld [vmem:[#allocation43] sm:$0x3]
        %v8255 = vlaneseq
        %v8256 = vshrl.u32 %v8255, 7
        %v8257 = vsub.s32 0, %v8256
        %v8258 = vrot.slane %v8253, %v8257
        %v8259 = vlaneseq
        %v8260 = vshrl.u32 %v8259, 7
        %v8261 = vsub.s32 1, %v8260
        %v8262 = vrot.slane %v8253, %v8261
        %v8265 = vmul.f32 %v8251, %v8258
        %v8266 = vmul.f32 %v8252, %v8262
        %v8267 = vsel %vm2218, %v8265, 0.0
        %v8268 = vsel %vm2218, %v8266, 0.0
        %v8269 = vadd.f32 %v8267, %v8268
        %8270 = vadd.xlane.f32.xlu0 %v8269
        %v8271 = vpop.xlane.xlu0 %8270
        %v8272 = vld [vmem:[#allocation2] sm:$0x1]
        %v8273 = vadd.f32 %v8271, %v8272
        %vm8274 = vcmask 0
        %8275 = vst.msk [vmem:[%s1648] sm:$0x1] %vm8274, %v8273
        %p8276 = scmp.lt.s32.totalorder %s114, 1
        %s8277 = scalar_select %p8276, %s114, 1
        %s8278 = scalar_lea.vmem %s87, %s8277
        // Predicated region
        $region301: #{resnet_forward.1} parent=191 // pred_check
          %p8279 = pneg %p1040
        $region302: #{resnet_forward.1} parent=191 // pred_check_branch
          %8281 = sbr.rel (%p8279) target = $region304
        $region303: #{resnet_forward.1} parent=191 // pred_region
          _
        $region304: #{resnet_forward.1} parent=191 // pred_fallthru
          _
      $region192: #{resnet_forward.1} parent=5 // pred_fallthru
        _
      %p8282 = scmp.le.s32.totalorder 2, %s109
      // Predicated region
      $region305: #{resnet_forward.1} parent=5 // pred_check
        %p8283 = pneg %p8282
      $region306: #{resnet_forward.1} parent=5 // pred_check_branch
        %8285 = sbr.rel (%p8283) target = $region308
      $region307: #{resnet_forward.1} parent=5 // pred_region
        %s8286 = ssub.s32 %s109, 2
        // Predicated region
        $region309: #{resnet_forward.1} parent=307 // pred_check
          %p8287 = pneg %p1046
        $region310: #{resnet_forward.1} parent=307 // pred_check_branch
          %8289 = sbr.rel (%p8287) target = $region312
        $region311: #{resnet_forward.1} parent=307 // pred_region
          %p8290 = scmp.lt.s32.totalorder %s115, 1
          %s8291 = scalar_select %p8290, %s115, 1
          %s8292 = scalar_lea.vmem %s87, %s8291
        $region312: #{resnet_forward.1} parent=307 // pred_fallthru
          _
      $region308: #{resnet_forward.1} parent=5 // pred_fallthru
        _
    $region6: #{resnet_forward.1} parent=1 // loop_footer
      %s113 = sadd.s32 1, %s109
    $region7: #{resnet_forward.1} parent=1 // loop_footer_branch
      %108 = sbr.rel target = $region3
    $region8: #{resnet_forward.1} parent=1 // loop_exit
      _
    %8293 = vsyncpa [#allocation4], 1
    %s8294 = scalar_lea.sflag [#allocation4], 1
    %8295 = vsyncpa %s8294, 1
    %8296 = vsyncpa [#allocation6], 1
    %8297 = vsyncpa [#allocation9], 1
    %8298 = vsyncpa [#allocation12], 1
    %8299 = vsyncpa [#allocation15], 1
    %8300 = vsyncpa [#allocation18], 1
    %8301 = vsyncpa [#allocation21], 1
    %8302 = vsyncpa [#allocation24], 1
    %8303 = vsyncpa [#allocation27], 1
    %8304 = vsyncpa [#allocation30], 1
    %8305 = vsyncpa [#allocation33], 1
    %8306 = vsyncpa [#allocation36], 1
    %8307 = vsyncpa [#allocation39], 1
    %8308 = vsyncpa [#allocation42], 1

</llo_original>
